<compile_context>
chip_gen: v6e
topology: v6e:2x2x1
jax: 0.10.0
libtpu: 0.0.40
codegen_flags: <defaults>
</compile_context>

<pallas_src>
import functools

import jax
import jax.numpy as jnp
from jax import lax
from jax.experimental import pallas as pl
from jax.experimental.pallas import tpu as pltpu


# ----------------------------------------------------------------------------
# Instruction encoder kernel: hoisted input projection + unrolled LSTM loop
# ----------------------------------------------------------------------------
def _instr_lstm_kernel(x_ref, m_ref, wih_ref, whh_ref, b_ref, hout_ref, gx_sc):
    T, B = m_ref.shape[0], m_ref.shape[1]
    H = hout_ref.shape[-1]

    # Hoisted input projection: a single (T*B, E) @ (E, 4H) MXU call replaces
    # T tiny per-step matmuls on the recurrence critical path.
    # NOTE: b_ref holds (bias_ih + bias_hh) — PyTorch nn.LSTM has two biases;
    # sum them when porting trained weights.
    gx_sc[...] = (
        jnp.dot(x_ref[...], wih_ref[...], preferred_element_type=jnp.float32)
        + b_ref[...])

    def step(t, carry):
        h, c = carry
        start = pl.multiple_of(t * B, B)
        gates = gx_sc[pl.ds(start, B), :] + jnp.dot(
            h.astype(whh_ref.dtype), whh_ref[...],
            preferred_element_type=jnp.float32)
        i = jax.nn.sigmoid(gates[:, 0 * H:1 * H])
        f = jax.nn.sigmoid(gates[:, 1 * H:2 * H])
        g = jnp.tanh(gates[:, 2 * H:3 * H])
        o = jax.nn.sigmoid(gates[:, 3 * H:4 * H])
        c_new = f * c + i * g
        h_new = o * jnp.tanh(c_new)
        # Only advance state on valid (non-padding) timesteps -> final state
        # equals PyTorch's packed-sequence final hidden state.
        m = m_ref[t]                                   # (B, 1)
        return (m * h_new + (1.0 - m) * h,
                m * c_new + (1.0 - m) * c)

    zeros = jnp.zeros((B, H), jnp.float32)
    h_final, _ = lax.fori_loop(0, T, step, (zeros, zeros), unroll=True)
    hout_ref[...] = h_final
    # TODO(synk): a scalar-prefetched max-length could bound the loop to skip
    # fully-padded tail steps; with T=8 static it is not worth the complexity.


def instruction_encoder(tokens, emb_table, wih, whh, b):
    """tokens: (B, T) int32, padding id = 0. Returns final LSTM state (B, H) f32."""
    B, T = tokens.shape
    E = emb_table.shape[1]
    H = whh.shape[0]
    E_pad = max(64, -(-E // 8) * 8)   # pad contraction dim for clean sublanes

    emb_p = jnp.pad(emb_table.astype(jnp.bfloat16), ((0, 0), (0, E_pad - E)))
    wih_p = jnp.pad(wih.astype(jnp.bfloat16), ((0, E_pad - E), (0, 0)))
    whh_p = whh.astype(jnp.bfloat16)

    x_emb = jnp.take(emb_p, tokens, axis=0)                       # (B, T, E_pad)
    x_flat = jnp.transpose(x_emb, (1, 0, 2)).reshape(T * B, E_pad)  # (T*B, E_pad)
    step_mask = (tokens != 0).astype(jnp.float32).T[:, :, None]   # (T, B, 1)

    return pl.pallas_call(
        _instr_lstm_kernel,
        out_shape=jax.ShapeDtypeStruct((B, H), jnp.float32),
        grid_spec=pltpu.PrefetchScalarGridSpec(
            num_scalar_prefetch=0,
            grid=(1,),
            in_specs=[
                pl.BlockSpec((T * B, E_pad), lambda i: (0, 0)),
                pl.BlockSpec((T, B, 1), lambda i: (0, 0, 0)),
                pl.BlockSpec((E_pad, 4 * H), lambda i: (0, 0)),
                pl.BlockSpec((H, 4 * H), lambda i: (0, 0)),
                pl.BlockSpec((1, 4 * H), lambda i: (0, 0)),
            ],
            out_specs=pl.BlockSpec((B, H), lambda i: (0, 0)),
            scratch_shapes=[pltpu.VMEM((T * B, 4 * H), jnp.float32)],
        ),
        compiler_params=pltpu.CompilerParams(
            dimension_semantics=("arbitrary",)),
    )(x_flat, step_mask, wih_p, whh_p, b.astype(jnp.float32))


# ----------------------------------------------------------------------------
# Fused visual encoders + concat + GRU state-encoder kernel (single call)
# ----------------------------------------------------------------------------
def _fused_visual_gru_kernel(instr_ref, depth_ref, rgb_ref, h_ref, m_ref,
                             dw_ref, db_ref, rw_ref, rb_ref,
                             wih_ref, whh_ref, bih_ref, bhh_ref, o_ref):
    # Depth / RGB projection heads (flatten + Linear + ReLU).
    depth_emb = jnp.maximum(
        jnp.dot(depth_ref[...], dw_ref[...],
                preferred_element_type=jnp.float32) + db_ref[...], 0.0)
    rgb_emb = jnp.maximum(
        jnp.dot(rgb_ref[...], rw_ref[...],
                preferred_element_type=jnp.float32) + rb_ref[...], 0.0)

    # concat([instr, depth, rgb]) -> (B, 512); 128-aligned lane sections.
    x = jnp.concatenate([instr_ref[...], depth_emb, rgb_emb],
                        axis=1).astype(wih_ref.dtype)

    # Habitat RNNStateEncoder: hidden state is zeroed on episode reset (masks).
    h = h_ref[...] * m_ref[...]
    H = h.shape[-1]

    gi = jnp.dot(x, wih_ref[...],
                 preferred_element_type=jnp.float32) + bih_ref[...]
    gh = jnp.dot(h.astype(whh_ref.dtype), whh_ref[...],
                 preferred_element_type=jnp.float32) + bhh_ref[...]

    r = jax.nn.sigmoid(gi[:, 0 * H:1 * H] + gh[:, 0 * H:1 * H])
    z = jax.nn.sigmoid(gi[:, 1 * H:2 * H] + gh[:, 1 * H:2 * H])
    n = jnp.tanh(gi[:, 2 * H:3 * H] + r * gh[:, 2 * H:3 * H])
    o_ref[...] = (1.0 - z) * n + z * h


def fused_visual_gru(instr_emb, depth_flat, rgb_flat, h, masks,
                     dw, db, rw, rb, wih, whh, bih, bhh):
    B = instr_emb.shape[0]
    H = whh.shape[0]
    args = (instr_emb, depth_flat, rgb_flat, h, masks,
            dw, db, rw, rb, wih, whh, bih, bhh)
    in_specs = [pl.BlockSpec(a.shape, lambda i: (0, 0)) for a in args]  # all 2-D
    return pl.pallas_call(
        _fused_visual_gru_kernel,
        out_shape=jax.ShapeDtypeStruct((B, H), jnp.float32),
        grid_spec=pltpu.PrefetchScalarGridSpec(
            num_scalar_prefetch=0,
            grid=(1,),
            in_specs=in_specs,
            out_specs=pl.BlockSpec((B, H), lambda i: (0, 0)),
        ),
        compiler_params=pltpu.CompilerParams(
            dimension_semantics=("arbitrary",)),
        # TODO(synk): with real ResNet-head sizes (Din in the tens of
        # thousands) the weight blocks must be K-tiled with an accumulator
        # scratch and vmem_limit_bytes set (v7x has only 64 MiB VMEM).
    )(*args)


# ----------------------------------------------------------------------------
# Full Seq2SeqNet forward
# ----------------------------------------------------------------------------
def seq2seq_forward(params, observations, rnn_states, prev_actions, masks,
                    ablate_instruction=False, ablate_depth=False,
                    ablate_rgb=False):
    del prev_actions  # TODO(synk): use_prev_action embedding path omitted (default False).
    tokens = observations["instruction"]
    B = tokens.shape[0]
    B_pad = max(8, -(-B // 8) * 8)       # pad batch to sublane width

    def pad_b(a):
        if a.shape[0] == B_pad:
            return a
        return jnp.pad(a, [(0, B_pad - B)] + [(0, 0)] * (a.ndim - 1))

    tokens_p = pad_b(tokens)             # pad rows are all-zero -> LSTM h stays 0
    depth_p = pad_b(observations["depth"])
    rgb_p = pad_b(observations["rgb"])
    masks_p = pad_b(masks.astype(jnp.float32))
    h0_p = pad_b(rnn_states[0].astype(jnp.float32))

    instr_emb = instruction_encoder(tokens_p, params["emb"],
                                    params["lstm_wih"], params["lstm_whh"],
                                    params["lstm_b"])                 # (Bp, 128)
    if ablate_instruction:
        instr_emb = instr_emb * 0

    depth_flat = depth_p.reshape(B_pad, -1).astype(jnp.bfloat16)      # (Bp, 256)
    rgb_flat = rgb_p.reshape(B_pad, -1).astype(jnp.bfloat16)          # (Bp, 768)

    dw, db = params["depth_w"], params["depth_b"]
    rw, rb = params["rgb_w"], params["rgb_b"]
    if ablate_depth:    # relu(x @ 0 + 0) == 0  ->  exactly `depth_embedding * 0`
        dw, db = dw * 0, db * 0
    if ablate_rgb:
        rw, rb = rw * 0, rb * 0

    h1_p = fused_visual_gru(instr_emb, depth_flat, rgb_flat, h0_p, masks_p,
                            dw, db, rw, rb,
                            params["gru_wih"], params["gru_whh"],
                            params["gru_bih"], params["gru_bhh"])     # (Bp, 512)

    h1 = h1_p[:B]
    rnn_states_out = h1[None]                                         # (1, B, 512)
    # TODO(synk): progress_monitor Linear(512,1) only runs under AuxLosses;
    # it is initialized in params but not applied (matches default path).
    return h1, rnn_states_out


# ----------------------------------------------------------------------------
# Deterministic parameter construction (bf16 storage for heavy weights)
# ----------------------------------------------------------------------------
def make_params(key, *, vocab=1000, emb_dim=50, instr_hidden=128,
                depth_in=16 * 16 * 1, depth_out=128,
                rgb_in=16 * 16 * 3, rgb_out=256, state_hidden=512):
    ks = jax.random.split(key, 12)
    s = 0.05
    wdt = jnp.bfloat16  # weight storage dtype: halves HBM->VMEM bytes
    rnn_in = instr_hidden + depth_out + rgb_out
    emb = jax.random.normal(ks[0], (vocab, emb_dim), jnp.float32) * s
    emb = emb.at[0].set(0.0)  # padding_idx=0
    params = dict(
        emb=emb.astype(wdt),
        lstm_wih=(jax.random.normal(ks[1], (emb_dim, 4 * instr_hidden)) * s).astype(wdt),
        lstm_whh=(jax.random.normal(ks[2], (instr_hidden, 4 * instr_hidden)) * s).astype(wdt),
        # NOTE: represents (bias_ih + bias_hh) of PyTorch nn.LSTM.
        lstm_b=jax.random.normal(ks[3], (1, 4 * instr_hidden), jnp.float32) * s,
        depth_w=(jax.random.normal(ks[4], (depth_in, depth_out)) * s).astype(wdt),
        depth_b=jax.random.normal(ks[5], (1, depth_out), jnp.float32) * s,
        rgb_w=(jax.random.normal(ks[6], (rgb_in, rgb_out)) * s).astype(wdt),
        rgb_b=jax.random.normal(ks[7], (1, rgb_out), jnp.float32) * s,
        gru_wih=(jax.random.normal(ks[8], (rnn_in, 3 * state_hidden)) * s).astype(wdt),
        gru_whh=(jax.random.normal(ks[9], (state_hidden, 3 * state_hidden)) * s).astype(wdt),
        gru_bih=jax.random.normal(ks[10], (1, 3 * state_hidden), jnp.float32) * s,
        gru_bhh=jax.random.normal(ks[11], (1, 3 * state_hidden), jnp.float32) * s,
        # progress monitor head (kaiming-normal-ish init, bias 0); unused in fwd.
        progress_w=jax.random.normal(ks[0], (state_hidden, 1), jnp.float32)
        * jnp.sqrt(2.0 / state_hidden),
        progress_b=jnp.zeros((1, 1), jnp.float32),
    )
    return params


if __name__ == "__main__":
    B, T = 2, 8
    STATE_H = 512
    key = jax.random.PRNGKey(0)
    k_par, k_tok, k_d, k_r = jax.random.split(key, 4)

    params = make_params(k_par)

    tokens = jax.random.randint(k_tok, (B, T), 1, 1000, dtype=jnp.int32)
    tokens = tokens.at[:, 6:].set(0)  # simulate padded instruction tails
    depth = jax.random.uniform(k_d, (B, 16, 16, 1), jnp.float32)
    rgb = jax.random.uniform(k_r, (B, 16, 16, 3), jnp.float32)

    observations = {"instruction": tokens, "depth": depth, "rgb": rgb}
    rnn_states = jnp.zeros((1, B, STATE_H), jnp.float32)
    prev_actions = jnp.zeros((B, 1), jnp.int32)
    masks = jnp.ones((B, 1), jnp.float32)

    fwd = jax.jit(functools.partial(seq2seq_forward, params))
    x, rnn_states_out = jax.block_until_ready(
        fwd(observations, rnn_states, prev_actions, masks))

    assert x.shape == (B, STATE_H)
    assert rnn_states_out.shape == (1, B, STATE_H)
    assert jnp.all(jnp.isfinite(x)) and jnp.all(jnp.isfinite(rnn_states_out))
    print("KERNEL_OK")
</pallas_src>

<mosaic_0001>
module attributes {stable_mosaic.version = 11 : i64} {
  func.func @_instr_lstm_kernel(%arg0: i32, %arg1: memref<64x64xbf16, #tpu.memory_space<vmem>>, %arg2: memref<8x8x1xf32, #tpu.memory_space<vmem>>, %arg3: memref<64x512xbf16, #tpu.memory_space<vmem>>, %arg4: memref<128x512xbf16, #tpu.memory_space<vmem>>, %arg5: memref<1x512xf32, #tpu.memory_space<vmem>>, %arg6: memref<8x128xf32, #tpu.memory_space<vmem>>, %arg7: memref<64x512xf32, #tpu.memory_space<vmem>>) attributes {dimension_semantics = [#tpu.dimension_semantics<arbitrary>], iteration_bounds = array<i64: 1>, scalar_prefetch = 0 : i64, scratch_operands = 1 : i64, tpu.core_type = #tpu.core_type<tc>, window_params = [{pipeline_mode = #tpu.pipeline_mode<synchronous>, transform_indices = @transform_0, window_bounds = array<i64: 64, 64>}, {pipeline_mode = #tpu.pipeline_mode<synchronous>, transform_indices = @transform_1, window_bounds = array<i64: 8, 8, 1>}, {pipeline_mode = #tpu.pipeline_mode<synchronous>, transform_indices = @transform_2, window_bounds = array<i64: 64, 512>}, {pipeline_mode = #tpu.pipeline_mode<synchronous>, transform_indices = @transform_3, window_bounds = array<i64: 128, 512>}, {pipeline_mode = #tpu.pipeline_mode<synchronous>, transform_indices = @transform_4, window_bounds = array<i64: 1, 512>}, {pipeline_mode = #tpu.pipeline_mode<synchronous>, transform_indices = @transform_5, window_bounds = array<i64: 8, 128>}]} {
    %c0 = arith.constant 0 : index
    %c0_0 = arith.constant 0 : index
    %0 = vector.load %arg1[%c0, %c0_0] : memref<64x64xbf16, #tpu.memory_space<vmem>>, vector<64x64xbf16>
    %c0_1 = arith.constant 0 : index
    %c0_2 = arith.constant 0 : index
    %1 = vector.load %arg3[%c0_1, %c0_2] : memref<64x512xbf16, #tpu.memory_space<vmem>>, vector<64x512xbf16>
    %cst = arith.constant dense<0.000000e+00> : vector<64x512xf32>
    %2 = tpu.matmul %0, %1, %cst {dimension_numbers = #tpu.dot_dimension_numbers<[1], [0], [0], [1], [0, 0, 1, 1], [], []>} : vector<64x64xbf16>, vector<64x512xbf16>, vector<64x512xf32> -> vector<64x512xf32>
    %c0_3 = arith.constant 0 : index
    %c0_4 = arith.constant 0 : index
    %3 = vector.load %arg5[%c0_3, %c0_4] : memref<1x512xf32, #tpu.memory_space<vmem>>, vector<1x512xf32>
    %4 = vector.broadcast %3 : vector<1x512xf32> to vector<64x512xf32>
    %5 = arith.addf %2, %4 : vector<64x512xf32>
    %c0_5 = arith.constant 0 : index
    %c0_6 = arith.constant 0 : index
    %6 = vector.load %arg7[%c0_5, %c0_6] : memref<64x512xf32, #tpu.memory_space<vmem>>, vector<64x512xf32>
    tpu.vector_store %arg7[%c0_5, %c0_6], %5 {strides = array<i32>} : memref<64x512xf32, #tpu.memory_space<vmem>>, vector<64x512xf32>,
    %cst_7 = arith.constant 0.000000e+00 : f32
    %7 = vector.broadcast %cst_7 : f32 to vector<8x128xf32>
    %c0_i32 = arith.constant 0 : i32
    %c8_i32 = arith.constant 8 : i32
    %8 = arith.muli %c0_i32, %c8_i32 : i32
    %9 = tpu.assume_multiple %8, 8 : i32
    %10 = arith.index_cast %9 : i32 to index
    %c0_8 = arith.constant 0 : index
    %11 = vector.load %arg7[%10, %c0_8] : memref<64x512xf32, #tpu.memory_space<vmem>>, vector<8x512xf32>
    %12 = arith.truncf %7 : vector<8x128xf32> to vector<8x128xbf16>
    %c0_9 = arith.constant 0 : index
    %c0_10 = arith.constant 0 : index
    %13 = vector.load %arg4[%c0_9, %c0_10] : memref<128x512xbf16, #tpu.memory_space<vmem>>, vector<128x512xbf16>
    %cst_11 = arith.constant dense<0.000000e+00> : vector<8x512xf32>
    %14 = tpu.matmul %12, %13, %cst_11 {dimension_numbers = #tpu.dot_dimension_numbers<[1], [0], [0], [1], [0, 0, 1, 1], [], []>} : vector<8x128xbf16>, vector<128x512xbf16>, vector<8x512xf32> -> vector<8x512xf32>
    %15 = arith.addf %11, %14 : vector<8x512xf32>
    %16 = vector.extract_strided_slice %15 {offsets = [0, 0], sizes = [8, 128], strides = [1, 1]} : vector<8x512xf32> to vector<8x128xf32>
    %17 = arith.negf %16 : vector<8x128xf32>
    %18 = math.exp %17 : vector<8x128xf32>
    %cst_12 = arith.constant 1.000000e+00 : f32
    %19 = vector.broadcast %cst_12 : f32 to vector<8x128xf32>
    %20 = arith.addf %19, %18 : vector<8x128xf32>
    %21 = arith.divf %19, %20 : vector<8x128xf32>
    %22 = vector.extract_strided_slice %15 {offsets = [0, 128], sizes = [8, 128], strides = [1, 1]} : vector<8x512xf32> to vector<8x128xf32>
    %23 = arith.negf %22 : vector<8x128xf32>
    %24 = math.exp %23 : vector<8x128xf32>
    %cst_13 = arith.constant 1.000000e+00 : f32
    %25 = vector.broadcast %cst_13 : f32 to vector<8x128xf32>
    %26 = arith.addf %25, %24 : vector<8x128xf32>
    %27 = arith.divf %25, %26 : vector<8x128xf32>
    %28 = vector.extract_strided_slice %15 {offsets = [0, 256], sizes = [8, 128], strides = [1, 1]} : vector<8x512xf32> to vector<8x128xf32>
    %29 = math.tanh %28 : vector<8x128xf32>
    %30 = vector.extract_strided_slice %15 {offsets = [0, 384], sizes = [8, 128], strides = [1, 1]} : vector<8x512xf32> to vector<8x128xf32>
    %31 = arith.negf %30 : vector<8x128xf32>
    %32 = math.exp %31 : vector<8x128xf32>
    %cst_14 = arith.constant 1.000000e+00 : f32
    %33 = vector.broadcast %cst_14 : f32 to vector<8x128xf32>
    %34 = arith.addf %33, %32 : vector<8x128xf32>
    %35 = arith.divf %33, %34 : vector<8x128xf32>
    %36 = arith.mulf %27, %7 : vector<8x128xf32>
    %37 = arith.mulf %21, %29 : vector<8x128xf32>
    %38 = arith.addf %36, %37 : vector<8x128xf32>
    %39 = math.tanh %38 : vector<8x128xf32>
    %40 = arith.mulf %35, %39 : vector<8x128xf32>
    %41 = arith.index_cast %c0_i32 : i32 to index
    %c0_15 = arith.constant 0 : index
    %c0_16 = arith.constant 0 : index
    %42 = vector.load %arg2[%41, %c0_15, %c0_16] : memref<8x8x1xf32, #tpu.memory_space<vmem>>, vector<1x8x1xf32>
    %43 = vector.shape_cast %42 : vector<1x8x1xf32> to vector<8x1xf32>
    %44 = vector.broadcast %43 : vector<8x1xf32> to vector<8x128xf32>
    %45 = arith.mulf %44, %40 : vector<8x128xf32>
    %cst_17 = arith.constant 1.000000e+00 : f32
    %46 = vector.broadcast %cst_17 : f32 to vector<8x1xf32>
    %47 = arith.subf %46, %43 : vector<8x1xf32>
    %48 = vector.broadcast %47 : vector<8x1xf32> to vector<8x128xf32>
    %49 = arith.mulf %48, %7 : vector<8x128xf32>
    %50 = arith.addf %45, %49 : vector<8x128xf32>
    %51 = vector.broadcast %43 : vector<8x1xf32> to vector<8x128xf32>
    %52 = arith.mulf %51, %38 : vector<8x128xf32>
    %cst_18 = arith.constant 1.000000e+00 : f32
    %53 = vector.broadcast %cst_18 : f32 to vector<8x1xf32>
    %54 = arith.subf %53, %43 : vector<8x1xf32>
    %55 = vector.broadcast %54 : vector<8x1xf32> to vector<8x128xf32>
    %56 = arith.mulf %55, %7 : vector<8x128xf32>
    %57 = arith.addf %52, %56 : vector<8x128xf32>
    %c1_i32 = arith.constant 1 : i32
    %c8_i32_19 = arith.constant 8 : i32
    %58 = arith.muli %c1_i32, %c8_i32_19 : i32
    %59 = tpu.assume_multiple %58, 8 : i32
    %60 = arith.index_cast %59 : i32 to index
    %c0_20 = arith.constant 0 : index
    %61 = vector.load %arg7[%60, %c0_20] : memref<64x512xf32, #tpu.memory_space<vmem>>, vector<8x512xf32>
    %62 = arith.truncf %50 : vector<8x128xf32> to vector<8x128xbf16>
    %c0_21 = arith.constant 0 : index
    %c0_22 = arith.constant 0 : index
    %63 = vector.load %arg4[%c0_21, %c0_22] : memref<128x512xbf16, #tpu.memory_space<vmem>>, vector<128x512xbf16>
    %cst_23 = arith.constant dense<0.000000e+00> : vector<8x512xf32>
    %64 = tpu.matmul %62, %63, %cst_23 {dimension_numbers = #tpu.dot_dimension_numbers<[1], [0], [0], [1], [0, 0, 1, 1], [], []>} : vector<8x128xbf16>, vector<128x512xbf16>, vector<8x512xf32> -> vector<8x512xf32>
    %65 = arith.addf %61, %64 : vector<8x512xf32>
    %66 = vector.extract_strided_slice %65 {offsets = [0, 0], sizes = [8, 128], strides = [1, 1]} : vector<8x512xf32> to vector<8x128xf32>
    %67 = arith.negf %66 : vector<8x128xf32>
    %68 = math.exp %67 : vector<8x128xf32>
    %cst_24 = arith.constant 1.000000e+00 : f32
    %69 = vector.broadcast %cst_24 : f32 to vector<8x128xf32>
    %70 = arith.addf %69, %68 : vector<8x128xf32>
    %71 = arith.divf %69, %70 : vector<8x128xf32>
    %72 = vector.extract_strided_slice %65 {offsets = [0, 128], sizes = [8, 128], strides = [1, 1]} : vector<8x512xf32> to vector<8x128xf32>
    %73 = arith.negf %72 : vector<8x128xf32>
    %74 = math.exp %73 : vector<8x128xf32>
    %cst_25 = arith.constant 1.000000e+00 : f32
    %75 = vector.broadcast %cst_25 : f32 to vector<8x128xf32>
    %76 = arith.addf %75, %74 : vector<8x128xf32>
    %77 = arith.divf %75, %76 : vector<8x128xf32>
    %78 = vector.extract_strided_slice %65 {offsets = [0, 256], sizes = [8, 128], strides = [1, 1]} : vector<8x512xf32> to vector<8x128xf32>
    %79 = math.tanh %78 : vector<8x128xf32>
    %80 = vector.extract_strided_slice %65 {offsets = [0, 384], sizes = [8, 128], strides = [1, 1]} : vector<8x512xf32> to vector<8x128xf32>
    %81 = arith.negf %80 : vector<8x128xf32>
    %82 = math.exp %81 : vector<8x128xf32>
    %cst_26 = arith.constant 1.000000e+00 : f32
    %83 = vector.broadcast %cst_26 : f32 to vector<8x128xf32>
    %84 = arith.addf %83, %82 : vector<8x128xf32>
    %85 = arith.divf %83, %84 : vector<8x128xf32>
    %86 = arith.mulf %77, %57 : vector<8x128xf32>
    %87 = arith.mulf %71, %79 : vector<8x128xf32>
    %88 = arith.addf %86, %87 : vector<8x128xf32>
    %89 = math.tanh %88 : vector<8x128xf32>
    %90 = arith.mulf %85, %89 : vector<8x128xf32>
    %91 = arith.index_cast %c1_i32 : i32 to index
    %c0_27 = arith.constant 0 : index
    %c0_28 = arith.constant 0 : index
    %92 = vector.load %arg2[%91, %c0_27, %c0_28] : memref<8x8x1xf32, #tpu.memory_space<vmem>>, vector<1x8x1xf32>
    %93 = vector.shape_cast %92 : vector<1x8x1xf32> to vector<8x1xf32>
    %94 = vector.broadcast %93 : vector<8x1xf32> to vector<8x128xf32>
    %95 = arith.mulf %94, %90 : vector<8x128xf32>
    %cst_29 = arith.constant 1.000000e+00 : f32
    %96 = vector.broadcast %cst_29 : f32 to vector<8x1xf32>
    %97 = arith.subf %96, %93 : vector<8x1xf32>
    %98 = vector.broadcast %97 : vector<8x1xf32> to vector<8x128xf32>
    %99 = arith.mulf %98, %50 : vector<8x128xf32>
    %100 = arith.addf %95, %99 : vector<8x128xf32>
    %101 = vector.broadcast %93 : vector<8x1xf32> to vector<8x128xf32>
    %102 = arith.mulf %101, %88 : vector<8x128xf32>
    %cst_30 = arith.constant 1.000000e+00 : f32
    %103 = vector.broadcast %cst_30 : f32 to vector<8x1xf32>
    %104 = arith.subf %103, %93 : vector<8x1xf32>
    %105 = vector.broadcast %104 : vector<8x1xf32> to vector<8x128xf32>
    %106 = arith.mulf %105, %57 : vector<8x128xf32>
    %107 = arith.addf %102, %106 : vector<8x128xf32>
    %c2_i32 = arith.constant 2 : i32
    %c8_i32_31 = arith.constant 8 : i32
    %108 = arith.muli %c2_i32, %c8_i32_31 : i32
    %109 = tpu.assume_multiple %108, 8 : i32
    %110 = arith.index_cast %109 : i32 to index
    %c0_32 = arith.constant 0 : index
    %111 = vector.load %arg7[%110, %c0_32] : memref<64x512xf32, #tpu.memory_space<vmem>>, vector<8x512xf32>
    %112 = arith.truncf %100 : vector<8x128xf32> to vector<8x128xbf16>
    %c0_33 = arith.constant 0 : index
    %c0_34 = arith.constant 0 : index
    %113 = vector.load %arg4[%c0_33, %c0_34] : memref<128x512xbf16, #tpu.memory_space<vmem>>, vector<128x512xbf16>
    %cst_35 = arith.constant dense<0.000000e+00> : vector<8x512xf32>
    %114 = tpu.matmul %112, %113, %cst_35 {dimension_numbers = #tpu.dot_dimension_numbers<[1], [0], [0], [1], [0, 0, 1, 1], [], []>} : vector<8x128xbf16>, vector<128x512xbf16>, vector<8x512xf32> -> vector<8x512xf32>
    %115 = arith.addf %111, %114 : vector<8x512xf32>
    %116 = vector.extract_strided_slice %115 {offsets = [0, 0], sizes = [8, 128], strides = [1, 1]} : vector<8x512xf32> to vector<8x128xf32>
    %117 = arith.negf %116 : vector<8x128xf32>
    %118 = math.exp %117 : vector<8x128xf32>
    %cst_36 = arith.constant 1.000000e+00 : f32
    %119 = vector.broadcast %cst_36 : f32 to vector<8x128xf32>
    %120 = arith.addf %119, %118 : vector<8x128xf32>
    %121 = arith.divf %119, %120 : vector<8x128xf32>
    %122 = vector.extract_strided_slice %115 {offsets = [0, 128], sizes = [8, 128], strides = [1, 1]} : vector<8x512xf32> to vector<8x128xf32>
    %123 = arith.negf %122 : vector<8x128xf32>
    %124 = math.exp %123 : vector<8x128xf32>
    %cst_37 = arith.constant 1.000000e+00 : f32
    %125 = vector.broadcast %cst_37 : f32 to vector<8x128xf32>
    %126 = arith.addf %125, %124 : vector<8x128xf32>
    %127 = arith.divf %125, %126 : vector<8x128xf32>
    %128 = vector.extract_strided_slice %115 {offsets = [0, 256], sizes = [8, 128], strides = [1, 1]} : vector<8x512xf32> to vector<8x128xf32>
    %129 = math.tanh %128 : vector<8x128xf32>
    %130 = vector.extract_strided_slice %115 {offsets = [0, 384], sizes = [8, 128], strides = [1, 1]} : vector<8x512xf32> to vector<8x128xf32>
    %131 = arith.negf %130 : vector<8x128xf32>
    %132 = math.exp %131 : vector<8x128xf32>
    %cst_38 = arith.constant 1.000000e+00 : f32
    %133 = vector.broadcast %cst_38 : f32 to vector<8x128xf32>
    %134 = arith.addf %133, %132 : vector<8x128xf32>
    %135 = arith.divf %133, %134 : vector<8x128xf32>
    %136 = arith.mulf %127, %107 : vector<8x128xf32>
    %137 = arith.mulf %121, %129 : vector<8x128xf32>
    %138 = arith.addf %136, %137 : vector<8x128xf32>
    %139 = math.tanh %138 : vector<8x128xf32>
    %140 = arith.mulf %135, %139 : vector<8x128xf32>
    %141 = arith.index_cast %c2_i32 : i32 to index
    %c0_39 = arith.constant 0 : index
    %c0_40 = arith.constant 0 : index
    %142 = vector.load %arg2[%141, %c0_39, %c0_40] : memref<8x8x1xf32, #tpu.memory_space<vmem>>, vector<1x8x1xf32>
    %143 = vector.shape_cast %142 : vector<1x8x1xf32> to vector<8x1xf32>
    %144 = vector.broadcast %143 : vector<8x1xf32> to vector<8x128xf32>
    %145 = arith.mulf %144, %140 : vector<8x128xf32>
    %cst_41 = arith.constant 1.000000e+00 : f32
    %146 = vector.broadcast %cst_41 : f32 to vector<8x1xf32>
    %147 = arith.subf %146, %143 : vector<8x1xf32>
    %148 = vector.broadcast %147 : vector<8x1xf32> to vector<8x128xf32>
    %149 = arith.mulf %148, %100 : vector<8x128xf32>
    %150 = arith.addf %145, %149 : vector<8x128xf32>
    %151 = vector.broadcast %143 : vector<8x1xf32> to vector<8x128xf32>
    %152 = arith.mulf %151, %138 : vector<8x128xf32>
    %cst_42 = arith.constant 1.000000e+00 : f32
    %153 = vector.broadcast %cst_42 : f32 to vector<8x1xf32>
    %154 = arith.subf %153, %143 : vector<8x1xf32>
    %155 = vector.broadcast %154 : vector<8x1xf32> to vector<8x128xf32>
    %156 = arith.mulf %155, %107 : vector<8x128xf32>
    %157 = arith.addf %152, %156 : vector<8x128xf32>
    %c3_i32 = arith.constant 3 : i32
    %c8_i32_43 = arith.constant 8 : i32
    %158 = arith.muli %c3_i32, %c8_i32_43 : i32
    %159 = tpu.assume_multiple %158, 8 : i32
    %160 = arith.index_cast %159 : i32 to index
    %c0_44 = arith.constant 0 : index
    %161 = vector.load %arg7[%160, %c0_44] : memref<64x512xf32, #tpu.memory_space<vmem>>, vector<8x512xf32>
    %162 = arith.truncf %150 : vector<8x128xf32> to vector<8x128xbf16>
    %c0_45 = arith.constant 0 : index
    %c0_46 = arith.constant 0 : index
    %163 = vector.load %arg4[%c0_45, %c0_46] : memref<128x512xbf16, #tpu.memory_space<vmem>>, vector<128x512xbf16>
    %cst_47 = arith.constant dense<0.000000e+00> : vector<8x512xf32>
    %164 = tpu.matmul %162, %163, %cst_47 {dimension_numbers = #tpu.dot_dimension_numbers<[1], [0], [0], [1], [0, 0, 1, 1], [], []>} : vector<8x128xbf16>, vector<128x512xbf16>, vector<8x512xf32> -> vector<8x512xf32>
    %165 = arith.addf %161, %164 : vector<8x512xf32>
    %166 = vector.extract_strided_slice %165 {offsets = [0, 0], sizes = [8, 128], strides = [1, 1]} : vector<8x512xf32> to vector<8x128xf32>
    %167 = arith.negf %166 : vector<8x128xf32>
    %168 = math.exp %167 : vector<8x128xf32>
    %cst_48 = arith.constant 1.000000e+00 : f32
    %169 = vector.broadcast %cst_48 : f32 to vector<8x128xf32>
    %170 = arith.addf %169, %168 : vector<8x128xf32>
    %171 = arith.divf %169, %170 : vector<8x128xf32>
    %172 = vector.extract_strided_slice %165 {offsets = [0, 128], sizes = [8, 128], strides = [1, 1]} : vector<8x512xf32> to vector<8x128xf32>
    %173 = arith.negf %172 : vector<8x128xf32>
    %174 = math.exp %173 : vector<8x128xf32>
    %cst_49 = arith.constant 1.000000e+00 : f32
    %175 = vector.broadcast %cst_49 : f32 to vector<8x128xf32>
    %176 = arith.addf %175, %174 : vector<8x128xf32>
    %177 = arith.divf %175, %176 : vector<8x128xf32>
    %178 = vector.extract_strided_slice %165 {offsets = [0, 256], sizes = [8, 128], strides = [1, 1]} : vector<8x512xf32> to vector<8x128xf32>
    %179 = math.tanh %178 : vector<8x128xf32>
    %180 = vector.extract_strided_slice %165 {offsets = [0, 384], sizes = [8, 128], strides = [1, 1]} : vector<8x512xf32> to vector<8x128xf32>
    %181 = arith.negf %180 : vector<8x128xf32>
    %182 = math.exp %181 : vector<8x128xf32>
    %cst_50 = arith.constant 1.000000e+00 : f32
    %183 = vector.broadcast %cst_50 : f32 to vector<8x128xf32>
    %184 = arith.addf %183, %182 : vector<8x128xf32>
    %185 = arith.divf %183, %184 : vector<8x128xf32>
    %186 = arith.mulf %177, %157 : vector<8x128xf32>
    %187 = arith.mulf %171, %179 : vector<8x128xf32>
    %188 = arith.addf %186, %187 : vector<8x128xf32>
    %189 = math.tanh %188 : vector<8x128xf32>
    %190 = arith.mulf %185, %189 : vector<8x128xf32>
    %191 = arith.index_cast %c3_i32 : i32 to index
    %c0_51 = arith.constant 0 : index
    %c0_52 = arith.constant 0 : index
    %192 = vector.load %arg2[%191, %c0_51, %c0_52] : memref<8x8x1xf32, #tpu.memory_space<vmem>>, vector<1x8x1xf32>
    %193 = vector.shape_cast %192 : vector<1x8x1xf32> to vector<8x1xf32>
    %194 = vector.broadcast %193 : vector<8x1xf32> to vector<8x128xf32>
    %195 = arith.mulf %194, %190 : vector<8x128xf32>
    %cst_53 = arith.constant 1.000000e+00 : f32
    %196 = vector.broadcast %cst_53 : f32 to vector<8x1xf32>
    %197 = arith.subf %196, %193 : vector<8x1xf32>
    %198 = vector.broadcast %197 : vector<8x1xf32> to vector<8x128xf32>
    %199 = arith.mulf %198, %150 : vector<8x128xf32>
    %200 = arith.addf %195, %199 : vector<8x128xf32>
    %201 = vector.broadcast %193 : vector<8x1xf32> to vector<8x128xf32>
    %202 = arith.mulf %201, %188 : vector<8x128xf32>
    %cst_54 = arith.constant 1.000000e+00 : f32
    %203 = vector.broadcast %cst_54 : f32 to vector<8x1xf32>
    %204 = arith.subf %203, %193 : vector<8x1xf32>
    %205 = vector.broadcast %204 : vector<8x1xf32> to vector<8x128xf32>
    %206 = arith.mulf %205, %157 : vector<8x128xf32>
    %207 = arith.addf %202, %206 : vector<8x128xf32>
    %c4_i32 = arith.constant 4 : i32
    %c8_i32_55 = arith.constant 8 : i32
    %208 = arith.muli %c4_i32, %c8_i32_55 : i32
    %209 = tpu.assume_multiple %208, 8 : i32
    %210 = arith.index_cast %209 : i32 to index
    %c0_56 = arith.constant 0 : index
    %211 = vector.load %arg7[%210, %c0_56] : memref<64x512xf32, #tpu.memory_space<vmem>>, vector<8x512xf32>
    %212 = arith.truncf %200 : vector<8x128xf32> to vector<8x128xbf16>
    %c0_57 = arith.constant 0 : index
    %c0_58 = arith.constant 0 : index
    %213 = vector.load %arg4[%c0_57, %c0_58] : memref<128x512xbf16, #tpu.memory_space<vmem>>, vector<128x512xbf16>
    %cst_59 = arith.constant dense<0.000000e+00> : vector<8x512xf32>
    %214 = tpu.matmul %212, %213, %cst_59 {dimension_numbers = #tpu.dot_dimension_numbers<[1], [0], [0], [1], [0, 0, 1, 1], [], []>} : vector<8x128xbf16>, vector<128x512xbf16>, vector<8x512xf32> -> vector<8x512xf32>
    %215 = arith.addf %211, %214 : vector<8x512xf32>
    %216 = vector.extract_strided_slice %215 {offsets = [0, 0], sizes = [8, 128], strides = [1, 1]} : vector<8x512xf32> to vector<8x128xf32>
    %217 = arith.negf %216 : vector<8x128xf32>
    %218 = math.exp %217 : vector<8x128xf32>
    %cst_60 = arith.constant 1.000000e+00 : f32
    %219 = vector.broadcast %cst_60 : f32 to vector<8x128xf32>
    %220 = arith.addf %219, %218 : vector<8x128xf32>
    %221 = arith.divf %219, %220 : vector<8x128xf32>
    %222 = vector.extract_strided_slice %215 {offsets = [0, 128], sizes = [8, 128], strides = [1, 1]} : vector<8x512xf32> to vector<8x128xf32>
    %223 = arith.negf %222 : vector<8x128xf32>
    %224 = math.exp %223 : vector<8x128xf32>
    %cst_61 = arith.constant 1.000000e+00 : f32
    %225 = vector.broadcast %cst_61 : f32 to vector<8x128xf32>
    %226 = arith.addf %225, %224 : vector<8x128xf32>
    %227 = arith.divf %225, %226 : vector<8x128xf32>
    %228 = vector.extract_strided_slice %215 {offsets = [0, 256], sizes = [8, 128], strides = [1, 1]} : vector<8x512xf32> to vector<8x128xf32>
    %229 = math.tanh %228 : vector<8x128xf32>
    %230 = vector.extract_strided_slice %215 {offsets = [0, 384], sizes = [8, 128], strides = [1, 1]} : vector<8x512xf32> to vector<8x128xf32>
    %231 = arith.negf %230 : vector<8x128xf32>
    %232 = math.exp %231 : vector<8x128xf32>
    %cst_62 = arith.constant 1.000000e+00 : f32
    %233 = vector.broadcast %cst_62 : f32 to vector<8x128xf32>
    %234 = arith.addf %233, %232 : vector<8x128xf32>
    %235 = arith.divf %233, %234 : vector<8x128xf32>
    %236 = arith.mulf %227, %207 : vector<8x128xf32>
    %237 = arith.mulf %221, %229 : vector<8x128xf32>
    %238 = arith.addf %236, %237 : vector<8x128xf32>
    %239 = math.tanh %238 : vector<8x128xf32>
    %240 = arith.mulf %235, %239 : vector<8x128xf32>
    %241 = arith.index_cast %c4_i32 : i32 to index
    %c0_63 = arith.constant 0 : index
    %c0_64 = arith.constant 0 : index
    %242 = vector.load %arg2[%241, %c0_63, %c0_64] : memref<8x8x1xf32, #tpu.memory_space<vmem>>, vector<1x8x1xf32>
    %243 = vector.shape_cast %242 : vector<1x8x1xf32> to vector<8x1xf32>
    %244 = vector.broadcast %243 : vector<8x1xf32> to vector<8x128xf32>
    %245 = arith.mulf %244, %240 : vector<8x128xf32>
    %cst_65 = arith.constant 1.000000e+00 : f32
    %246 = vector.broadcast %cst_65 : f32 to vector<8x1xf32>
    %247 = arith.subf %246, %243 : vector<8x1xf32>
    %248 = vector.broadcast %247 : vector<8x1xf32> to vector<8x128xf32>
    %249 = arith.mulf %248, %200 : vector<8x128xf32>
    %250 = arith.addf %245, %249 : vector<8x128xf32>
    %251 = vector.broadcast %243 : vector<8x1xf32> to vector<8x128xf32>
    %252 = arith.mulf %251, %238 : vector<8x128xf32>
    %cst_66 = arith.constant 1.000000e+00 : f32
    %253 = vector.broadcast %cst_66 : f32 to vector<8x1xf32>
    %254 = arith.subf %253, %243 : vector<8x1xf32>
    %255 = vector.broadcast %254 : vector<8x1xf32> to vector<8x128xf32>
    %256 = arith.mulf %255, %207 : vector<8x128xf32>
    %257 = arith.addf %252, %256 : vector<8x128xf32>
    %c5_i32 = arith.constant 5 : i32
    %c8_i32_67 = arith.constant 8 : i32
    %258 = arith.muli %c5_i32, %c8_i32_67 : i32
    %259 = tpu.assume_multiple %258, 8 : i32
    %260 = arith.index_cast %259 : i32 to index
    %c0_68 = arith.constant 0 : index
    %261 = vector.load %arg7[%260, %c0_68] : memref<64x512xf32, #tpu.memory_space<vmem>>, vector<8x512xf32>
    %262 = arith.truncf %250 : vector<8x128xf32> to vector<8x128xbf16>
    %c0_69 = arith.constant 0 : index
    %c0_70 = arith.constant 0 : index
    %263 = vector.load %arg4[%c0_69, %c0_70] : memref<128x512xbf16, #tpu.memory_space<vmem>>, vector<128x512xbf16>
    %cst_71 = arith.constant dense<0.000000e+00> : vector<8x512xf32>
    %264 = tpu.matmul %262, %263, %cst_71 {dimension_numbers = #tpu.dot_dimension_numbers<[1], [0], [0], [1], [0, 0, 1, 1], [], []>} : vector<8x128xbf16>, vector<128x512xbf16>, vector<8x512xf32> -> vector<8x512xf32>
    %265 = arith.addf %261, %264 : vector<8x512xf32>
    %266 = vector.extract_strided_slice %265 {offsets = [0, 0], sizes = [8, 128], strides = [1, 1]} : vector<8x512xf32> to vector<8x128xf32>
    %267 = arith.negf %266 : vector<8x128xf32>
    %268 = math.exp %267 : vector<8x128xf32>
    %cst_72 = arith.constant 1.000000e+00 : f32
    %269 = vector.broadcast %cst_72 : f32 to vector<8x128xf32>
    %270 = arith.addf %269, %268 : vector<8x128xf32>
    %271 = arith.divf %269, %270 : vector<8x128xf32>
    %272 = vector.extract_strided_slice %265 {offsets = [0, 128], sizes = [8, 128], strides = [1, 1]} : vector<8x512xf32> to vector<8x128xf32>
    %273 = arith.negf %272 : vector<8x128xf32>
    %274 = math.exp %273 : vector<8x128xf32>
    %cst_73 = arith.constant 1.000000e+00 : f32
    %275 = vector.broadcast %cst_73 : f32 to vector<8x128xf32>
    %276 = arith.addf %275, %274 : vector<8x128xf32>
    %277 = arith.divf %275, %276 : vector<8x128xf32>
    %278 = vector.extract_strided_slice %265 {offsets = [0, 256], sizes = [8, 128], strides = [1, 1]} : vector<8x512xf32> to vector<8x128xf32>
    %279 = math.tanh %278 : vector<8x128xf32>
    %280 = vector.extract_strided_slice %265 {offsets = [0, 384], sizes = [8, 128], strides = [1, 1]} : vector<8x512xf32> to vector<8x128xf32>
    %281 = arith.negf %280 : vector<8x128xf32>
    %282 = math.exp %281 : vector<8x128xf32>
    %cst_74 = arith.constant 1.000000e+00 : f32
    %283 = vector.broadcast %cst_74 : f32 to vector<8x128xf32>
    %284 = arith.addf %283, %282 : vector<8x128xf32>
    %285 = arith.divf %283, %284 : vector<8x128xf32>
    %286 = arith.mulf %277, %257 : vector<8x128xf32>
    %287 = arith.mulf %271, %279 : vector<8x128xf32>
    %288 = arith.addf %286, %287 : vector<8x128xf32>
    %289 = math.tanh %288 : vector<8x128xf32>
    %290 = arith.mulf %285, %289 : vector<8x128xf32>
    %291 = arith.index_cast %c5_i32 : i32 to index
    %c0_75 = arith.constant 0 : index
    %c0_76 = arith.constant 0 : index
    %292 = vector.load %arg2[%291, %c0_75, %c0_76] : memref<8x8x1xf32, #tpu.memory_space<vmem>>, vector<1x8x1xf32>
    %293 = vector.shape_cast %292 : vector<1x8x1xf32> to vector<8x1xf32>
    %294 = vector.broadcast %293 : vector<8x1xf32> to vector<8x128xf32>
    %295 = arith.mulf %294, %290 : vector<8x128xf32>
    %cst_77 = arith.constant 1.000000e+00 : f32
    %296 = vector.broadcast %cst_77 : f32 to vector<8x1xf32>
    %297 = arith.subf %296, %293 : vector<8x1xf32>
    %298 = vector.broadcast %297 : vector<8x1xf32> to vector<8x128xf32>
    %299 = arith.mulf %298, %250 : vector<8x128xf32>
    %300 = arith.addf %295, %299 : vector<8x128xf32>
    %301 = vector.broadcast %293 : vector<8x1xf32> to vector<8x128xf32>
    %302 = arith.mulf %301, %288 : vector<8x128xf32>
    %cst_78 = arith.constant 1.000000e+00 : f32
    %303 = vector.broadcast %cst_78 : f32 to vector<8x1xf32>
    %304 = arith.subf %303, %293 : vector<8x1xf32>
    %305 = vector.broadcast %304 : vector<8x1xf32> to vector<8x128xf32>
    %306 = arith.mulf %305, %257 : vector<8x128xf32>
    %307 = arith.addf %302, %306 : vector<8x128xf32>
    %c6_i32 = arith.constant 6 : i32
    %c8_i32_79 = arith.constant 8 : i32
    %308 = arith.muli %c6_i32, %c8_i32_79 : i32
    %309 = tpu.assume_multiple %308, 8 : i32
    %310 = arith.index_cast %309 : i32 to index
    %c0_80 = arith.constant 0 : index
    %311 = vector.load %arg7[%310, %c0_80] : memref<64x512xf32, #tpu.memory_space<vmem>>, vector<8x512xf32>
    %312 = arith.truncf %300 : vector<8x128xf32> to vector<8x128xbf16>
    %c0_81 = arith.constant 0 : index
    %c0_82 = arith.constant 0 : index
    %313 = vector.load %arg4[%c0_81, %c0_82] : memref<128x512xbf16, #tpu.memory_space<vmem>>, vector<128x512xbf16>
    %cst_83 = arith.constant dense<0.000000e+00> : vector<8x512xf32>
    %314 = tpu.matmul %312, %313, %cst_83 {dimension_numbers = #tpu.dot_dimension_numbers<[1], [0], [0], [1], [0, 0, 1, 1], [], []>} : vector<8x128xbf16>, vector<128x512xbf16>, vector<8x512xf32> -> vector<8x512xf32>
    %315 = arith.addf %311, %314 : vector<8x512xf32>
    %316 = vector.extract_strided_slice %315 {offsets = [0, 0], sizes = [8, 128], strides = [1, 1]} : vector<8x512xf32> to vector<8x128xf32>
    %317 = arith.negf %316 : vector<8x128xf32>
    %318 = math.exp %317 : vector<8x128xf32>
    %cst_84 = arith.constant 1.000000e+00 : f32
    %319 = vector.broadcast %cst_84 : f32 to vector<8x128xf32>
    %320 = arith.addf %319, %318 : vector<8x128xf32>
    %321 = arith.divf %319, %320 : vector<8x128xf32>
    %322 = vector.extract_strided_slice %315 {offsets = [0, 128], sizes = [8, 128], strides = [1, 1]} : vector<8x512xf32> to vector<8x128xf32>
    %323 = arith.negf %322 : vector<8x128xf32>
    %324 = math.exp %323 : vector<8x128xf32>
    %cst_85 = arith.constant 1.000000e+00 : f32
    %325 = vector.broadcast %cst_85 : f32 to vector<8x128xf32>
    %326 = arith.addf %325, %324 : vector<8x128xf32>
    %327 = arith.divf %325, %326 : vector<8x128xf32>
    %328 = vector.extract_strided_slice %315 {offsets = [0, 256], sizes = [8, 128], strides = [1, 1]} : vector<8x512xf32> to vector<8x128xf32>
    %329 = math.tanh %328 : vector<8x128xf32>
    %330 = vector.extract_strided_slice %315 {offsets = [0, 384], sizes = [8, 128], strides = [1, 1]} : vector<8x512xf32> to vector<8x128xf32>
    %331 = arith.negf %330 : vector<8x128xf32>
    %332 = math.exp %331 : vector<8x128xf32>
    %cst_86 = arith.constant 1.000000e+00 : f32
    %333 = vector.broadcast %cst_86 : f32 to vector<8x128xf32>
    %334 = arith.addf %333, %332 : vector<8x128xf32>
    %335 = arith.divf %333, %334 : vector<8x128xf32>
    %336 = arith.mulf %327, %307 : vector<8x128xf32>
    %337 = arith.mulf %321, %329 : vector<8x128xf32>
    %338 = arith.addf %336, %337 : vector<8x128xf32>
    %339 = math.tanh %338 : vector<8x128xf32>
    %340 = arith.mulf %335, %339 : vector<8x128xf32>
    %341 = arith.index_cast %c6_i32 : i32 to index
    %c0_87 = arith.constant 0 : index
    %c0_88 = arith.constant 0 : index
    %342 = vector.load %arg2[%341, %c0_87, %c0_88] : memref<8x8x1xf32, #tpu.memory_space<vmem>>, vector<1x8x1xf32>
    %343 = vector.shape_cast %342 : vector<1x8x1xf32> to vector<8x1xf32>
    %344 = vector.broadcast %343 : vector<8x1xf32> to vector<8x128xf32>
    %345 = arith.mulf %344, %340 : vector<8x128xf32>
    %cst_89 = arith.constant 1.000000e+00 : f32
    %346 = vector.broadcast %cst_89 : f32 to vector<8x1xf32>
    %347 = arith.subf %346, %343 : vector<8x1xf32>
    %348 = vector.broadcast %347 : vector<8x1xf32> to vector<8x128xf32>
    %349 = arith.mulf %348, %300 : vector<8x128xf32>
    %350 = arith.addf %345, %349 : vector<8x128xf32>
    %351 = vector.broadcast %343 : vector<8x1xf32> to vector<8x128xf32>
    %352 = arith.mulf %351, %338 : vector<8x128xf32>
    %cst_90 = arith.constant 1.000000e+00 : f32
    %353 = vector.broadcast %cst_90 : f32 to vector<8x1xf32>
    %354 = arith.subf %353, %343 : vector<8x1xf32>
    %355 = vector.broadcast %354 : vector<8x1xf32> to vector<8x128xf32>
    %356 = arith.mulf %355, %307 : vector<8x128xf32>
    %357 = arith.addf %352, %356 : vector<8x128xf32>
    %c7_i32 = arith.constant 7 : i32
    %c8_i32_91 = arith.constant 8 : i32
    %358 = arith.muli %c7_i32, %c8_i32_91 : i32
    %359 = tpu.assume_multiple %358, 8 : i32
    %360 = arith.index_cast %359 : i32 to index
    %c0_92 = arith.constant 0 : index
    %361 = vector.load %arg7[%360, %c0_92] : memref<64x512xf32, #tpu.memory_space<vmem>>, vector<8x512xf32>
    %362 = arith.truncf %350 : vector<8x128xf32> to vector<8x128xbf16>
    %c0_93 = arith.constant 0 : index
    %c0_94 = arith.constant 0 : index
    %363 = vector.load %arg4[%c0_93, %c0_94] : memref<128x512xbf16, #tpu.memory_space<vmem>>, vector<128x512xbf16>
    %cst_95 = arith.constant dense<0.000000e+00> : vector<8x512xf32>
    %364 = tpu.matmul %362, %363, %cst_95 {dimension_numbers = #tpu.dot_dimension_numbers<[1], [0], [0], [1], [0, 0, 1, 1], [], []>} : vector<8x128xbf16>, vector<128x512xbf16>, vector<8x512xf32> -> vector<8x512xf32>
    %365 = arith.addf %361, %364 : vector<8x512xf32>
    %366 = vector.extract_strided_slice %365 {offsets = [0, 0], sizes = [8, 128], strides = [1, 1]} : vector<8x512xf32> to vector<8x128xf32>
    %367 = arith.negf %366 : vector<8x128xf32>
    %368 = math.exp %367 : vector<8x128xf32>
    %cst_96 = arith.constant 1.000000e+00 : f32
    %369 = vector.broadcast %cst_96 : f32 to vector<8x128xf32>
    %370 = arith.addf %369, %368 : vector<8x128xf32>
    %371 = arith.divf %369, %370 : vector<8x128xf32>
    %372 = vector.extract_strided_slice %365 {offsets = [0, 128], sizes = [8, 128], strides = [1, 1]} : vector<8x512xf32> to vector<8x128xf32>
    %373 = arith.negf %372 : vector<8x128xf32>
    %374 = math.exp %373 : vector<8x128xf32>
    %cst_97 = arith.constant 1.000000e+00 : f32
    %375 = vector.broadcast %cst_97 : f32 to vector<8x128xf32>
    %376 = arith.addf %375, %374 : vector<8x128xf32>
    %377 = arith.divf %375, %376 : vector<8x128xf32>
    %378 = vector.extract_strided_slice %365 {offsets = [0, 256], sizes = [8, 128], strides = [1, 1]} : vector<8x512xf32> to vector<8x128xf32>
    %379 = math.tanh %378 : vector<8x128xf32>
    %380 = vector.extract_strided_slice %365 {offsets = [0, 384], sizes = [8, 128], strides = [1, 1]} : vector<8x512xf32> to vector<8x128xf32>
    %381 = arith.negf %380 : vector<8x128xf32>
    %382 = math.exp %381 : vector<8x128xf32>
    %cst_98 = arith.constant 1.000000e+00 : f32
    %383 = vector.broadcast %cst_98 : f32 to vector<8x128xf32>
    %384 = arith.addf %383, %382 : vector<8x128xf32>
    %385 = arith.divf %383, %384 : vector<8x128xf32>
    %386 = arith.mulf %377, %357 : vector<8x128xf32>
    %387 = arith.mulf %371, %379 : vector<8x128xf32>
    %388 = arith.addf %386, %387 : vector<8x128xf32>
    %389 = math.tanh %388 : vector<8x128xf32>
    %390 = arith.mulf %385, %389 : vector<8x128xf32>
    %391 = arith.index_cast %c7_i32 : i32 to index
    %c0_99 = arith.constant 0 : index
    %c0_100 = arith.constant 0 : index
    %392 = vector.load %arg2[%391, %c0_99, %c0_100] : memref<8x8x1xf32, #tpu.memory_space<vmem>>, vector<1x8x1xf32>
    %393 = vector.shape_cast %392 : vector<1x8x1xf32> to vector<8x1xf32>
    %394 = vector.broadcast %393 : vector<8x1xf32> to vector<8x128xf32>
    %395 = arith.mulf %394, %390 : vector<8x128xf32>
    %cst_101 = arith.constant 1.000000e+00 : f32
    %396 = vector.broadcast %cst_101 : f32 to vector<8x1xf32>
    %397 = arith.subf %396, %393 : vector<8x1xf32>
    %398 = vector.broadcast %397 : vector<8x1xf32> to vector<8x128xf32>
    %399 = arith.mulf %398, %350 : vector<8x128xf32>
    %400 = arith.addf %395, %399 : vector<8x128xf32>
    %401 = vector.broadcast %393 : vector<8x1xf32> to vector<8x128xf32>
    %402 = arith.mulf %401, %388 : vector<8x128xf32>
    %cst_102 = arith.constant 1.000000e+00 : f32
    %403 = vector.broadcast %cst_102 : f32 to vector<8x1xf32>
    %404 = arith.subf %403, %393 : vector<8x1xf32>
    %405 = vector.broadcast %404 : vector<8x1xf32> to vector<8x128xf32>
    %406 = arith.mulf %405, %357 : vector<8x128xf32>
    %407 = arith.addf %402, %406 : vector<8x128xf32>
    %c8_i32_103 = arith.constant 8 : i32
    %c0_104 = arith.constant 0 : index
    %c0_105 = arith.constant 0 : index
    %408 = vector.load %arg6[%c0_104, %c0_105] : memref<8x128xf32, #tpu.memory_space<vmem>>, vector<8x128xf32>
    tpu.vector_store %arg6[%c0_104, %c0_105], %400 {strides = array<i32>} : memref<8x128xf32, #tpu.memory_space<vmem>>, vector<8x128xf32>,
    return
  }
  func.func @transform_0(%arg0: i32) -> (i32, i32) {
    %c0_i32 = arith.constant 0 : i32
    %c0_i32_0 = arith.constant 0 : i32
    %c0_i32_1 = arith.constant 0 : i32
    return %c0_i32, %c0_i32_0 : i32, i32
  }
  func.func @transform_1(%arg0: i32) -> (i32, i32, i32) {
    %c0_i32 = arith.constant 0 : i32
    %c0_i32_0 = arith.constant 0 : i32
    %c0_i32_1 = arith.constant 0 : i32
    %c0_i32_2 = arith.constant 0 : i32
    return %c0_i32, %c0_i32_0, %c0_i32_1 : i32, i32, i32
  }
  func.func @transform_2(%arg0: i32) -> (i32, i32) {
    %c0_i32 = arith.constant 0 : i32
    %c0_i32_0 = arith.constant 0 : i32
    %c0_i32_1 = arith.constant 0 : i32
    return %c0_i32, %c0_i32_0 : i32, i32
  }
  func.func @transform_3(%arg0: i32) -> (i32, i32) {
    %c0_i32 = arith.constant 0 : i32
    %c0_i32_0 = arith.constant 0 : i32
    %c0_i32_1 = arith.constant 0 : i32
    return %c0_i32, %c0_i32_0 : i32, i32
  }
  func.func @transform_4(%arg0: i32) -> (i32, i32) {
    %c0_i32 = arith.constant 0 : i32
    %c0_i32_0 = arith.constant 0 : i32
    %c0_i32_1 = arith.constant 0 : i32
    return %c0_i32, %c0_i32_0 : i32, i32
  }
  func.func @transform_5(%arg0: i32) -> (i32, i32) {
    %c0_i32 = arith.constant 0 : i32
    %c0_i32_0 = arith.constant 0 : i32
    %c0_i32_1 = arith.constant 0 : i32
    return %c0_i32, %c0_i32_0 : i32, i32
  }
}

module attributes {stable_mosaic.version = 11 : i64} {
  func.func @_fused_visual_gru_kernel(%arg0: i32, %arg1: memref<8x128xf32, #tpu.memory_space<vmem>>, %arg2: memref<8x256xbf16, #tpu.memory_space<vmem>>, %arg3: memref<8x768xbf16, #tpu.memory_space<vmem>>, %arg4: memref<8x512xf32, #tpu.memory_space<vmem>>, %arg5: memref<8x1xf32, #tpu.memory_space<vmem>>, %arg6: memref<256x128xbf16, #tpu.memory_space<vmem>>, %arg7: memref<1x128xf32, #tpu.memory_space<vmem>>, %arg8: memref<768x256xbf16, #tpu.memory_space<vmem>>, %arg9: memref<1x256xf32, #tpu.memory_space<vmem>>, %arg10: memref<512x1536xbf16, #tpu.memory_space<vmem>>, %arg11: memref<512x1536xbf16, #tpu.memory_space<vmem>>, %arg12: memref<1x1536xf32, #tpu.memory_space<vmem>>, %arg13: memref<1x1536xf32, #tpu.memory_space<vmem>>, %arg14: memref<8x512xf32, #tpu.memory_space<vmem>>) attributes {dimension_semantics = [#tpu.dimension_semantics<arbitrary>], iteration_bounds = array<i64: 1>, scalar_prefetch = 0 : i64, scratch_operands = 0 : i64, tpu.core_type = #tpu.core_type<tc>, window_params = [{pipeline_mode = #tpu.pipeline_mode<synchronous>, transform_indices = @transform_0, window_bounds = array<i64: 8, 128>}, {pipeline_mode = #tpu.pipeline_mode<synchronous>, transform_indices = @transform_1, window_bounds = array<i64: 8, 256>}, {pipeline_mode = #tpu.pipeline_mode<synchronous>, transform_indices = @transform_2, window_bounds = array<i64: 8, 768>}, {pipeline_mode = #tpu.pipeline_mode<synchronous>, transform_indices = @transform_3, window_bounds = array<i64: 8, 512>}, {pipeline_mode = #tpu.pipeline_mode<synchronous>, transform_indices = @transform_4, window_bounds = array<i64: 8, 1>}, {pipeline_mode = #tpu.pipeline_mode<synchronous>, transform_indices = @transform_5, window_bounds = array<i64: 256, 128>}, {pipeline_mode = #tpu.pipeline_mode<synchronous>, transform_indices = @transform_6, window_bounds = array<i64: 1, 128>}, {pipeline_mode = #tpu.pipeline_mode<synchronous>, transform_indices = @transform_7, window_bounds = array<i64: 768, 256>}, {pipeline_mode = #tpu.pipeline_mode<synchronous>, transform_indices = @transform_8, window_bounds = array<i64: 1, 256>}, {pipeline_mode = #tpu.pipeline_mode<synchronous>, transform_indices = @transform_9, window_bounds = array<i64: 512, 1536>}, {pipeline_mode = #tpu.pipeline_mode<synchronous>, transform_indices = @transform_10, window_bounds = array<i64: 512, 1536>}, {pipeline_mode = #tpu.pipeline_mode<synchronous>, transform_indices = @transform_11, window_bounds = array<i64: 1, 1536>}, {pipeline_mode = #tpu.pipeline_mode<synchronous>, transform_indices = @transform_12, window_bounds = array<i64: 1, 1536>}, {pipeline_mode = #tpu.pipeline_mode<synchronous>, transform_indices = @transform_13, window_bounds = array<i64: 8, 512>}]} {
    %c0 = arith.constant 0 : index
    %c0_0 = arith.constant 0 : index
    %0 = vector.load %arg2[%c0, %c0_0] : memref<8x256xbf16, #tpu.memory_space<vmem>>, vector<8x256xbf16>
    %c0_1 = arith.constant 0 : index
    %c0_2 = arith.constant 0 : index
    %1 = vector.load %arg6[%c0_1, %c0_2] : memref<256x128xbf16, #tpu.memory_space<vmem>>, vector<256x128xbf16>
    %cst = arith.constant dense<0.000000e+00> : vector<8x128xf32>
    %2 = tpu.matmul %0, %1, %cst {dimension_numbers = #tpu.dot_dimension_numbers<[1], [0], [0], [1], [0, 0, 1, 1], [], []>} : vector<8x256xbf16>, vector<256x128xbf16>, vector<8x128xf32> -> vector<8x128xf32>
    %c0_3 = arith.constant 0 : index
    %c0_4 = arith.constant 0 : index
    %3 = vector.load %arg7[%c0_3, %c0_4] : memref<1x128xf32, #tpu.memory_space<vmem>>, vector<1x128xf32>
    %4 = vector.broadcast %3 : vector<1x128xf32> to vector<8x128xf32>
    %5 = arith.addf %2, %4 : vector<8x128xf32>
    %cst_5 = arith.constant 0.000000e+00 : f32
    %6 = vector.broadcast %cst_5 : f32 to vector<8x128xf32>
    %7 = arith.maximumf %5, %6 : vector<8x128xf32>
    %c0_6 = arith.constant 0 : index
    %c0_7 = arith.constant 0 : index
    %8 = vector.load %arg3[%c0_6, %c0_7] : memref<8x768xbf16, #tpu.memory_space<vmem>>, vector<8x768xbf16>
    %c0_8 = arith.constant 0 : index
    %c0_9 = arith.constant 0 : index
    %9 = vector.load %arg8[%c0_8, %c0_9] : memref<768x256xbf16, #tpu.memory_space<vmem>>, vector<768x256xbf16>
    %cst_10 = arith.constant dense<0.000000e+00> : vector<8x256xf32>
    %10 = tpu.matmul %8, %9, %cst_10 {dimension_numbers = #tpu.dot_dimension_numbers<[1], [0], [0], [1], [0, 0, 1, 1], [], []>} : vector<8x768xbf16>, vector<768x256xbf16>, vector<8x256xf32> -> vector<8x256xf32>
    %c0_11 = arith.constant 0 : index
    %c0_12 = arith.constant 0 : index
    %11 = vector.load %arg9[%c0_11, %c0_12] : memref<1x256xf32, #tpu.memory_space<vmem>>, vector<1x256xf32>
    %12 = vector.broadcast %11 : vector<1x256xf32> to vector<8x256xf32>
    %13 = arith.addf %10, %12 : vector<8x256xf32>
    %cst_13 = arith.constant 0.000000e+00 : f32
    %14 = vector.broadcast %cst_13 : f32 to vector<8x256xf32>
    %15 = arith.maximumf %13, %14 : vector<8x256xf32>
    %c0_14 = arith.constant 0 : index
    %c0_15 = arith.constant 0 : index
    %16 = vector.load %arg1[%c0_14, %c0_15] : memref<8x128xf32, #tpu.memory_space<vmem>>, vector<8x128xf32>
    %17 = tpu.concatenate %16, %7, %15 in 1 : vector<8x128xf32>, vector<8x128xf32>, vector<8x256xf32> -> vector<8x512xf32>
    %18 = arith.truncf %17 : vector<8x512xf32> to vector<8x512xbf16>
    %c0_16 = arith.constant 0 : index
    %c0_17 = arith.constant 0 : index
    %19 = vector.load %arg4[%c0_16, %c0_17] : memref<8x512xf32, #tpu.memory_space<vmem>>, vector<8x512xf32>
    %c0_18 = arith.constant 0 : index
    %c0_19 = arith.constant 0 : index
    %20 = vector.load %arg5[%c0_18, %c0_19] : memref<8x1xf32, #tpu.memory_space<vmem>>, vector<8x1xf32>
    %21 = vector.broadcast %20 : vector<8x1xf32> to vector<8x512xf32>
    %22 = arith.mulf %19, %21 : vector<8x512xf32>
    %c0_20 = arith.constant 0 : index
    %c0_21 = arith.constant 0 : index
    %23 = vector.load %arg10[%c0_20, %c0_21] : memref<512x1536xbf16, #tpu.memory_space<vmem>>, vector<512x1536xbf16>
    %cst_22 = arith.constant dense<0.000000e+00> : vector<8x1536xf32>
    %24 = tpu.matmul %18, %23, %cst_22 {dimension_numbers = #tpu.dot_dimension_numbers<[1], [0], [0], [1], [0, 0, 1, 1], [], []>} : vector<8x512xbf16>, vector<512x1536xbf16>, vector<8x1536xf32> -> vector<8x1536xf32>
    %c0_23 = arith.constant 0 : index
    %c0_24 = arith.constant 0 : index
    %25 = vector.load %arg12[%c0_23, %c0_24] : memref<1x1536xf32, #tpu.memory_space<vmem>>, vector<1x1536xf32>
    %26 = vector.broadcast %25 : vector<1x1536xf32> to vector<8x1536xf32>
    %27 = arith.addf %24, %26 : vector<8x1536xf32>
    %28 = arith.truncf %22 : vector<8x512xf32> to vector<8x512xbf16>
    %c0_25 = arith.constant 0 : index
    %c0_26 = arith.constant 0 : index
    %29 = vector.load %arg11[%c0_25, %c0_26] : memref<512x1536xbf16, #tpu.memory_space<vmem>>, vector<512x1536xbf16>
    %cst_27 = arith.constant dense<0.000000e+00> : vector<8x1536xf32>
    %30 = tpu.matmul %28, %29, %cst_27 {dimension_numbers = #tpu.dot_dimension_numbers<[1], [0], [0], [1], [0, 0, 1, 1], [], []>} : vector<8x512xbf16>, vector<512x1536xbf16>, vector<8x1536xf32> -> vector<8x1536xf32>
    %c0_28 = arith.constant 0 : index
    %c0_29 = arith.constant 0 : index
    %31 = vector.load %arg13[%c0_28, %c0_29] : memref<1x1536xf32, #tpu.memory_space<vmem>>, vector<1x1536xf32>
    %32 = vector.broadcast %31 : vector<1x1536xf32> to vector<8x1536xf32>
    %33 = arith.addf %30, %32 : vector<8x1536xf32>
    %34 = vector.extract_strided_slice %27 {offsets = [0, 0], sizes = [8, 512], strides = [1, 1]} : vector<8x1536xf32> to vector<8x512xf32>
    %35 = vector.extract_strided_slice %33 {offsets = [0, 0], sizes = [8, 512], strides = [1, 1]} : vector<8x1536xf32> to vector<8x512xf32>
    %36 = arith.addf %34, %35 : vector<8x512xf32>
    %37 = arith.negf %36 : vector<8x512xf32>
    %38 = math.exp %37 : vector<8x512xf32>
    %cst_30 = arith.constant 1.000000e+00 : f32
    %39 = vector.broadcast %cst_30 : f32 to vector<8x512xf32>
    %40 = arith.addf %39, %38 : vector<8x512xf32>
    %41 = arith.divf %39, %40 : vector<8x512xf32>
    %42 = vector.extract_strided_slice %27 {offsets = [0, 512], sizes = [8, 512], strides = [1, 1]} : vector<8x1536xf32> to vector<8x512xf32>
    %43 = vector.extract_strided_slice %33 {offsets = [0, 512], sizes = [8, 512], strides = [1, 1]} : vector<8x1536xf32> to vector<8x512xf32>
    %44 = arith.addf %42, %43 : vector<8x512xf32>
    %45 = arith.negf %44 : vector<8x512xf32>
    %46 = math.exp %45 : vector<8x512xf32>
    %cst_31 = arith.constant 1.000000e+00 : f32
    %47 = vector.broadcast %cst_31 : f32 to vector<8x512xf32>
    %48 = arith.addf %47, %46 : vector<8x512xf32>
    %49 = arith.divf %47, %48 : vector<8x512xf32>
    %50 = vector.extract_strided_slice %27 {offsets = [0, 1024], sizes = [8, 512], strides = [1, 1]} : vector<8x1536xf32> to vector<8x512xf32>
    %51 = vector.extract_strided_slice %33 {offsets = [0, 1024], sizes = [8, 512], strides = [1, 1]} : vector<8x1536xf32> to vector<8x512xf32>
    %52 = arith.mulf %41, %51 : vector<8x512xf32>
    %53 = arith.addf %50, %52 : vector<8x512xf32>
    %54 = math.tanh %53 : vector<8x512xf32>
    %cst_32 = arith.constant 1.000000e+00 : f32
    %55 = vector.broadcast %cst_32 : f32 to vector<8x512xf32>
    %56 = arith.subf %55, %49 : vector<8x512xf32>
    %57 = arith.mulf %56, %54 : vector<8x512xf32>
    %58 = arith.mulf %49, %22 : vector<8x512xf32>
    %59 = arith.addf %57, %58 : vector<8x512xf32>
    %c0_33 = arith.constant 0 : index
    %c0_34 = arith.constant 0 : index
    %60 = vector.load %arg14[%c0_33, %c0_34] : memref<8x512xf32, #tpu.memory_space<vmem>>, vector<8x512xf32>
    tpu.vector_store %arg14[%c0_33, %c0_34], %59 {strides = array<i32>} : memref<8x512xf32, #tpu.memory_space<vmem>>, vector<8x512xf32>,
    return
  }
  func.func @transform_0(%arg0: i32) -> (i32, i32) {
    %c0_i32 = arith.constant 0 : i32
    %c0_i32_0 = arith.constant 0 : i32
    %c0_i32_1 = arith.constant 0 : i32
    return %c0_i32, %c0_i32_0 : i32, i32
  }
  func.func @transform_1(%arg0: i32) -> (i32, i32) {
    %c0_i32 = arith.constant 0 : i32
    %c0_i32_0 = arith.constant 0 : i32
    %c0_i32_1 = arith.constant 0 : i32
    return %c0_i32, %c0_i32_0 : i32, i32
  }
  func.func @transform_2(%arg0: i32) -> (i32, i32) {
    %c0_i32 = arith.constant 0 : i32
    %c0_i32_0 = arith.constant 0 : i32
    %c0_i32_1 = arith.constant 0 : i32
    return %c0_i32, %c0_i32_0 : i32, i32
  }
  func.func @transform_3(%arg0: i32) -> (i32, i32) {
    %c0_i32 = arith.constant 0 : i32
    %c0_i32_0 = arith.constant 0 : i32
    %c0_i32_1 = arith.constant 0 : i32
    return %c0_i32, %c0_i32_0 : i32, i32
  }
  func.func @transform_4(%arg0: i32) -> (i32, i32) {
    %c0_i32 = arith.constant 0 : i32
    %c0_i32_0 = arith.constant 0 : i32
    %c0_i32_1 = arith.constant 0 : i32
    return %c0_i32, %c0_i32_0 : i32, i32
  }
  func.func @transform_5(%arg0: i32) -> (i32, i32) {
    %c0_i32 = arith.constant 0 : i32
    %c0_i32_0 = arith.constant 0 : i32
    %c0_i32_1 = arith.constant 0 : i32
    return %c0_i32, %c0_i32_0 : i32, i32
  }
  func.func @transform_6(%arg0: i32) -> (i32, i32) {
    %c0_i32 = arith.constant 0 : i32
    %c0_i32_0 = arith.constant 0 : i32
    %c0_i32_1 = arith.constant 0 : i32
    return %c0_i32, %c0_i32_0 : i32, i32
  }
  func.func @transform_7(%arg0: i32) -> (i32, i32) {
    %c0_i32 = arith.constant 0 : i32
    %c0_i32_0 = arith.constant 0 : i32
    %c0_i32_1 = arith.constant 0 : i32
    return %c0_i32, %c0_i32_0 : i32, i32
  }
  func.func @transform_8(%arg0: i32) -> (i32, i32) {
    %c0_i32 = arith.constant 0 : i32
    %c0_i32_0 = arith.constant 0 : i32
    %c0_i32_1 = arith.constant 0 : i32
    return %c0_i32, %c0_i32_0 : i32, i32
  }
  func.func @transform_9(%arg0: i32) -> (i32, i32) {
    %c0_i32 = arith.constant 0 : i32
    %c0_i32_0 = arith.constant 0 : i32
    %c0_i32_1 = arith.constant 0 : i32
    return %c0_i32, %c0_i32_0 : i32, i32
  }
  func.func @transform_10(%arg0: i32) -> (i32, i32) {
    %c0_i32 = arith.constant 0 : i32
    %c0_i32_0 = arith.constant 0 : i32
    %c0_i32_1 = arith.constant 0 : i32
    return %c0_i32, %c0_i32_0 : i32, i32
  }
  func.func @transform_11(%arg0: i32) -> (i32, i32) {
    %c0_i32 = arith.constant 0 : i32
    %c0_i32_0 = arith.constant 0 : i32
    %c0_i32_1 = arith.constant 0 : i32
    return %c0_i32, %c0_i32_0 : i32, i32
  }
  func.func @transform_12(%arg0: i32) -> (i32, i32) {
    %c0_i32 = arith.constant 0 : i32
    %c0_i32_0 = arith.constant 0 : i32
    %c0_i32_1 = arith.constant 0 : i32
    return %c0_i32, %c0_i32_0 : i32, i32
  }
  func.func @transform_13(%arg0: i32) -> (i32, i32) {
    %c0_i32 = arith.constant 0 : i32
    %c0_i32_0 = arith.constant 0 : i32
    %c0_i32_1 = arith.constant 0 : i32
    return %c0_i32, %c0_i32_0 : i32, i32
  }
}

</mosaic_0001>

<llo_original>
// kernel: seq2seq_forward.2
$region0: #{seq2seq_forward.2}
  #allocation0 [shape = 'u32[]', space=smem, size = 0x4, offset = 0x4, fixed_abs, tag = 'smem constant byte address 0x4 - core index']
  #allocation1 [shape = 'u32[144,128]{1,0:T(1,128)}', space=vmem, size = 0x12000, scoped, tag = 'internal scratch']
  #allocation2 [shape = 'f32[64,512]{1,0:T(8,128)}', space=vmem, size = 0x20000, scoped, tag = 'scratch operand']
  %s0 = inlined_call_operand.vmem [shape: bf16[64,64], index: 0, kind: input, shape index: {}]
  %s1 = inlined_call_operand.vmem [shape: f32[8,8,1], index: 1, kind: input, shape index: {}]
  %s2 = inlined_call_operand.hbm [shape: bf16[64,512], index: 2, kind: input, shape index: {}]
  %s3 = inlined_call_operand.hbm [shape: bf16[128,512], index: 3, kind: input, shape index: {}]
  %s4 = inlined_call_operand.hbm [shape: f32[1,512], index: 4, kind: input, shape index: {}]
  %s5 = inlined_call_operand.vmem [shape: f32[8,128], index: 5, kind: output, shape index: {}]
  %s6 = sld [smem:[#allocation0]]
  $region42: #{seq2seq_forward.2} parent=0
    _
  %s8 = ssub.s32 1, %s6
  %s9 = scalar_select 0, %s8, %s6
  $region1: #{seq2seq_forward.2} parent=0
    #allocation3 [shape = 'u8[65536]{0}', space=vmem, size = 0x10000, scoped, tag = 'input window, operand 2, single buffered']
    #allocation4 [shape = 's32[1]{0}', space=sflag, size = 0x4, scoped, tag = 'scoped memory for seq2seq_forward.2']
    #allocation5 [shape = 'u8[131072]{0}', space=vmem, size = 0x20000, scoped, tag = 'input window, operand 3, single buffered']
    #allocation6 [shape = 's32[1]{0}', space=sflag, size = 0x4, scoped, tag = 'scoped memory for seq2seq_forward.2']
    #allocation7 [shape = 'u8[2048]{0}', space=vmem, size = 0x800, scoped, tag = 'input window, operand 4, single buffered']
    %10 = vsyncpa [#allocation4], 0
    %11 = vsyncpa [#allocation6], 0
    // Predicated region
    $region2: #{seq2seq_forward.2} parent=1 // pred_check
      _
    $region3: #{seq2seq_forward.2} parent=1 // pred_check_branch
      %13 = sbr.rel (0) target = $region5
    $region4: #{seq2seq_forward.2} parent=1 // pred_region
      _
    $region5: #{seq2seq_forward.2} parent=1 // pred_fallthru
      _
    // Predicated region
    $region6: #{seq2seq_forward.2} parent=1 // pred_check
      _
    $region7: #{seq2seq_forward.2} parent=1 // pred_check_branch
      %15 = sbr.rel (0) target = $region9
    $region8: #{seq2seq_forward.2} parent=1 // pred_region
      _
    $region9: #{seq2seq_forward.2} parent=1 // pred_fallthru
      _
    // Predicated region
    $region10: #{seq2seq_forward.2} parent=1 // pred_check
      _
    $region11: #{seq2seq_forward.2} parent=1 // pred_check_branch
      %17 = sbr.rel (0) target = $region13
    $region12: #{seq2seq_forward.2} parent=1 // pred_region
      %s19 = ssub.s32 2048, 2048
      %20 = vsyncadd [#allocation4], %s19
      %s21 = sshll.u32 [#allocation3], 4
      %s22 = int_to_ptr.vmem [resolvable:$true] %s21
      %27 = dma.hbm_to_vmem [thread:$0]  %s2, 2048, %s22, [#allocation4], 256, 256, 16
    $region13: #{seq2seq_forward.2} parent=1 // pred_fallthru
      _
    // Predicated region
    $region14: #{seq2seq_forward.2} parent=1 // pred_check
      _
    $region15: #{seq2seq_forward.2} parent=1 // pred_check_branch
      %29 = sbr.rel (0) target = $region17
    $region16: #{seq2seq_forward.2} parent=1 // pred_region
      %s31 = ssub.s32 4096, 4096
      %32 = vsyncadd [#allocation6], %s31
      %s33 = sshll.u32 [#allocation5], 4
      %s34 = int_to_ptr.vmem [resolvable:$true] %s33
      %39 = dma.hbm_to_vmem [thread:$0]  %s3, 4096, %s34, [#allocation6], 256, 256, 16
    $region17: #{seq2seq_forward.2} parent=1 // pred_fallthru
      _
    // Predicated region
    $region18: #{seq2seq_forward.2} parent=1 // pred_check
      _
    $region19: #{seq2seq_forward.2} parent=1 // pred_check_branch
      %41 = sbr.rel (0) target = $region21
    $region20: #{seq2seq_forward.2} parent=1 // pred_region
      %s43 = ssub.s32 64, 64
      %44 = vsyncadd [#allocation6], %s43
      %s46 = sshll.u32 [#allocation7], 4
      %s47 = int_to_ptr.vmem [resolvable:$true] %s46
      %49 = dma.hbm_to_vmem [thread:$0]  %s4, 64, %s47, [#allocation6]
    $region21: #{seq2seq_forward.2} parent=1 // pred_fallthru
      _
    // Predicated region
    $region22: #{seq2seq_forward.2} parent=1 // pred_check
      _
    $region23: #{seq2seq_forward.2} parent=1 // pred_check_branch
      %51 = sbr.rel (0) target = $region25
    $region24: #{seq2seq_forward.2} parent=1 // pred_region
      %52 = dma.done [#allocation4], 2048
    $region25: #{seq2seq_forward.2} parent=1 // pred_fallthru
      _
    // Predicated region
    $region26: #{seq2seq_forward.2} parent=1 // pred_check
      _
    $region27: #{seq2seq_forward.2} parent=1 // pred_check_branch
      %54 = sbr.rel (0) target = $region29
    $region28: #{seq2seq_forward.2} parent=1 // pred_region
      %55 = dma.done [#allocation6], 4096
    $region29: #{seq2seq_forward.2} parent=1 // pred_fallthru
      _
    // Predicated region
    $region30: #{seq2seq_forward.2} parent=1 // pred_check
      _
    $region31: #{seq2seq_forward.2} parent=1 // pred_check_branch
      %57 = sbr.rel (0) target = $region33
    $region32: #{seq2seq_forward.2} parent=1 // pred_region
      %58 = dma.done [#allocation6], 64
    $region33: #{seq2seq_forward.2} parent=1 // pred_fallthru
      _
    %v60 = vld [vmem:[%s0] sm:$0xf]
    %v61 = vld [vmem:[%s0 + $0x4] sm:$0xf]
    %v62 = vld [vmem:[%s0 + $0x8] sm:$0xf]
    %v63 = vld [vmem:[%s0 + $0xc] sm:$0xf]
    %v64 = vld [vmem:[%s0 + $0x10] sm:$0xf]
    %v65 = vld [vmem:[%s0 + $0x14] sm:$0xf]
    %v66 = vld [vmem:[%s0 + $0x18] sm:$0xf]
    %v67 = vld [vmem:[%s0 + $0x1c] sm:$0xf]
    %v68 = vld [vmem:[#allocation3] sm:$0xff]
    %v69 = vld [vmem:[#allocation3 + $0x8] sm:$0xff]
    %v70 = vld [vmem:[#allocation3 + $0x10] sm:$0xff]
    %v71 = vld [vmem:[#allocation3 + $0x18] sm:$0xff]
    %v72 = vld [vmem:[#allocation3 + $0x20] sm:$0xff]
    %v73 = vld [vmem:[#allocation3 + $0x28] sm:$0xff]
    %v74 = vld [vmem:[#allocation3 + $0x30] sm:$0xff]
    %v75 = vld [vmem:[#allocation3 + $0x38] sm:$0xff]
    %v76 = vld [vmem:[#allocation3 + $0x40] sm:$0xff]
    %v77 = vld [vmem:[#allocation3 + $0x48] sm:$0xff]
    %v78 = vld [vmem:[#allocation3 + $0x50] sm:$0xff]
    %v79 = vld [vmem:[#allocation3 + $0x58] sm:$0xff]
    %v80 = vld [vmem:[#allocation3 + $0x60] sm:$0xff]
    %v81 = vld [vmem:[#allocation3 + $0x68] sm:$0xff]
    %v82 = vld [vmem:[#allocation3 + $0x70] sm:$0xff]
    %v83 = vld [vmem:[#allocation3 + $0x78] sm:$0xff]
    %v84 = vld [vmem:[#allocation7] sm:$0xf]
    %v86 = vlaneseq
    %v87 = vshrl.u32 %v86, 7
    %v88 = vsub.s32 0, %v87
    %v89 = vrot.slane %v84, %v88
    %v90 = vlaneseq
    %v91 = vshrl.u32 %v90, 7
    %v92 = vsub.s32 1, %v91
    %v93 = vrot.slane %v84, %v92
    %v94 = vlaneseq
    %v95 = vshrl.u32 %v94, 7
    %v96 = vsub.s32 2, %v95
    %v97 = vrot.slane %v84, %v96
    %v98 = vlaneseq
    %v99 = vshrl.u32 %v98, 7
    %v100 = vsub.s32 3, %v99
    %v101 = vrot.slane %v84, %v100
    %v114 = vunpack.c.l.b16 %v60
    %v115 = vunpack.c.l.b16 %v61
    %v116 = vunpack.c.l.b16 %v62
    %v117 = vunpack.c.l.b16 %v63
    %v118 = vunpack.c.l.b16 %v64
    %v119 = vunpack.c.l.b16 %v65
    %v120 = vunpack.c.l.b16 %v66
    %v121 = vunpack.c.l.b16 %v67
    %v122 = vpack.c.b16 %v115, %v114
    %v123 = vpack.c.b16 %v117, %v116
    %v124 = vpack.c.b16 %v119, %v118
    %v125 = vpack.c.b16 %v121, %v120
    %v142 = vunpack.c.l.b16 %v68
    %v143 = vunpack.c.h.b16 %v68
    %v144 = vunpack.c.l.b16 %v69
    %v145 = vunpack.c.h.b16 %v69
    %v146 = vunpack.c.l.b16 %v70
    %v147 = vunpack.c.h.b16 %v70
    %v148 = vunpack.c.l.b16 %v71
    %v149 = vunpack.c.h.b16 %v71
    %v150 = vunpack.c.l.b16 %v72
    %v151 = vunpack.c.h.b16 %v72
    %v152 = vunpack.c.l.b16 %v73
    %v153 = vunpack.c.h.b16 %v73
    %v154 = vunpack.c.l.b16 %v74
    %v155 = vunpack.c.h.b16 %v74
    %v156 = vunpack.c.l.b16 %v75
    %v157 = vunpack.c.h.b16 %v75
    %v158 = vunpack.c.l.b16 %v76
    %v159 = vunpack.c.h.b16 %v76
    %v160 = vunpack.c.l.b16 %v77
    %v161 = vunpack.c.h.b16 %v77
    %v162 = vunpack.c.l.b16 %v78
    %v163 = vunpack.c.h.b16 %v78
    %v164 = vunpack.c.l.b16 %v79
    %v165 = vunpack.c.h.b16 %v79
    %v166 = vunpack.c.l.b16 %v80
    %v167 = vunpack.c.h.b16 %v80
    %v168 = vunpack.c.l.b16 %v81
    %v169 = vunpack.c.h.b16 %v81
    %v170 = vunpack.c.l.b16 %v82
    %v171 = vunpack.c.h.b16 %v82
    %v172 = vunpack.c.l.b16 %v83
    %v173 = vunpack.c.h.b16 %v83
    %v174 = vpack.c.b16 %v146, %v142
    %v175 = vpack.c.b16 %v147, %v143
    %v176 = vpack.c.b16 %v148, %v144
    %v177 = vpack.c.b16 %v149, %v145
    %v178 = vpack.c.b16 %v154, %v150
    %v179 = vpack.c.b16 %v155, %v151
    %v180 = vpack.c.b16 %v156, %v152
    %v181 = vpack.c.b16 %v157, %v153
    %v182 = vpack.c.b16 %v162, %v158
    %v183 = vpack.c.b16 %v163, %v159
    %v184 = vpack.c.b16 %v164, %v160
    %v185 = vpack.c.b16 %v165, %v161
    %v186 = vpack.c.b16 %v170, %v166
    %v187 = vpack.c.b16 %v171, %v167
    %v188 = vpack.c.b16 %v172, %v168
    %v189 = vpack.c.b16 %v173, %v169
    %vm206 = vcmask 523264
    %v208 = vsel %vm206, %v122, 0
    %v211 = vsel %vm206, %v123, 0
    %v214 = vsel %vm206, %v124, 0
    %v217 = vsel %vm206, %v125, 0
    %219 = vmatprep.subr.bf16.mxu0 0
    %220 = vmatpush1.bf16.msra.mxu0 0
    %221 = vmatprep.subr.bf16.mxu0 0
    %222 = vmatpush1.bf16.msra.mxu0 0
    %223 = vmatprep.subr.bf16.mxu0 0
    %224 = vmatpush1.bf16.msra.mxu0 0
    %225 = vmatprep.subr.bf16.mxu0 0
    %226 = vmatpush1.bf16.msra.mxu0 0
    %227 = vmatprep.subr.bf16.mxu0 %v187
    %228 = vmatpush1.bf16.msra.mxu0 %v186
    %229 = vmatprep.subr.bf16.mxu0 %v183
    %230 = vmatpush1.bf16.msra.mxu0 %v182
    %231 = vmatprep.subr.bf16.mxu0 %v179
    %232 = vmatpush1.bf16.msra.mxu0 %v178
    %233 = vmatprep.subr.bf16.mxu0 %v175
    %234 = vmatpush1.bf16.msra.mxu0 %v174
    %235 = vmatprep.subr.bf16.mxu0 0
    %236 = vmatpush2.bf16.msra.mxu0 0
    %237 = vmatprep.subr.bf16.mxu0 0
    %238 = vmatpush2.bf16.msra.mxu0 0
    %239 = vmatprep.subr.bf16.mxu0 0
    %240 = vmatpush2.bf16.msra.mxu0 0
    %241 = vmatprep.subr.bf16.mxu0 0
    %242 = vmatpush2.bf16.msra.mxu0 0
    %243 = vmatprep.subr.bf16.mxu0 0
    %244 = vmatpush2.bf16.msra.mxu0 0
    %245 = vmatprep.subr.bf16.mxu0 0
    %246 = vmatpush2.bf16.msra.mxu0 0
    %247 = vmatprep.subr.bf16.mxu0 0
    %248 = vmatpush2.bf16.msra.mxu0 0
    %249 = vmatprep.subr.bf16.mxu0 0
    %250 = vmatpush2.bf16.msra.mxu0 0
    %251 = vmatprep.mubr.bf16.mxu0 0
    %252 = vmatmul.mubr.bf16.gmra.mxu0 %v208
    %v253 = vpop.f32.mrf.mxu0
    %v254 = vadd.f32 %v89, %v253
    %v255 = vpop.f32.mrf.mxu0
    %v256 = vadd.f32 %v93, %v255
    %v257 = vpop.f32.mrf.mxu0
    %v258 = vadd.f32 %v89, %v257
    %v259 = vpop.f32.mrf.mxu0
    %v260 = vadd.f32 %v93, %v259
    %261 = vmatprep.mubr.bf16.mxu0 0
    %262 = vmatmul.mubr.bf16.gmra.mxu0 %v211
    %v263 = vpop.f32.mrf.mxu0
    %v264 = vadd.f32 %v89, %v263
    %v265 = vpop.f32.mrf.mxu0
    %v266 = vadd.f32 %v93, %v265
    %v267 = vpop.f32.mrf.mxu0
    %v268 = vadd.f32 %v89, %v267
    %v269 = vpop.f32.mrf.mxu0
    %v270 = vadd.f32 %v93, %v269
    %271 = vmatprep.mubr.bf16.mxu0 0
    %272 = vmatmul.mubr.bf16.gmra.mxu0 %v214
    %v273 = vpop.f32.mrf.mxu0
    %v274 = vadd.f32 %v89, %v273
    %v275 = vpop.f32.mrf.mxu0
    %v276 = vadd.f32 %v93, %v275
    %v277 = vpop.f32.mrf.mxu0
    %v278 = vadd.f32 %v89, %v277
    %v279 = vpop.f32.mrf.mxu0
    %v280 = vadd.f32 %v93, %v279
    %281 = vmatprep.mubr.bf16.mxu0 0
    %282 = vmatmul.mubr.bf16.gmra.mxu0 %v217
    %v283 = vpop.f32.mrf.mxu0
    %v284 = vadd.f32 %v89, %v283
    %v285 = vpop.f32.mrf.mxu0
    %v286 = vadd.f32 %v93, %v285
    %v287 = vpop.f32.mrf.mxu0
    %v288 = vadd.f32 %v89, %v287
    %v289 = vpop.f32.mrf.mxu0
    %v290 = vadd.f32 %v93, %v289
    %291 = vdwg.mxu0
    %292 = vmatprep.subr.bf16.mxu0 0
    %293 = vmatpush1.bf16.msra.mxu0 0
    %294 = vmatprep.subr.bf16.mxu0 0
    %295 = vmatpush1.bf16.msra.mxu0 0
    %296 = vmatprep.subr.bf16.mxu0 0
    %297 = vmatpush1.bf16.msra.mxu0 0
    %298 = vmatprep.subr.bf16.mxu0 0
    %299 = vmatpush1.bf16.msra.mxu0 0
    %300 = vmatprep.subr.bf16.mxu0 %v189
    %301 = vmatpush1.bf16.msra.mxu0 %v188
    %302 = vmatprep.subr.bf16.mxu0 %v185
    %303 = vmatpush1.bf16.msra.mxu0 %v184
    %304 = vmatprep.subr.bf16.mxu0 %v181
    %305 = vmatpush1.bf16.msra.mxu0 %v180
    %306 = vmatprep.subr.bf16.mxu0 %v177
    %307 = vmatpush1.bf16.msra.mxu0 %v176
    %308 = vmatprep.subr.bf16.mxu0 0
    %309 = vmatpush2.bf16.msra.mxu0 0
    %310 = vmatprep.subr.bf16.mxu0 0
    %311 = vmatpush2.bf16.msra.mxu0 0
    %312 = vmatprep.subr.bf16.mxu0 0
    %313 = vmatpush2.bf16.msra.mxu0 0
    %314 = vmatprep.subr.bf16.mxu0 0
    %315 = vmatpush2.bf16.msra.mxu0 0
    %316 = vmatprep.subr.bf16.mxu0 0
    %317 = vmatpush2.bf16.msra.mxu0 0
    %318 = vmatprep.subr.bf16.mxu0 0
    %319 = vmatpush2.bf16.msra.mxu0 0
    %320 = vmatprep.subr.bf16.mxu0 0
    %321 = vmatpush2.bf16.msra.mxu0 0
    %322 = vmatprep.subr.bf16.mxu0 0
    %323 = vmatpush2.bf16.msra.mxu0 0
    %324 = vmatprep.mubr.bf16.mxu0 0
    %325 = vmatmul.mubr.bf16.gmra.mxu0 %v208
    %v326 = vpop.f32.mrf.mxu0
    %v327 = vadd.f32 %v97, %v326
    %v328 = vpop.f32.mrf.mxu0
    %v329 = vadd.f32 %v101, %v328
    %v330 = vpop.f32.mrf.mxu0
    %v331 = vadd.f32 %v97, %v330
    %v332 = vpop.f32.mrf.mxu0
    %v333 = vadd.f32 %v101, %v332
    %334 = vmatprep.mubr.bf16.mxu0 0
    %335 = vmatmul.mubr.bf16.gmra.mxu0 %v211
    %v336 = vpop.f32.mrf.mxu0
    %v337 = vadd.f32 %v97, %v336
    %v338 = vpop.f32.mrf.mxu0
    %v339 = vadd.f32 %v101, %v338
    %v340 = vpop.f32.mrf.mxu0
    %v341 = vadd.f32 %v97, %v340
    %v342 = vpop.f32.mrf.mxu0
    %v343 = vadd.f32 %v101, %v342
    %344 = vmatprep.mubr.bf16.mxu0 0
    %345 = vmatmul.mubr.bf16.gmra.mxu0 %v214
    %v346 = vpop.f32.mrf.mxu0
    %v347 = vadd.f32 %v97, %v346
    %v348 = vpop.f32.mrf.mxu0
    %v349 = vadd.f32 %v101, %v348
    %v350 = vpop.f32.mrf.mxu0
    %v351 = vadd.f32 %v97, %v350
    %v352 = vpop.f32.mrf.mxu0
    %v353 = vadd.f32 %v101, %v352
    %354 = vmatprep.mubr.bf16.mxu0 0
    %355 = vmatmul.mubr.bf16.gmra.mxu0 %v217
    %v356 = vpop.f32.mrf.mxu0
    %v357 = vadd.f32 %v97, %v356
    %v358 = vpop.f32.mrf.mxu0
    %v359 = vadd.f32 %v101, %v358
    %v360 = vpop.f32.mrf.mxu0
    %v361 = vadd.f32 %v97, %v360
    %v362 = vpop.f32.mrf.mxu0
    %v363 = vadd.f32 %v101, %v362
    %364 = vdwg.mxu0
    %365 = vst [vmem:[#allocation2] sm:$0xff] %v254
    %366 = vst [vmem:[#allocation2 + $0x8] sm:$0xff] %v256
    %367 = vst [vmem:[#allocation2 + $0x10] sm:$0xff] %v327
    %368 = vst [vmem:[#allocation2 + $0x18] sm:$0xff] %v329
    %369 = vst [vmem:[#allocation2 + $0x20] sm:$0xff] %v258
    %370 = vst [vmem:[#allocation2 + $0x28] sm:$0xff] %v260
    %371 = vst [vmem:[#allocation2 + $0x30] sm:$0xff] %v331
    %372 = vst [vmem:[#allocation2 + $0x38] sm:$0xff] %v333
    %373 = vst [vmem:[#allocation2 + $0x40] sm:$0xff] %v264
    %374 = vst [vmem:[#allocation2 + $0x48] sm:$0xff] %v266
    %375 = vst [vmem:[#allocation2 + $0x50] sm:$0xff] %v337
    %376 = vst [vmem:[#allocation2 + $0x58] sm:$0xff] %v339
    %377 = vst [vmem:[#allocation2 + $0x60] sm:$0xff] %v268
    %378 = vst [vmem:[#allocation2 + $0x68] sm:$0xff] %v270
    %379 = vst [vmem:[#allocation2 + $0x70] sm:$0xff] %v341
    %380 = vst [vmem:[#allocation2 + $0x78] sm:$0xff] %v343
    %381 = vst [vmem:[#allocation2 + $0x80] sm:$0xff] %v274
    %382 = vst [vmem:[#allocation2 + $0x88] sm:$0xff] %v276
    %383 = vst [vmem:[#allocation2 + $0x90] sm:$0xff] %v347
    %384 = vst [vmem:[#allocation2 + $0x98] sm:$0xff] %v349
    %385 = vst [vmem:[#allocation2 + $0xa0] sm:$0xff] %v278
    %386 = vst [vmem:[#allocation2 + $0xa8] sm:$0xff] %v280
    %387 = vst [vmem:[#allocation2 + $0xb0] sm:$0xff] %v351
    %388 = vst [vmem:[#allocation2 + $0xb8] sm:$0xff] %v353
    %389 = vst [vmem:[#allocation2 + $0xc0] sm:$0xff] %v284
    %390 = vst [vmem:[#allocation2 + $0xc8] sm:$0xff] %v286
    %391 = vst [vmem:[#allocation2 + $0xd0] sm:$0xff] %v357
    %392 = vst [vmem:[#allocation2 + $0xd8] sm:$0xff] %v359
    %393 = vst [vmem:[#allocation2 + $0xe0] sm:$0xff] %v288
    %394 = vst [vmem:[#allocation2 + $0xe8] sm:$0xff] %v290
    %395 = vst [vmem:[#allocation2 + $0xf0] sm:$0xff] %v361
    %396 = vst [vmem:[#allocation2 + $0xf8] sm:$0xff] %v363
    %s397 = smul.u32 0, 4
    %s398 = smul.addr %s397, 8
    %s399 = scalar_lea.vmem [#allocation2], %s398
    %v400 = vld [vmem:[%s399] sm:$0xff]
    %v401 = vld [vmem:[%s399 + $0x8] sm:$0xff]
    %v402 = vld [vmem:[%s399 + $0x10] sm:$0xff]
    %v403 = vld [vmem:[%s399 + $0x18] sm:$0xff]
    %v404 = vld [vmem:[#allocation5] sm:$0xff]
    %v405 = vld [vmem:[#allocation5 + $0x8] sm:$0xff]
    %v406 = vld [vmem:[#allocation5 + $0x10] sm:$0xff]
    %v407 = vld [vmem:[#allocation5 + $0x18] sm:$0xff]
    %v408 = vld [vmem:[#allocation5 + $0x20] sm:$0xff]
    %v409 = vld [vmem:[#allocation5 + $0x28] sm:$0xff]
    %v410 = vld [vmem:[#allocation5 + $0x30] sm:$0xff]
    %v411 = vld [vmem:[#allocation5 + $0x38] sm:$0xff]
    %v412 = vld [vmem:[#allocation5 + $0x40] sm:$0xff]
    %v413 = vld [vmem:[#allocation5 + $0x48] sm:$0xff]
    %v414 = vld [vmem:[#allocation5 + $0x50] sm:$0xff]
    %v415 = vld [vmem:[#allocation5 + $0x58] sm:$0xff]
    %v416 = vld [vmem:[#allocation5 + $0x60] sm:$0xff]
    %v417 = vld [vmem:[#allocation5 + $0x68] sm:$0xff]
    %v418 = vld [vmem:[#allocation5 + $0x70] sm:$0xff]
    %v419 = vld [vmem:[#allocation5 + $0x78] sm:$0xff]
    %v420 = vld [vmem:[#allocation5 + $0x80] sm:$0xff]
    %v421 = vld [vmem:[#allocation5 + $0x88] sm:$0xff]
    %v422 = vld [vmem:[#allocation5 + $0x90] sm:$0xff]
    %v423 = vld [vmem:[#allocation5 + $0x98] sm:$0xff]
    %v424 = vld [vmem:[#allocation5 + $0xa0] sm:$0xff]
    %v425 = vld [vmem:[#allocation5 + $0xa8] sm:$0xff]
    %v426 = vld [vmem:[#allocation5 + $0xb0] sm:$0xff]
    %v427 = vld [vmem:[#allocation5 + $0xb8] sm:$0xff]
    %v428 = vld [vmem:[#allocation5 + $0xc0] sm:$0xff]
    %v429 = vld [vmem:[#allocation5 + $0xc8] sm:$0xff]
    %v430 = vld [vmem:[#allocation5 + $0xd0] sm:$0xff]
    %v431 = vld [vmem:[#allocation5 + $0xd8] sm:$0xff]
    %v432 = vld [vmem:[#allocation5 + $0xe0] sm:$0xff]
    %v433 = vld [vmem:[#allocation5 + $0xe8] sm:$0xff]
    %v434 = vld [vmem:[#allocation5 + $0xf0] sm:$0xff]
    %v435 = vld [vmem:[#allocation5 + $0xf8] sm:$0xff]
    %v468 = vunpack.c.l.b16 %v404
    %v469 = vunpack.c.h.b16 %v404
    %v470 = vunpack.c.l.b16 %v405
    %v471 = vunpack.c.h.b16 %v405
    %v472 = vunpack.c.l.b16 %v406
    %v473 = vunpack.c.h.b16 %v406
    %v474 = vunpack.c.l.b16 %v407
    %v475 = vunpack.c.h.b16 %v407
    %v476 = vunpack.c.l.b16 %v408
    %v477 = vunpack.c.h.b16 %v408
    %v478 = vunpack.c.l.b16 %v409
    %v479 = vunpack.c.h.b16 %v409
    %v480 = vunpack.c.l.b16 %v410
    %v481 = vunpack.c.h.b16 %v410
    %v482 = vunpack.c.l.b16 %v411
    %v483 = vunpack.c.h.b16 %v411
    %v484 = vunpack.c.l.b16 %v412
    %v485 = vunpack.c.h.b16 %v412
    %v486 = vunpack.c.l.b16 %v413
    %v487 = vunpack.c.h.b16 %v413
    %v488 = vunpack.c.l.b16 %v414
    %v489 = vunpack.c.h.b16 %v414
    %v490 = vunpack.c.l.b16 %v415
    %v491 = vunpack.c.h.b16 %v415
    %v492 = vunpack.c.l.b16 %v416
    %v493 = vunpack.c.h.b16 %v416
    %v494 = vunpack.c.l.b16 %v417
    %v495 = vunpack.c.h.b16 %v417
    %v496 = vunpack.c.l.b16 %v418
    %v497 = vunpack.c.h.b16 %v418
    %v498 = vunpack.c.l.b16 %v419
    %v499 = vunpack.c.h.b16 %v419
    %v500 = vunpack.c.l.b16 %v420
    %v501 = vunpack.c.h.b16 %v420
    %v502 = vunpack.c.l.b16 %v421
    %v503 = vunpack.c.h.b16 %v421
    %v504 = vunpack.c.l.b16 %v422
    %v505 = vunpack.c.h.b16 %v422
    %v506 = vunpack.c.l.b16 %v423
    %v507 = vunpack.c.h.b16 %v423
    %v508 = vunpack.c.l.b16 %v424
    %v509 = vunpack.c.h.b16 %v424
    %v510 = vunpack.c.l.b16 %v425
    %v511 = vunpack.c.h.b16 %v425
    %v512 = vunpack.c.l.b16 %v426
    %v513 = vunpack.c.h.b16 %v426
    %v514 = vunpack.c.l.b16 %v427
    %v515 = vunpack.c.h.b16 %v427
    %v516 = vunpack.c.l.b16 %v428
    %v517 = vunpack.c.h.b16 %v428
    %v518 = vunpack.c.l.b16 %v429
    %v519 = vunpack.c.h.b16 %v429
    %v520 = vunpack.c.l.b16 %v430
    %v521 = vunpack.c.h.b16 %v430
    %v522 = vunpack.c.l.b16 %v431
    %v523 = vunpack.c.h.b16 %v431
    %v524 = vunpack.c.l.b16 %v432
    %v525 = vunpack.c.h.b16 %v432
    %v526 = vunpack.c.l.b16 %v433
    %v527 = vunpack.c.h.b16 %v433
    %v528 = vunpack.c.l.b16 %v434
    %v529 = vunpack.c.h.b16 %v434
    %v530 = vunpack.c.l.b16 %v435
    %v531 = vunpack.c.h.b16 %v435
    %v532 = vpack.c.b16 %v472, %v468
    %v533 = vpack.c.b16 %v473, %v469
    %v534 = vpack.c.b16 %v474, %v470
    %v535 = vpack.c.b16 %v475, %v471
    %v536 = vpack.c.b16 %v480, %v476
    %v537 = vpack.c.b16 %v481, %v477
    %v538 = vpack.c.b16 %v482, %v478
    %v539 = vpack.c.b16 %v483, %v479
    %v540 = vpack.c.b16 %v488, %v484
    %v541 = vpack.c.b16 %v489, %v485
    %v542 = vpack.c.b16 %v490, %v486
    %v543 = vpack.c.b16 %v491, %v487
    %v544 = vpack.c.b16 %v496, %v492
    %v545 = vpack.c.b16 %v497, %v493
    %v546 = vpack.c.b16 %v498, %v494
    %v547 = vpack.c.b16 %v499, %v495
    %v548 = vpack.c.b16 %v504, %v500
    %v549 = vpack.c.b16 %v505, %v501
    %v550 = vpack.c.b16 %v506, %v502
    %v551 = vpack.c.b16 %v507, %v503
    %v552 = vpack.c.b16 %v512, %v508
    %v553 = vpack.c.b16 %v513, %v509
    %v554 = vpack.c.b16 %v514, %v510
    %v555 = vpack.c.b16 %v515, %v511
    %v556 = vpack.c.b16 %v520, %v516
    %v557 = vpack.c.b16 %v521, %v517
    %v558 = vpack.c.b16 %v522, %v518
    %v559 = vpack.c.b16 %v523, %v519
    %v560 = vpack.c.b16 %v528, %v524
    %v561 = vpack.c.b16 %v529, %v525
    %v562 = vpack.c.b16 %v530, %v526
    %v563 = vpack.c.b16 %v531, %v527
    %596 = vmatprep.subr.bf16.mxu0 %v561
    %597 = vmatpush1.bf16.msra.mxu0 %v560
    %598 = vmatprep.subr.bf16.mxu0 %v557
    %599 = vmatpush1.bf16.msra.mxu0 %v556
    %600 = vmatprep.subr.bf16.mxu0 %v553
    %601 = vmatpush1.bf16.msra.mxu0 %v552
    %602 = vmatprep.subr.bf16.mxu0 %v549
    %603 = vmatpush1.bf16.msra.mxu0 %v548
    %604 = vmatprep.subr.bf16.mxu0 %v545
    %605 = vmatpush1.bf16.msra.mxu0 %v544
    %606 = vmatprep.subr.bf16.mxu0 %v541
    %607 = vmatpush1.bf16.msra.mxu0 %v540
    %608 = vmatprep.subr.bf16.mxu0 %v537
    %609 = vmatpush1.bf16.msra.mxu0 %v536
    %610 = vmatprep.subr.bf16.mxu0 %v533
    %611 = vmatpush1.bf16.msra.mxu0 %v532
    %612 = vmatprep.subr.bf16.mxu0 0
    %613 = vmatpush2.bf16.msra.mxu0 0
    %614 = vmatprep.subr.bf16.mxu0 0
    %615 = vmatpush2.bf16.msra.mxu0 0
    %616 = vmatprep.subr.bf16.mxu0 0
    %617 = vmatpush2.bf16.msra.mxu0 0
    %618 = vmatprep.subr.bf16.mxu0 0
    %619 = vmatpush2.bf16.msra.mxu0 0
    %620 = vmatprep.subr.bf16.mxu0 0
    %621 = vmatpush2.bf16.msra.mxu0 0
    %622 = vmatprep.subr.bf16.mxu0 0
    %623 = vmatpush2.bf16.msra.mxu0 0
    %624 = vmatprep.subr.bf16.mxu0 0
    %625 = vmatpush2.bf16.msra.mxu0 0
    %626 = vmatprep.subr.bf16.mxu0 0
    %627 = vmatpush2.bf16.msra.mxu0 0
    %628 = vmatprep.mubr.bf16.mxu0 0
    %629 = vmatmul.mubr.bf16.gmra.mxu0 0
    %v630 = vpop.f32.mrf.mxu0
    %v631 = vadd.f32 0.0, %v630
    %v632 = vpop.f32.mrf.mxu0
    %v633 = vadd.f32 0.0, %v632
    %v634 = vpop.f32.mrf.mxu0
    %v635 = vpop.f32.mrf.mxu0
    %636 = vdwg.mxu0
    %637 = vmatprep.subr.bf16.mxu0 %v563
    %638 = vmatpush1.bf16.msra.mxu0 %v562
    %639 = vmatprep.subr.bf16.mxu0 %v559
    %640 = vmatpush1.bf16.msra.mxu0 %v558
    %641 = vmatprep.subr.bf16.mxu0 %v555
    %642 = vmatpush1.bf16.msra.mxu0 %v554
    %643 = vmatprep.subr.bf16.mxu0 %v551
    %644 = vmatpush1.bf16.msra.mxu0 %v550
    %645 = vmatprep.subr.bf16.mxu0 %v547
    %646 = vmatpush1.bf16.msra.mxu0 %v546
    %647 = vmatprep.subr.bf16.mxu0 %v543
    %648 = vmatpush1.bf16.msra.mxu0 %v542
    %649 = vmatprep.subr.bf16.mxu0 %v539
    %650 = vmatpush1.bf16.msra.mxu0 %v538
    %651 = vmatprep.subr.bf16.mxu0 %v535
    %652 = vmatpush1.bf16.msra.mxu0 %v534
    %653 = vmatprep.subr.bf16.mxu0 0
    %654 = vmatpush2.bf16.msra.mxu0 0
    %655 = vmatprep.subr.bf16.mxu0 0
    %656 = vmatpush2.bf16.msra.mxu0 0
    %657 = vmatprep.subr.bf16.mxu0 0
    %658 = vmatpush2.bf16.msra.mxu0 0
    %659 = vmatprep.subr.bf16.mxu0 0
    %660 = vmatpush2.bf16.msra.mxu0 0
    %661 = vmatprep.subr.bf16.mxu0 0
    %662 = vmatpush2.bf16.msra.mxu0 0
    %663 = vmatprep.subr.bf16.mxu0 0
    %664 = vmatpush2.bf16.msra.mxu0 0
    %665 = vmatprep.subr.bf16.mxu0 0
    %666 = vmatpush2.bf16.msra.mxu0 0
    %667 = vmatprep.subr.bf16.mxu0 0
    %668 = vmatpush2.bf16.msra.mxu0 0
    %669 = vmatprep.mubr.bf16.mxu0 0
    %670 = vmatmul.mubr.bf16.gmra.mxu0 0
    %v671 = vpop.f32.mrf.mxu0
    %v672 = vadd.f32 0.0, %v671
    %v673 = vpop.f32.mrf.mxu0
    %v674 = vadd.f32 0.0, %v673
    %v675 = vpop.f32.mrf.mxu0
    %v676 = vpop.f32.mrf.mxu0
    %677 = vdwg.mxu0
    %v678 = vadd.f32 %v400, %v631
    %v679 = vadd.f32 %v401, %v633
    %v680 = vadd.f32 %v402, %v672
    %v681 = vadd.f32 %v403, %v674
    %v682 = vxor.u32 %v678, 2147483648
    %v683 = vmul.f32 %v682, 1.442695
    %v684 = vpow.pop %v683
    %v685 = vadd.f32 %v684, 1.0
    %v686 = vrcp.pop %v685
    %v687 = vmul.f32 1.0, %v686
    %v688 = vxor.u32 %v679, 2147483648
    %v689 = vmul.f32 %v688, 1.442695
    %v690 = vpow.pop %v689
    %v691 = vadd.f32 %v690, 1.0
    %v692 = vrcp.pop %v691
    %v693 = vmul.f32 1.0, %v692
    %v694 = vtanh.pop %v680
    %v695 = vxor.u32 %v681, 2147483648
    %v696 = vmul.f32 %v695, 1.442695
    %v697 = vpow.pop %v696
    %v698 = vadd.f32 %v697, 1.0
    %v699 = vrcp.pop %v698
    %v700 = vmul.f32 1.0, %v699
    %v701 = vmul.f32 %v693, 0.0
    %v702 = vmul.f32 %v687, %v694
    %v703 = vadd.f32 %v701, %v702
    %v704 = vtanh.pop %v703
    %v705 = vmul.f32 %v700, %v704
    %v706 = vld [vmem:[%s1] sm:$0xff]
    %708 = vset.pattern.permute.xlu0 0
    %709 = vperm.xlu0 %708, %v706
    %v710 = vpop.permute.xlu0 %709
    %v712 = vmul.f32 %v710, %v705
    %v713 = vsub.f32 1.0, %v706
    %715 = vset.pattern.permute.xlu0 0
    %716 = vperm.xlu0 %715, %v713
    %v717 = vpop.permute.xlu0 %716
    %v719 = vmul.f32 %v717, 0.0
    %v720 = vadd.f32 %v712, %v719
    %v721 = vmul.f32 %v710, %v703
    %v722 = vadd.f32 %v721, %v719
    %s723 = smul.u32 1, 4
    %s724 = smul.addr %s723, 8
    %s725 = scalar_lea.vmem [#allocation2], %s724
    %v726 = vld [vmem:[%s725] sm:$0xff]
    %v727 = vld [vmem:[%s725 + $0x8] sm:$0xff]
    %v728 = vld [vmem:[%s725 + $0x10] sm:$0xff]
    %v729 = vld [vmem:[%s725 + $0x18] sm:$0xff]
    %v730 = vpack.c.bf16 %v720, %v720
    %731 = vmatprep.subr.bf16.mxu0 %v561
    %732 = vmatpush1.bf16.msra.mxu0 %v560
    %733 = vmatprep.subr.bf16.mxu0 %v557
    %734 = vmatpush1.bf16.msra.mxu0 %v556
    %735 = vmatprep.subr.bf16.mxu0 %v553
    %736 = vmatpush1.bf16.msra.mxu0 %v552
    %737 = vmatprep.subr.bf16.mxu0 %v549
    %738 = vmatpush1.bf16.msra.mxu0 %v548
    %739 = vmatprep.subr.bf16.mxu0 %v545
    %740 = vmatpush1.bf16.msra.mxu0 %v544
    %741 = vmatprep.subr.bf16.mxu0 %v541
    %742 = vmatpush1.bf16.msra.mxu0 %v540
    %743 = vmatprep.subr.bf16.mxu0 %v537
    %744 = vmatpush1.bf16.msra.mxu0 %v536
    %745 = vmatprep.subr.bf16.mxu0 %v533
    %746 = vmatpush1.bf16.msra.mxu0 %v532
    %747 = vmatprep.subr.bf16.mxu0 0
    %748 = vmatpush2.bf16.msra.mxu0 0
    %749 = vmatprep.subr.bf16.mxu0 0
    %750 = vmatpush2.bf16.msra.mxu0 0
    %751 = vmatprep.subr.bf16.mxu0 0
    %752 = vmatpush2.bf16.msra.mxu0 0
    %753 = vmatprep.subr.bf16.mxu0 0
    %754 = vmatpush2.bf16.msra.mxu0 0
    %755 = vmatprep.subr.bf16.mxu0 0
    %756 = vmatpush2.bf16.msra.mxu0 0
    %757 = vmatprep.subr.bf16.mxu0 0
    %758 = vmatpush2.bf16.msra.mxu0 0
    %759 = vmatprep.subr.bf16.mxu0 0
    %760 = vmatpush2.bf16.msra.mxu0 0
    %761 = vmatprep.subr.bf16.mxu0 0
    %762 = vmatpush2.bf16.msra.mxu0 0
    %763 = vmatprep.mubr.bf16.mxu0 0
    %764 = vmatmul.mubr.bf16.gmra.mxu0 %v730
    %v765 = vpop.f32.mrf.mxu0
    %v766 = vadd.f32 0.0, %v765
    %v767 = vpop.f32.mrf.mxu0
    %v768 = vadd.f32 0.0, %v767
    %v769 = vpop.f32.mrf.mxu0
    %v770 = vpop.f32.mrf.mxu0
    %771 = vdwg.mxu0
    %772 = vmatprep.subr.bf16.mxu0 %v563
    %773 = vmatpush1.bf16.msra.mxu0 %v562
    %774 = vmatprep.subr.bf16.mxu0 %v559
    %775 = vmatpush1.bf16.msra.mxu0 %v558
    %776 = vmatprep.subr.bf16.mxu0 %v555
    %777 = vmatpush1.bf16.msra.mxu0 %v554
    %778 = vmatprep.subr.bf16.mxu0 %v551
    %779 = vmatpush1.bf16.msra.mxu0 %v550
    %780 = vmatprep.subr.bf16.mxu0 %v547
    %781 = vmatpush1.bf16.msra.mxu0 %v546
    %782 = vmatprep.subr.bf16.mxu0 %v543
    %783 = vmatpush1.bf16.msra.mxu0 %v542
    %784 = vmatprep.subr.bf16.mxu0 %v539
    %785 = vmatpush1.bf16.msra.mxu0 %v538
    %786 = vmatprep.subr.bf16.mxu0 %v535
    %787 = vmatpush1.bf16.msra.mxu0 %v534
    %788 = vmatprep.subr.bf16.mxu0 0
    %789 = vmatpush2.bf16.msra.mxu0 0
    %790 = vmatprep.subr.bf16.mxu0 0
    %791 = vmatpush2.bf16.msra.mxu0 0
    %792 = vmatprep.subr.bf16.mxu0 0
    %793 = vmatpush2.bf16.msra.mxu0 0
    %794 = vmatprep.subr.bf16.mxu0 0
    %795 = vmatpush2.bf16.msra.mxu0 0
    %796 = vmatprep.subr.bf16.mxu0 0
    %797 = vmatpush2.bf16.msra.mxu0 0
    %798 = vmatprep.subr.bf16.mxu0 0
    %799 = vmatpush2.bf16.msra.mxu0 0
    %800 = vmatprep.subr.bf16.mxu0 0
    %801 = vmatpush2.bf16.msra.mxu0 0
    %802 = vmatprep.subr.bf16.mxu0 0
    %803 = vmatpush2.bf16.msra.mxu0 0
    %804 = vmatprep.mubr.bf16.mxu0 0
    %805 = vmatmul.mubr.bf16.gmra.mxu0 %v730
    %v806 = vpop.f32.mrf.mxu0
    %v807 = vadd.f32 0.0, %v806
    %v808 = vpop.f32.mrf.mxu0
    %v809 = vadd.f32 0.0, %v808
    %v810 = vpop.f32.mrf.mxu0
    %v811 = vpop.f32.mrf.mxu0
    %812 = vdwg.mxu0
    %v813 = vadd.f32 %v726, %v766
    %v814 = vadd.f32 %v727, %v768
    %v815 = vadd.f32 %v728, %v807
    %v816 = vadd.f32 %v729, %v809
    %v817 = vxor.u32 %v813, 2147483648
    %v818 = vmul.f32 %v817, 1.442695
    %v819 = vpow.pop %v818
    %v820 = vadd.f32 %v819, 1.0
    %v821 = vrcp.pop %v820
    %v822 = vmul.f32 1.0, %v821
    %v823 = vxor.u32 %v814, 2147483648
    %v824 = vmul.f32 %v823, 1.442695
    %v825 = vpow.pop %v824
    %v826 = vadd.f32 %v825, 1.0
    %v827 = vrcp.pop %v826
    %v828 = vmul.f32 1.0, %v827
    %v829 = vtanh.pop %v815
    %v830 = vxor.u32 %v816, 2147483648
    %v831 = vmul.f32 %v830, 1.442695
    %v832 = vpow.pop %v831
    %v833 = vadd.f32 %v832, 1.0
    %v834 = vrcp.pop %v833
    %v835 = vmul.f32 1.0, %v834
    %v836 = vmul.f32 %v828, %v722
    %v837 = vmul.f32 %v822, %v829
    %v838 = vadd.f32 %v836, %v837
    %v839 = vtanh.pop %v838
    %v840 = vmul.f32 %v835, %v839
    %s841 = scalar_lea.vmem %s1, 8
    %v842 = vld [vmem:[%s841] sm:$0xff]
    %844 = vset.pattern.permute.xlu0 0
    %845 = vperm.xlu0 %844, %v842
    %v846 = vpop.permute.xlu0 %845
    %v848 = vmul.f32 %v846, %v840
    %v849 = vsub.f32 1.0, %v842
    %851 = vset.pattern.permute.xlu0 0
    %852 = vperm.xlu0 %851, %v849
    %v853 = vpop.permute.xlu0 %852
    %v855 = vmul.f32 %v853, %v720
    %v856 = vadd.f32 %v848, %v855
    %v857 = vmul.f32 %v846, %v838
    %v858 = vmul.f32 %v853, %v722
    %v859 = vadd.f32 %v857, %v858
    %s860 = smul.u32 2, 4
    %s861 = smul.addr %s860, 8
    %s862 = scalar_lea.vmem [#allocation2], %s861
    %v863 = vld [vmem:[%s862] sm:$0xff]
    %v864 = vld [vmem:[%s862 + $0x8] sm:$0xff]
    %v865 = vld [vmem:[%s862 + $0x10] sm:$0xff]
    %v866 = vld [vmem:[%s862 + $0x18] sm:$0xff]
    %v867 = vpack.c.bf16 %v856, %v856
    %868 = vmatprep.subr.bf16.mxu0 %v561
    %869 = vmatpush1.bf16.msra.mxu0 %v560
    %870 = vmatprep.subr.bf16.mxu0 %v557
    %871 = vmatpush1.bf16.msra.mxu0 %v556
    %872 = vmatprep.subr.bf16.mxu0 %v553
    %873 = vmatpush1.bf16.msra.mxu0 %v552
    %874 = vmatprep.subr.bf16.mxu0 %v549
    %875 = vmatpush1.bf16.msra.mxu0 %v548
    %876 = vmatprep.subr.bf16.mxu0 %v545
    %877 = vmatpush1.bf16.msra.mxu0 %v544
    %878 = vmatprep.subr.bf16.mxu0 %v541
    %879 = vmatpush1.bf16.msra.mxu0 %v540
    %880 = vmatprep.subr.bf16.mxu0 %v537
    %881 = vmatpush1.bf16.msra.mxu0 %v536
    %882 = vmatprep.subr.bf16.mxu0 %v533
    %883 = vmatpush1.bf16.msra.mxu0 %v532
    %884 = vmatprep.subr.bf16.mxu0 0
    %885 = vmatpush2.bf16.msra.mxu0 0
    %886 = vmatprep.subr.bf16.mxu0 0
    %887 = vmatpush2.bf16.msra.mxu0 0
    %888 = vmatprep.subr.bf16.mxu0 0
    %889 = vmatpush2.bf16.msra.mxu0 0
    %890 = vmatprep.subr.bf16.mxu0 0
    %891 = vmatpush2.bf16.msra.mxu0 0
    %892 = vmatprep.subr.bf16.mxu0 0
    %893 = vmatpush2.bf16.msra.mxu0 0
    %894 = vmatprep.subr.bf16.mxu0 0
    %895 = vmatpush2.bf16.msra.mxu0 0
    %896 = vmatprep.subr.bf16.mxu0 0
    %897 = vmatpush2.bf16.msra.mxu0 0
    %898 = vmatprep.subr.bf16.mxu0 0
    %899 = vmatpush2.bf16.msra.mxu0 0
    %900 = vmatprep.mubr.bf16.mxu0 0
    %901 = vmatmul.mubr.bf16.gmra.mxu0 %v867
    %v902 = vpop.f32.mrf.mxu0
    %v903 = vadd.f32 0.0, %v902
    %v904 = vpop.f32.mrf.mxu0
    %v905 = vadd.f32 0.0, %v904
    %v906 = vpop.f32.mrf.mxu0
    %v907 = vpop.f32.mrf.mxu0
    %908 = vdwg.mxu0
    %909 = vmatprep.subr.bf16.mxu0 %v563
    %910 = vmatpush1.bf16.msra.mxu0 %v562
    %911 = vmatprep.subr.bf16.mxu0 %v559
    %912 = vmatpush1.bf16.msra.mxu0 %v558
    %913 = vmatprep.subr.bf16.mxu0 %v555
    %914 = vmatpush1.bf16.msra.mxu0 %v554
    %915 = vmatprep.subr.bf16.mxu0 %v551
    %916 = vmatpush1.bf16.msra.mxu0 %v550
    %917 = vmatprep.subr.bf16.mxu0 %v547
    %918 = vmatpush1.bf16.msra.mxu0 %v546
    %919 = vmatprep.subr.bf16.mxu0 %v543
    %920 = vmatpush1.bf16.msra.mxu0 %v542
    %921 = vmatprep.subr.bf16.mxu0 %v539
    %922 = vmatpush1.bf16.msra.mxu0 %v538
    %923 = vmatprep.subr.bf16.mxu0 %v535
    %924 = vmatpush1.bf16.msra.mxu0 %v534
    %925 = vmatprep.subr.bf16.mxu0 0
    %926 = vmatpush2.bf16.msra.mxu0 0
    %927 = vmatprep.subr.bf16.mxu0 0
    %928 = vmatpush2.bf16.msra.mxu0 0
    %929 = vmatprep.subr.bf16.mxu0 0
    %930 = vmatpush2.bf16.msra.mxu0 0
    %931 = vmatprep.subr.bf16.mxu0 0
    %932 = vmatpush2.bf16.msra.mxu0 0
    %933 = vmatprep.subr.bf16.mxu0 0
    %934 = vmatpush2.bf16.msra.mxu0 0
    %935 = vmatprep.subr.bf16.mxu0 0
    %936 = vmatpush2.bf16.msra.mxu0 0
    %937 = vmatprep.subr.bf16.mxu0 0
    %938 = vmatpush2.bf16.msra.mxu0 0
    %939 = vmatprep.subr.bf16.mxu0 0
    %940 = vmatpush2.bf16.msra.mxu0 0
    %941 = vmatprep.mubr.bf16.mxu0 0
    %942 = vmatmul.mubr.bf16.gmra.mxu0 %v867
    %v943 = vpop.f32.mrf.mxu0
    %v944 = vadd.f32 0.0, %v943
    %v945 = vpop.f32.mrf.mxu0
    %v946 = vadd.f32 0.0, %v945
    %v947 = vpop.f32.mrf.mxu0
    %v948 = vpop.f32.mrf.mxu0
    %949 = vdwg.mxu0
    %v950 = vadd.f32 %v863, %v903
    %v951 = vadd.f32 %v864, %v905
    %v952 = vadd.f32 %v865, %v944
    %v953 = vadd.f32 %v866, %v946
    %v954 = vxor.u32 %v950, 2147483648
    %v955 = vmul.f32 %v954, 1.442695
    %v956 = vpow.pop %v955
    %v957 = vadd.f32 %v956, 1.0
    %v958 = vrcp.pop %v957
    %v959 = vmul.f32 1.0, %v958
    %v960 = vxor.u32 %v951, 2147483648
    %v961 = vmul.f32 %v960, 1.442695
    %v962 = vpow.pop %v961
    %v963 = vadd.f32 %v962, 1.0
    %v964 = vrcp.pop %v963
    %v965 = vmul.f32 1.0, %v964
    %v966 = vtanh.pop %v952
    %v967 = vxor.u32 %v953, 2147483648
    %v968 = vmul.f32 %v967, 1.442695
    %v969 = vpow.pop %v968
    %v970 = vadd.f32 %v969, 1.0
    %v971 = vrcp.pop %v970
    %v972 = vmul.f32 1.0, %v971
    %v973 = vmul.f32 %v965, %v859
    %v974 = vmul.f32 %v959, %v966
    %v975 = vadd.f32 %v973, %v974
    %v976 = vtanh.pop %v975
    %v977 = vmul.f32 %v972, %v976
    %s978 = scalar_lea.vmem %s1, 16
    %v979 = vld [vmem:[%s978] sm:$0xff]
    %981 = vset.pattern.permute.xlu0 0
    %982 = vperm.xlu0 %981, %v979
    %v983 = vpop.permute.xlu0 %982
    %v985 = vmul.f32 %v983, %v977
    %v986 = vsub.f32 1.0, %v979
    %988 = vset.pattern.permute.xlu0 0
    %989 = vperm.xlu0 %988, %v986
    %v990 = vpop.permute.xlu0 %989
    %v992 = vmul.f32 %v990, %v856
    %v993 = vadd.f32 %v985, %v992
    %v994 = vmul.f32 %v983, %v975
    %v995 = vmul.f32 %v990, %v859
    %v996 = vadd.f32 %v994, %v995
    %s997 = smul.u32 3, 4
    %s998 = smul.addr %s997, 8
    %s999 = scalar_lea.vmem [#allocation2], %s998
    %v1000 = vld [vmem:[%s999] sm:$0xff]
    %v1001 = vld [vmem:[%s999 + $0x8] sm:$0xff]
    %v1002 = vld [vmem:[%s999 + $0x10] sm:$0xff]
    %v1003 = vld [vmem:[%s999 + $0x18] sm:$0xff]
    %v1004 = vpack.c.bf16 %v993, %v993
    %1005 = vmatprep.subr.bf16.mxu0 %v561
    %1006 = vmatpush1.bf16.msra.mxu0 %v560
    %1007 = vmatprep.subr.bf16.mxu0 %v557
    %1008 = vmatpush1.bf16.msra.mxu0 %v556
    %1009 = vmatprep.subr.bf16.mxu0 %v553
    %1010 = vmatpush1.bf16.msra.mxu0 %v552
    %1011 = vmatprep.subr.bf16.mxu0 %v549
    %1012 = vmatpush1.bf16.msra.mxu0 %v548
    %1013 = vmatprep.subr.bf16.mxu0 %v545
    %1014 = vmatpush1.bf16.msra.mxu0 %v544
    %1015 = vmatprep.subr.bf16.mxu0 %v541
    %1016 = vmatpush1.bf16.msra.mxu0 %v540
    %1017 = vmatprep.subr.bf16.mxu0 %v537
    %1018 = vmatpush1.bf16.msra.mxu0 %v536
    %1019 = vmatprep.subr.bf16.mxu0 %v533
    %1020 = vmatpush1.bf16.msra.mxu0 %v532
    %1021 = vmatprep.subr.bf16.mxu0 0
    %1022 = vmatpush2.bf16.msra.mxu0 0
    %1023 = vmatprep.subr.bf16.mxu0 0
    %1024 = vmatpush2.bf16.msra.mxu0 0
    %1025 = vmatprep.subr.bf16.mxu0 0
    %1026 = vmatpush2.bf16.msra.mxu0 0
    %1027 = vmatprep.subr.bf16.mxu0 0
    %1028 = vmatpush2.bf16.msra.mxu0 0
    %1029 = vmatprep.subr.bf16.mxu0 0
    %1030 = vmatpush2.bf16.msra.mxu0 0
    %1031 = vmatprep.subr.bf16.mxu0 0
    %1032 = vmatpush2.bf16.msra.mxu0 0
    %1033 = vmatprep.subr.bf16.mxu0 0
    %1034 = vmatpush2.bf16.msra.mxu0 0
    %1035 = vmatprep.subr.bf16.mxu0 0
    %1036 = vmatpush2.bf16.msra.mxu0 0
    %1037 = vmatprep.mubr.bf16.mxu0 0
    %1038 = vmatmul.mubr.bf16.gmra.mxu0 %v1004
    %v1039 = vpop.f32.mrf.mxu0
    %v1040 = vadd.f32 0.0, %v1039
    %v1041 = vpop.f32.mrf.mxu0
    %v1042 = vadd.f32 0.0, %v1041
    %v1043 = vpop.f32.mrf.mxu0
    %v1044 = vpop.f32.mrf.mxu0
    %1045 = vdwg.mxu0
    %1046 = vmatprep.subr.bf16.mxu0 %v563
    %1047 = vmatpush1.bf16.msra.mxu0 %v562
    %1048 = vmatprep.subr.bf16.mxu0 %v559
    %1049 = vmatpush1.bf16.msra.mxu0 %v558
    %1050 = vmatprep.subr.bf16.mxu0 %v555
    %1051 = vmatpush1.bf16.msra.mxu0 %v554
    %1052 = vmatprep.subr.bf16.mxu0 %v551
    %1053 = vmatpush1.bf16.msra.mxu0 %v550
    %1054 = vmatprep.subr.bf16.mxu0 %v547
    %1055 = vmatpush1.bf16.msra.mxu0 %v546
    %1056 = vmatprep.subr.bf16.mxu0 %v543
    %1057 = vmatpush1.bf16.msra.mxu0 %v542
    %1058 = vmatprep.subr.bf16.mxu0 %v539
    %1059 = vmatpush1.bf16.msra.mxu0 %v538
    %1060 = vmatprep.subr.bf16.mxu0 %v535
    %1061 = vmatpush1.bf16.msra.mxu0 %v534
    %1062 = vmatprep.subr.bf16.mxu0 0
    %1063 = vmatpush2.bf16.msra.mxu0 0
    %1064 = vmatprep.subr.bf16.mxu0 0
    %1065 = vmatpush2.bf16.msra.mxu0 0
    %1066 = vmatprep.subr.bf16.mxu0 0
    %1067 = vmatpush2.bf16.msra.mxu0 0
    %1068 = vmatprep.subr.bf16.mxu0 0
    %1069 = vmatpush2.bf16.msra.mxu0 0
    %1070 = vmatprep.subr.bf16.mxu0 0
    %1071 = vmatpush2.bf16.msra.mxu0 0
    %1072 = vmatprep.subr.bf16.mxu0 0
    %1073 = vmatpush2.bf16.msra.mxu0 0
    %1074 = vmatprep.subr.bf16.mxu0 0
    %1075 = vmatpush2.bf16.msra.mxu0 0
    %1076 = vmatprep.subr.bf16.mxu0 0
    %1077 = vmatpush2.bf16.msra.mxu0 0
    %1078 = vmatprep.mubr.bf16.mxu0 0
    %1079 = vmatmul.mubr.bf16.gmra.mxu0 %v1004
    %v1080 = vpop.f32.mrf.mxu0
    %v1081 = vadd.f32 0.0, %v1080
    %v1082 = vpop.f32.mrf.mxu0
    %v1083 = vadd.f32 0.0, %v1082
    %v1084 = vpop.f32.mrf.mxu0
    %v1085 = vpop.f32.mrf.mxu0
    %1086 = vdwg.mxu0
    %v1087 = vadd.f32 %v1000, %v1040
    %v1088 = vadd.f32 %v1001, %v1042
    %v1089 = vadd.f32 %v1002, %v1081
    %v1090 = vadd.f32 %v1003, %v1083
    %v1091 = vxor.u32 %v1087, 2147483648
    %v1092 = vmul.f32 %v1091, 1.442695
    %v1093 = vpow.pop %v1092
    %v1094 = vadd.f32 %v1093, 1.0
    %v1095 = vrcp.pop %v1094
    %v1096 = vmul.f32 1.0, %v1095
    %v1097 = vxor.u32 %v1088, 2147483648
    %v1098 = vmul.f32 %v1097, 1.442695
    %v1099 = vpow.pop %v1098
    %v1100 = vadd.f32 %v1099, 1.0
    %v1101 = vrcp.pop %v1100
    %v1102 = vmul.f32 1.0, %v1101
    %v1103 = vtanh.pop %v1089
    %v1104 = vxor.u32 %v1090, 2147483648
    %v1105 = vmul.f32 %v1104, 1.442695
    %v1106 = vpow.pop %v1105
    %v1107 = vadd.f32 %v1106, 1.0
    %v1108 = vrcp.pop %v1107
    %v1109 = vmul.f32 1.0, %v1108
    %v1110 = vmul.f32 %v1102, %v996
    %v1111 = vmul.f32 %v1096, %v1103
    %v1112 = vadd.f32 %v1110, %v1111
    %v1113 = vtanh.pop %v1112
    %v1114 = vmul.f32 %v1109, %v1113
    %s1115 = scalar_lea.vmem %s1, 24
    %v1116 = vld [vmem:[%s1115] sm:$0xff]
    %1118 = vset.pattern.permute.xlu0 0
    %1119 = vperm.xlu0 %1118, %v1116
    %v1120 = vpop.permute.xlu0 %1119
    %v1122 = vmul.f32 %v1120, %v1114
    %v1123 = vsub.f32 1.0, %v1116
    %1125 = vset.pattern.permute.xlu0 0
    %1126 = vperm.xlu0 %1125, %v1123
    %v1127 = vpop.permute.xlu0 %1126
    %v1129 = vmul.f32 %v1127, %v993
    %v1130 = vadd.f32 %v1122, %v1129
    %v1131 = vmul.f32 %v1120, %v1112
    %v1132 = vmul.f32 %v1127, %v996
    %v1133 = vadd.f32 %v1131, %v1132
    %s1134 = smul.u32 4, 4
    %s1135 = smul.addr %s1134, 8
    %s1136 = scalar_lea.vmem [#allocation2], %s1135
    %v1137 = vld [vmem:[%s1136] sm:$0xff]
    %v1138 = vld [vmem:[%s1136 + $0x8] sm:$0xff]
    %v1139 = vld [vmem:[%s1136 + $0x10] sm:$0xff]
    %v1140 = vld [vmem:[%s1136 + $0x18] sm:$0xff]
    %v1141 = vpack.c.bf16 %v1130, %v1130
    %1142 = vmatprep.subr.bf16.mxu0 %v561
    %1143 = vmatpush1.bf16.msra.mxu0 %v560
    %1144 = vmatprep.subr.bf16.mxu0 %v557
    %1145 = vmatpush1.bf16.msra.mxu0 %v556
    %1146 = vmatprep.subr.bf16.mxu0 %v553
    %1147 = vmatpush1.bf16.msra.mxu0 %v552
    %1148 = vmatprep.subr.bf16.mxu0 %v549
    %1149 = vmatpush1.bf16.msra.mxu0 %v548
    %1150 = vmatprep.subr.bf16.mxu0 %v545
    %1151 = vmatpush1.bf16.msra.mxu0 %v544
    %1152 = vmatprep.subr.bf16.mxu0 %v541
    %1153 = vmatpush1.bf16.msra.mxu0 %v540
    %1154 = vmatprep.subr.bf16.mxu0 %v537
    %1155 = vmatpush1.bf16.msra.mxu0 %v536
    %1156 = vmatprep.subr.bf16.mxu0 %v533
    %1157 = vmatpush1.bf16.msra.mxu0 %v532
    %1158 = vmatprep.subr.bf16.mxu0 0
    %1159 = vmatpush2.bf16.msra.mxu0 0
    %1160 = vmatprep.subr.bf16.mxu0 0
    %1161 = vmatpush2.bf16.msra.mxu0 0
    %1162 = vmatprep.subr.bf16.mxu0 0
    %1163 = vmatpush2.bf16.msra.mxu0 0
    %1164 = vmatprep.subr.bf16.mxu0 0
    %1165 = vmatpush2.bf16.msra.mxu0 0
    %1166 = vmatprep.subr.bf16.mxu0 0
    %1167 = vmatpush2.bf16.msra.mxu0 0
    %1168 = vmatprep.subr.bf16.mxu0 0
    %1169 = vmatpush2.bf16.msra.mxu0 0
    %1170 = vmatprep.subr.bf16.mxu0 0
    %1171 = vmatpush2.bf16.msra.mxu0 0
    %1172 = vmatprep.subr.bf16.mxu0 0
    %1173 = vmatpush2.bf16.msra.mxu0 0
    %1174 = vmatprep.mubr.bf16.mxu0 0
    %1175 = vmatmul.mubr.bf16.gmra.mxu0 %v1141
    %v1176 = vpop.f32.mrf.mxu0
    %v1177 = vadd.f32 0.0, %v1176
    %v1178 = vpop.f32.mrf.mxu0
    %v1179 = vadd.f32 0.0, %v1178
    %v1180 = vpop.f32.mrf.mxu0
    %v1181 = vpop.f32.mrf.mxu0
    %1182 = vdwg.mxu0
    %1183 = vmatprep.subr.bf16.mxu0 %v563
    %1184 = vmatpush1.bf16.msra.mxu0 %v562
    %1185 = vmatprep.subr.bf16.mxu0 %v559
    %1186 = vmatpush1.bf16.msra.mxu0 %v558
    %1187 = vmatprep.subr.bf16.mxu0 %v555
    %1188 = vmatpush1.bf16.msra.mxu0 %v554
    %1189 = vmatprep.subr.bf16.mxu0 %v551
    %1190 = vmatpush1.bf16.msra.mxu0 %v550
    %1191 = vmatprep.subr.bf16.mxu0 %v547
    %1192 = vmatpush1.bf16.msra.mxu0 %v546
    %1193 = vmatprep.subr.bf16.mxu0 %v543
    %1194 = vmatpush1.bf16.msra.mxu0 %v542
    %1195 = vmatprep.subr.bf16.mxu0 %v539
    %1196 = vmatpush1.bf16.msra.mxu0 %v538
    %1197 = vmatprep.subr.bf16.mxu0 %v535
    %1198 = vmatpush1.bf16.msra.mxu0 %v534
    %1199 = vmatprep.subr.bf16.mxu0 0
    %1200 = vmatpush2.bf16.msra.mxu0 0
    %1201 = vmatprep.subr.bf16.mxu0 0
    %1202 = vmatpush2.bf16.msra.mxu0 0
    %1203 = vmatprep.subr.bf16.mxu0 0
    %1204 = vmatpush2.bf16.msra.mxu0 0
    %1205 = vmatprep.subr.bf16.mxu0 0
    %1206 = vmatpush2.bf16.msra.mxu0 0
    %1207 = vmatprep.subr.bf16.mxu0 0
    %1208 = vmatpush2.bf16.msra.mxu0 0
    %1209 = vmatprep.subr.bf16.mxu0 0
    %1210 = vmatpush2.bf16.msra.mxu0 0
    %1211 = vmatprep.subr.bf16.mxu0 0
    %1212 = vmatpush2.bf16.msra.mxu0 0
    %1213 = vmatprep.subr.bf16.mxu0 0
    %1214 = vmatpush2.bf16.msra.mxu0 0
    %1215 = vmatprep.mubr.bf16.mxu0 0
    %1216 = vmatmul.mubr.bf16.gmra.mxu0 %v1141
    %v1217 = vpop.f32.mrf.mxu0
    %v1218 = vadd.f32 0.0, %v1217
    %v1219 = vpop.f32.mrf.mxu0
    %v1220 = vadd.f32 0.0, %v1219
    %v1221 = vpop.f32.mrf.mxu0
    %v1222 = vpop.f32.mrf.mxu0
    %1223 = vdwg.mxu0
    %v1224 = vadd.f32 %v1137, %v1177
    %v1225 = vadd.f32 %v1138, %v1179
    %v1226 = vadd.f32 %v1139, %v1218
    %v1227 = vadd.f32 %v1140, %v1220
    %v1228 = vxor.u32 %v1224, 2147483648
    %v1229 = vmul.f32 %v1228, 1.442695
    %v1230 = vpow.pop %v1229
    %v1231 = vadd.f32 %v1230, 1.0
    %v1232 = vrcp.pop %v1231
    %v1233 = vmul.f32 1.0, %v1232
    %v1234 = vxor.u32 %v1225, 2147483648
    %v1235 = vmul.f32 %v1234, 1.442695
    %v1236 = vpow.pop %v1235
    %v1237 = vadd.f32 %v1236, 1.0
    %v1238 = vrcp.pop %v1237
    %v1239 = vmul.f32 1.0, %v1238
    %v1240 = vtanh.pop %v1226
    %v1241 = vxor.u32 %v1227, 2147483648
    %v1242 = vmul.f32 %v1241, 1.442695
    %v1243 = vpow.pop %v1242
    %v1244 = vadd.f32 %v1243, 1.0
    %v1245 = vrcp.pop %v1244
    %v1246 = vmul.f32 1.0, %v1245
    %v1247 = vmul.f32 %v1239, %v1133
    %v1248 = vmul.f32 %v1233, %v1240
    %v1249 = vadd.f32 %v1247, %v1248
    %v1250 = vtanh.pop %v1249
    %v1251 = vmul.f32 %v1246, %v1250
    %s1252 = scalar_lea.vmem %s1, 32
    %v1253 = vld [vmem:[%s1252] sm:$0xff]
    %1255 = vset.pattern.permute.xlu0 0
    %1256 = vperm.xlu0 %1255, %v1253
    %v1257 = vpop.permute.xlu0 %1256
    %v1259 = vmul.f32 %v1257, %v1251
    %v1260 = vsub.f32 1.0, %v1253
    %1262 = vset.pattern.permute.xlu0 0
    %1263 = vperm.xlu0 %1262, %v1260
    %v1264 = vpop.permute.xlu0 %1263
    %v1266 = vmul.f32 %v1264, %v1130
    %v1267 = vadd.f32 %v1259, %v1266
    %v1268 = vmul.f32 %v1257, %v1249
    %v1269 = vmul.f32 %v1264, %v1133
    %v1270 = vadd.f32 %v1268, %v1269
    %s1271 = smul.u32 5, 4
    %s1272 = smul.addr %s1271, 8
    %s1273 = scalar_lea.vmem [#allocation2], %s1272
    %v1274 = vld [vmem:[%s1273] sm:$0xff]
    %v1275 = vld [vmem:[%s1273 + $0x8] sm:$0xff]
    %v1276 = vld [vmem:[%s1273 + $0x10] sm:$0xff]
    %v1277 = vld [vmem:[%s1273 + $0x18] sm:$0xff]
    %v1278 = vpack.c.bf16 %v1267, %v1267
    %1279 = vmatprep.subr.bf16.mxu0 %v561
    %1280 = vmatpush1.bf16.msra.mxu0 %v560
    %1281 = vmatprep.subr.bf16.mxu0 %v557
    %1282 = vmatpush1.bf16.msra.mxu0 %v556
    %1283 = vmatprep.subr.bf16.mxu0 %v553
    %1284 = vmatpush1.bf16.msra.mxu0 %v552
    %1285 = vmatprep.subr.bf16.mxu0 %v549
    %1286 = vmatpush1.bf16.msra.mxu0 %v548
    %1287 = vmatprep.subr.bf16.mxu0 %v545
    %1288 = vmatpush1.bf16.msra.mxu0 %v544
    %1289 = vmatprep.subr.bf16.mxu0 %v541
    %1290 = vmatpush1.bf16.msra.mxu0 %v540
    %1291 = vmatprep.subr.bf16.mxu0 %v537
    %1292 = vmatpush1.bf16.msra.mxu0 %v536
    %1293 = vmatprep.subr.bf16.mxu0 %v533
    %1294 = vmatpush1.bf16.msra.mxu0 %v532
    %1295 = vmatprep.subr.bf16.mxu0 0
    %1296 = vmatpush2.bf16.msra.mxu0 0
    %1297 = vmatprep.subr.bf16.mxu0 0
    %1298 = vmatpush2.bf16.msra.mxu0 0
    %1299 = vmatprep.subr.bf16.mxu0 0
    %1300 = vmatpush2.bf16.msra.mxu0 0
    %1301 = vmatprep.subr.bf16.mxu0 0
    %1302 = vmatpush2.bf16.msra.mxu0 0
    %1303 = vmatprep.subr.bf16.mxu0 0
    %1304 = vmatpush2.bf16.msra.mxu0 0
    %1305 = vmatprep.subr.bf16.mxu0 0
    %1306 = vmatpush2.bf16.msra.mxu0 0
    %1307 = vmatprep.subr.bf16.mxu0 0
    %1308 = vmatpush2.bf16.msra.mxu0 0
    %1309 = vmatprep.subr.bf16.mxu0 0
    %1310 = vmatpush2.bf16.msra.mxu0 0
    %1311 = vmatprep.mubr.bf16.mxu0 0
    %1312 = vmatmul.mubr.bf16.gmra.mxu0 %v1278
    %v1313 = vpop.f32.mrf.mxu0
    %v1314 = vadd.f32 0.0, %v1313
    %v1315 = vpop.f32.mrf.mxu0
    %v1316 = vadd.f32 0.0, %v1315
    %v1317 = vpop.f32.mrf.mxu0
    %v1318 = vpop.f32.mrf.mxu0
    %1319 = vdwg.mxu0
    %1320 = vmatprep.subr.bf16.mxu0 %v563
    %1321 = vmatpush1.bf16.msra.mxu0 %v562
    %1322 = vmatprep.subr.bf16.mxu0 %v559
    %1323 = vmatpush1.bf16.msra.mxu0 %v558
    %1324 = vmatprep.subr.bf16.mxu0 %v555
    %1325 = vmatpush1.bf16.msra.mxu0 %v554
    %1326 = vmatprep.subr.bf16.mxu0 %v551
    %1327 = vmatpush1.bf16.msra.mxu0 %v550
    %1328 = vmatprep.subr.bf16.mxu0 %v547
    %1329 = vmatpush1.bf16.msra.mxu0 %v546
    %1330 = vmatprep.subr.bf16.mxu0 %v543
    %1331 = vmatpush1.bf16.msra.mxu0 %v542
    %1332 = vmatprep.subr.bf16.mxu0 %v539
    %1333 = vmatpush1.bf16.msra.mxu0 %v538
    %1334 = vmatprep.subr.bf16.mxu0 %v535
    %1335 = vmatpush1.bf16.msra.mxu0 %v534
    %1336 = vmatprep.subr.bf16.mxu0 0
    %1337 = vmatpush2.bf16.msra.mxu0 0
    %1338 = vmatprep.subr.bf16.mxu0 0
    %1339 = vmatpush2.bf16.msra.mxu0 0
    %1340 = vmatprep.subr.bf16.mxu0 0
    %1341 = vmatpush2.bf16.msra.mxu0 0
    %1342 = vmatprep.subr.bf16.mxu0 0
    %1343 = vmatpush2.bf16.msra.mxu0 0
    %1344 = vmatprep.subr.bf16.mxu0 0
    %1345 = vmatpush2.bf16.msra.mxu0 0
    %1346 = vmatprep.subr.bf16.mxu0 0
    %1347 = vmatpush2.bf16.msra.mxu0 0
    %1348 = vmatprep.subr.bf16.mxu0 0
    %1349 = vmatpush2.bf16.msra.mxu0 0
    %1350 = vmatprep.subr.bf16.mxu0 0
    %1351 = vmatpush2.bf16.msra.mxu0 0
    %1352 = vmatprep.mubr.bf16.mxu0 0
    %1353 = vmatmul.mubr.bf16.gmra.mxu0 %v1278
    %v1354 = vpop.f32.mrf.mxu0
    %v1355 = vadd.f32 0.0, %v1354
    %v1356 = vpop.f32.mrf.mxu0
    %v1357 = vadd.f32 0.0, %v1356
    %v1358 = vpop.f32.mrf.mxu0
    %v1359 = vpop.f32.mrf.mxu0
    %1360 = vdwg.mxu0
    %v1361 = vadd.f32 %v1274, %v1314
    %v1362 = vadd.f32 %v1275, %v1316
    %v1363 = vadd.f32 %v1276, %v1355
    %v1364 = vadd.f32 %v1277, %v1357
    %v1365 = vxor.u32 %v1361, 2147483648
    %v1366 = vmul.f32 %v1365, 1.442695
    %v1367 = vpow.pop %v1366
    %v1368 = vadd.f32 %v1367, 1.0
    %v1369 = vrcp.pop %v1368
    %v1370 = vmul.f32 1.0, %v1369
    %v1371 = vxor.u32 %v1362, 2147483648
    %v1372 = vmul.f32 %v1371, 1.442695
    %v1373 = vpow.pop %v1372
    %v1374 = vadd.f32 %v1373, 1.0
    %v1375 = vrcp.pop %v1374
    %v1376 = vmul.f32 1.0, %v1375
    %v1377 = vtanh.pop %v1363
    %v1378 = vxor.u32 %v1364, 2147483648
    %v1379 = vmul.f32 %v1378, 1.442695
    %v1380 = vpow.pop %v1379
    %v1381 = vadd.f32 %v1380, 1.0
    %v1382 = vrcp.pop %v1381
    %v1383 = vmul.f32 1.0, %v1382
    %v1384 = vmul.f32 %v1376, %v1270
    %v1385 = vmul.f32 %v1370, %v1377
    %v1386 = vadd.f32 %v1384, %v1385
    %v1387 = vtanh.pop %v1386
    %v1388 = vmul.f32 %v1383, %v1387
    %s1389 = scalar_lea.vmem %s1, 40
    %v1390 = vld [vmem:[%s1389] sm:$0xff]
    %1392 = vset.pattern.permute.xlu0 0
    %1393 = vperm.xlu0 %1392, %v1390
    %v1394 = vpop.permute.xlu0 %1393
    %v1396 = vmul.f32 %v1394, %v1388
    %v1397 = vsub.f32 1.0, %v1390
    %1399 = vset.pattern.permute.xlu0 0
    %1400 = vperm.xlu0 %1399, %v1397
    %v1401 = vpop.permute.xlu0 %1400
    %v1403 = vmul.f32 %v1401, %v1267
    %v1404 = vadd.f32 %v1396, %v1403
    %v1405 = vmul.f32 %v1394, %v1386
    %v1406 = vmul.f32 %v1401, %v1270
    %v1407 = vadd.f32 %v1405, %v1406
    %s1408 = smul.u32 6, 4
    %s1409 = smul.addr %s1408, 8
    %s1410 = scalar_lea.vmem [#allocation2], %s1409
    %v1411 = vld [vmem:[%s1410] sm:$0xff]
    %v1412 = vld [vmem:[%s1410 + $0x8] sm:$0xff]
    %v1413 = vld [vmem:[%s1410 + $0x10] sm:$0xff]
    %v1414 = vld [vmem:[%s1410 + $0x18] sm:$0xff]
    %v1415 = vpack.c.bf16 %v1404, %v1404
    %1416 = vmatprep.subr.bf16.mxu0 %v561
    %1417 = vmatpush1.bf16.msra.mxu0 %v560
    %1418 = vmatprep.subr.bf16.mxu0 %v557
    %1419 = vmatpush1.bf16.msra.mxu0 %v556
    %1420 = vmatprep.subr.bf16.mxu0 %v553
    %1421 = vmatpush1.bf16.msra.mxu0 %v552
    %1422 = vmatprep.subr.bf16.mxu0 %v549
    %1423 = vmatpush1.bf16.msra.mxu0 %v548
    %1424 = vmatprep.subr.bf16.mxu0 %v545
    %1425 = vmatpush1.bf16.msra.mxu0 %v544
    %1426 = vmatprep.subr.bf16.mxu0 %v541
    %1427 = vmatpush1.bf16.msra.mxu0 %v540
    %1428 = vmatprep.subr.bf16.mxu0 %v537
    %1429 = vmatpush1.bf16.msra.mxu0 %v536
    %1430 = vmatprep.subr.bf16.mxu0 %v533
    %1431 = vmatpush1.bf16.msra.mxu0 %v532
    %1432 = vmatprep.subr.bf16.mxu0 0
    %1433 = vmatpush2.bf16.msra.mxu0 0
    %1434 = vmatprep.subr.bf16.mxu0 0
    %1435 = vmatpush2.bf16.msra.mxu0 0
    %1436 = vmatprep.subr.bf16.mxu0 0
    %1437 = vmatpush2.bf16.msra.mxu0 0
    %1438 = vmatprep.subr.bf16.mxu0 0
    %1439 = vmatpush2.bf16.msra.mxu0 0
    %1440 = vmatprep.subr.bf16.mxu0 0
    %1441 = vmatpush2.bf16.msra.mxu0 0
    %1442 = vmatprep.subr.bf16.mxu0 0
    %1443 = vmatpush2.bf16.msra.mxu0 0
    %1444 = vmatprep.subr.bf16.mxu0 0
    %1445 = vmatpush2.bf16.msra.mxu0 0
    %1446 = vmatprep.subr.bf16.mxu0 0
    %1447 = vmatpush2.bf16.msra.mxu0 0
    %1448 = vmatprep.mubr.bf16.mxu0 0
    %1449 = vmatmul.mubr.bf16.gmra.mxu0 %v1415
    %v1450 = vpop.f32.mrf.mxu0
    %v1451 = vadd.f32 0.0, %v1450
    %v1452 = vpop.f32.mrf.mxu0
    %v1453 = vadd.f32 0.0, %v1452
    %v1454 = vpop.f32.mrf.mxu0
    %v1455 = vpop.f32.mrf.mxu0
    %1456 = vdwg.mxu0
    %1457 = vmatprep.subr.bf16.mxu0 %v563
    %1458 = vmatpush1.bf16.msra.mxu0 %v562
    %1459 = vmatprep.subr.bf16.mxu0 %v559
    %1460 = vmatpush1.bf16.msra.mxu0 %v558
    %1461 = vmatprep.subr.bf16.mxu0 %v555
    %1462 = vmatpush1.bf16.msra.mxu0 %v554
    %1463 = vmatprep.subr.bf16.mxu0 %v551
    %1464 = vmatpush1.bf16.msra.mxu0 %v550
    %1465 = vmatprep.subr.bf16.mxu0 %v547
    %1466 = vmatpush1.bf16.msra.mxu0 %v546
    %1467 = vmatprep.subr.bf16.mxu0 %v543
    %1468 = vmatpush1.bf16.msra.mxu0 %v542
    %1469 = vmatprep.subr.bf16.mxu0 %v539
    %1470 = vmatpush1.bf16.msra.mxu0 %v538
    %1471 = vmatprep.subr.bf16.mxu0 %v535
    %1472 = vmatpush1.bf16.msra.mxu0 %v534
    %1473 = vmatprep.subr.bf16.mxu0 0
    %1474 = vmatpush2.bf16.msra.mxu0 0
    %1475 = vmatprep.subr.bf16.mxu0 0
    %1476 = vmatpush2.bf16.msra.mxu0 0
    %1477 = vmatprep.subr.bf16.mxu0 0
    %1478 = vmatpush2.bf16.msra.mxu0 0
    %1479 = vmatprep.subr.bf16.mxu0 0
    %1480 = vmatpush2.bf16.msra.mxu0 0
    %1481 = vmatprep.subr.bf16.mxu0 0
    %1482 = vmatpush2.bf16.msra.mxu0 0
    %1483 = vmatprep.subr.bf16.mxu0 0
    %1484 = vmatpush2.bf16.msra.mxu0 0
    %1485 = vmatprep.subr.bf16.mxu0 0
    %1486 = vmatpush2.bf16.msra.mxu0 0
    %1487 = vmatprep.subr.bf16.mxu0 0
    %1488 = vmatpush2.bf16.msra.mxu0 0
    %1489 = vmatprep.mubr.bf16.mxu0 0
    %1490 = vmatmul.mubr.bf16.gmra.mxu0 %v1415
    %v1491 = vpop.f32.mrf.mxu0
    %v1492 = vadd.f32 0.0, %v1491
    %v1493 = vpop.f32.mrf.mxu0
    %v1494 = vadd.f32 0.0, %v1493
    %v1495 = vpop.f32.mrf.mxu0
    %v1496 = vpop.f32.mrf.mxu0
    %1497 = vdwg.mxu0
    %v1498 = vadd.f32 %v1411, %v1451
    %v1499 = vadd.f32 %v1412, %v1453
    %v1500 = vadd.f32 %v1413, %v1492
    %v1501 = vadd.f32 %v1414, %v1494
    %v1502 = vxor.u32 %v1498, 2147483648
    %v1503 = vmul.f32 %v1502, 1.442695
    %v1504 = vpow.pop %v1503
    %v1505 = vadd.f32 %v1504, 1.0
    %v1506 = vrcp.pop %v1505
    %v1507 = vmul.f32 1.0, %v1506
    %v1508 = vxor.u32 %v1499, 2147483648
    %v1509 = vmul.f32 %v1508, 1.442695
    %v1510 = vpow.pop %v1509
    %v1511 = vadd.f32 %v1510, 1.0
    %v1512 = vrcp.pop %v1511
    %v1513 = vmul.f32 1.0, %v1512
    %v1514 = vtanh.pop %v1500
    %v1515 = vxor.u32 %v1501, 2147483648
    %v1516 = vmul.f32 %v1515, 1.442695
    %v1517 = vpow.pop %v1516
    %v1518 = vadd.f32 %v1517, 1.0
    %v1519 = vrcp.pop %v1518
    %v1520 = vmul.f32 1.0, %v1519
    %v1521 = vmul.f32 %v1513, %v1407
    %v1522 = vmul.f32 %v1507, %v1514
    %v1523 = vadd.f32 %v1521, %v1522
    %v1524 = vtanh.pop %v1523
    %v1525 = vmul.f32 %v1520, %v1524
    %s1526 = scalar_lea.vmem %s1, 48
    %v1527 = vld [vmem:[%s1526] sm:$0xff]
    %1529 = vset.pattern.permute.xlu0 0
    %1530 = vperm.xlu0 %1529, %v1527
    %v1531 = vpop.permute.xlu0 %1530
    %v1533 = vmul.f32 %v1531, %v1525
    %v1534 = vsub.f32 1.0, %v1527
    %1536 = vset.pattern.permute.xlu0 0
    %1537 = vperm.xlu0 %1536, %v1534
    %v1538 = vpop.permute.xlu0 %1537
    %v1540 = vmul.f32 %v1538, %v1404
    %v1541 = vadd.f32 %v1533, %v1540
    %v1542 = vmul.f32 %v1531, %v1523
    %v1543 = vmul.f32 %v1538, %v1407
    %v1544 = vadd.f32 %v1542, %v1543
    %s1545 = smul.u32 7, 4
    %s1546 = smul.addr %s1545, 8
    %s1547 = scalar_lea.vmem [#allocation2], %s1546
    %v1548 = vld [vmem:[%s1547] sm:$0xff]
    %v1549 = vld [vmem:[%s1547 + $0x8] sm:$0xff]
    %v1550 = vld [vmem:[%s1547 + $0x10] sm:$0xff]
    %v1551 = vld [vmem:[%s1547 + $0x18] sm:$0xff]
    %v1552 = vpack.c.bf16 %v1541, %v1541
    %1553 = vmatprep.subr.bf16.mxu0 %v561
    %1554 = vmatpush1.bf16.msra.mxu0 %v560
    %1555 = vmatprep.subr.bf16.mxu0 %v557
    %1556 = vmatpush1.bf16.msra.mxu0 %v556
    %1557 = vmatprep.subr.bf16.mxu0 %v553
    %1558 = vmatpush1.bf16.msra.mxu0 %v552
    %1559 = vmatprep.subr.bf16.mxu0 %v549
    %1560 = vmatpush1.bf16.msra.mxu0 %v548
    %1561 = vmatprep.subr.bf16.mxu0 %v545
    %1562 = vmatpush1.bf16.msra.mxu0 %v544
    %1563 = vmatprep.subr.bf16.mxu0 %v541
    %1564 = vmatpush1.bf16.msra.mxu0 %v540
    %1565 = vmatprep.subr.bf16.mxu0 %v537
    %1566 = vmatpush1.bf16.msra.mxu0 %v536
    %1567 = vmatprep.subr.bf16.mxu0 %v533
    %1568 = vmatpush1.bf16.msra.mxu0 %v532
    %1569 = vmatprep.subr.bf16.mxu0 0
    %1570 = vmatpush2.bf16.msra.mxu0 0
    %1571 = vmatprep.subr.bf16.mxu0 0
    %1572 = vmatpush2.bf16.msra.mxu0 0
    %1573 = vmatprep.subr.bf16.mxu0 0
    %1574 = vmatpush2.bf16.msra.mxu0 0
    %1575 = vmatprep.subr.bf16.mxu0 0
    %1576 = vmatpush2.bf16.msra.mxu0 0
    %1577 = vmatprep.subr.bf16.mxu0 0
    %1578 = vmatpush2.bf16.msra.mxu0 0
    %1579 = vmatprep.subr.bf16.mxu0 0
    %1580 = vmatpush2.bf16.msra.mxu0 0
    %1581 = vmatprep.subr.bf16.mxu0 0
    %1582 = vmatpush2.bf16.msra.mxu0 0
    %1583 = vmatprep.subr.bf16.mxu0 0
    %1584 = vmatpush2.bf16.msra.mxu0 0
    %1585 = vmatprep.mubr.bf16.mxu0 0
    %1586 = vmatmul.mubr.bf16.gmra.mxu0 %v1552
    %v1587 = vpop.f32.mrf.mxu0
    %v1588 = vadd.f32 0.0, %v1587
    %v1589 = vpop.f32.mrf.mxu0
    %v1590 = vadd.f32 0.0, %v1589
    %v1591 = vpop.f32.mrf.mxu0
    %v1592 = vpop.f32.mrf.mxu0
    %1593 = vdwg.mxu0
    %1594 = vmatprep.subr.bf16.mxu0 %v563
    %1595 = vmatpush1.bf16.msra.mxu0 %v562
    %1596 = vmatprep.subr.bf16.mxu0 %v559
    %1597 = vmatpush1.bf16.msra.mxu0 %v558
    %1598 = vmatprep.subr.bf16.mxu0 %v555
    %1599 = vmatpush1.bf16.msra.mxu0 %v554
    %1600 = vmatprep.subr.bf16.mxu0 %v551
    %1601 = vmatpush1.bf16.msra.mxu0 %v550
    %1602 = vmatprep.subr.bf16.mxu0 %v547
    %1603 = vmatpush1.bf16.msra.mxu0 %v546
    %1604 = vmatprep.subr.bf16.mxu0 %v543
    %1605 = vmatpush1.bf16.msra.mxu0 %v542
    %1606 = vmatprep.subr.bf16.mxu0 %v539
    %1607 = vmatpush1.bf16.msra.mxu0 %v538
    %1608 = vmatprep.subr.bf16.mxu0 %v535
    %1609 = vmatpush1.bf16.msra.mxu0 %v534
    %1610 = vmatprep.subr.bf16.mxu0 0
    %1611 = vmatpush2.bf16.msra.mxu0 0
    %1612 = vmatprep.subr.bf16.mxu0 0
    %1613 = vmatpush2.bf16.msra.mxu0 0
    %1614 = vmatprep.subr.bf16.mxu0 0
    %1615 = vmatpush2.bf16.msra.mxu0 0
    %1616 = vmatprep.subr.bf16.mxu0 0
    %1617 = vmatpush2.bf16.msra.mxu0 0
    %1618 = vmatprep.subr.bf16.mxu0 0
    %1619 = vmatpush2.bf16.msra.mxu0 0
    %1620 = vmatprep.subr.bf16.mxu0 0
    %1621 = vmatpush2.bf16.msra.mxu0 0
    %1622 = vmatprep.subr.bf16.mxu0 0
    %1623 = vmatpush2.bf16.msra.mxu0 0
    %1624 = vmatprep.subr.bf16.mxu0 0
    %1625 = vmatpush2.bf16.msra.mxu0 0
    %1626 = vmatprep.mubr.bf16.mxu0 0
    %1627 = vmatmul.mubr.bf16.gmra.mxu0 %v1552
    %v1628 = vpop.f32.mrf.mxu0
    %v1629 = vadd.f32 0.0, %v1628
    %v1630 = vpop.f32.mrf.mxu0
    %v1631 = vadd.f32 0.0, %v1630
    %v1632 = vpop.f32.mrf.mxu0
    %v1633 = vpop.f32.mrf.mxu0
    %1634 = vdwg.mxu0
    %v1635 = vadd.f32 %v1548, %v1588
    %v1636 = vadd.f32 %v1549, %v1590
    %v1637 = vadd.f32 %v1550, %v1629
    %v1638 = vadd.f32 %v1551, %v1631
    %v1639 = vxor.u32 %v1635, 2147483648
    %v1640 = vmul.f32 %v1639, 1.442695
    %v1641 = vpow.pop %v1640
    %v1642 = vadd.f32 %v1641, 1.0
    %v1643 = vrcp.pop %v1642
    %v1644 = vmul.f32 1.0, %v1643
    %v1645 = vxor.u32 %v1636, 2147483648
    %v1646 = vmul.f32 %v1645, 1.442695
    %v1647 = vpow.pop %v1646
    %v1648 = vadd.f32 %v1647, 1.0
    %v1649 = vrcp.pop %v1648
    %v1650 = vmul.f32 1.0, %v1649
    %v1651 = vtanh.pop %v1637
    %v1652 = vxor.u32 %v1638, 2147483648
    %v1653 = vmul.f32 %v1652, 1.442695
    %v1654 = vpow.pop %v1653
    %v1655 = vadd.f32 %v1654, 1.0
    %v1656 = vrcp.pop %v1655
    %v1657 = vmul.f32 1.0, %v1656
    %v1658 = vmul.f32 %v1650, %v1544
    %v1659 = vmul.f32 %v1644, %v1651
    %v1660 = vadd.f32 %v1658, %v1659
    %v1661 = vtanh.pop %v1660
    %v1662 = vmul.f32 %v1657, %v1661
    %s1663 = scalar_lea.vmem %s1, 56
    %v1664 = vld [vmem:[%s1663] sm:$0xff]
    %1666 = vset.pattern.permute.xlu0 0
    %1667 = vperm.xlu0 %1666, %v1664
    %v1668 = vpop.permute.xlu0 %1667
    %v1670 = vmul.f32 %v1668, %v1662
    %v1671 = vsub.f32 1.0, %v1664
    %1673 = vset.pattern.permute.xlu0 0
    %1674 = vperm.xlu0 %1673, %v1671
    %v1675 = vpop.permute.xlu0 %1674
    %v1677 = vmul.f32 %v1675, %v1541
    %v1678 = vadd.f32 %v1670, %v1677
    %1679 = vst [vmem:[%s5] sm:$0xff] %v1678
    // Predicated region
    $region34: #{seq2seq_forward.2} parent=1 // pred_check
      _
    $region35: #{seq2seq_forward.2} parent=1 // pred_check_branch
      %1681 = sbr.rel (0) target = $region37
    $region36: #{seq2seq_forward.2} parent=1 // pred_region
      _
    $region37: #{seq2seq_forward.2} parent=1 // pred_fallthru
      _
    // Predicated region
    $region38: #{seq2seq_forward.2} parent=1 // pred_check
      _
    $region39: #{seq2seq_forward.2} parent=1 // pred_check_branch
      %1683 = sbr.rel (0) target = $region41
    $region40: #{seq2seq_forward.2} parent=1 // pred_region
      _
    $region41: #{seq2seq_forward.2} parent=1 // pred_fallthru
      _
    %1684 = vsyncpa [#allocation4], 1
    %1685 = vsyncpa [#allocation6], 1

// kernel: seq2seq_forward.3
$region0: #{seq2seq_forward.3}
  #allocation0 [shape = 'u32[]', space=smem, size = 0x4, offset = 0x4, fixed_abs, tag = 'smem constant byte address 0x4 - core index']
  #allocation1 [shape = 'u32[144,128]{1,0:T(1,128)}', space=vmem, size = 0x12000, scoped, tag = 'internal scratch']
  %s0 = inlined_call_operand.vmem [shape: f32[8,128], index: 0, kind: input, shape index: {}]
  %s1 = inlined_call_operand.vmem [shape: bf16[8,256], index: 1, kind: input, shape index: {}]
  %s2 = inlined_call_operand.vmem [shape: bf16[8,768], index: 2, kind: input, shape index: {}]
  %s3 = inlined_call_operand.vmem [shape: f32[8,512], index: 3, kind: input, shape index: {}]
  %s4 = inlined_call_operand.vmem [shape: f32[8,1], index: 4, kind: input, shape index: {}]
  %s5 = inlined_call_operand.vmem [shape: bf16[256,128], index: 5, kind: input, shape index: {}]
  %s6 = inlined_call_operand.vmem [shape: f32[1,128], index: 6, kind: input, shape index: {}]
  %s7 = inlined_call_operand.vmem [shape: bf16[768,256], index: 7, kind: input, shape index: {}]
  %s8 = inlined_call_operand.vmem [shape: f32[1,256], index: 8, kind: input, shape index: {}]
  %s9 = inlined_call_operand.vmem [shape: bf16[512,1536], index: 9, kind: input, shape index: {}]
  %s10 = inlined_call_operand.hbm [shape: bf16[512,1536], index: 10, kind: input, shape index: {}]
  %s11 = inlined_call_operand.vmem [shape: f32[1,1536], index: 11, kind: input, shape index: {}]
  %s12 = inlined_call_operand.vmem [shape: f32[1,1536], index: 12, kind: input, shape index: {}]
  %s13 = inlined_call_operand.vmem [shape: f32[8,512], index: 13, kind: output, shape index: {}]
  %s14 = sld [smem:[#allocation0]]
  $region66: #{seq2seq_forward.3} parent=0
    _
  %s16 = ssub.s32 1, %s14
  %s17 = scalar_select 0, %s16, %s14
  $region1: #{seq2seq_forward.3} parent=0
    #allocation2 [shape = 'u8[1572864]{0}', space=vmem, size = 0x180000, scoped, tag = 'input window, operand 10, single buffered']
    #allocation3 [shape = 's32[1]{0}', space=sflag, size = 0x4, scoped, tag = 'scoped memory for seq2seq_forward.3']
    %18 = vsyncpa [#allocation3], 0
    // Predicated region
    $region2: #{seq2seq_forward.3} parent=1 // pred_check
      _
    $region3: #{seq2seq_forward.3} parent=1 // pred_check_branch
      %20 = sbr.rel (0) target = $region5
    $region4: #{seq2seq_forward.3} parent=1 // pred_region
      _
    $region5: #{seq2seq_forward.3} parent=1 // pred_fallthru
      _
    // Predicated region
    $region6: #{seq2seq_forward.3} parent=1 // pred_check
      _
    $region7: #{seq2seq_forward.3} parent=1 // pred_check_branch
      %22 = sbr.rel (0) target = $region9
    $region8: #{seq2seq_forward.3} parent=1 // pred_region
      _
    $region9: #{seq2seq_forward.3} parent=1 // pred_fallthru
      _
    // Predicated region
    $region10: #{seq2seq_forward.3} parent=1 // pred_check
      _
    $region11: #{seq2seq_forward.3} parent=1 // pred_check_branch
      %24 = sbr.rel (0) target = $region13
    $region12: #{seq2seq_forward.3} parent=1 // pred_region
      _
    $region13: #{seq2seq_forward.3} parent=1 // pred_fallthru
      _
    // Predicated region
    $region14: #{seq2seq_forward.3} parent=1 // pred_check
      _
    $region15: #{seq2seq_forward.3} parent=1 // pred_check_branch
      %26 = sbr.rel (0) target = $region17
    $region16: #{seq2seq_forward.3} parent=1 // pred_region
      _
    $region17: #{seq2seq_forward.3} parent=1 // pred_fallthru
      _
    // Predicated region
    $region18: #{seq2seq_forward.3} parent=1 // pred_check
      _
    $region19: #{seq2seq_forward.3} parent=1 // pred_check_branch
      %28 = sbr.rel (0) target = $region21
    $region20: #{seq2seq_forward.3} parent=1 // pred_region
      _
    $region21: #{seq2seq_forward.3} parent=1 // pred_fallthru
      _
    // Predicated region
    $region22: #{seq2seq_forward.3} parent=1 // pred_check
      _
    $region23: #{seq2seq_forward.3} parent=1 // pred_check_branch
      %30 = sbr.rel (0) target = $region25
    $region24: #{seq2seq_forward.3} parent=1 // pred_region
      _
    $region25: #{seq2seq_forward.3} parent=1 // pred_fallthru
      _
    // Predicated region
    $region26: #{seq2seq_forward.3} parent=1 // pred_check
      _
    $region27: #{seq2seq_forward.3} parent=1 // pred_check_branch
      %32 = sbr.rel (0) target = $region29
    $region28: #{seq2seq_forward.3} parent=1 // pred_region
      _
    $region29: #{seq2seq_forward.3} parent=1 // pred_fallthru
      _
    // Predicated region
    $region30: #{seq2seq_forward.3} parent=1 // pred_check
      _
    $region31: #{seq2seq_forward.3} parent=1 // pred_check_branch
      %34 = sbr.rel (0) target = $region33
    $region32: #{seq2seq_forward.3} parent=1 // pred_region
      _
    $region33: #{seq2seq_forward.3} parent=1 // pred_fallthru
      _
    // Predicated region
    $region34: #{seq2seq_forward.3} parent=1 // pred_check
      _
    $region35: #{seq2seq_forward.3} parent=1 // pred_check_branch
      %36 = sbr.rel (0) target = $region37
    $region36: #{seq2seq_forward.3} parent=1 // pred_region
      _
    $region37: #{seq2seq_forward.3} parent=1 // pred_fallthru
      _
    // Predicated region
    $region38: #{seq2seq_forward.3} parent=1 // pred_check
      _
    $region39: #{seq2seq_forward.3} parent=1 // pred_check_branch
      %38 = sbr.rel (0) target = $region41
    $region40: #{seq2seq_forward.3} parent=1 // pred_region
      _
    $region41: #{seq2seq_forward.3} parent=1 // pred_fallthru
      _
    // Predicated region
    $region42: #{seq2seq_forward.3} parent=1 // pred_check
      _
    $region43: #{seq2seq_forward.3} parent=1 // pred_check_branch
      %40 = sbr.rel (0) target = $region45
    $region44: #{seq2seq_forward.3} parent=1 // pred_region
      %s42 = ssub.s32 49152, 49152
      %43 = vsyncadd [#allocation3], %s42
      %s44 = sshll.u32 [#allocation2], 4
      %s45 = int_to_ptr.vmem [resolvable:$true] %s44
      %50 = dma.hbm_to_vmem [thread:$0]  %s10, 49152, %s45, [#allocation3], 768, 768, 48
    $region45: #{seq2seq_forward.3} parent=1 // pred_fallthru
      _
    // Predicated region
    $region46: #{seq2seq_forward.3} parent=1 // pred_check
      _
    $region47: #{seq2seq_forward.3} parent=1 // pred_check_branch
      %52 = sbr.rel (0) target = $region49
    $region48: #{seq2seq_forward.3} parent=1 // pred_region
      _
    $region49: #{seq2seq_forward.3} parent=1 // pred_fallthru
      _
    // Predicated region
    $region50: #{seq2seq_forward.3} parent=1 // pred_check
      _
    $region51: #{seq2seq_forward.3} parent=1 // pred_check_branch
      %54 = sbr.rel (0) target = $region53
    $region52: #{seq2seq_forward.3} parent=1 // pred_region
      _
    $region53: #{seq2seq_forward.3} parent=1 // pred_fallthru
      _
    // Predicated region
    $region54: #{seq2seq_forward.3} parent=1 // pred_check
      _
    $region55: #{seq2seq_forward.3} parent=1 // pred_check_branch
      %56 = sbr.rel (0) target = $region57
    $region56: #{seq2seq_forward.3} parent=1 // pred_region
      %57 = dma.done [#allocation3], 49152
    $region57: #{seq2seq_forward.3} parent=1 // pred_fallthru
      _
    %v59 = vld [vmem:[%s1] sm:$0xff]
    %v60 = vld [vmem:[%s5] sm:$0xf]
    %v61 = vld [vmem:[%s5 + $0x4] sm:$0xf]
    %v62 = vld [vmem:[%s5 + $0x8] sm:$0xf]
    %v63 = vld [vmem:[%s5 + $0xc] sm:$0xf]
    %v64 = vld [vmem:[%s5 + $0x10] sm:$0xf]
    %v65 = vld [vmem:[%s5 + $0x14] sm:$0xf]
    %v66 = vld [vmem:[%s5 + $0x18] sm:$0xf]
    %v67 = vld [vmem:[%s5 + $0x1c] sm:$0xf]
    %v68 = vld [vmem:[%s5 + $0x20] sm:$0xf]
    %v69 = vld [vmem:[%s5 + $0x24] sm:$0xf]
    %v70 = vld [vmem:[%s5 + $0x28] sm:$0xf]
    %v71 = vld [vmem:[%s5 + $0x2c] sm:$0xf]
    %v72 = vld [vmem:[%s5 + $0x30] sm:$0xf]
    %v73 = vld [vmem:[%s5 + $0x34] sm:$0xf]
    %v74 = vld [vmem:[%s5 + $0x38] sm:$0xf]
    %v75 = vld [vmem:[%s5 + $0x3c] sm:$0xf]
    %v76 = vld [vmem:[%s5 + $0x40] sm:$0xf]
    %v77 = vld [vmem:[%s5 + $0x44] sm:$0xf]
    %v78 = vld [vmem:[%s5 + $0x48] sm:$0xf]
    %v79 = vld [vmem:[%s5 + $0x4c] sm:$0xf]
    %v80 = vld [vmem:[%s5 + $0x50] sm:$0xf]
    %v81 = vld [vmem:[%s5 + $0x54] sm:$0xf]
    %v82 = vld [vmem:[%s5 + $0x58] sm:$0xf]
    %v83 = vld [vmem:[%s5 + $0x5c] sm:$0xf]
    %v84 = vld [vmem:[%s5 + $0x60] sm:$0xf]
    %v85 = vld [vmem:[%s5 + $0x64] sm:$0xf]
    %v86 = vld [vmem:[%s5 + $0x68] sm:$0xf]
    %v87 = vld [vmem:[%s5 + $0x6c] sm:$0xf]
    %v88 = vld [vmem:[%s5 + $0x70] sm:$0xf]
    %v89 = vld [vmem:[%s5 + $0x74] sm:$0xf]
    %v90 = vld [vmem:[%s5 + $0x78] sm:$0xf]
    %v91 = vld [vmem:[%s5 + $0x7c] sm:$0xf]
    %v92 = vld [vmem:[%s6] sm:$0x1]
    %v94 = vlaneseq
    %v95 = vshrl.u32 %v94, 7
    %v96 = vsub.s32 0, %v95
    %v97 = vrot.slane %v92, %v96
    %v100 = vunpack.c.l.b16 %v59
    %v101 = vunpack.c.h.b16 %v59
    %v102 = vpack.c.b16 %v100, %v100
    %v103 = vpack.c.b16 %v101, %v101
    %v138 = vunpack.c.l.b16 %v60
    %v139 = vunpack.c.l.b16 %v61
    %v140 = vunpack.c.l.b16 %v62
    %v141 = vunpack.c.l.b16 %v63
    %v142 = vunpack.c.l.b16 %v64
    %v143 = vunpack.c.l.b16 %v65
    %v144 = vunpack.c.l.b16 %v66
    %v145 = vunpack.c.l.b16 %v67
    %v146 = vunpack.c.l.b16 %v68
    %v147 = vunpack.c.l.b16 %v69
    %v148 = vunpack.c.l.b16 %v70
    %v149 = vunpack.c.l.b16 %v71
    %v150 = vunpack.c.l.b16 %v72
    %v151 = vunpack.c.l.b16 %v73
    %v152 = vunpack.c.l.b16 %v74
    %v153 = vunpack.c.l.b16 %v75
    %v154 = vunpack.c.l.b16 %v76
    %v155 = vunpack.c.l.b16 %v77
    %v156 = vunpack.c.l.b16 %v78
    %v157 = vunpack.c.l.b16 %v79
    %v158 = vunpack.c.l.b16 %v80
    %v159 = vunpack.c.l.b16 %v81
    %v160 = vunpack.c.l.b16 %v82
    %v161 = vunpack.c.l.b16 %v83
    %v162 = vunpack.c.l.b16 %v84
    %v163 = vunpack.c.l.b16 %v85
    %v164 = vunpack.c.l.b16 %v86
    %v165 = vunpack.c.l.b16 %v87
    %v166 = vunpack.c.l.b16 %v88
    %v167 = vunpack.c.l.b16 %v89
    %v168 = vunpack.c.l.b16 %v90
    %v169 = vunpack.c.l.b16 %v91
    %v170 = vpack.c.b16 %v139, %v138
    %v171 = vpack.c.b16 %v141, %v140
    %v172 = vpack.c.b16 %v143, %v142
    %v173 = vpack.c.b16 %v145, %v144
    %v174 = vpack.c.b16 %v147, %v146
    %v175 = vpack.c.b16 %v149, %v148
    %v176 = vpack.c.b16 %v151, %v150
    %v177 = vpack.c.b16 %v153, %v152
    %v178 = vpack.c.b16 %v155, %v154
    %v179 = vpack.c.b16 %v157, %v156
    %v180 = vpack.c.b16 %v159, %v158
    %v181 = vpack.c.b16 %v161, %v160
    %v182 = vpack.c.b16 %v163, %v162
    %v183 = vpack.c.b16 %v165, %v164
    %v184 = vpack.c.b16 %v167, %v166
    %v185 = vpack.c.b16 %v169, %v168
    %202 = vmatprep.subr.bf16.mxu0 0
    %203 = vmatpush1.bf16.msra.mxu0 %v177
    %204 = vmatprep.subr.bf16.mxu0 0
    %205 = vmatpush1.bf16.msra.mxu0 %v176
    %206 = vmatprep.subr.bf16.mxu0 0
    %207 = vmatpush1.bf16.msra.mxu0 %v175
    %208 = vmatprep.subr.bf16.mxu0 0
    %209 = vmatpush1.bf16.msra.mxu0 %v174
    %210 = vmatprep.subr.bf16.mxu0 0
    %211 = vmatpush1.bf16.msra.mxu0 %v173
    %212 = vmatprep.subr.bf16.mxu0 0
    %213 = vmatpush1.bf16.msra.mxu0 %v172
    %214 = vmatprep.subr.bf16.mxu0 0
    %215 = vmatpush1.bf16.msra.mxu0 %v171
    %216 = vmatprep.subr.bf16.mxu0 0
    %217 = vmatpush1.bf16.msra.mxu0 %v170
    %218 = vmatprep.subr.bf16.mxu0 0
    %219 = vmatpush2.bf16.msra.mxu0 %v185
    %220 = vmatprep.subr.bf16.mxu0 0
    %221 = vmatpush2.bf16.msra.mxu0 %v184
    %222 = vmatprep.subr.bf16.mxu0 0
    %223 = vmatpush2.bf16.msra.mxu0 %v183
    %224 = vmatprep.subr.bf16.mxu0 0
    %225 = vmatpush2.bf16.msra.mxu0 %v182
    %226 = vmatprep.subr.bf16.mxu0 0
    %227 = vmatpush2.bf16.msra.mxu0 %v181
    %228 = vmatprep.subr.bf16.mxu0 0
    %229 = vmatpush2.bf16.msra.mxu0 %v180
    %230 = vmatprep.subr.bf16.mxu0 0
    %231 = vmatpush2.bf16.msra.mxu0 %v179
    %232 = vmatprep.subr.bf16.mxu0 0
    %233 = vmatpush2.bf16.msra.mxu0 %v178
    %234 = vmatprep.mubr.bf16.mxu0 %v103
    %235 = vmatmul.mubr.bf16.gmra.mxu0 %v102
    %v236 = vpop.f32.mrf.mxu0
    %v237 = vadd.f32 %v97, %v236
    %v238 = vpop.f32.mrf.mxu0
    %v239 = vpop.f32.mrf.mxu0
    %v240 = vpop.f32.mrf.mxu0
    %241 = vdwg.mxu0
    %v242 = vmax.f32 %v237, 0.0
    %v243 = vld [vmem:[%s2] sm:$0xff]
    %v244 = vld [vmem:[%s2 + $0x8] sm:$0xff]
    %v245 = vld [vmem:[%s2 + $0x10] sm:$0xff]
    %v246 = vld [vmem:[%s7] sm:$0xff]
    %v247 = vld [vmem:[%s7 + $0x8] sm:$0xff]
    %v248 = vld [vmem:[%s7 + $0x10] sm:$0xff]
    %v249 = vld [vmem:[%s7 + $0x18] sm:$0xff]
    %v250 = vld [vmem:[%s7 + $0x20] sm:$0xff]
    %v251 = vld [vmem:[%s7 + $0x28] sm:$0xff]
    %v252 = vld [vmem:[%s7 + $0x30] sm:$0xff]
    %v253 = vld [vmem:[%s7 + $0x38] sm:$0xff]
    %v254 = vld [vmem:[%s7 + $0x40] sm:$0xff]
    %v255 = vld [vmem:[%s7 + $0x48] sm:$0xff]
    %v256 = vld [vmem:[%s7 + $0x50] sm:$0xff]
    %v257 = vld [vmem:[%s7 + $0x58] sm:$0xff]
    %v258 = vld [vmem:[%s7 + $0x60] sm:$0xff]
    %v259 = vld [vmem:[%s7 + $0x68] sm:$0xff]
    %v260 = vld [vmem:[%s7 + $0x70] sm:$0xff]
    %v261 = vld [vmem:[%s7 + $0x78] sm:$0xff]
    %v262 = vld [vmem:[%s7 + $0x80] sm:$0xff]
    %v263 = vld [vmem:[%s7 + $0x88] sm:$0xff]
    %v264 = vld [vmem:[%s7 + $0x90] sm:$0xff]
    %v265 = vld [vmem:[%s7 + $0x98] sm:$0xff]
    %v266 = vld [vmem:[%s7 + $0xa0] sm:$0xff]
    %v267 = vld [vmem:[%s7 + $0xa8] sm:$0xff]
    %v268 = vld [vmem:[%s7 + $0xb0] sm:$0xff]
    %v269 = vld [vmem:[%s7 + $0xb8] sm:$0xff]
    %v270 = vld [vmem:[%s7 + $0xc0] sm:$0xff]
    %v271 = vld [vmem:[%s7 + $0xc8] sm:$0xff]
    %v272 = vld [vmem:[%s7 + $0xd0] sm:$0xff]
    %v273 = vld [vmem:[%s7 + $0xd8] sm:$0xff]
    %v274 = vld [vmem:[%s7 + $0xe0] sm:$0xff]
    %v275 = vld [vmem:[%s7 + $0xe8] sm:$0xff]
    %v276 = vld [vmem:[%s7 + $0xf0] sm:$0xff]
    %v277 = vld [vmem:[%s7 + $0xf8] sm:$0xff]
    %v278 = vld [vmem:[%s7 + $0x100] sm:$0xff]
    %v279 = vld [vmem:[%s7 + $0x108] sm:$0xff]
    %v280 = vld [vmem:[%s7 + $0x110] sm:$0xff]
    %v281 = vld [vmem:[%s7 + $0x118] sm:$0xff]
    %v282 = vld [vmem:[%s7 + $0x120] sm:$0xff]
    %v283 = vld [vmem:[%s7 + $0x128] sm:$0xff]
    %v284 = vld [vmem:[%s7 + $0x130] sm:$0xff]
    %v285 = vld [vmem:[%s7 + $0x138] sm:$0xff]
    %v286 = vld [vmem:[%s7 + $0x140] sm:$0xff]
    %v287 = vld [vmem:[%s7 + $0x148] sm:$0xff]
    %v288 = vld [vmem:[%s7 + $0x150] sm:$0xff]
    %v289 = vld [vmem:[%s7 + $0x158] sm:$0xff]
    %v290 = vld [vmem:[%s7 + $0x160] sm:$0xff]
    %v291 = vld [vmem:[%s7 + $0x168] sm:$0xff]
    %v292 = vld [vmem:[%s7 + $0x170] sm:$0xff]
    %v293 = vld [vmem:[%s7 + $0x178] sm:$0xff]
    %v294 = vld [vmem:[%s7 + $0x180] sm:$0xff]
    %v295 = vld [vmem:[%s7 + $0x188] sm:$0xff]
    %v296 = vld [vmem:[%s7 + $0x190] sm:$0xff]
    %v297 = vld [vmem:[%s7 + $0x198] sm:$0xff]
    %v298 = vld [vmem:[%s7 + $0x1a0] sm:$0xff]
    %v299 = vld [vmem:[%s7 + $0x1a8] sm:$0xff]
    %v300 = vld [vmem:[%s7 + $0x1b0] sm:$0xff]
    %v301 = vld [vmem:[%s7 + $0x1b8] sm:$0xff]
    %v302 = vld [vmem:[%s7 + $0x1c0] sm:$0xff]
    %v303 = vld [vmem:[%s7 + $0x1c8] sm:$0xff]
    %v304 = vld [vmem:[%s7 + $0x1d0] sm:$0xff]
    %v305 = vld [vmem:[%s7 + $0x1d8] sm:$0xff]
    %v306 = vld [vmem:[%s7 + $0x1e0] sm:$0xff]
    %v307 = vld [vmem:[%s7 + $0x1e8] sm:$0xff]
    %v308 = vld [vmem:[%s7 + $0x1f0] sm:$0xff]
    %v309 = vld [vmem:[%s7 + $0x1f8] sm:$0xff]
    %v310 = vld [vmem:[%s7 + $0x200] sm:$0xff]
    %v311 = vld [vmem:[%s7 + $0x208] sm:$0xff]
    %v312 = vld [vmem:[%s7 + $0x210] sm:$0xff]
    %v313 = vld [vmem:[%s7 + $0x218] sm:$0xff]
    %v314 = vld [vmem:[%s7 + $0x220] sm:$0xff]
    %v315 = vld [vmem:[%s7 + $0x228] sm:$0xff]
    %v316 = vld [vmem:[%s7 + $0x230] sm:$0xff]
    %v317 = vld [vmem:[%s7 + $0x238] sm:$0xff]
    %v318 = vld [vmem:[%s7 + $0x240] sm:$0xff]
    %v319 = vld [vmem:[%s7 + $0x248] sm:$0xff]
    %v320 = vld [vmem:[%s7 + $0x250] sm:$0xff]
    %v321 = vld [vmem:[%s7 + $0x258] sm:$0xff]
    %v322 = vld [vmem:[%s7 + $0x260] sm:$0xff]
    %v323 = vld [vmem:[%s7 + $0x268] sm:$0xff]
    %v324 = vld [vmem:[%s7 + $0x270] sm:$0xff]
    %v325 = vld [vmem:[%s7 + $0x278] sm:$0xff]
    %v326 = vld [vmem:[%s7 + $0x280] sm:$0xff]
    %v327 = vld [vmem:[%s7 + $0x288] sm:$0xff]
    %v328 = vld [vmem:[%s7 + $0x290] sm:$0xff]
    %v329 = vld [vmem:[%s7 + $0x298] sm:$0xff]
    %v330 = vld [vmem:[%s7 + $0x2a0] sm:$0xff]
    %v331 = vld [vmem:[%s7 + $0x2a8] sm:$0xff]
    %v332 = vld [vmem:[%s7 + $0x2b0] sm:$0xff]
    %v333 = vld [vmem:[%s7 + $0x2b8] sm:$0xff]
    %v334 = vld [vmem:[%s7 + $0x2c0] sm:$0xff]
    %v335 = vld [vmem:[%s7 + $0x2c8] sm:$0xff]
    %v336 = vld [vmem:[%s7 + $0x2d0] sm:$0xff]
    %v337 = vld [vmem:[%s7 + $0x2d8] sm:$0xff]
    %v338 = vld [vmem:[%s7 + $0x2e0] sm:$0xff]
    %v339 = vld [vmem:[%s7 + $0x2e8] sm:$0xff]
    %v340 = vld [vmem:[%s7 + $0x2f0] sm:$0xff]
    %v341 = vld [vmem:[%s7 + $0x2f8] sm:$0xff]
    %v342 = vld [vmem:[%s8] sm:$0x3]
    %v344 = vlaneseq
    %v345 = vshrl.u32 %v344, 7
    %v346 = vsub.s32 0, %v345
    %v347 = vrot.slane %v342, %v346
    %v348 = vlaneseq
    %v349 = vshrl.u32 %v348, 7
    %v350 = vsub.s32 1, %v349
    %v351 = vrot.slane %v342, %v350
    %v357 = vunpack.c.l.b16 %v243
    %v358 = vunpack.c.h.b16 %v243
    %v359 = vunpack.c.l.b16 %v244
    %v360 = vunpack.c.h.b16 %v244
    %v361 = vunpack.c.l.b16 %v245
    %v362 = vunpack.c.h.b16 %v245
    %v363 = vpack.c.b16 %v357, %v357
    %v364 = vpack.c.b16 %v358, %v358
    %v365 = vpack.c.b16 %v359, %v359
    %v366 = vpack.c.b16 %v360, %v360
    %v367 = vpack.c.b16 %v361, %v361
    %v368 = vpack.c.b16 %v362, %v362
    %v471 = vunpack.c.l.b16 %v246
    %v472 = vunpack.c.h.b16 %v246
    %v473 = vunpack.c.l.b16 %v247
    %v474 = vunpack.c.h.b16 %v247
    %v475 = vunpack.c.l.b16 %v248
    %v476 = vunpack.c.h.b16 %v248
    %v477 = vunpack.c.l.b16 %v249
    %v478 = vunpack.c.h.b16 %v249
    %v479 = vunpack.c.l.b16 %v250
    %v480 = vunpack.c.h.b16 %v250
    %v481 = vunpack.c.l.b16 %v251
    %v482 = vunpack.c.h.b16 %v251
    %v483 = vunpack.c.l.b16 %v252
    %v484 = vunpack.c.h.b16 %v252
    %v485 = vunpack.c.l.b16 %v253
    %v486 = vunpack.c.h.b16 %v253
    %v487 = vunpack.c.l.b16 %v254
    %v488 = vunpack.c.h.b16 %v254
    %v489 = vunpack.c.l.b16 %v255
    %v490 = vunpack.c.h.b16 %v255
    %v491 = vunpack.c.l.b16 %v256
    %v492 = vunpack.c.h.b16 %v256
    %v493 = vunpack.c.l.b16 %v257
    %v494 = vunpack.c.h.b16 %v257
    %v495 = vunpack.c.l.b16 %v258
    %v496 = vunpack.c.h.b16 %v258
    %v497 = vunpack.c.l.b16 %v259
    %v498 = vunpack.c.h.b16 %v259
    %v499 = vunpack.c.l.b16 %v260
    %v500 = vunpack.c.h.b16 %v260
    %v501 = vunpack.c.l.b16 %v261
    %v502 = vunpack.c.h.b16 %v261
    %v503 = vunpack.c.l.b16 %v262
    %v504 = vunpack.c.h.b16 %v262
    %v505 = vunpack.c.l.b16 %v263
    %v506 = vunpack.c.h.b16 %v263
    %v507 = vunpack.c.l.b16 %v264
    %v508 = vunpack.c.h.b16 %v264
    %v509 = vunpack.c.l.b16 %v265
    %v510 = vunpack.c.h.b16 %v265
    %v511 = vunpack.c.l.b16 %v266
    %v512 = vunpack.c.h.b16 %v266
    %v513 = vunpack.c.l.b16 %v267
    %v514 = vunpack.c.h.b16 %v267
    %v515 = vunpack.c.l.b16 %v268
    %v516 = vunpack.c.h.b16 %v268
    %v517 = vunpack.c.l.b16 %v269
    %v518 = vunpack.c.h.b16 %v269
    %v519 = vunpack.c.l.b16 %v270
    %v520 = vunpack.c.h.b16 %v270
    %v521 = vunpack.c.l.b16 %v271
    %v522 = vunpack.c.h.b16 %v271
    %v523 = vunpack.c.l.b16 %v272
    %v524 = vunpack.c.h.b16 %v272
    %v525 = vunpack.c.l.b16 %v273
    %v526 = vunpack.c.h.b16 %v273
    %v527 = vunpack.c.l.b16 %v274
    %v528 = vunpack.c.h.b16 %v274
    %v529 = vunpack.c.l.b16 %v275
    %v530 = vunpack.c.h.b16 %v275
    %v531 = vunpack.c.l.b16 %v276
    %v532 = vunpack.c.h.b16 %v276
    %v533 = vunpack.c.l.b16 %v277
    %v534 = vunpack.c.h.b16 %v277
    %v535 = vunpack.c.l.b16 %v278
    %v536 = vunpack.c.h.b16 %v278
    %v537 = vunpack.c.l.b16 %v279
    %v538 = vunpack.c.h.b16 %v279
    %v539 = vunpack.c.l.b16 %v280
    %v540 = vunpack.c.h.b16 %v280
    %v541 = vunpack.c.l.b16 %v281
    %v542 = vunpack.c.h.b16 %v281
    %v543 = vunpack.c.l.b16 %v282
    %v544 = vunpack.c.h.b16 %v282
    %v545 = vunpack.c.l.b16 %v283
    %v546 = vunpack.c.h.b16 %v283
    %v547 = vunpack.c.l.b16 %v284
    %v548 = vunpack.c.h.b16 %v284
    %v549 = vunpack.c.l.b16 %v285
    %v550 = vunpack.c.h.b16 %v285
    %v551 = vunpack.c.l.b16 %v286
    %v552 = vunpack.c.h.b16 %v286
    %v553 = vunpack.c.l.b16 %v287
    %v554 = vunpack.c.h.b16 %v287
    %v555 = vunpack.c.l.b16 %v288
    %v556 = vunpack.c.h.b16 %v288
    %v557 = vunpack.c.l.b16 %v289
    %v558 = vunpack.c.h.b16 %v289
    %v559 = vunpack.c.l.b16 %v290
    %v560 = vunpack.c.h.b16 %v290
    %v561 = vunpack.c.l.b16 %v291
    %v562 = vunpack.c.h.b16 %v291
    %v563 = vunpack.c.l.b16 %v292
    %v564 = vunpack.c.h.b16 %v292
    %v565 = vunpack.c.l.b16 %v293
    %v566 = vunpack.c.h.b16 %v293
    %v567 = vunpack.c.l.b16 %v294
    %v568 = vunpack.c.h.b16 %v294
    %v569 = vunpack.c.l.b16 %v295
    %v570 = vunpack.c.h.b16 %v295
    %v571 = vunpack.c.l.b16 %v296
    %v572 = vunpack.c.h.b16 %v296
    %v573 = vunpack.c.l.b16 %v297
    %v574 = vunpack.c.h.b16 %v297
    %v575 = vunpack.c.l.b16 %v298
    %v576 = vunpack.c.h.b16 %v298
    %v577 = vunpack.c.l.b16 %v299
    %v578 = vunpack.c.h.b16 %v299
    %v579 = vunpack.c.l.b16 %v300
    %v580 = vunpack.c.h.b16 %v300
    %v581 = vunpack.c.l.b16 %v301
    %v582 = vunpack.c.h.b16 %v301
    %v583 = vunpack.c.l.b16 %v302
    %v584 = vunpack.c.h.b16 %v302
    %v585 = vunpack.c.l.b16 %v303
    %v586 = vunpack.c.h.b16 %v303
    %v587 = vunpack.c.l.b16 %v304
    %v588 = vunpack.c.h.b16 %v304
    %v589 = vunpack.c.l.b16 %v305
    %v590 = vunpack.c.h.b16 %v305
    %v591 = vunpack.c.l.b16 %v306
    %v592 = vunpack.c.h.b16 %v306
    %v593 = vunpack.c.l.b16 %v307
    %v594 = vunpack.c.h.b16 %v307
    %v595 = vunpack.c.l.b16 %v308
    %v596 = vunpack.c.h.b16 %v308
    %v597 = vunpack.c.l.b16 %v309
    %v598 = vunpack.c.h.b16 %v309
    %v599 = vunpack.c.l.b16 %v310
    %v600 = vunpack.c.h.b16 %v310
    %v601 = vunpack.c.l.b16 %v311
    %v602 = vunpack.c.h.b16 %v311
    %v603 = vunpack.c.l.b16 %v312
    %v604 = vunpack.c.h.b16 %v312
    %v605 = vunpack.c.l.b16 %v313
    %v606 = vunpack.c.h.b16 %v313
    %v607 = vunpack.c.l.b16 %v314
    %v608 = vunpack.c.h.b16 %v314
    %v609 = vunpack.c.l.b16 %v315
    %v610 = vunpack.c.h.b16 %v315
    %v611 = vunpack.c.l.b16 %v316
    %v612 = vunpack.c.h.b16 %v316
    %v613 = vunpack.c.l.b16 %v317
    %v614 = vunpack.c.h.b16 %v317
    %v615 = vunpack.c.l.b16 %v318
    %v616 = vunpack.c.h.b16 %v318
    %v617 = vunpack.c.l.b16 %v319
    %v618 = vunpack.c.h.b16 %v319
    %v619 = vunpack.c.l.b16 %v320
    %v620 = vunpack.c.h.b16 %v320
    %v621 = vunpack.c.l.b16 %v321
    %v622 = vunpack.c.h.b16 %v321
    %v623 = vunpack.c.l.b16 %v322
    %v624 = vunpack.c.h.b16 %v322
    %v625 = vunpack.c.l.b16 %v323
    %v626 = vunpack.c.h.b16 %v323
    %v627 = vunpack.c.l.b16 %v324
    %v628 = vunpack.c.h.b16 %v324
    %v629 = vunpack.c.l.b16 %v325
    %v630 = vunpack.c.h.b16 %v325
    %v631 = vunpack.c.l.b16 %v326
    %v632 = vunpack.c.h.b16 %v326
    %v633 = vunpack.c.l.b16 %v327
    %v634 = vunpack.c.h.b16 %v327
    %v635 = vunpack.c.l.b16 %v328
    %v636 = vunpack.c.h.b16 %v328
    %v637 = vunpack.c.l.b16 %v329
    %v638 = vunpack.c.h.b16 %v329
    %v639 = vunpack.c.l.b16 %v330
    %v640 = vunpack.c.h.b16 %v330
    %v641 = vunpack.c.l.b16 %v331
    %v642 = vunpack.c.h.b16 %v331
    %v643 = vunpack.c.l.b16 %v332
    %v644 = vunpack.c.h.b16 %v332
    %v645 = vunpack.c.l.b16 %v333
    %v646 = vunpack.c.h.b16 %v333
    %v647 = vunpack.c.l.b16 %v334
    %v648 = vunpack.c.h.b16 %v334
    %v649 = vunpack.c.l.b16 %v335
    %v650 = vunpack.c.h.b16 %v335
    %v651 = vunpack.c.l.b16 %v336
    %v652 = vunpack.c.h.b16 %v336
    %v653 = vunpack.c.l.b16 %v337
    %v654 = vunpack.c.h.b16 %v337
    %v655 = vunpack.c.l.b16 %v338
    %v656 = vunpack.c.h.b16 %v338
    %v657 = vunpack.c.l.b16 %v339
    %v658 = vunpack.c.h.b16 %v339
    %v659 = vunpack.c.l.b16 %v340
    %v660 = vunpack.c.h.b16 %v340
    %v661 = vunpack.c.l.b16 %v341
    %v662 = vunpack.c.h.b16 %v341
    %v663 = vpack.c.b16 %v473, %v471
    %v664 = vpack.c.b16 %v474, %v472
    %v665 = vpack.c.b16 %v477, %v475
    %v666 = vpack.c.b16 %v478, %v476
    %v667 = vpack.c.b16 %v481, %v479
    %v668 = vpack.c.b16 %v482, %v480
    %v669 = vpack.c.b16 %v485, %v483
    %v670 = vpack.c.b16 %v486, %v484
    %v671 = vpack.c.b16 %v489, %v487
    %v672 = vpack.c.b16 %v490, %v488
    %v673 = vpack.c.b16 %v493, %v491
    %v674 = vpack.c.b16 %v494, %v492
    %v675 = vpack.c.b16 %v497, %v495
    %v676 = vpack.c.b16 %v498, %v496
    %v677 = vpack.c.b16 %v501, %v499
    %v678 = vpack.c.b16 %v502, %v500
    %v679 = vpack.c.b16 %v505, %v503
    %v680 = vpack.c.b16 %v506, %v504
    %v681 = vpack.c.b16 %v509, %v507
    %v682 = vpack.c.b16 %v510, %v508
    %v683 = vpack.c.b16 %v513, %v511
    %v684 = vpack.c.b16 %v514, %v512
    %v685 = vpack.c.b16 %v517, %v515
    %v686 = vpack.c.b16 %v518, %v516
    %v687 = vpack.c.b16 %v521, %v519
    %v688 = vpack.c.b16 %v522, %v520
    %v689 = vpack.c.b16 %v525, %v523
    %v690 = vpack.c.b16 %v526, %v524
    %v691 = vpack.c.b16 %v529, %v527
    %v692 = vpack.c.b16 %v530, %v528
    %v693 = vpack.c.b16 %v533, %v531
    %v694 = vpack.c.b16 %v534, %v532
    %v695 = vpack.c.b16 %v537, %v535
    %v696 = vpack.c.b16 %v538, %v536
    %v697 = vpack.c.b16 %v541, %v539
    %v698 = vpack.c.b16 %v542, %v540
    %v699 = vpack.c.b16 %v545, %v543
    %v700 = vpack.c.b16 %v546, %v544
    %v701 = vpack.c.b16 %v549, %v547
    %v702 = vpack.c.b16 %v550, %v548
    %v703 = vpack.c.b16 %v553, %v551
    %v704 = vpack.c.b16 %v554, %v552
    %v705 = vpack.c.b16 %v557, %v555
    %v706 = vpack.c.b16 %v558, %v556
    %v707 = vpack.c.b16 %v561, %v559
    %v708 = vpack.c.b16 %v562, %v560
    %v709 = vpack.c.b16 %v565, %v563
    %v710 = vpack.c.b16 %v566, %v564
    %v711 = vpack.c.b16 %v569, %v567
    %v712 = vpack.c.b16 %v570, %v568
    %v713 = vpack.c.b16 %v573, %v571
    %v714 = vpack.c.b16 %v574, %v572
    %v715 = vpack.c.b16 %v577, %v575
    %v716 = vpack.c.b16 %v578, %v576
    %v717 = vpack.c.b16 %v581, %v579
    %v718 = vpack.c.b16 %v582, %v580
    %v719 = vpack.c.b16 %v585, %v583
    %v720 = vpack.c.b16 %v586, %v584
    %v721 = vpack.c.b16 %v589, %v587
    %v722 = vpack.c.b16 %v590, %v588
    %v723 = vpack.c.b16 %v593, %v591
    %v724 = vpack.c.b16 %v594, %v592
    %v725 = vpack.c.b16 %v597, %v595
    %v726 = vpack.c.b16 %v598, %v596
    %v727 = vpack.c.b16 %v601, %v599
    %v728 = vpack.c.b16 %v602, %v600
    %v729 = vpack.c.b16 %v605, %v603
    %v730 = vpack.c.b16 %v606, %v604
    %v731 = vpack.c.b16 %v609, %v607
    %v732 = vpack.c.b16 %v610, %v608
    %v733 = vpack.c.b16 %v613, %v611
    %v734 = vpack.c.b16 %v614, %v612
    %v735 = vpack.c.b16 %v617, %v615
    %v736 = vpack.c.b16 %v618, %v616
    %v737 = vpack.c.b16 %v621, %v619
    %v738 = vpack.c.b16 %v622, %v620
    %v739 = vpack.c.b16 %v625, %v623
    %v740 = vpack.c.b16 %v626, %v624
    %v741 = vpack.c.b16 %v629, %v627
    %v742 = vpack.c.b16 %v630, %v628
    %v743 = vpack.c.b16 %v633, %v631
    %v744 = vpack.c.b16 %v634, %v632
    %v745 = vpack.c.b16 %v637, %v635
    %v746 = vpack.c.b16 %v638, %v636
    %v747 = vpack.c.b16 %v641, %v639
    %v748 = vpack.c.b16 %v642, %v640
    %v749 = vpack.c.b16 %v645, %v643
    %v750 = vpack.c.b16 %v646, %v644
    %v751 = vpack.c.b16 %v649, %v647
    %v752 = vpack.c.b16 %v650, %v648
    %v753 = vpack.c.b16 %v653, %v651
    %v754 = vpack.c.b16 %v654, %v652
    %v755 = vpack.c.b16 %v657, %v655
    %v756 = vpack.c.b16 %v658, %v656
    %v757 = vpack.c.b16 %v661, %v659
    %v758 = vpack.c.b16 %v662, %v660
    %855 = vmatprep.subr.bf16.mxu0 %v678
    %856 = vmatpush1.bf16.msra.mxu0 %v677
    %857 = vmatprep.subr.bf16.mxu0 %v676
    %858 = vmatpush1.bf16.msra.mxu0 %v675
    %859 = vmatprep.subr.bf16.mxu0 %v674
    %860 = vmatpush1.bf16.msra.mxu0 %v673
    %861 = vmatprep.subr.bf16.mxu0 %v672
    %862 = vmatpush1.bf16.msra.mxu0 %v671
    %863 = vmatprep.subr.bf16.mxu0 %v670
    %864 = vmatpush1.bf16.msra.mxu0 %v669
    %865 = vmatprep.subr.bf16.mxu0 %v668
    %866 = vmatpush1.bf16.msra.mxu0 %v667
    %867 = vmatprep.subr.bf16.mxu0 %v666
    %868 = vmatpush1.bf16.msra.mxu0 %v665
    %869 = vmatprep.subr.bf16.mxu0 %v664
    %870 = vmatpush1.bf16.msra.mxu0 %v663
    %871 = vmatprep.subr.bf16.mxu0 %v694
    %872 = vmatpush2.bf16.msra.mxu0 %v693
    %873 = vmatprep.subr.bf16.mxu0 %v692
    %874 = vmatpush2.bf16.msra.mxu0 %v691
    %875 = vmatprep.subr.bf16.mxu0 %v690
    %876 = vmatpush2.bf16.msra.mxu0 %v689
    %877 = vmatprep.subr.bf16.mxu0 %v688
    %878 = vmatpush2.bf16.msra.mxu0 %v687
    %879 = vmatprep.subr.bf16.mxu0 %v686
    %880 = vmatpush2.bf16.msra.mxu0 %v685
    %881 = vmatprep.subr.bf16.mxu0 %v684
    %882 = vmatpush2.bf16.msra.mxu0 %v683
    %883 = vmatprep.subr.bf16.mxu0 %v682
    %884 = vmatpush2.bf16.msra.mxu0 %v681
    %885 = vmatprep.subr.bf16.mxu0 %v680
    %886 = vmatpush2.bf16.msra.mxu0 %v679
    %887 = vmatprep.mubr.bf16.mxu0 %v364
    %888 = vmatmul.mubr.bf16.gmra.mxu0 %v363
    %v889 = vpop.f32.mrf.mxu0
    %v890 = vadd.f32 %v347, %v889
    %v891 = vpop.f32.mrf.mxu0
    %v892 = vadd.f32 %v351, %v891
    %v893 = vpop.f32.mrf.mxu0
    %v894 = vpop.f32.mrf.mxu0
    %895 = vdwg.mxu0
    %896 = vmatprep.subr.bf16.mxu0 %v710
    %897 = vmatpush1.bf16.msra.mxu0 %v709
    %898 = vmatprep.subr.bf16.mxu0 %v708
    %899 = vmatpush1.bf16.msra.mxu0 %v707
    %900 = vmatprep.subr.bf16.mxu0 %v706
    %901 = vmatpush1.bf16.msra.mxu0 %v705
    %902 = vmatprep.subr.bf16.mxu0 %v704
    %903 = vmatpush1.bf16.msra.mxu0 %v703
    %904 = vmatprep.subr.bf16.mxu0 %v702
    %905 = vmatpush1.bf16.msra.mxu0 %v701
    %906 = vmatprep.subr.bf16.mxu0 %v700
    %907 = vmatpush1.bf16.msra.mxu0 %v699
    %908 = vmatprep.subr.bf16.mxu0 %v698
    %909 = vmatpush1.bf16.msra.mxu0 %v697
    %910 = vmatprep.subr.bf16.mxu0 %v696
    %911 = vmatpush1.bf16.msra.mxu0 %v695
    %912 = vmatprep.subr.bf16.mxu0 %v726
    %913 = vmatpush2.bf16.msra.mxu0 %v725
    %914 = vmatprep.subr.bf16.mxu0 %v724
    %915 = vmatpush2.bf16.msra.mxu0 %v723
    %916 = vmatprep.subr.bf16.mxu0 %v722
    %917 = vmatpush2.bf16.msra.mxu0 %v721
    %918 = vmatprep.subr.bf16.mxu0 %v720
    %919 = vmatpush2.bf16.msra.mxu0 %v719
    %920 = vmatprep.subr.bf16.mxu0 %v718
    %921 = vmatpush2.bf16.msra.mxu0 %v717
    %922 = vmatprep.subr.bf16.mxu0 %v716
    %923 = vmatpush2.bf16.msra.mxu0 %v715
    %924 = vmatprep.subr.bf16.mxu0 %v714
    %925 = vmatpush2.bf16.msra.mxu0 %v713
    %926 = vmatprep.subr.bf16.mxu0 %v712
    %927 = vmatpush2.bf16.msra.mxu0 %v711
    %928 = vmatprep.mubr.bf16.mxu0 %v366
    %929 = vmatmul.mubr.bf16.gmra.mxu0 %v365
    %v930 = vpop.f32.mrf.mxu0
    %v931 = vadd.f32 %v890, %v930
    %v932 = vpop.f32.mrf.mxu0
    %v933 = vadd.f32 %v892, %v932
    %v934 = vpop.f32.mrf.mxu0
    %v935 = vpop.f32.mrf.mxu0
    %936 = vdwg.mxu0
    %937 = vmatprep.subr.bf16.mxu0 %v742
    %938 = vmatpush1.bf16.msra.mxu0 %v741
    %939 = vmatprep.subr.bf16.mxu0 %v740
    %940 = vmatpush1.bf16.msra.mxu0 %v739
    %941 = vmatprep.subr.bf16.mxu0 %v738
    %942 = vmatpush1.bf16.msra.mxu0 %v737
    %943 = vmatprep.subr.bf16.mxu0 %v736
    %944 = vmatpush1.bf16.msra.mxu0 %v735
    %945 = vmatprep.subr.bf16.mxu0 %v734
    %946 = vmatpush1.bf16.msra.mxu0 %v733
    %947 = vmatprep.subr.bf16.mxu0 %v732
    %948 = vmatpush1.bf16.msra.mxu0 %v731
    %949 = vmatprep.subr.bf16.mxu0 %v730
    %950 = vmatpush1.bf16.msra.mxu0 %v729
    %951 = vmatprep.subr.bf16.mxu0 %v728
    %952 = vmatpush1.bf16.msra.mxu0 %v727
    %953 = vmatprep.subr.bf16.mxu0 %v758
    %954 = vmatpush2.bf16.msra.mxu0 %v757
    %955 = vmatprep.subr.bf16.mxu0 %v756
    %956 = vmatpush2.bf16.msra.mxu0 %v755
    %957 = vmatprep.subr.bf16.mxu0 %v754
    %958 = vmatpush2.bf16.msra.mxu0 %v753
    %959 = vmatprep.subr.bf16.mxu0 %v752
    %960 = vmatpush2.bf16.msra.mxu0 %v751
    %961 = vmatprep.subr.bf16.mxu0 %v750
    %962 = vmatpush2.bf16.msra.mxu0 %v749
    %963 = vmatprep.subr.bf16.mxu0 %v748
    %964 = vmatpush2.bf16.msra.mxu0 %v747
    %965 = vmatprep.subr.bf16.mxu0 %v746
    %966 = vmatpush2.bf16.msra.mxu0 %v745
    %967 = vmatprep.subr.bf16.mxu0 %v744
    %968 = vmatpush2.bf16.msra.mxu0 %v743
    %969 = vmatprep.mubr.bf16.mxu0 %v368
    %970 = vmatmul.mubr.bf16.gmra.mxu0 %v367
    %v971 = vpop.f32.mrf.mxu0
    %v972 = vadd.f32 %v931, %v971
    %v973 = vpop.f32.mrf.mxu0
    %v974 = vadd.f32 %v933, %v973
    %v975 = vpop.f32.mrf.mxu0
    %v976 = vpop.f32.mrf.mxu0
    %977 = vdwg.mxu0
    %v978 = vmax.f32 %v972, 0.0
    %v979 = vmax.f32 %v974, 0.0
    %v980 = vld [vmem:[%s0] sm:$0xff]
    %v981 = vpack.c.bf16 %v980, %v980
    %v982 = vpack.c.bf16 %v242, %v242
    %v983 = vpack.c.bf16 %v978, %v978
    %v984 = vpack.c.bf16 %v979, %v979
    %v985 = vld [vmem:[%s3] sm:$0xff]
    %v986 = vld [vmem:[%s3 + $0x8] sm:$0xff]
    %v987 = vld [vmem:[%s3 + $0x10] sm:$0xff]
    %v988 = vld [vmem:[%s3 + $0x18] sm:$0xff]
    %v989 = vld [vmem:[%s4] sm:$0xff]
    %991 = vset.pattern.permute.xlu0 0
    %992 = vperm.xlu0 %991, %v989
    %v993 = vpop.permute.xlu0 %992
    %v995 = vmul.f32 %v985, %v993
    %v996 = vmul.f32 %v986, %v993
    %v997 = vmul.f32 %v987, %v993
    %v998 = vmul.f32 %v988, %v993
    %v999 = vld [vmem:[%s9] sm:$0xff]
    %v1000 = vld [vmem:[%s9 + $0x8] sm:$0xff]
    %v1001 = vld [vmem:[%s9 + $0x10] sm:$0xff]
    %v1002 = vld [vmem:[%s9 + $0x18] sm:$0xff]
    %v1003 = vld [vmem:[%s9 + $0x20] sm:$0xff]
    %v1004 = vld [vmem:[%s9 + $0x28] sm:$0xff]
    %v1005 = vld [vmem:[%s9 + $0x30] sm:$0xff]
    %v1006 = vld [vmem:[%s9 + $0x38] sm:$0xff]
    %v1007 = vld [vmem:[%s9 + $0x40] sm:$0xff]
    %v1008 = vld [vmem:[%s9 + $0x48] sm:$0xff]
    %v1009 = vld [vmem:[%s9 + $0x50] sm:$0xff]
    %v1010 = vld [vmem:[%s9 + $0x58] sm:$0xff]
    %v1011 = vld [vmem:[%s9 + $0x60] sm:$0xff]
    %v1012 = vld [vmem:[%s9 + $0x68] sm:$0xff]
    %v1013 = vld [vmem:[%s9 + $0x70] sm:$0xff]
    %v1014 = vld [vmem:[%s9 + $0x78] sm:$0xff]
    %v1015 = vld [vmem:[%s9 + $0x80] sm:$0xff]
    %v1016 = vld [vmem:[%s9 + $0x88] sm:$0xff]
    %v1017 = vld [vmem:[%s9 + $0x90] sm:$0xff]
    %v1018 = vld [vmem:[%s9 + $0x98] sm:$0xff]
    %v1019 = vld [vmem:[%s9 + $0xa0] sm:$0xff]
    %v1020 = vld [vmem:[%s9 + $0xa8] sm:$0xff]
    %v1021 = vld [vmem:[%s9 + $0xb0] sm:$0xff]
    %v1022 = vld [vmem:[%s9 + $0xb8] sm:$0xff]
    %v1023 = vld [vmem:[%s9 + $0xc0] sm:$0xff]
    %v1024 = vld [vmem:[%s9 + $0xc8] sm:$0xff]
    %v1025 = vld [vmem:[%s9 + $0xd0] sm:$0xff]
    %v1026 = vld [vmem:[%s9 + $0xd8] sm:$0xff]
    %v1027 = vld [vmem:[%s9 + $0xe0] sm:$0xff]
    %v1028 = vld [vmem:[%s9 + $0xe8] sm:$0xff]
    %v1029 = vld [vmem:[%s9 + $0xf0] sm:$0xff]
    %v1030 = vld [vmem:[%s9 + $0xf8] sm:$0xff]
    %v1031 = vld [vmem:[%s9 + $0x100] sm:$0xff]
    %v1032 = vld [vmem:[%s9 + $0x108] sm:$0xff]
    %v1033 = vld [vmem:[%s9 + $0x110] sm:$0xff]
    %v1034 = vld [vmem:[%s9 + $0x118] sm:$0xff]
    %v1035 = vld [vmem:[%s9 + $0x120] sm:$0xff]
    %v1036 = vld [vmem:[%s9 + $0x128] sm:$0xff]
    %v1037 = vld [vmem:[%s9 + $0x130] sm:$0xff]
    %v1038 = vld [vmem:[%s9 + $0x138] sm:$0xff]
    %v1039 = vld [vmem:[%s9 + $0x140] sm:$0xff]
    %v1040 = vld [vmem:[%s9 + $0x148] sm:$0xff]
    %v1041 = vld [vmem:[%s9 + $0x150] sm:$0xff]
    %v1042 = vld [vmem:[%s9 + $0x158] sm:$0xff]
    %v1043 = vld [vmem:[%s9 + $0x160] sm:$0xff]
    %v1044 = vld [vmem:[%s9 + $0x168] sm:$0xff]
    %v1045 = vld [vmem:[%s9 + $0x170] sm:$0xff]
    %v1046 = vld [vmem:[%s9 + $0x178] sm:$0xff]
    %v1047 = vld [vmem:[%s9 + $0x180] sm:$0xff]
    %v1048 = vld [vmem:[%s9 + $0x188] sm:$0xff]
    %v1049 = vld [vmem:[%s9 + $0x190] sm:$0xff]
    %v1050 = vld [vmem:[%s9 + $0x198] sm:$0xff]
    %v1051 = vld [vmem:[%s9 + $0x1a0] sm:$0xff]
    %v1052 = vld [vmem:[%s9 + $0x1a8] sm:$0xff]
    %v1053 = vld [vmem:[%s9 + $0x1b0] sm:$0xff]
    %v1054 = vld [vmem:[%s9 + $0x1b8] sm:$0xff]
    %v1055 = vld [vmem:[%s9 + $0x1c0] sm:$0xff]
    %v1056 = vld [vmem:[%s9 + $0x1c8] sm:$0xff]
    %v1057 = vld [vmem:[%s9 + $0x1d0] sm:$0xff]
    %v1058 = vld [vmem:[%s9 + $0x1d8] sm:$0xff]
    %v1059 = vld [vmem:[%s9 + $0x1e0] sm:$0xff]
    %v1060 = vld [vmem:[%s9 + $0x1e8] sm:$0xff]
    %v1061 = vld [vmem:[%s9 + $0x1f0] sm:$0xff]
    %v1062 = vld [vmem:[%s9 + $0x1f8] sm:$0xff]
    %v1063 = vld [vmem:[%s9 + $0x200] sm:$0xff]
    %v1064 = vld [vmem:[%s9 + $0x208] sm:$0xff]
    %v1065 = vld [vmem:[%s9 + $0x210] sm:$0xff]
    %v1066 = vld [vmem:[%s9 + $0x218] sm:$0xff]
    %v1067 = vld [vmem:[%s9 + $0x220] sm:$0xff]
    %v1068 = vld [vmem:[%s9 + $0x228] sm:$0xff]
    %v1069 = vld [vmem:[%s9 + $0x230] sm:$0xff]
    %v1070 = vld [vmem:[%s9 + $0x238] sm:$0xff]
    %v1071 = vld [vmem:[%s9 + $0x240] sm:$0xff]
    %v1072 = vld [vmem:[%s9 + $0x248] sm:$0xff]
    %v1073 = vld [vmem:[%s9 + $0x250] sm:$0xff]
    %v1074 = vld [vmem:[%s9 + $0x258] sm:$0xff]
    %v1075 = vld [vmem:[%s9 + $0x260] sm:$0xff]
    %v1076 = vld [vmem:[%s9 + $0x268] sm:$0xff]
    %v1077 = vld [vmem:[%s9 + $0x270] sm:$0xff]
    %v1078 = vld [vmem:[%s9 + $0x278] sm:$0xff]
    %v1079 = vld [vmem:[%s9 + $0x280] sm:$0xff]
    %v1080 = vld [vmem:[%s9 + $0x288] sm:$0xff]
    %v1081 = vld [vmem:[%s9 + $0x290] sm:$0xff]
    %v1082 = vld [vmem:[%s9 + $0x298] sm:$0xff]
    %v1083 = vld [vmem:[%s9 + $0x2a0] sm:$0xff]
    %v1084 = vld [vmem:[%s9 + $0x2a8] sm:$0xff]
    %v1085 = vld [vmem:[%s9 + $0x2b0] sm:$0xff]
    %v1086 = vld [vmem:[%s9 + $0x2b8] sm:$0xff]
    %v1087 = vld [vmem:[%s9 + $0x2c0] sm:$0xff]
    %v1088 = vld [vmem:[%s9 + $0x2c8] sm:$0xff]
    %v1089 = vld [vmem:[%s9 + $0x2d0] sm:$0xff]
    %v1090 = vld [vmem:[%s9 + $0x2d8] sm:$0xff]
    %v1091 = vld [vmem:[%s9 + $0x2e0] sm:$0xff]
    %v1092 = vld [vmem:[%s9 + $0x2e8] sm:$0xff]
    %v1093 = vld [vmem:[%s9 + $0x2f0] sm:$0xff]
    %v1094 = vld [vmem:[%s9 + $0x2f8] sm:$0xff]
    %v1095 = vld [vmem:[%s9 + $0x300] sm:$0xff]
    %v1096 = vld [vmem:[%s9 + $0x308] sm:$0xff]
    %v1097 = vld [vmem:[%s9 + $0x310] sm:$0xff]
    %v1098 = vld [vmem:[%s9 + $0x318] sm:$0xff]
    %v1099 = vld [vmem:[%s9 + $0x320] sm:$0xff]
    %v1100 = vld [vmem:[%s9 + $0x328] sm:$0xff]
    %v1101 = vld [vmem:[%s9 + $0x330] sm:$0xff]
    %v1102 = vld [vmem:[%s9 + $0x338] sm:$0xff]
    %v1103 = vld [vmem:[%s9 + $0x340] sm:$0xff]
    %v1104 = vld [vmem:[%s9 + $0x348] sm:$0xff]
    %v1105 = vld [vmem:[%s9 + $0x350] sm:$0xff]
    %v1106 = vld [vmem:[%s9 + $0x358] sm:$0xff]
    %v1107 = vld [vmem:[%s9 + $0x360] sm:$0xff]
    %v1108 = vld [vmem:[%s9 + $0x368] sm:$0xff]
    %v1109 = vld [vmem:[%s9 + $0x370] sm:$0xff]
    %v1110 = vld [vmem:[%s9 + $0x378] sm:$0xff]
    %v1111 = vld [vmem:[%s9 + $0x380] sm:$0xff]
    %v1112 = vld [vmem:[%s9 + $0x388] sm:$0xff]
    %v1113 = vld [vmem:[%s9 + $0x390] sm:$0xff]
    %v1114 = vld [vmem:[%s9 + $0x398] sm:$0xff]
    %v1115 = vld [vmem:[%s9 + $0x3a0] sm:$0xff]
    %v1116 = vld [vmem:[%s9 + $0x3a8] sm:$0xff]
    %v1117 = vld [vmem:[%s9 + $0x3b0] sm:$0xff]
    %v1118 = vld [vmem:[%s9 + $0x3b8] sm:$0xff]
    %v1119 = vld [vmem:[%s9 + $0x3c0] sm:$0xff]
    %v1120 = vld [vmem:[%s9 + $0x3c8] sm:$0xff]
    %v1121 = vld [vmem:[%s9 + $0x3d0] sm:$0xff]
    %v1122 = vld [vmem:[%s9 + $0x3d8] sm:$0xff]
    %v1123 = vld [vmem:[%s9 + $0x3e0] sm:$0xff]
    %v1124 = vld [vmem:[%s9 + $0x3e8] sm:$0xff]
    %v1125 = vld [vmem:[%s9 + $0x3f0] sm:$0xff]
    %v1126 = vld [vmem:[%s9 + $0x3f8] sm:$0xff]
    %v1127 = vld [vmem:[%s9 + $0x400] sm:$0xff]
    %v1128 = vld [vmem:[%s9 + $0x408] sm:$0xff]
    %v1129 = vld [vmem:[%s9 + $0x410] sm:$0xff]
    %v1130 = vld [vmem:[%s9 + $0x418] sm:$0xff]
    %v1131 = vld [vmem:[%s9 + $0x420] sm:$0xff]
    %v1132 = vld [vmem:[%s9 + $0x428] sm:$0xff]
    %v1133 = vld [vmem:[%s9 + $0x430] sm:$0xff]
    %v1134 = vld [vmem:[%s9 + $0x438] sm:$0xff]
    %v1135 = vld [vmem:[%s9 + $0x440] sm:$0xff]
    %v1136 = vld [vmem:[%s9 + $0x448] sm:$0xff]
    %v1137 = vld [vmem:[%s9 + $0x450] sm:$0xff]
    %v1138 = vld [vmem:[%s9 + $0x458] sm:$0xff]
    %v1139 = vld [vmem:[%s9 + $0x460] sm:$0xff]
    %v1140 = vld [vmem:[%s9 + $0x468] sm:$0xff]
    %v1141 = vld [vmem:[%s9 + $0x470] sm:$0xff]
    %v1142 = vld [vmem:[%s9 + $0x478] sm:$0xff]
    %v1143 = vld [vmem:[%s9 + $0x480] sm:$0xff]
    %v1144 = vld [vmem:[%s9 + $0x488] sm:$0xff]
    %v1145 = vld [vmem:[%s9 + $0x490] sm:$0xff]
    %v1146 = vld [vmem:[%s9 + $0x498] sm:$0xff]
    %v1147 = vld [vmem:[%s9 + $0x4a0] sm:$0xff]
    %v1148 = vld [vmem:[%s9 + $0x4a8] sm:$0xff]
    %v1149 = vld [vmem:[%s9 + $0x4b0] sm:$0xff]
    %v1150 = vld [vmem:[%s9 + $0x4b8] sm:$0xff]
    %v1151 = vld [vmem:[%s9 + $0x4c0] sm:$0xff]
    %v1152 = vld [vmem:[%s9 + $0x4c8] sm:$0xff]
    %v1153 = vld [vmem:[%s9 + $0x4d0] sm:$0xff]
    %v1154 = vld [vmem:[%s9 + $0x4d8] sm:$0xff]
    %v1155 = vld [vmem:[%s9 + $0x4e0] sm:$0xff]
    %v1156 = vld [vmem:[%s9 + $0x4e8] sm:$0xff]
    %v1157 = vld [vmem:[%s9 + $0x4f0] sm:$0xff]
    %v1158 = vld [vmem:[%s9 + $0x4f8] sm:$0xff]
    %v1159 = vld [vmem:[%s9 + $0x500] sm:$0xff]
    %v1160 = vld [vmem:[%s9 + $0x508] sm:$0xff]
    %v1161 = vld [vmem:[%s9 + $0x510] sm:$0xff]
    %v1162 = vld [vmem:[%s9 + $0x518] sm:$0xff]
    %v1163 = vld [vmem:[%s9 + $0x520] sm:$0xff]
    %v1164 = vld [vmem:[%s9 + $0x528] sm:$0xff]
    %v1165 = vld [vmem:[%s9 + $0x530] sm:$0xff]
    %v1166 = vld [vmem:[%s9 + $0x538] sm:$0xff]
    %v1167 = vld [vmem:[%s9 + $0x540] sm:$0xff]
    %v1168 = vld [vmem:[%s9 + $0x548] sm:$0xff]
    %v1169 = vld [vmem:[%s9 + $0x550] sm:$0xff]
    %v1170 = vld [vmem:[%s9 + $0x558] sm:$0xff]
    %v1171 = vld [vmem:[%s9 + $0x560] sm:$0xff]
    %v1172 = vld [vmem:[%s9 + $0x568] sm:$0xff]
    %v1173 = vld [vmem:[%s9 + $0x570] sm:$0xff]
    %v1174 = vld [vmem:[%s9 + $0x578] sm:$0xff]
    %v1175 = vld [vmem:[%s9 + $0x580] sm:$0xff]
    %v1176 = vld [vmem:[%s9 + $0x588] sm:$0xff]
    %v1177 = vld [vmem:[%s9 + $0x590] sm:$0xff]
    %v1178 = vld [vmem:[%s9 + $0x598] sm:$0xff]
    %v1179 = vld [vmem:[%s9 + $0x5a0] sm:$0xff]
    %v1180 = vld [vmem:[%s9 + $0x5a8] sm:$0xff]
    %v1181 = vld [vmem:[%s9 + $0x5b0] sm:$0xff]
    %v1182 = vld [vmem:[%s9 + $0x5b8] sm:$0xff]
    %v1183 = vld [vmem:[%s9 + $0x5c0] sm:$0xff]
    %v1184 = vld [vmem:[%s9 + $0x5c8] sm:$0xff]
    %v1185 = vld [vmem:[%s9 + $0x5d0] sm:$0xff]
    %v1186 = vld [vmem:[%s9 + $0x5d8] sm:$0xff]
    %v1187 = vld [vmem:[%s9 + $0x5e0] sm:$0xff]
    %v1188 = vld [vmem:[%s9 + $0x5e8] sm:$0xff]
    %v1189 = vld [vmem:[%s9 + $0x5f0] sm:$0xff]
    %v1190 = vld [vmem:[%s9 + $0x5f8] sm:$0xff]
    %v1191 = vld [vmem:[%s9 + $0x600] sm:$0xff]
    %v1192 = vld [vmem:[%s9 + $0x608] sm:$0xff]
    %v1193 = vld [vmem:[%s9 + $0x610] sm:$0xff]
    %v1194 = vld [vmem:[%s9 + $0x618] sm:$0xff]
    %v1195 = vld [vmem:[%s9 + $0x620] sm:$0xff]
    %v1196 = vld [vmem:[%s9 + $0x628] sm:$0xff]
    %v1197 = vld [vmem:[%s9 + $0x630] sm:$0xff]
    %v1198 = vld [vmem:[%s9 + $0x638] sm:$0xff]
    %v1199 = vld [vmem:[%s9 + $0x640] sm:$0xff]
    %v1200 = vld [vmem:[%s9 + $0x648] sm:$0xff]
    %v1201 = vld [vmem:[%s9 + $0x650] sm:$0xff]
    %v1202 = vld [vmem:[%s9 + $0x658] sm:$0xff]
    %v1203 = vld [vmem:[%s9 + $0x660] sm:$0xff]
    %v1204 = vld [vmem:[%s9 + $0x668] sm:$0xff]
    %v1205 = vld [vmem:[%s9 + $0x670] sm:$0xff]
    %v1206 = vld [vmem:[%s9 + $0x678] sm:$0xff]
    %v1207 = vld [vmem:[%s9 + $0x680] sm:$0xff]
    %v1208 = vld [vmem:[%s9 + $0x688] sm:$0xff]
    %v1209 = vld [vmem:[%s9 + $0x690] sm:$0xff]
    %v1210 = vld [vmem:[%s9 + $0x698] sm:$0xff]
    %v1211 = vld [vmem:[%s9 + $0x6a0] sm:$0xff]
    %v1212 = vld [vmem:[%s9 + $0x6a8] sm:$0xff]
    %v1213 = vld [vmem:[%s9 + $0x6b0] sm:$0xff]
    %v1214 = vld [vmem:[%s9 + $0x6b8] sm:$0xff]
    %v1215 = vld [vmem:[%s9 + $0x6c0] sm:$0xff]
    %v1216 = vld [vmem:[%s9 + $0x6c8] sm:$0xff]
    %v1217 = vld [vmem:[%s9 + $0x6d0] sm:$0xff]
    %v1218 = vld [vmem:[%s9 + $0x6d8] sm:$0xff]
    %v1219 = vld [vmem:[%s9 + $0x6e0] sm:$0xff]
    %v1220 = vld [vmem:[%s9 + $0x6e8] sm:$0xff]
    %v1221 = vld [vmem:[%s9 + $0x6f0] sm:$0xff]
    %v1222 = vld [vmem:[%s9 + $0x6f8] sm:$0xff]
    %v1223 = vld [vmem:[%s9 + $0x700] sm:$0xff]
    %v1224 = vld [vmem:[%s9 + $0x708] sm:$0xff]
    %v1225 = vld [vmem:[%s9 + $0x710] sm:$0xff]
    %v1226 = vld [vmem:[%s9 + $0x718] sm:$0xff]
    %v1227 = vld [vmem:[%s9 + $0x720] sm:$0xff]
    %v1228 = vld [vmem:[%s9 + $0x728] sm:$0xff]
    %v1229 = vld [vmem:[%s9 + $0x730] sm:$0xff]
    %v1230 = vld [vmem:[%s9 + $0x738] sm:$0xff]
    %v1231 = vld [vmem:[%s9 + $0x740] sm:$0xff]
    %v1232 = vld [vmem:[%s9 + $0x748] sm:$0xff]
    %v1233 = vld [vmem:[%s9 + $0x750] sm:$0xff]
    %v1234 = vld [vmem:[%s9 + $0x758] sm:$0xff]
    %v1235 = vld [vmem:[%s9 + $0x760] sm:$0xff]
    %v1236 = vld [vmem:[%s9 + $0x768] sm:$0xff]
    %v1237 = vld [vmem:[%s9 + $0x770] sm:$0xff]
    %v1238 = vld [vmem:[%s9 + $0x778] sm:$0xff]
    %v1239 = vld [vmem:[%s9 + $0x780] sm:$0xff]
    %v1240 = vld [vmem:[%s9 + $0x788] sm:$0xff]
    %v1241 = vld [vmem:[%s9 + $0x790] sm:$0xff]
    %v1242 = vld [vmem:[%s9 + $0x798] sm:$0xff]
    %v1243 = vld [vmem:[%s9 + $0x7a0] sm:$0xff]
    %v1244 = vld [vmem:[%s9 + $0x7a8] sm:$0xff]
    %v1245 = vld [vmem:[%s9 + $0x7b0] sm:$0xff]
    %v1246 = vld [vmem:[%s9 + $0x7b8] sm:$0xff]
    %v1247 = vld [vmem:[%s9 + $0x7c0] sm:$0xff]
    %v1248 = vld [vmem:[%s9 + $0x7c8] sm:$0xff]
    %v1249 = vld [vmem:[%s9 + $0x7d0] sm:$0xff]
    %v1250 = vld [vmem:[%s9 + $0x7d8] sm:$0xff]
    %v1251 = vld [vmem:[%s9 + $0x7e0] sm:$0xff]
    %v1252 = vld [vmem:[%s9 + $0x7e8] sm:$0xff]
    %v1253 = vld [vmem:[%s9 + $0x7f0] sm:$0xff]
    %v1254 = vld [vmem:[%s9 + $0x7f8] sm:$0xff]
    %v1255 = vld [vmem:[%s9 + $0x800] sm:$0xff]
    %v1256 = vld [vmem:[%s9 + $0x808] sm:$0xff]
    %v1257 = vld [vmem:[%s9 + $0x810] sm:$0xff]
    %v1258 = vld [vmem:[%s9 + $0x818] sm:$0xff]
    %v1259 = vld [vmem:[%s9 + $0x820] sm:$0xff]
    %v1260 = vld [vmem:[%s9 + $0x828] sm:$0xff]
    %v1261 = vld [vmem:[%s9 + $0x830] sm:$0xff]
    %v1262 = vld [vmem:[%s9 + $0x838] sm:$0xff]
    %v1263 = vld [vmem:[%s9 + $0x840] sm:$0xff]
    %v1264 = vld [vmem:[%s9 + $0x848] sm:$0xff]
    %v1265 = vld [vmem:[%s9 + $0x850] sm:$0xff]
    %v1266 = vld [vmem:[%s9 + $0x858] sm:$0xff]
    %v1267 = vld [vmem:[%s9 + $0x860] sm:$0xff]
    %v1268 = vld [vmem:[%s9 + $0x868] sm:$0xff]
    %v1269 = vld [vmem:[%s9 + $0x870] sm:$0xff]
    %v1270 = vld [vmem:[%s9 + $0x878] sm:$0xff]
    %v1271 = vld [vmem:[%s9 + $0x880] sm:$0xff]
    %v1272 = vld [vmem:[%s9 + $0x888] sm:$0xff]
    %v1273 = vld [vmem:[%s9 + $0x890] sm:$0xff]
    %v1274 = vld [vmem:[%s9 + $0x898] sm:$0xff]
    %v1275 = vld [vmem:[%s9 + $0x8a0] sm:$0xff]
    %v1276 = vld [vmem:[%s9 + $0x8a8] sm:$0xff]
    %v1277 = vld [vmem:[%s9 + $0x8b0] sm:$0xff]
    %v1278 = vld [vmem:[%s9 + $0x8b8] sm:$0xff]
    %v1279 = vld [vmem:[%s9 + $0x8c0] sm:$0xff]
    %v1280 = vld [vmem:[%s9 + $0x8c8] sm:$0xff]
    %v1281 = vld [vmem:[%s9 + $0x8d0] sm:$0xff]
    %v1282 = vld [vmem:[%s9 + $0x8d8] sm:$0xff]
    %v1283 = vld [vmem:[%s9 + $0x8e0] sm:$0xff]
    %v1284 = vld [vmem:[%s9 + $0x8e8] sm:$0xff]
    %v1285 = vld [vmem:[%s9 + $0x8f0] sm:$0xff]
    %v1286 = vld [vmem:[%s9 + $0x8f8] sm:$0xff]
    %v1287 = vld [vmem:[%s9 + $0x900] sm:$0xff]
    %v1288 = vld [vmem:[%s9 + $0x908] sm:$0xff]
    %v1289 = vld [vmem:[%s9 + $0x910] sm:$0xff]
    %v1290 = vld [vmem:[%s9 + $0x918] sm:$0xff]
    %v1291 = vld [vmem:[%s9 + $0x920] sm:$0xff]
    %v1292 = vld [vmem:[%s9 + $0x928] sm:$0xff]
    %v1293 = vld [vmem:[%s9 + $0x930] sm:$0xff]
    %v1294 = vld [vmem:[%s9 + $0x938] sm:$0xff]
    %v1295 = vld [vmem:[%s9 + $0x940] sm:$0xff]
    %v1296 = vld [vmem:[%s9 + $0x948] sm:$0xff]
    %v1297 = vld [vmem:[%s9 + $0x950] sm:$0xff]
    %v1298 = vld [vmem:[%s9 + $0x958] sm:$0xff]
    %v1299 = vld [vmem:[%s9 + $0x960] sm:$0xff]
    %v1300 = vld [vmem:[%s9 + $0x968] sm:$0xff]
    %v1301 = vld [vmem:[%s9 + $0x970] sm:$0xff]
    %v1302 = vld [vmem:[%s9 + $0x978] sm:$0xff]
    %v1303 = vld [vmem:[%s9 + $0x980] sm:$0xff]
    %v1304 = vld [vmem:[%s9 + $0x988] sm:$0xff]
    %v1305 = vld [vmem:[%s9 + $0x990] sm:$0xff]
    %v1306 = vld [vmem:[%s9 + $0x998] sm:$0xff]
    %v1307 = vld [vmem:[%s9 + $0x9a0] sm:$0xff]
    %v1308 = vld [vmem:[%s9 + $0x9a8] sm:$0xff]
    %v1309 = vld [vmem:[%s9 + $0x9b0] sm:$0xff]
    %v1310 = vld [vmem:[%s9 + $0x9b8] sm:$0xff]
    %v1311 = vld [vmem:[%s9 + $0x9c0] sm:$0xff]
    %v1312 = vld [vmem:[%s9 + $0x9c8] sm:$0xff]
    %v1313 = vld [vmem:[%s9 + $0x9d0] sm:$0xff]
    %v1314 = vld [vmem:[%s9 + $0x9d8] sm:$0xff]
    %v1315 = vld [vmem:[%s9 + $0x9e0] sm:$0xff]
    %v1316 = vld [vmem:[%s9 + $0x9e8] sm:$0xff]
    %v1317 = vld [vmem:[%s9 + $0x9f0] sm:$0xff]
    %v1318 = vld [vmem:[%s9 + $0x9f8] sm:$0xff]
    %v1319 = vld [vmem:[%s9 + $0xa00] sm:$0xff]
    %v1320 = vld [vmem:[%s9 + $0xa08] sm:$0xff]
    %v1321 = vld [vmem:[%s9 + $0xa10] sm:$0xff]
    %v1322 = vld [vmem:[%s9 + $0xa18] sm:$0xff]
    %v1323 = vld [vmem:[%s9 + $0xa20] sm:$0xff]
    %v1324 = vld [vmem:[%s9 + $0xa28] sm:$0xff]
    %v1325 = vld [vmem:[%s9 + $0xa30] sm:$0xff]
    %v1326 = vld [vmem:[%s9 + $0xa38] sm:$0xff]
    %v1327 = vld [vmem:[%s9 + $0xa40] sm:$0xff]
    %v1328 = vld [vmem:[%s9 + $0xa48] sm:$0xff]
    %v1329 = vld [vmem:[%s9 + $0xa50] sm:$0xff]
    %v1330 = vld [vmem:[%s9 + $0xa58] sm:$0xff]
    %v1331 = vld [vmem:[%s9 + $0xa60] sm:$0xff]
    %v1332 = vld [vmem:[%s9 + $0xa68] sm:$0xff]
    %v1333 = vld [vmem:[%s9 + $0xa70] sm:$0xff]
    %v1334 = vld [vmem:[%s9 + $0xa78] sm:$0xff]
    %v1335 = vld [vmem:[%s9 + $0xa80] sm:$0xff]
    %v1336 = vld [vmem:[%s9 + $0xa88] sm:$0xff]
    %v1337 = vld [vmem:[%s9 + $0xa90] sm:$0xff]
    %v1338 = vld [vmem:[%s9 + $0xa98] sm:$0xff]
    %v1339 = vld [vmem:[%s9 + $0xaa0] sm:$0xff]
    %v1340 = vld [vmem:[%s9 + $0xaa8] sm:$0xff]
    %v1341 = vld [vmem:[%s9 + $0xab0] sm:$0xff]
    %v1342 = vld [vmem:[%s9 + $0xab8] sm:$0xff]
    %v1343 = vld [vmem:[%s9 + $0xac0] sm:$0xff]
    %v1344 = vld [vmem:[%s9 + $0xac8] sm:$0xff]
    %v1345 = vld [vmem:[%s9 + $0xad0] sm:$0xff]
    %v1346 = vld [vmem:[%s9 + $0xad8] sm:$0xff]
    %v1347 = vld [vmem:[%s9 + $0xae0] sm:$0xff]
    %v1348 = vld [vmem:[%s9 + $0xae8] sm:$0xff]
    %v1349 = vld [vmem:[%s9 + $0xaf0] sm:$0xff]
    %v1350 = vld [vmem:[%s9 + $0xaf8] sm:$0xff]
    %v1351 = vld [vmem:[%s9 + $0xb00] sm:$0xff]
    %v1352 = vld [vmem:[%s9 + $0xb08] sm:$0xff]
    %v1353 = vld [vmem:[%s9 + $0xb10] sm:$0xff]
    %v1354 = vld [vmem:[%s9 + $0xb18] sm:$0xff]
    %v1355 = vld [vmem:[%s9 + $0xb20] sm:$0xff]
    %v1356 = vld [vmem:[%s9 + $0xb28] sm:$0xff]
    %v1357 = vld [vmem:[%s9 + $0xb30] sm:$0xff]
    %v1358 = vld [vmem:[%s9 + $0xb38] sm:$0xff]
    %v1359 = vld [vmem:[%s9 + $0xb40] sm:$0xff]
    %v1360 = vld [vmem:[%s9 + $0xb48] sm:$0xff]
    %v1361 = vld [vmem:[%s9 + $0xb50] sm:$0xff]
    %v1362 = vld [vmem:[%s9 + $0xb58] sm:$0xff]
    %v1363 = vld [vmem:[%s9 + $0xb60] sm:$0xff]
    %v1364 = vld [vmem:[%s9 + $0xb68] sm:$0xff]
    %v1365 = vld [vmem:[%s9 + $0xb70] sm:$0xff]
    %v1366 = vld [vmem:[%s9 + $0xb78] sm:$0xff]
    %v1367 = vld [vmem:[%s9 + $0xb80] sm:$0xff]
    %v1368 = vld [vmem:[%s9 + $0xb88] sm:$0xff]
    %v1369 = vld [vmem:[%s9 + $0xb90] sm:$0xff]
    %v1370 = vld [vmem:[%s9 + $0xb98] sm:$0xff]
    %v1371 = vld [vmem:[%s9 + $0xba0] sm:$0xff]
    %v1372 = vld [vmem:[%s9 + $0xba8] sm:$0xff]
    %v1373 = vld [vmem:[%s9 + $0xbb0] sm:$0xff]
    %v1374 = vld [vmem:[%s9 + $0xbb8] sm:$0xff]
    %v1375 = vld [vmem:[%s9 + $0xbc0] sm:$0xff]
    %v1376 = vld [vmem:[%s9 + $0xbc8] sm:$0xff]
    %v1377 = vld [vmem:[%s9 + $0xbd0] sm:$0xff]
    %v1378 = vld [vmem:[%s9 + $0xbd8] sm:$0xff]
    %v1379 = vld [vmem:[%s9 + $0xbe0] sm:$0xff]
    %v1380 = vld [vmem:[%s9 + $0xbe8] sm:$0xff]
    %v1381 = vld [vmem:[%s9 + $0xbf0] sm:$0xff]
    %v1382 = vld [vmem:[%s9 + $0xbf8] sm:$0xff]
    %v1383 = vld [vmem:[%s11] sm:$0xff]
    %v1384 = vld [vmem:[%s11 + $0x8] sm:$0xf]
    %v1387 = vlaneseq
    %v1388 = vshrl.u32 %v1387, 7
    %v1389 = vsub.s32 0, %v1388
    %v1390 = vrot.slane %v1383, %v1389
    %v1391 = vlaneseq
    %v1392 = vshrl.u32 %v1391, 7
    %v1393 = vsub.s32 1, %v1392
    %v1394 = vrot.slane %v1383, %v1393
    %v1395 = vlaneseq
    %v1396 = vshrl.u32 %v1395, 7
    %v1397 = vsub.s32 2, %v1396
    %v1398 = vrot.slane %v1383, %v1397
    %v1399 = vlaneseq
    %v1400 = vshrl.u32 %v1399, 7
    %v1401 = vsub.s32 3, %v1400
    %v1402 = vrot.slane %v1383, %v1401
    %v1403 = vlaneseq
    %v1404 = vshrl.u32 %v1403, 7
    %v1405 = vsub.s32 4, %v1404
    %v1406 = vrot.slane %v1383, %v1405
    %v1407 = vlaneseq
    %v1408 = vshrl.u32 %v1407, 7
    %v1409 = vsub.s32 5, %v1408
    %v1410 = vrot.slane %v1383, %v1409
    %v1411 = vlaneseq
    %v1412 = vshrl.u32 %v1411, 7
    %v1413 = vsub.s32 6, %v1412
    %v1414 = vrot.slane %v1383, %v1413
    %v1415 = vlaneseq
    %v1416 = vshrl.u32 %v1415, 7
    %v1417 = vsub.s32 7, %v1416
    %v1418 = vrot.slane %v1383, %v1417
    %v1419 = vlaneseq
    %v1420 = vshrl.u32 %v1419, 7
    %v1421 = vsub.s32 0, %v1420
    %v1422 = vrot.slane %v1384, %v1421
    %v1423 = vlaneseq
    %v1424 = vshrl.u32 %v1423, 7
    %v1425 = vsub.s32 1, %v1424
    %v1426 = vrot.slane %v1384, %v1425
    %v1427 = vlaneseq
    %v1428 = vshrl.u32 %v1427, 7
    %v1429 = vsub.s32 2, %v1428
    %v1430 = vrot.slane %v1384, %v1429
    %v1431 = vlaneseq
    %v1432 = vshrl.u32 %v1431, 7
    %v1433 = vsub.s32 3, %v1432
    %v1434 = vrot.slane %v1384, %v1433
    %v1831 = vunpack.c.l.b16 %v999
    %v1832 = vunpack.c.h.b16 %v999
    %v1833 = vunpack.c.l.b16 %v1000
    %v1834 = vunpack.c.h.b16 %v1000
    %v1835 = vunpack.c.l.b16 %v1001
    %v1836 = vunpack.c.h.b16 %v1001
    %v1837 = vunpack.c.l.b16 %v1002
    %v1838 = vunpack.c.h.b16 %v1002
    %v1839 = vunpack.c.l.b16 %v1003
    %v1840 = vunpack.c.h.b16 %v1003
    %v1841 = vunpack.c.l.b16 %v1004
    %v1842 = vunpack.c.h.b16 %v1004
    %v1843 = vunpack.c.l.b16 %v1005
    %v1844 = vunpack.c.h.b16 %v1005
    %v1845 = vunpack.c.l.b16 %v1006
    %v1846 = vunpack.c.h.b16 %v1006
    %v1847 = vunpack.c.l.b16 %v1007
    %v1848 = vunpack.c.h.b16 %v1007
    %v1849 = vunpack.c.l.b16 %v1008
    %v1850 = vunpack.c.h.b16 %v1008
    %v1851 = vunpack.c.l.b16 %v1009
    %v1852 = vunpack.c.h.b16 %v1009
    %v1853 = vunpack.c.l.b16 %v1010
    %v1854 = vunpack.c.h.b16 %v1010
    %v1855 = vunpack.c.l.b16 %v1011
    %v1856 = vunpack.c.h.b16 %v1011
    %v1857 = vunpack.c.l.b16 %v1012
    %v1858 = vunpack.c.h.b16 %v1012
    %v1859 = vunpack.c.l.b16 %v1013
    %v1860 = vunpack.c.h.b16 %v1013
    %v1861 = vunpack.c.l.b16 %v1014
    %v1862 = vunpack.c.h.b16 %v1014
    %v1863 = vunpack.c.l.b16 %v1015
    %v1864 = vunpack.c.h.b16 %v1015
    %v1865 = vunpack.c.l.b16 %v1016
    %v1866 = vunpack.c.h.b16 %v1016
    %v1867 = vunpack.c.l.b16 %v1017
    %v1868 = vunpack.c.h.b16 %v1017
    %v1869 = vunpack.c.l.b16 %v1018
    %v1870 = vunpack.c.h.b16 %v1018
    %v1871 = vunpack.c.l.b16 %v1019
    %v1872 = vunpack.c.h.b16 %v1019
    %v1873 = vunpack.c.l.b16 %v1020
    %v1874 = vunpack.c.h.b16 %v1020
    %v1875 = vunpack.c.l.b16 %v1021
    %v1876 = vunpack.c.h.b16 %v1021
    %v1877 = vunpack.c.l.b16 %v1022
    %v1878 = vunpack.c.h.b16 %v1022
    %v1879 = vunpack.c.l.b16 %v1023
    %v1880 = vunpack.c.h.b16 %v1023
    %v1881 = vunpack.c.l.b16 %v1024
    %v1882 = vunpack.c.h.b16 %v1024
    %v1883 = vunpack.c.l.b16 %v1025
    %v1884 = vunpack.c.h.b16 %v1025
    %v1885 = vunpack.c.l.b16 %v1026
    %v1886 = vunpack.c.h.b16 %v1026
    %v1887 = vunpack.c.l.b16 %v1027
    %v1888 = vunpack.c.h.b16 %v1027
    %v1889 = vunpack.c.l.b16 %v1028
    %v1890 = vunpack.c.h.b16 %v1028
    %v1891 = vunpack.c.l.b16 %v1029
    %v1892 = vunpack.c.h.b16 %v1029
    %v1893 = vunpack.c.l.b16 %v1030
    %v1894 = vunpack.c.h.b16 %v1030
    %v1895 = vunpack.c.l.b16 %v1031
    %v1896 = vunpack.c.h.b16 %v1031
    %v1897 = vunpack.c.l.b16 %v1032
    %v1898 = vunpack.c.h.b16 %v1032
    %v1899 = vunpack.c.l.b16 %v1033
    %v1900 = vunpack.c.h.b16 %v1033
    %v1901 = vunpack.c.l.b16 %v1034
    %v1902 = vunpack.c.h.b16 %v1034
    %v1903 = vunpack.c.l.b16 %v1035
    %v1904 = vunpack.c.h.b16 %v1035
    %v1905 = vunpack.c.l.b16 %v1036
    %v1906 = vunpack.c.h.b16 %v1036
    %v1907 = vunpack.c.l.b16 %v1037
    %v1908 = vunpack.c.h.b16 %v1037
    %v1909 = vunpack.c.l.b16 %v1038
    %v1910 = vunpack.c.h.b16 %v1038
    %v1911 = vunpack.c.l.b16 %v1039
    %v1912 = vunpack.c.h.b16 %v1039
    %v1913 = vunpack.c.l.b16 %v1040
    %v1914 = vunpack.c.h.b16 %v1040
    %v1915 = vunpack.c.l.b16 %v1041
    %v1916 = vunpack.c.h.b16 %v1041
    %v1917 = vunpack.c.l.b16 %v1042
    %v1918 = vunpack.c.h.b16 %v1042
    %v1919 = vunpack.c.l.b16 %v1043
    %v1920 = vunpack.c.h.b16 %v1043
    %v1921 = vunpack.c.l.b16 %v1044
    %v1922 = vunpack.c.h.b16 %v1044
    %v1923 = vunpack.c.l.b16 %v1045
    %v1924 = vunpack.c.h.b16 %v1045
    %v1925 = vunpack.c.l.b16 %v1046
    %v1926 = vunpack.c.h.b16 %v1046
    %v1927 = vunpack.c.l.b16 %v1047
    %v1928 = vunpack.c.h.b16 %v1047
    %v1929 = vunpack.c.l.b16 %v1048
    %v1930 = vunpack.c.h.b16 %v1048
    %v1931 = vunpack.c.l.b16 %v1049
    %v1932 = vunpack.c.h.b16 %v1049
    %v1933 = vunpack.c.l.b16 %v1050
    %v1934 = vunpack.c.h.b16 %v1050
    %v1935 = vunpack.c.l.b16 %v1051
    %v1936 = vunpack.c.h.b16 %v1051
    %v1937 = vunpack.c.l.b16 %v1052
    %v1938 = vunpack.c.h.b16 %v1052
    %v1939 = vunpack.c.l.b16 %v1053
    %v1940 = vunpack.c.h.b16 %v1053
    %v1941 = vunpack.c.l.b16 %v1054
    %v1942 = vunpack.c.h.b16 %v1054
    %v1943 = vunpack.c.l.b16 %v1055
    %v1944 = vunpack.c.h.b16 %v1055
    %v1945 = vunpack.c.l.b16 %v1056
    %v1946 = vunpack.c.h.b16 %v1056
    %v1947 = vunpack.c.l.b16 %v1057
    %v1948 = vunpack.c.h.b16 %v1057
    %v1949 = vunpack.c.l.b16 %v1058
    %v1950 = vunpack.c.h.b16 %v1058
    %v1951 = vunpack.c.l.b16 %v1059
    %v1952 = vunpack.c.h.b16 %v1059
    %v1953 = vunpack.c.l.b16 %v1060
    %v1954 = vunpack.c.h.b16 %v1060
    %v1955 = vunpack.c.l.b16 %v1061
    %v1956 = vunpack.c.h.b16 %v1061
    %v1957 = vunpack.c.l.b16 %v1062
    %v1958 = vunpack.c.h.b16 %v1062
    %v1959 = vunpack.c.l.b16 %v1063
    %v1960 = vunpack.c.h.b16 %v1063
    %v1961 = vunpack.c.l.b16 %v1064
    %v1962 = vunpack.c.h.b16 %v1064
    %v1963 = vunpack.c.l.b16 %v1065
    %v1964 = vunpack.c.h.b16 %v1065
    %v1965 = vunpack.c.l.b16 %v1066
    %v1966 = vunpack.c.h.b16 %v1066
    %v1967 = vunpack.c.l.b16 %v1067
    %v1968 = vunpack.c.h.b16 %v1067
    %v1969 = vunpack.c.l.b16 %v1068
    %v1970 = vunpack.c.h.b16 %v1068
    %v1971 = vunpack.c.l.b16 %v1069
    %v1972 = vunpack.c.h.b16 %v1069
    %v1973 = vunpack.c.l.b16 %v1070
    %v1974 = vunpack.c.h.b16 %v1070
    %v1975 = vunpack.c.l.b16 %v1071
    %v1976 = vunpack.c.h.b16 %v1071
    %v1977 = vunpack.c.l.b16 %v1072
    %v1978 = vunpack.c.h.b16 %v1072
    %v1979 = vunpack.c.l.b16 %v1073
    %v1980 = vunpack.c.h.b16 %v1073
    %v1981 = vunpack.c.l.b16 %v1074
    %v1982 = vunpack.c.h.b16 %v1074
    %v1983 = vunpack.c.l.b16 %v1075
    %v1984 = vunpack.c.h.b16 %v1075
    %v1985 = vunpack.c.l.b16 %v1076
    %v1986 = vunpack.c.h.b16 %v1076
    %v1987 = vunpack.c.l.b16 %v1077
    %v1988 = vunpack.c.h.b16 %v1077
    %v1989 = vunpack.c.l.b16 %v1078
    %v1990 = vunpack.c.h.b16 %v1078
    %v1991 = vunpack.c.l.b16 %v1079
    %v1992 = vunpack.c.h.b16 %v1079
    %v1993 = vunpack.c.l.b16 %v1080
    %v1994 = vunpack.c.h.b16 %v1080
    %v1995 = vunpack.c.l.b16 %v1081
    %v1996 = vunpack.c.h.b16 %v1081
    %v1997 = vunpack.c.l.b16 %v1082
    %v1998 = vunpack.c.h.b16 %v1082
    %v1999 = vunpack.c.l.b16 %v1083
    %v2000 = vunpack.c.h.b16 %v1083
    %v2001 = vunpack.c.l.b16 %v1084
    %v2002 = vunpack.c.h.b16 %v1084
    %v2003 = vunpack.c.l.b16 %v1085
    %v2004 = vunpack.c.h.b16 %v1085
    %v2005 = vunpack.c.l.b16 %v1086
    %v2006 = vunpack.c.h.b16 %v1086
    %v2007 = vunpack.c.l.b16 %v1087
    %v2008 = vunpack.c.h.b16 %v1087
    %v2009 = vunpack.c.l.b16 %v1088
    %v2010 = vunpack.c.h.b16 %v1088
    %v2011 = vunpack.c.l.b16 %v1089
    %v2012 = vunpack.c.h.b16 %v1089
    %v2013 = vunpack.c.l.b16 %v1090
    %v2014 = vunpack.c.h.b16 %v1090
    %v2015 = vunpack.c.l.b16 %v1091
    %v2016 = vunpack.c.h.b16 %v1091
    %v2017 = vunpack.c.l.b16 %v1092
    %v2018 = vunpack.c.h.b16 %v1092
    %v2019 = vunpack.c.l.b16 %v1093
    %v2020 = vunpack.c.h.b16 %v1093
    %v2021 = vunpack.c.l.b16 %v1094
    %v2022 = vunpack.c.h.b16 %v1094
    %v2023 = vunpack.c.l.b16 %v1095
    %v2024 = vunpack.c.h.b16 %v1095
    %v2025 = vunpack.c.l.b16 %v1096
    %v2026 = vunpack.c.h.b16 %v1096
    %v2027 = vunpack.c.l.b16 %v1097
    %v2028 = vunpack.c.h.b16 %v1097
    %v2029 = vunpack.c.l.b16 %v1098
    %v2030 = vunpack.c.h.b16 %v1098
    %v2031 = vunpack.c.l.b16 %v1099
    %v2032 = vunpack.c.h.b16 %v1099
    %v2033 = vunpack.c.l.b16 %v1100
    %v2034 = vunpack.c.h.b16 %v1100
    %v2035 = vunpack.c.l.b16 %v1101
    %v2036 = vunpack.c.h.b16 %v1101
    %v2037 = vunpack.c.l.b16 %v1102
    %v2038 = vunpack.c.h.b16 %v1102
    %v2039 = vunpack.c.l.b16 %v1103
    %v2040 = vunpack.c.h.b16 %v1103
    %v2041 = vunpack.c.l.b16 %v1104
    %v2042 = vunpack.c.h.b16 %v1104
    %v2043 = vunpack.c.l.b16 %v1105
    %v2044 = vunpack.c.h.b16 %v1105
    %v2045 = vunpack.c.l.b16 %v1106
    %v2046 = vunpack.c.h.b16 %v1106
    %v2047 = vunpack.c.l.b16 %v1107
    %v2048 = vunpack.c.h.b16 %v1107
    %v2049 = vunpack.c.l.b16 %v1108
    %v2050 = vunpack.c.h.b16 %v1108
    %v2051 = vunpack.c.l.b16 %v1109
    %v2052 = vunpack.c.h.b16 %v1109
    %v2053 = vunpack.c.l.b16 %v1110
    %v2054 = vunpack.c.h.b16 %v1110
    %v2055 = vunpack.c.l.b16 %v1111
    %v2056 = vunpack.c.h.b16 %v1111
    %v2057 = vunpack.c.l.b16 %v1112
    %v2058 = vunpack.c.h.b16 %v1112
    %v2059 = vunpack.c.l.b16 %v1113
    %v2060 = vunpack.c.h.b16 %v1113
    %v2061 = vunpack.c.l.b16 %v1114
    %v2062 = vunpack.c.h.b16 %v1114
    %v2063 = vunpack.c.l.b16 %v1115
    %v2064 = vunpack.c.h.b16 %v1115
    %v2065 = vunpack.c.l.b16 %v1116
    %v2066 = vunpack.c.h.b16 %v1116
    %v2067 = vunpack.c.l.b16 %v1117
    %v2068 = vunpack.c.h.b16 %v1117
    %v2069 = vunpack.c.l.b16 %v1118
    %v2070 = vunpack.c.h.b16 %v1118
    %v2071 = vunpack.c.l.b16 %v1119
    %v2072 = vunpack.c.h.b16 %v1119
    %v2073 = vunpack.c.l.b16 %v1120
    %v2074 = vunpack.c.h.b16 %v1120
    %v2075 = vunpack.c.l.b16 %v1121
    %v2076 = vunpack.c.h.b16 %v1121
    %v2077 = vunpack.c.l.b16 %v1122
    %v2078 = vunpack.c.h.b16 %v1122
    %v2079 = vunpack.c.l.b16 %v1123
    %v2080 = vunpack.c.h.b16 %v1123
    %v2081 = vunpack.c.l.b16 %v1124
    %v2082 = vunpack.c.h.b16 %v1124
    %v2083 = vunpack.c.l.b16 %v1125
    %v2084 = vunpack.c.h.b16 %v1125
    %v2085 = vunpack.c.l.b16 %v1126
    %v2086 = vunpack.c.h.b16 %v1126
    %v2087 = vunpack.c.l.b16 %v1127
    %v2088 = vunpack.c.h.b16 %v1127
    %v2089 = vunpack.c.l.b16 %v1128
    %v2090 = vunpack.c.h.b16 %v1128
    %v2091 = vunpack.c.l.b16 %v1129
    %v2092 = vunpack.c.h.b16 %v1129
    %v2093 = vunpack.c.l.b16 %v1130
    %v2094 = vunpack.c.h.b16 %v1130
    %v2095 = vunpack.c.l.b16 %v1131
    %v2096 = vunpack.c.h.b16 %v1131
    %v2097 = vunpack.c.l.b16 %v1132
    %v2098 = vunpack.c.h.b16 %v1132
    %v2099 = vunpack.c.l.b16 %v1133
    %v2100 = vunpack.c.h.b16 %v1133
    %v2101 = vunpack.c.l.b16 %v1134
    %v2102 = vunpack.c.h.b16 %v1134
    %v2103 = vunpack.c.l.b16 %v1135
    %v2104 = vunpack.c.h.b16 %v1135
    %v2105 = vunpack.c.l.b16 %v1136
    %v2106 = vunpack.c.h.b16 %v1136
    %v2107 = vunpack.c.l.b16 %v1137
    %v2108 = vunpack.c.h.b16 %v1137
    %v2109 = vunpack.c.l.b16 %v1138
    %v2110 = vunpack.c.h.b16 %v1138
    %v2111 = vunpack.c.l.b16 %v1139
    %v2112 = vunpack.c.h.b16 %v1139
    %v2113 = vunpack.c.l.b16 %v1140
    %v2114 = vunpack.c.h.b16 %v1140
    %v2115 = vunpack.c.l.b16 %v1141
    %v2116 = vunpack.c.h.b16 %v1141
    %v2117 = vunpack.c.l.b16 %v1142
    %v2118 = vunpack.c.h.b16 %v1142
    %v2119 = vunpack.c.l.b16 %v1143
    %v2120 = vunpack.c.h.b16 %v1143
    %v2121 = vunpack.c.l.b16 %v1144
    %v2122 = vunpack.c.h.b16 %v1144
    %v2123 = vunpack.c.l.b16 %v1145
    %v2124 = vunpack.c.h.b16 %v1145
    %v2125 = vunpack.c.l.b16 %v1146
    %v2126 = vunpack.c.h.b16 %v1146
    %v2127 = vunpack.c.l.b16 %v1147
    %v2128 = vunpack.c.h.b16 %v1147
    %v2129 = vunpack.c.l.b16 %v1148
    %v2130 = vunpack.c.h.b16 %v1148
    %v2131 = vunpack.c.l.b16 %v1149
    %v2132 = vunpack.c.h.b16 %v1149
    %v2133 = vunpack.c.l.b16 %v1150
    %v2134 = vunpack.c.h.b16 %v1150
    %v2135 = vunpack.c.l.b16 %v1151
    %v2136 = vunpack.c.h.b16 %v1151
    %v2137 = vunpack.c.l.b16 %v1152
    %v2138 = vunpack.c.h.b16 %v1152
    %v2139 = vunpack.c.l.b16 %v1153
    %v2140 = vunpack.c.h.b16 %v1153
    %v2141 = vunpack.c.l.b16 %v1154
    %v2142 = vunpack.c.h.b16 %v1154
    %v2143 = vunpack.c.l.b16 %v1155
    %v2144 = vunpack.c.h.b16 %v1155
    %v2145 = vunpack.c.l.b16 %v1156
    %v2146 = vunpack.c.h.b16 %v1156
    %v2147 = vunpack.c.l.b16 %v1157
    %v2148 = vunpack.c.h.b16 %v1157
    %v2149 = vunpack.c.l.b16 %v1158
    %v2150 = vunpack.c.h.b16 %v1158
    %v2151 = vunpack.c.l.b16 %v1159
    %v2152 = vunpack.c.h.b16 %v1159
    %v2153 = vunpack.c.l.b16 %v1160
    %v2154 = vunpack.c.h.b16 %v1160
    %v2155 = vunpack.c.l.b16 %v1161
    %v2156 = vunpack.c.h.b16 %v1161
    %v2157 = vunpack.c.l.b16 %v1162
    %v2158 = vunpack.c.h.b16 %v1162
    %v2159 = vunpack.c.l.b16 %v1163
    %v2160 = vunpack.c.h.b16 %v1163
    %v2161 = vunpack.c.l.b16 %v1164
    %v2162 = vunpack.c.h.b16 %v1164
    %v2163 = vunpack.c.l.b16 %v1165
    %v2164 = vunpack.c.h.b16 %v1165
    %v2165 = vunpack.c.l.b16 %v1166
    %v2166 = vunpack.c.h.b16 %v1166
    %v2167 = vunpack.c.l.b16 %v1167
    %v2168 = vunpack.c.h.b16 %v1167
    %v2169 = vunpack.c.l.b16 %v1168
    %v2170 = vunpack.c.h.b16 %v1168
    %v2171 = vunpack.c.l.b16 %v1169
    %v2172 = vunpack.c.h.b16 %v1169
    %v2173 = vunpack.c.l.b16 %v1170
    %v2174 = vunpack.c.h.b16 %v1170
    %v2175 = vunpack.c.l.b16 %v1171
    %v2176 = vunpack.c.h.b16 %v1171
    %v2177 = vunpack.c.l.b16 %v1172
    %v2178 = vunpack.c.h.b16 %v1172
    %v2179 = vunpack.c.l.b16 %v1173
    %v2180 = vunpack.c.h.b16 %v1173
    %v2181 = vunpack.c.l.b16 %v1174
    %v2182 = vunpack.c.h.b16 %v1174
    %v2183 = vunpack.c.l.b16 %v1175
    %v2184 = vunpack.c.h.b16 %v1175
    %v2185 = vunpack.c.l.b16 %v1176
    %v2186 = vunpack.c.h.b16 %v1176
    %v2187 = vunpack.c.l.b16 %v1177
    %v2188 = vunpack.c.h.b16 %v1177
    %v2189 = vunpack.c.l.b16 %v1178
    %v2190 = vunpack.c.h.b16 %v1178
    %v2191 = vunpack.c.l.b16 %v1179
    %v2192 = vunpack.c.h.b16 %v1179
    %v2193 = vunpack.c.l.b16 %v1180
    %v2194 = vunpack.c.h.b16 %v1180
    %v2195 = vunpack.c.l.b16 %v1181
    %v2196 = vunpack.c.h.b16 %v1181
    %v2197 = vunpack.c.l.b16 %v1182
    %v2198 = vunpack.c.h.b16 %v1182
    %v2199 = vunpack.c.l.b16 %v1183
    %v2200 = vunpack.c.h.b16 %v1183
    %v2201 = vunpack.c.l.b16 %v1184
    %v2202 = vunpack.c.h.b16 %v1184
    %v2203 = vunpack.c.l.b16 %v1185
    %v2204 = vunpack.c.h.b16 %v1185
    %v2205 = vunpack.c.l.b16 %v1186
    %v2206 = vunpack.c.h.b16 %v1186
    %v2207 = vunpack.c.l.b16 %v1187
    %v2208 = vunpack.c.h.b16 %v1187
    %v2209 = vunpack.c.l.b16 %v1188
    %v2210 = vunpack.c.h.b16 %v1188
    %v2211 = vunpack.c.l.b16 %v1189
    %v2212 = vunpack.c.h.b16 %v1189
    %v2213 = vunpack.c.l.b16 %v1190
    %v2214 = vunpack.c.h.b16 %v1190
    %v2215 = vunpack.c.l.b16 %v1191
    %v2216 = vunpack.c.h.b16 %v1191
    %v2217 = vunpack.c.l.b16 %v1192
    %v2218 = vunpack.c.h.b16 %v1192
    %v2219 = vunpack.c.l.b16 %v1193
    %v2220 = vunpack.c.h.b16 %v1193
    %v2221 = vunpack.c.l.b16 %v1194
    %v2222 = vunpack.c.h.b16 %v1194
    %v2223 = vunpack.c.l.b16 %v1195
    %v2224 = vunpack.c.h.b16 %v1195
    %v2225 = vunpack.c.l.b16 %v1196
    %v2226 = vunpack.c.h.b16 %v1196
    %v2227 = vunpack.c.l.b16 %v1197
    %v2228 = vunpack.c.h.b16 %v1197
    %v2229 = vunpack.c.l.b16 %v1198
    %v2230 = vunpack.c.h.b16 %v1198
    %v2231 = vunpack.c.l.b16 %v1199
    %v2232 = vunpack.c.h.b16 %v1199
    %v2233 = vunpack.c.l.b16 %v1200
    %v2234 = vunpack.c.h.b16 %v1200
    %v2235 = vunpack.c.l.b16 %v1201
    %v2236 = vunpack.c.h.b16 %v1201
    %v2237 = vunpack.c.l.b16 %v1202
    %v2238 = vunpack.c.h.b16 %v1202
    %v2239 = vunpack.c.l.b16 %v1203
    %v2240 = vunpack.c.h.b16 %v1203
    %v2241 = vunpack.c.l.b16 %v1204
    %v2242 = vunpack.c.h.b16 %v1204
    %v2243 = vunpack.c.l.b16 %v1205
    %v2244 = vunpack.c.h.b16 %v1205
    %v2245 = vunpack.c.l.b16 %v1206
    %v2246 = vunpack.c.h.b16 %v1206
    %v2247 = vunpack.c.l.b16 %v1207
    %v2248 = vunpack.c.h.b16 %v1207
    %v2249 = vunpack.c.l.b16 %v1208
    %v2250 = vunpack.c.h.b16 %v1208
    %v2251 = vunpack.c.l.b16 %v1209
    %v2252 = vunpack.c.h.b16 %v1209
    %v2253 = vunpack.c.l.b16 %v1210
    %v2254 = vunpack.c.h.b16 %v1210
    %v2255 = vunpack.c.l.b16 %v1211
    %v2256 = vunpack.c.h.b16 %v1211
    %v2257 = vunpack.c.l.b16 %v1212
    %v2258 = vunpack.c.h.b16 %v1212
    %v2259 = vunpack.c.l.b16 %v1213
    %v2260 = vunpack.c.h.b16 %v1213
    %v2261 = vunpack.c.l.b16 %v1214
    %v2262 = vunpack.c.h.b16 %v1214
    %v2263 = vunpack.c.l.b16 %v1215
    %v2264 = vunpack.c.h.b16 %v1215
    %v2265 = vunpack.c.l.b16 %v1216
    %v2266 = vunpack.c.h.b16 %v1216
    %v2267 = vunpack.c.l.b16 %v1217
    %v2268 = vunpack.c.h.b16 %v1217
    %v2269 = vunpack.c.l.b16 %v1218
    %v2270 = vunpack.c.h.b16 %v1218
    %v2271 = vunpack.c.l.b16 %v1219
    %v2272 = vunpack.c.h.b16 %v1219
    %v2273 = vunpack.c.l.b16 %v1220
    %v2274 = vunpack.c.h.b16 %v1220
    %v2275 = vunpack.c.l.b16 %v1221
    %v2276 = vunpack.c.h.b16 %v1221
    %v2277 = vunpack.c.l.b16 %v1222
    %v2278 = vunpack.c.h.b16 %v1222
    %v2279 = vunpack.c.l.b16 %v1223
    %v2280 = vunpack.c.h.b16 %v1223
    %v2281 = vunpack.c.l.b16 %v1224
    %v2282 = vunpack.c.h.b16 %v1224
    %v2283 = vunpack.c.l.b16 %v1225
    %v2284 = vunpack.c.h.b16 %v1225
    %v2285 = vunpack.c.l.b16 %v1226
    %v2286 = vunpack.c.h.b16 %v1226
    %v2287 = vunpack.c.l.b16 %v1227
    %v2288 = vunpack.c.h.b16 %v1227
    %v2289 = vunpack.c.l.b16 %v1228
    %v2290 = vunpack.c.h.b16 %v1228
    %v2291 = vunpack.c.l.b16 %v1229
    %v2292 = vunpack.c.h.b16 %v1229
    %v2293 = vunpack.c.l.b16 %v1230
    %v2294 = vunpack.c.h.b16 %v1230
    %v2295 = vunpack.c.l.b16 %v1231
    %v2296 = vunpack.c.h.b16 %v1231
    %v2297 = vunpack.c.l.b16 %v1232
    %v2298 = vunpack.c.h.b16 %v1232
    %v2299 = vunpack.c.l.b16 %v1233
    %v2300 = vunpack.c.h.b16 %v1233
    %v2301 = vunpack.c.l.b16 %v1234
    %v2302 = vunpack.c.h.b16 %v1234
    %v2303 = vunpack.c.l.b16 %v1235
    %v2304 = vunpack.c.h.b16 %v1235
    %v2305 = vunpack.c.l.b16 %v1236
    %v2306 = vunpack.c.h.b16 %v1236
    %v2307 = vunpack.c.l.b16 %v1237
    %v2308 = vunpack.c.h.b16 %v1237
    %v2309 = vunpack.c.l.b16 %v1238
    %v2310 = vunpack.c.h.b16 %v1238
    %v2311 = vunpack.c.l.b16 %v1239
    %v2312 = vunpack.c.h.b16 %v1239
    %v2313 = vunpack.c.l.b16 %v1240
    %v2314 = vunpack.c.h.b16 %v1240
    %v2315 = vunpack.c.l.b16 %v1241
    %v2316 = vunpack.c.h.b16 %v1241
    %v2317 = vunpack.c.l.b16 %v1242
    %v2318 = vunpack.c.h.b16 %v1242
    %v2319 = vunpack.c.l.b16 %v1243
    %v2320 = vunpack.c.h.b16 %v1243
    %v2321 = vunpack.c.l.b16 %v1244
    %v2322 = vunpack.c.h.b16 %v1244
    %v2323 = vunpack.c.l.b16 %v1245
    %v2324 = vunpack.c.h.b16 %v1245
    %v2325 = vunpack.c.l.b16 %v1246
    %v2326 = vunpack.c.h.b16 %v1246
    %v2327 = vunpack.c.l.b16 %v1247
    %v2328 = vunpack.c.h.b16 %v1247
    %v2329 = vunpack.c.l.b16 %v1248
    %v2330 = vunpack.c.h.b16 %v1248
    %v2331 = vunpack.c.l.b16 %v1249
    %v2332 = vunpack.c.h.b16 %v1249
    %v2333 = vunpack.c.l.b16 %v1250
    %v2334 = vunpack.c.h.b16 %v1250
    %v2335 = vunpack.c.l.b16 %v1251
    %v2336 = vunpack.c.h.b16 %v1251
    %v2337 = vunpack.c.l.b16 %v1252
    %v2338 = vunpack.c.h.b16 %v1252
    %v2339 = vunpack.c.l.b16 %v1253
    %v2340 = vunpack.c.h.b16 %v1253
    %v2341 = vunpack.c.l.b16 %v1254
    %v2342 = vunpack.c.h.b16 %v1254
    %v2343 = vunpack.c.l.b16 %v1255
    %v2344 = vunpack.c.h.b16 %v1255
    %v2345 = vunpack.c.l.b16 %v1256
    %v2346 = vunpack.c.h.b16 %v1256
    %v2347 = vunpack.c.l.b16 %v1257
    %v2348 = vunpack.c.h.b16 %v1257
    %v2349 = vunpack.c.l.b16 %v1258
    %v2350 = vunpack.c.h.b16 %v1258
    %v2351 = vunpack.c.l.b16 %v1259
    %v2352 = vunpack.c.h.b16 %v1259
    %v2353 = vunpack.c.l.b16 %v1260
    %v2354 = vunpack.c.h.b16 %v1260
    %v2355 = vunpack.c.l.b16 %v1261
    %v2356 = vunpack.c.h.b16 %v1261
    %v2357 = vunpack.c.l.b16 %v1262
    %v2358 = vunpack.c.h.b16 %v1262
    %v2359 = vunpack.c.l.b16 %v1263
    %v2360 = vunpack.c.h.b16 %v1263
    %v2361 = vunpack.c.l.b16 %v1264
    %v2362 = vunpack.c.h.b16 %v1264
    %v2363 = vunpack.c.l.b16 %v1265
    %v2364 = vunpack.c.h.b16 %v1265
    %v2365 = vunpack.c.l.b16 %v1266
    %v2366 = vunpack.c.h.b16 %v1266
    %v2367 = vunpack.c.l.b16 %v1267
    %v2368 = vunpack.c.h.b16 %v1267
    %v2369 = vunpack.c.l.b16 %v1268
    %v2370 = vunpack.c.h.b16 %v1268
    %v2371 = vunpack.c.l.b16 %v1269
    %v2372 = vunpack.c.h.b16 %v1269
    %v2373 = vunpack.c.l.b16 %v1270
    %v2374 = vunpack.c.h.b16 %v1270
    %v2375 = vunpack.c.l.b16 %v1271
    %v2376 = vunpack.c.h.b16 %v1271
    %v2377 = vunpack.c.l.b16 %v1272
    %v2378 = vunpack.c.h.b16 %v1272
    %v2379 = vunpack.c.l.b16 %v1273
    %v2380 = vunpack.c.h.b16 %v1273
    %v2381 = vunpack.c.l.b16 %v1274
    %v2382 = vunpack.c.h.b16 %v1274
    %v2383 = vunpack.c.l.b16 %v1275
    %v2384 = vunpack.c.h.b16 %v1275
    %v2385 = vunpack.c.l.b16 %v1276
    %v2386 = vunpack.c.h.b16 %v1276
    %v2387 = vunpack.c.l.b16 %v1277
    %v2388 = vunpack.c.h.b16 %v1277
    %v2389 = vunpack.c.l.b16 %v1278
    %v2390 = vunpack.c.h.b16 %v1278
    %v2391 = vunpack.c.l.b16 %v1279
    %v2392 = vunpack.c.h.b16 %v1279
    %v2393 = vunpack.c.l.b16 %v1280
    %v2394 = vunpack.c.h.b16 %v1280
    %v2395 = vunpack.c.l.b16 %v1281
    %v2396 = vunpack.c.h.b16 %v1281
    %v2397 = vunpack.c.l.b16 %v1282
    %v2398 = vunpack.c.h.b16 %v1282
    %v2399 = vunpack.c.l.b16 %v1283
    %v2400 = vunpack.c.h.b16 %v1283
    %v2401 = vunpack.c.l.b16 %v1284
    %v2402 = vunpack.c.h.b16 %v1284
    %v2403 = vunpack.c.l.b16 %v1285
    %v2404 = vunpack.c.h.b16 %v1285
    %v2405 = vunpack.c.l.b16 %v1286
    %v2406 = vunpack.c.h.b16 %v1286
    %v2407 = vunpack.c.l.b16 %v1287
    %v2408 = vunpack.c.h.b16 %v1287
    %v2409 = vunpack.c.l.b16 %v1288
    %v2410 = vunpack.c.h.b16 %v1288
    %v2411 = vunpack.c.l.b16 %v1289
    %v2412 = vunpack.c.h.b16 %v1289
    %v2413 = vunpack.c.l.b16 %v1290
    %v2414 = vunpack.c.h.b16 %v1290
    %v2415 = vunpack.c.l.b16 %v1291
    %v2416 = vunpack.c.h.b16 %v1291
    %v2417 = vunpack.c.l.b16 %v1292
    %v2418 = vunpack.c.h.b16 %v1292
    %v2419 = vunpack.c.l.b16 %v1293
    %v2420 = vunpack.c.h.b16 %v1293
    %v2421 = vunpack.c.l.b16 %v1294
    %v2422 = vunpack.c.h.b16 %v1294
    %v2423 = vunpack.c.l.b16 %v1295
    %v2424 = vunpack.c.h.b16 %v1295
    %v2425 = vunpack.c.l.b16 %v1296
    %v2426 = vunpack.c.h.b16 %v1296
    %v2427 = vunpack.c.l.b16 %v1297
    %v2428 = vunpack.c.h.b16 %v1297
    %v2429 = vunpack.c.l.b16 %v1298
    %v2430 = vunpack.c.h.b16 %v1298
    %v2431 = vunpack.c.l.b16 %v1299
    %v2432 = vunpack.c.h.b16 %v1299
    %v2433 = vunpack.c.l.b16 %v1300
    %v2434 = vunpack.c.h.b16 %v1300
    %v2435 = vunpack.c.l.b16 %v1301
    %v2436 = vunpack.c.h.b16 %v1301
    %v2437 = vunpack.c.l.b16 %v1302
    %v2438 = vunpack.c.h.b16 %v1302
    %v2439 = vunpack.c.l.b16 %v1303
    %v2440 = vunpack.c.h.b16 %v1303
    %v2441 = vunpack.c.l.b16 %v1304
    %v2442 = vunpack.c.h.b16 %v1304
    %v2443 = vunpack.c.l.b16 %v1305
    %v2444 = vunpack.c.h.b16 %v1305
    %v2445 = vunpack.c.l.b16 %v1306
    %v2446 = vunpack.c.h.b16 %v1306
    %v2447 = vunpack.c.l.b16 %v1307
    %v2448 = vunpack.c.h.b16 %v1307
    %v2449 = vunpack.c.l.b16 %v1308
    %v2450 = vunpack.c.h.b16 %v1308
    %v2451 = vunpack.c.l.b16 %v1309
    %v2452 = vunpack.c.h.b16 %v1309
    %v2453 = vunpack.c.l.b16 %v1310
    %v2454 = vunpack.c.h.b16 %v1310
    %v2455 = vunpack.c.l.b16 %v1311
    %v2456 = vunpack.c.h.b16 %v1311
    %v2457 = vunpack.c.l.b16 %v1312
    %v2458 = vunpack.c.h.b16 %v1312
    %v2459 = vunpack.c.l.b16 %v1313
    %v2460 = vunpack.c.h.b16 %v1313
    %v2461 = vunpack.c.l.b16 %v1314
    %v2462 = vunpack.c.h.b16 %v1314
    %v2463 = vunpack.c.l.b16 %v1315
    %v2464 = vunpack.c.h.b16 %v1315
    %v2465 = vunpack.c.l.b16 %v1316
    %v2466 = vunpack.c.h.b16 %v1316
    %v2467 = vunpack.c.l.b16 %v1317
    %v2468 = vunpack.c.h.b16 %v1317
    %v2469 = vunpack.c.l.b16 %v1318
    %v2470 = vunpack.c.h.b16 %v1318
    %v2471 = vunpack.c.l.b16 %v1319
    %v2472 = vunpack.c.h.b16 %v1319
    %v2473 = vunpack.c.l.b16 %v1320
    %v2474 = vunpack.c.h.b16 %v1320
    %v2475 = vunpack.c.l.b16 %v1321
    %v2476 = vunpack.c.h.b16 %v1321
    %v2477 = vunpack.c.l.b16 %v1322
    %v2478 = vunpack.c.h.b16 %v1322
    %v2479 = vunpack.c.l.b16 %v1323
    %v2480 = vunpack.c.h.b16 %v1323
    %v2481 = vunpack.c.l.b16 %v1324
    %v2482 = vunpack.c.h.b16 %v1324
    %v2483 = vunpack.c.l.b16 %v1325
    %v2484 = vunpack.c.h.b16 %v1325
    %v2485 = vunpack.c.l.b16 %v1326
    %v2486 = vunpack.c.h.b16 %v1326
    %v2487 = vunpack.c.l.b16 %v1327
    %v2488 = vunpack.c.h.b16 %v1327
    %v2489 = vunpack.c.l.b16 %v1328
    %v2490 = vunpack.c.h.b16 %v1328
    %v2491 = vunpack.c.l.b16 %v1329
    %v2492 = vunpack.c.h.b16 %v1329
    %v2493 = vunpack.c.l.b16 %v1330
    %v2494 = vunpack.c.h.b16 %v1330
    %v2495 = vunpack.c.l.b16 %v1331
    %v2496 = vunpack.c.h.b16 %v1331
    %v2497 = vunpack.c.l.b16 %v1332
    %v2498 = vunpack.c.h.b16 %v1332
    %v2499 = vunpack.c.l.b16 %v1333
    %v2500 = vunpack.c.h.b16 %v1333
    %v2501 = vunpack.c.l.b16 %v1334
    %v2502 = vunpack.c.h.b16 %v1334
    %v2503 = vunpack.c.l.b16 %v1335
    %v2504 = vunpack.c.h.b16 %v1335
    %v2505 = vunpack.c.l.b16 %v1336
    %v2506 = vunpack.c.h.b16 %v1336
    %v2507 = vunpack.c.l.b16 %v1337
    %v2508 = vunpack.c.h.b16 %v1337
    %v2509 = vunpack.c.l.b16 %v1338
    %v2510 = vunpack.c.h.b16 %v1338
    %v2511 = vunpack.c.l.b16 %v1339
    %v2512 = vunpack.c.h.b16 %v1339
    %v2513 = vunpack.c.l.b16 %v1340
    %v2514 = vunpack.c.h.b16 %v1340
    %v2515 = vunpack.c.l.b16 %v1341
    %v2516 = vunpack.c.h.b16 %v1341
    %v2517 = vunpack.c.l.b16 %v1342
    %v2518 = vunpack.c.h.b16 %v1342
    %v2519 = vunpack.c.l.b16 %v1343
    %v2520 = vunpack.c.h.b16 %v1343
    %v2521 = vunpack.c.l.b16 %v1344
    %v2522 = vunpack.c.h.b16 %v1344
    %v2523 = vunpack.c.l.b16 %v1345
    %v2524 = vunpack.c.h.b16 %v1345
    %v2525 = vunpack.c.l.b16 %v1346
    %v2526 = vunpack.c.h.b16 %v1346
    %v2527 = vunpack.c.l.b16 %v1347
    %v2528 = vunpack.c.h.b16 %v1347
    %v2529 = vunpack.c.l.b16 %v1348
    %v2530 = vunpack.c.h.b16 %v1348
    %v2531 = vunpack.c.l.b16 %v1349
    %v2532 = vunpack.c.h.b16 %v1349
    %v2533 = vunpack.c.l.b16 %v1350
    %v2534 = vunpack.c.h.b16 %v1350
    %v2535 = vunpack.c.l.b16 %v1351
    %v2536 = vunpack.c.h.b16 %v1351
    %v2537 = vunpack.c.l.b16 %v1352
    %v2538 = vunpack.c.h.b16 %v1352
    %v2539 = vunpack.c.l.b16 %v1353
    %v2540 = vunpack.c.h.b16 %v1353
    %v2541 = vunpack.c.l.b16 %v1354
    %v2542 = vunpack.c.h.b16 %v1354
    %v2543 = vunpack.c.l.b16 %v1355
    %v2544 = vunpack.c.h.b16 %v1355
    %v2545 = vunpack.c.l.b16 %v1356
    %v2546 = vunpack.c.h.b16 %v1356
    %v2547 = vunpack.c.l.b16 %v1357
    %v2548 = vunpack.c.h.b16 %v1357
    %v2549 = vunpack.c.l.b16 %v1358
    %v2550 = vunpack.c.h.b16 %v1358
    %v2551 = vunpack.c.l.b16 %v1359
    %v2552 = vunpack.c.h.b16 %v1359
    %v2553 = vunpack.c.l.b16 %v1360
    %v2554 = vunpack.c.h.b16 %v1360
    %v2555 = vunpack.c.l.b16 %v1361
    %v2556 = vunpack.c.h.b16 %v1361
    %v2557 = vunpack.c.l.b16 %v1362
    %v2558 = vunpack.c.h.b16 %v1362
    %v2559 = vunpack.c.l.b16 %v1363
    %v2560 = vunpack.c.h.b16 %v1363
    %v2561 = vunpack.c.l.b16 %v1364
    %v2562 = vunpack.c.h.b16 %v1364
    %v2563 = vunpack.c.l.b16 %v1365
    %v2564 = vunpack.c.h.b16 %v1365
    %v2565 = vunpack.c.l.b16 %v1366
    %v2566 = vunpack.c.h.b16 %v1366
    %v2567 = vunpack.c.l.b16 %v1367
    %v2568 = vunpack.c.h.b16 %v1367
    %v2569 = vunpack.c.l.b16 %v1368
    %v2570 = vunpack.c.h.b16 %v1368
    %v2571 = vunpack.c.l.b16 %v1369
    %v2572 = vunpack.c.h.b16 %v1369
    %v2573 = vunpack.c.l.b16 %v1370
    %v2574 = vunpack.c.h.b16 %v1370
    %v2575 = vunpack.c.l.b16 %v1371
    %v2576 = vunpack.c.h.b16 %v1371
    %v2577 = vunpack.c.l.b16 %v1372
    %v2578 = vunpack.c.h.b16 %v1372
    %v2579 = vunpack.c.l.b16 %v1373
    %v2580 = vunpack.c.h.b16 %v1373
    %v2581 = vunpack.c.l.b16 %v1374
    %v2582 = vunpack.c.h.b16 %v1374
    %v2583 = vunpack.c.l.b16 %v1375
    %v2584 = vunpack.c.h.b16 %v1375
    %v2585 = vunpack.c.l.b16 %v1376
    %v2586 = vunpack.c.h.b16 %v1376
    %v2587 = vunpack.c.l.b16 %v1377
    %v2588 = vunpack.c.h.b16 %v1377
    %v2589 = vunpack.c.l.b16 %v1378
    %v2590 = vunpack.c.h.b16 %v1378
    %v2591 = vunpack.c.l.b16 %v1379
    %v2592 = vunpack.c.h.b16 %v1379
    %v2593 = vunpack.c.l.b16 %v1380
    %v2594 = vunpack.c.h.b16 %v1380
    %v2595 = vunpack.c.l.b16 %v1381
    %v2596 = vunpack.c.h.b16 %v1381
    %v2597 = vunpack.c.l.b16 %v1382
    %v2598 = vunpack.c.h.b16 %v1382
    %v2599 = vpack.c.b16 %v1843, %v1831
    %v2600 = vpack.c.b16 %v1844, %v1832
    %v2601 = vpack.c.b16 %v1845, %v1833
    %v2602 = vpack.c.b16 %v1846, %v1834
    %v2603 = vpack.c.b16 %v1847, %v1835
    %v2604 = vpack.c.b16 %v1848, %v1836
    %v2605 = vpack.c.b16 %v1849, %v1837
    %v2606 = vpack.c.b16 %v1850, %v1838
    %v2607 = vpack.c.b16 %v1851, %v1839
    %v2608 = vpack.c.b16 %v1852, %v1840
    %v2609 = vpack.c.b16 %v1853, %v1841
    %v2610 = vpack.c.b16 %v1854, %v1842
    %v2611 = vpack.c.b16 %v1867, %v1855
    %v2612 = vpack.c.b16 %v1868, %v1856
    %v2613 = vpack.c.b16 %v1869, %v1857
    %v2614 = vpack.c.b16 %v1870, %v1858
    %v2615 = vpack.c.b16 %v1871, %v1859
    %v2616 = vpack.c.b16 %v1872, %v1860
    %v2617 = vpack.c.b16 %v1873, %v1861
    %v2618 = vpack.c.b16 %v1874, %v1862
    %v2619 = vpack.c.b16 %v1875, %v1863
    %v2620 = vpack.c.b16 %v1876, %v1864
    %v2621 = vpack.c.b16 %v1877, %v1865
    %v2622 = vpack.c.b16 %v1878, %v1866
    %v2623 = vpack.c.b16 %v1891, %v1879
    %v2624 = vpack.c.b16 %v1892, %v1880
    %v2625 = vpack.c.b16 %v1893, %v1881
    %v2626 = vpack.c.b16 %v1894, %v1882
    %v2627 = vpack.c.b16 %v1895, %v1883
    %v2628 = vpack.c.b16 %v1896, %v1884
    %v2629 = vpack.c.b16 %v1897, %v1885
    %v2630 = vpack.c.b16 %v1898, %v1886
    %v2631 = vpack.c.b16 %v1899, %v1887
    %v2632 = vpack.c.b16 %v1900, %v1888
    %v2633 = vpack.c.b16 %v1901, %v1889
    %v2634 = vpack.c.b16 %v1902, %v1890
    %v2635 = vpack.c.b16 %v1915, %v1903
    %v2636 = vpack.c.b16 %v1916, %v1904
    %v2637 = vpack.c.b16 %v1917, %v1905
    %v2638 = vpack.c.b16 %v1918, %v1906
    %v2639 = vpack.c.b16 %v1919, %v1907
    %v2640 = vpack.c.b16 %v1920, %v1908
    %v2641 = vpack.c.b16 %v1921, %v1909
    %v2642 = vpack.c.b16 %v1922, %v1910
    %v2643 = vpack.c.b16 %v1923, %v1911
    %v2644 = vpack.c.b16 %v1924, %v1912
    %v2645 = vpack.c.b16 %v1925, %v1913
    %v2646 = vpack.c.b16 %v1926, %v1914
    %v2647 = vpack.c.b16 %v1939, %v1927
    %v2648 = vpack.c.b16 %v1940, %v1928
    %v2649 = vpack.c.b16 %v1941, %v1929
    %v2650 = vpack.c.b16 %v1942, %v1930
    %v2651 = vpack.c.b16 %v1943, %v1931
    %v2652 = vpack.c.b16 %v1944, %v1932
    %v2653 = vpack.c.b16 %v1945, %v1933
    %v2654 = vpack.c.b16 %v1946, %v1934
    %v2655 = vpack.c.b16 %v1947, %v1935
    %v2656 = vpack.c.b16 %v1948, %v1936
    %v2657 = vpack.c.b16 %v1949, %v1937
    %v2658 = vpack.c.b16 %v1950, %v1938
    %v2659 = vpack.c.b16 %v1963, %v1951
    %v2660 = vpack.c.b16 %v1964, %v1952
    %v2661 = vpack.c.b16 %v1965, %v1953
    %v2662 = vpack.c.b16 %v1966, %v1954
    %v2663 = vpack.c.b16 %v1967, %v1955
    %v2664 = vpack.c.b16 %v1968, %v1956
    %v2665 = vpack.c.b16 %v1969, %v1957
    %v2666 = vpack.c.b16 %v1970, %v1958
    %v2667 = vpack.c.b16 %v1971, %v1959
    %v2668 = vpack.c.b16 %v1972, %v1960
    %v2669 = vpack.c.b16 %v1973, %v1961
    %v2670 = vpack.c.b16 %v1974, %v1962
    %v2671 = vpack.c.b16 %v1987, %v1975
    %v2672 = vpack.c.b16 %v1988, %v1976
    %v2673 = vpack.c.b16 %v1989, %v1977
    %v2674 = vpack.c.b16 %v1990, %v1978
    %v2675 = vpack.c.b16 %v1991, %v1979
    %v2676 = vpack.c.b16 %v1992, %v1980
    %v2677 = vpack.c.b16 %v1993, %v1981
    %v2678 = vpack.c.b16 %v1994, %v1982
    %v2679 = vpack.c.b16 %v1995, %v1983
    %v2680 = vpack.c.b16 %v1996, %v1984
    %v2681 = vpack.c.b16 %v1997, %v1985
    %v2682 = vpack.c.b16 %v1998, %v1986
    %v2683 = vpack.c.b16 %v2011, %v1999
    %v2684 = vpack.c.b16 %v2012, %v2000
    %v2685 = vpack.c.b16 %v2013, %v2001
    %v2686 = vpack.c.b16 %v2014, %v2002
    %v2687 = vpack.c.b16 %v2015, %v2003
    %v2688 = vpack.c.b16 %v2016, %v2004
    %v2689 = vpack.c.b16 %v2017, %v2005
    %v2690 = vpack.c.b16 %v2018, %v2006
    %v2691 = vpack.c.b16 %v2019, %v2007
    %v2692 = vpack.c.b16 %v2020, %v2008
    %v2693 = vpack.c.b16 %v2021, %v2009
    %v2694 = vpack.c.b16 %v2022, %v2010
    %v2695 = vpack.c.b16 %v2035, %v2023
    %v2696 = vpack.c.b16 %v2036, %v2024
    %v2697 = vpack.c.b16 %v2037, %v2025
    %v2698 = vpack.c.b16 %v2038, %v2026
    %v2699 = vpack.c.b16 %v2039, %v2027
    %v2700 = vpack.c.b16 %v2040, %v2028
    %v2701 = vpack.c.b16 %v2041, %v2029
    %v2702 = vpack.c.b16 %v2042, %v2030
    %v2703 = vpack.c.b16 %v2043, %v2031
    %v2704 = vpack.c.b16 %v2044, %v2032
    %v2705 = vpack.c.b16 %v2045, %v2033
    %v2706 = vpack.c.b16 %v2046, %v2034
    %v2707 = vpack.c.b16 %v2059, %v2047
    %v2708 = vpack.c.b16 %v2060, %v2048
    %v2709 = vpack.c.b16 %v2061, %v2049
    %v2710 = vpack.c.b16 %v2062, %v2050
    %v2711 = vpack.c.b16 %v2063, %v2051
    %v2712 = vpack.c.b16 %v2064, %v2052
    %v2713 = vpack.c.b16 %v2065, %v2053
    %v2714 = vpack.c.b16 %v2066, %v2054
    %v2715 = vpack.c.b16 %v2067, %v2055
    %v2716 = vpack.c.b16 %v2068, %v2056
    %v2717 = vpack.c.b16 %v2069, %v2057
    %v2718 = vpack.c.b16 %v2070, %v2058
    %v2719 = vpack.c.b16 %v2083, %v2071
    %v2720 = vpack.c.b16 %v2084, %v2072
    %v2721 = vpack.c.b16 %v2085, %v2073
    %v2722 = vpack.c.b16 %v2086, %v2074
    %v2723 = vpack.c.b16 %v2087, %v2075
    %v2724 = vpack.c.b16 %v2088, %v2076
    %v2725 = vpack.c.b16 %v2089, %v2077
    %v2726 = vpack.c.b16 %v2090, %v2078
    %v2727 = vpack.c.b16 %v2091, %v2079
    %v2728 = vpack.c.b16 %v2092, %v2080
    %v2729 = vpack.c.b16 %v2093, %v2081
    %v2730 = vpack.c.b16 %v2094, %v2082
    %v2731 = vpack.c.b16 %v2107, %v2095
    %v2732 = vpack.c.b16 %v2108, %v2096
    %v2733 = vpack.c.b16 %v2109, %v2097
    %v2734 = vpack.c.b16 %v2110, %v2098
    %v2735 = vpack.c.b16 %v2111, %v2099
    %v2736 = vpack.c.b16 %v2112, %v2100
    %v2737 = vpack.c.b16 %v2113, %v2101
    %v2738 = vpack.c.b16 %v2114, %v2102
    %v2739 = vpack.c.b16 %v2115, %v2103
    %v2740 = vpack.c.b16 %v2116, %v2104
    %v2741 = vpack.c.b16 %v2117, %v2105
    %v2742 = vpack.c.b16 %v2118, %v2106
    %v2743 = vpack.c.b16 %v2131, %v2119
    %v2744 = vpack.c.b16 %v2132, %v2120
    %v2745 = vpack.c.b16 %v2133, %v2121
    %v2746 = vpack.c.b16 %v2134, %v2122
    %v2747 = vpack.c.b16 %v2135, %v2123
    %v2748 = vpack.c.b16 %v2136, %v2124
    %v2749 = vpack.c.b16 %v2137, %v2125
    %v2750 = vpack.c.b16 %v2138, %v2126
    %v2751 = vpack.c.b16 %v2139, %v2127
    %v2752 = vpack.c.b16 %v2140, %v2128
    %v2753 = vpack.c.b16 %v2141, %v2129
    %v2754 = vpack.c.b16 %v2142, %v2130
    %v2755 = vpack.c.b16 %v2155, %v2143
    %v2756 = vpack.c.b16 %v2156, %v2144
    %v2757 = vpack.c.b16 %v2157, %v2145
    %v2758 = vpack.c.b16 %v2158, %v2146
    %v2759 = vpack.c.b16 %v2159, %v2147
    %v2760 = vpack.c.b16 %v2160, %v2148
    %v2761 = vpack.c.b16 %v2161, %v2149
    %v2762 = vpack.c.b16 %v2162, %v2150
    %v2763 = vpack.c.b16 %v2163, %v2151
    %v2764 = vpack.c.b16 %v2164, %v2152
    %v2765 = vpack.c.b16 %v2165, %v2153
    %v2766 = vpack.c.b16 %v2166, %v2154
    %v2767 = vpack.c.b16 %v2179, %v2167
    %v2768 = vpack.c.b16 %v2180, %v2168
    %v2769 = vpack.c.b16 %v2181, %v2169
    %v2770 = vpack.c.b16 %v2182, %v2170
    %v2771 = vpack.c.b16 %v2183, %v2171
    %v2772 = vpack.c.b16 %v2184, %v2172
    %v2773 = vpack.c.b16 %v2185, %v2173
    %v2774 = vpack.c.b16 %v2186, %v2174
    %v2775 = vpack.c.b16 %v2187, %v2175
    %v2776 = vpack.c.b16 %v2188, %v2176
    %v2777 = vpack.c.b16 %v2189, %v2177
    %v2778 = vpack.c.b16 %v2190, %v2178
    %v2779 = vpack.c.b16 %v2203, %v2191
    %v2780 = vpack.c.b16 %v2204, %v2192
    %v2781 = vpack.c.b16 %v2205, %v2193
    %v2782 = vpack.c.b16 %v2206, %v2194
    %v2783 = vpack.c.b16 %v2207, %v2195
    %v2784 = vpack.c.b16 %v2208, %v2196
    %v2785 = vpack.c.b16 %v2209, %v2197
    %v2786 = vpack.c.b16 %v2210, %v2198
    %v2787 = vpack.c.b16 %v2211, %v2199
    %v2788 = vpack.c.b16 %v2212, %v2200
    %v2789 = vpack.c.b16 %v2213, %v2201
    %v2790 = vpack.c.b16 %v2214, %v2202
    %v2791 = vpack.c.b16 %v2227, %v2215
    %v2792 = vpack.c.b16 %v2228, %v2216
    %v2793 = vpack.c.b16 %v2229, %v2217
    %v2794 = vpack.c.b16 %v2230, %v2218
    %v2795 = vpack.c.b16 %v2231, %v2219
    %v2796 = vpack.c.b16 %v2232, %v2220
    %v2797 = vpack.c.b16 %v2233, %v2221
    %v2798 = vpack.c.b16 %v2234, %v2222
    %v2799 = vpack.c.b16 %v2235, %v2223
    %v2800 = vpack.c.b16 %v2236, %v2224
    %v2801 = vpack.c.b16 %v2237, %v2225
    %v2802 = vpack.c.b16 %v2238, %v2226
    %v2803 = vpack.c.b16 %v2251, %v2239
    %v2804 = vpack.c.b16 %v2252, %v2240
    %v2805 = vpack.c.b16 %v2253, %v2241
    %v2806 = vpack.c.b16 %v2254, %v2242
    %v2807 = vpack.c.b16 %v2255, %v2243
    %v2808 = vpack.c.b16 %v2256, %v2244
    %v2809 = vpack.c.b16 %v2257, %v2245
    %v2810 = vpack.c.b16 %v2258, %v2246
    %v2811 = vpack.c.b16 %v2259, %v2247
    %v2812 = vpack.c.b16 %v2260, %v2248
    %v2813 = vpack.c.b16 %v2261, %v2249
    %v2814 = vpack.c.b16 %v2262, %v2250
    %v2815 = vpack.c.b16 %v2275, %v2263
    %v2816 = vpack.c.b16 %v2276, %v2264
    %v2817 = vpack.c.b16 %v2277, %v2265
    %v2818 = vpack.c.b16 %v2278, %v2266
    %v2819 = vpack.c.b16 %v2279, %v2267
    %v2820 = vpack.c.b16 %v2280, %v2268
    %v2821 = vpack.c.b16 %v2281, %v2269
    %v2822 = vpack.c.b16 %v2282, %v2270
    %v2823 = vpack.c.b16 %v2283, %v2271
    %v2824 = vpack.c.b16 %v2284, %v2272
    %v2825 = vpack.c.b16 %v2285, %v2273
    %v2826 = vpack.c.b16 %v2286, %v2274
    %v2827 = vpack.c.b16 %v2299, %v2287
    %v2828 = vpack.c.b16 %v2300, %v2288
    %v2829 = vpack.c.b16 %v2301, %v2289
    %v2830 = vpack.c.b16 %v2302, %v2290
    %v2831 = vpack.c.b16 %v2303, %v2291
    %v2832 = vpack.c.b16 %v2304, %v2292
    %v2833 = vpack.c.b16 %v2305, %v2293
    %v2834 = vpack.c.b16 %v2306, %v2294
    %v2835 = vpack.c.b16 %v2307, %v2295
    %v2836 = vpack.c.b16 %v2308, %v2296
    %v2837 = vpack.c.b16 %v2309, %v2297
    %v2838 = vpack.c.b16 %v2310, %v2298
    %v2839 = vpack.c.b16 %v2323, %v2311
    %v2840 = vpack.c.b16 %v2324, %v2312
    %v2841 = vpack.c.b16 %v2325, %v2313
    %v2842 = vpack.c.b16 %v2326, %v2314
    %v2843 = vpack.c.b16 %v2327, %v2315
    %v2844 = vpack.c.b16 %v2328, %v2316
    %v2845 = vpack.c.b16 %v2329, %v2317
    %v2846 = vpack.c.b16 %v2330, %v2318
    %v2847 = vpack.c.b16 %v2331, %v2319
    %v2848 = vpack.c.b16 %v2332, %v2320
    %v2849 = vpack.c.b16 %v2333, %v2321
    %v2850 = vpack.c.b16 %v2334, %v2322
    %v2851 = vpack.c.b16 %v2347, %v2335
    %v2852 = vpack.c.b16 %v2348, %v2336
    %v2853 = vpack.c.b16 %v2349, %v2337
    %v2854 = vpack.c.b16 %v2350, %v2338
    %v2855 = vpack.c.b16 %v2351, %v2339
    %v2856 = vpack.c.b16 %v2352, %v2340
    %v2857 = vpack.c.b16 %v2353, %v2341
    %v2858 = vpack.c.b16 %v2354, %v2342
    %v2859 = vpack.c.b16 %v2355, %v2343
    %v2860 = vpack.c.b16 %v2356, %v2344
    %v2861 = vpack.c.b16 %v2357, %v2345
    %v2862 = vpack.c.b16 %v2358, %v2346
    %v2863 = vpack.c.b16 %v2371, %v2359
    %v2864 = vpack.c.b16 %v2372, %v2360
    %v2865 = vpack.c.b16 %v2373, %v2361
    %v2866 = vpack.c.b16 %v2374, %v2362
    %v2867 = vpack.c.b16 %v2375, %v2363
    %v2868 = vpack.c.b16 %v2376, %v2364
    %v2869 = vpack.c.b16 %v2377, %v2365
    %v2870 = vpack.c.b16 %v2378, %v2366
    %v2871 = vpack.c.b16 %v2379, %v2367
    %v2872 = vpack.c.b16 %v2380, %v2368
    %v2873 = vpack.c.b16 %v2381, %v2369
    %v2874 = vpack.c.b16 %v2382, %v2370
    %v2875 = vpack.c.b16 %v2395, %v2383
    %v2876 = vpack.c.b16 %v2396, %v2384
    %v2877 = vpack.c.b16 %v2397, %v2385
    %v2878 = vpack.c.b16 %v2398, %v2386
    %v2879 = vpack.c.b16 %v2399, %v2387
    %v2880 = vpack.c.b16 %v2400, %v2388
    %v2881 = vpack.c.b16 %v2401, %v2389
    %v2882 = vpack.c.b16 %v2402, %v2390
    %v2883 = vpack.c.b16 %v2403, %v2391
    %v2884 = vpack.c.b16 %v2404, %v2392
    %v2885 = vpack.c.b16 %v2405, %v2393
    %v2886 = vpack.c.b16 %v2406, %v2394
    %v2887 = vpack.c.b16 %v2419, %v2407
    %v2888 = vpack.c.b16 %v2420, %v2408
    %v2889 = vpack.c.b16 %v2421, %v2409
    %v2890 = vpack.c.b16 %v2422, %v2410
    %v2891 = vpack.c.b16 %v2423, %v2411
    %v2892 = vpack.c.b16 %v2424, %v2412
    %v2893 = vpack.c.b16 %v2425, %v2413
    %v2894 = vpack.c.b16 %v2426, %v2414
    %v2895 = vpack.c.b16 %v2427, %v2415
    %v2896 = vpack.c.b16 %v2428, %v2416
    %v2897 = vpack.c.b16 %v2429, %v2417
    %v2898 = vpack.c.b16 %v2430, %v2418
    %v2899 = vpack.c.b16 %v2443, %v2431
    %v2900 = vpack.c.b16 %v2444, %v2432
    %v2901 = vpack.c.b16 %v2445, %v2433
    %v2902 = vpack.c.b16 %v2446, %v2434
    %v2903 = vpack.c.b16 %v2447, %v2435
    %v2904 = vpack.c.b16 %v2448, %v2436
    %v2905 = vpack.c.b16 %v2449, %v2437
    %v2906 = vpack.c.b16 %v2450, %v2438
    %v2907 = vpack.c.b16 %v2451, %v2439
    %v2908 = vpack.c.b16 %v2452, %v2440
    %v2909 = vpack.c.b16 %v2453, %v2441
    %v2910 = vpack.c.b16 %v2454, %v2442
    %v2911 = vpack.c.b16 %v2467, %v2455
    %v2912 = vpack.c.b16 %v2468, %v2456
    %v2913 = vpack.c.b16 %v2469, %v2457
    %v2914 = vpack.c.b16 %v2470, %v2458
    %v2915 = vpack.c.b16 %v2471, %v2459
    %v2916 = vpack.c.b16 %v2472, %v2460
    %v2917 = vpack.c.b16 %v2473, %v2461
    %v2918 = vpack.c.b16 %v2474, %v2462
    %v2919 = vpack.c.b16 %v2475, %v2463
    %v2920 = vpack.c.b16 %v2476, %v2464
    %v2921 = vpack.c.b16 %v2477, %v2465
    %v2922 = vpack.c.b16 %v2478, %v2466
    %v2923 = vpack.c.b16 %v2491, %v2479
    %v2924 = vpack.c.b16 %v2492, %v2480
    %v2925 = vpack.c.b16 %v2493, %v2481
    %v2926 = vpack.c.b16 %v2494, %v2482
    %v2927 = vpack.c.b16 %v2495, %v2483
    %v2928 = vpack.c.b16 %v2496, %v2484
    %v2929 = vpack.c.b16 %v2497, %v2485
    %v2930 = vpack.c.b16 %v2498, %v2486
    %v2931 = vpack.c.b16 %v2499, %v2487
    %v2932 = vpack.c.b16 %v2500, %v2488
    %v2933 = vpack.c.b16 %v2501, %v2489
    %v2934 = vpack.c.b16 %v2502, %v2490
    %v2935 = vpack.c.b16 %v2515, %v2503
    %v2936 = vpack.c.b16 %v2516, %v2504
    %v2937 = vpack.c.b16 %v2517, %v2505
    %v2938 = vpack.c.b16 %v2518, %v2506
    %v2939 = vpack.c.b16 %v2519, %v2507
    %v2940 = vpack.c.b16 %v2520, %v2508
    %v2941 = vpack.c.b16 %v2521, %v2509
    %v2942 = vpack.c.b16 %v2522, %v2510
    %v2943 = vpack.c.b16 %v2523, %v2511
    %v2944 = vpack.c.b16 %v2524, %v2512
    %v2945 = vpack.c.b16 %v2525, %v2513
    %v2946 = vpack.c.b16 %v2526, %v2514
    %v2947 = vpack.c.b16 %v2539, %v2527
    %v2948 = vpack.c.b16 %v2540, %v2528
    %v2949 = vpack.c.b16 %v2541, %v2529
    %v2950 = vpack.c.b16 %v2542, %v2530
    %v2951 = vpack.c.b16 %v2543, %v2531
    %v2952 = vpack.c.b16 %v2544, %v2532
    %v2953 = vpack.c.b16 %v2545, %v2533
    %v2954 = vpack.c.b16 %v2546, %v2534
    %v2955 = vpack.c.b16 %v2547, %v2535
    %v2956 = vpack.c.b16 %v2548, %v2536
    %v2957 = vpack.c.b16 %v2549, %v2537
    %v2958 = vpack.c.b16 %v2550, %v2538
    %v2959 = vpack.c.b16 %v2563, %v2551
    %v2960 = vpack.c.b16 %v2564, %v2552
    %v2961 = vpack.c.b16 %v2565, %v2553
    %v2962 = vpack.c.b16 %v2566, %v2554
    %v2963 = vpack.c.b16 %v2567, %v2555
    %v2964 = vpack.c.b16 %v2568, %v2556
    %v2965 = vpack.c.b16 %v2569, %v2557
    %v2966 = vpack.c.b16 %v2570, %v2558
    %v2967 = vpack.c.b16 %v2571, %v2559
    %v2968 = vpack.c.b16 %v2572, %v2560
    %v2969 = vpack.c.b16 %v2573, %v2561
    %v2970 = vpack.c.b16 %v2574, %v2562
    %v2971 = vpack.c.b16 %v2587, %v2575
    %v2972 = vpack.c.b16 %v2588, %v2576
    %v2973 = vpack.c.b16 %v2589, %v2577
    %v2974 = vpack.c.b16 %v2590, %v2578
    %v2975 = vpack.c.b16 %v2591, %v2579
    %v2976 = vpack.c.b16 %v2592, %v2580
    %v2977 = vpack.c.b16 %v2593, %v2581
    %v2978 = vpack.c.b16 %v2594, %v2582
    %v2979 = vpack.c.b16 %v2595, %v2583
    %v2980 = vpack.c.b16 %v2596, %v2584
    %v2981 = vpack.c.b16 %v2597, %v2585
    %v2982 = vpack.c.b16 %v2598, %v2586
    %3367 = vmatprep.subr.bf16.mxu0 %v2684
    %3368 = vmatpush1.bf16.msra.mxu0 %v2683
    %3369 = vmatprep.subr.bf16.mxu0 %v2672
    %3370 = vmatpush1.bf16.msra.mxu0 %v2671
    %3371 = vmatprep.subr.bf16.mxu0 %v2660
    %3372 = vmatpush1.bf16.msra.mxu0 %v2659
    %3373 = vmatprep.subr.bf16.mxu0 %v2648
    %3374 = vmatpush1.bf16.msra.mxu0 %v2647
    %3375 = vmatprep.subr.bf16.mxu0 %v2636
    %3376 = vmatpush1.bf16.msra.mxu0 %v2635
    %3377 = vmatprep.subr.bf16.mxu0 %v2624
    %3378 = vmatpush1.bf16.msra.mxu0 %v2623
    %3379 = vmatprep.subr.bf16.mxu0 %v2612
    %3380 = vmatpush1.bf16.msra.mxu0 %v2611
    %3381 = vmatprep.subr.bf16.mxu0 %v2600
    %3382 = vmatpush1.bf16.msra.mxu0 %v2599
    %3383 = vmatprep.subr.bf16.mxu0 %v2780
    %3384 = vmatpush2.bf16.msra.mxu0 %v2779
    %3385 = vmatprep.subr.bf16.mxu0 %v2768
    %3386 = vmatpush2.bf16.msra.mxu0 %v2767
    %3387 = vmatprep.subr.bf16.mxu0 %v2756
    %3388 = vmatpush2.bf16.msra.mxu0 %v2755
    %3389 = vmatprep.subr.bf16.mxu0 %v2744
    %3390 = vmatpush2.bf16.msra.mxu0 %v2743
    %3391 = vmatprep.subr.bf16.mxu0 %v2732
    %3392 = vmatpush2.bf16.msra.mxu0 %v2731
    %3393 = vmatprep.subr.bf16.mxu0 %v2720
    %3394 = vmatpush2.bf16.msra.mxu0 %v2719
    %3395 = vmatprep.subr.bf16.mxu0 %v2708
    %3396 = vmatpush2.bf16.msra.mxu0 %v2707
    %3397 = vmatprep.subr.bf16.mxu0 %v2696
    %3398 = vmatpush2.bf16.msra.mxu0 %v2695
    %3399 = vmatprep.mubr.bf16.mxu0 %v982
    %3400 = vmatmul.mubr.bf16.gmra.mxu0 %v981
    %v3401 = vpop.f32.mrf.mxu0
    %v3402 = vadd.f32 %v1390, %v3401
    %v3403 = vpop.f32.mrf.mxu0
    %v3404 = vadd.f32 %v1394, %v3403
    %v3405 = vpop.f32.mrf.mxu0
    %v3406 = vpop.f32.mrf.mxu0
    %3407 = vdwg.mxu0
    %3408 = vmatprep.subr.bf16.mxu0 %v2876
    %3409 = vmatpush1.bf16.msra.mxu0 %v2875
    %3410 = vmatprep.subr.bf16.mxu0 %v2864
    %3411 = vmatpush1.bf16.msra.mxu0 %v2863
    %3412 = vmatprep.subr.bf16.mxu0 %v2852
    %3413 = vmatpush1.bf16.msra.mxu0 %v2851
    %3414 = vmatprep.subr.bf16.mxu0 %v2840
    %3415 = vmatpush1.bf16.msra.mxu0 %v2839
    %3416 = vmatprep.subr.bf16.mxu0 %v2828
    %3417 = vmatpush1.bf16.msra.mxu0 %v2827
    %3418 = vmatprep.subr.bf16.mxu0 %v2816
    %3419 = vmatpush1.bf16.msra.mxu0 %v2815
    %3420 = vmatprep.subr.bf16.mxu0 %v2804
    %3421 = vmatpush1.bf16.msra.mxu0 %v2803
    %3422 = vmatprep.subr.bf16.mxu0 %v2792
    %3423 = vmatpush1.bf16.msra.mxu0 %v2791
    %3424 = vmatprep.subr.bf16.mxu0 %v2972
    %3425 = vmatpush2.bf16.msra.mxu0 %v2971
    %3426 = vmatprep.subr.bf16.mxu0 %v2960
    %3427 = vmatpush2.bf16.msra.mxu0 %v2959
    %3428 = vmatprep.subr.bf16.mxu0 %v2948
    %3429 = vmatpush2.bf16.msra.mxu0 %v2947
    %3430 = vmatprep.subr.bf16.mxu0 %v2936
    %3431 = vmatpush2.bf16.msra.mxu0 %v2935
    %3432 = vmatprep.subr.bf16.mxu0 %v2924
    %3433 = vmatpush2.bf16.msra.mxu0 %v2923
    %3434 = vmatprep.subr.bf16.mxu0 %v2912
    %3435 = vmatpush2.bf16.msra.mxu0 %v2911
    %3436 = vmatprep.subr.bf16.mxu0 %v2900
    %3437 = vmatpush2.bf16.msra.mxu0 %v2899
    %3438 = vmatprep.subr.bf16.mxu0 %v2888
    %3439 = vmatpush2.bf16.msra.mxu0 %v2887
    %3440 = vmatprep.mubr.bf16.mxu0 %v984
    %3441 = vmatmul.mubr.bf16.gmra.mxu0 %v983
    %v3442 = vpop.f32.mrf.mxu0
    %v3443 = vadd.f32 %v3402, %v3442
    %v3444 = vpop.f32.mrf.mxu0
    %v3445 = vadd.f32 %v3404, %v3444
    %v3446 = vpop.f32.mrf.mxu0
    %v3447 = vpop.f32.mrf.mxu0
    %3448 = vdwg.mxu0
    %3449 = vmatprep.subr.bf16.mxu0 %v2686
    %3450 = vmatpush1.bf16.msra.mxu0 %v2685
    %3451 = vmatprep.subr.bf16.mxu0 %v2674
    %3452 = vmatpush1.bf16.msra.mxu0 %v2673
    %3453 = vmatprep.subr.bf16.mxu0 %v2662
    %3454 = vmatpush1.bf16.msra.mxu0 %v2661
    %3455 = vmatprep.subr.bf16.mxu0 %v2650
    %3456 = vmatpush1.bf16.msra.mxu0 %v2649
    %3457 = vmatprep.subr.bf16.mxu0 %v2638
    %3458 = vmatpush1.bf16.msra.mxu0 %v2637
    %3459 = vmatprep.subr.bf16.mxu0 %v2626
    %3460 = vmatpush1.bf16.msra.mxu0 %v2625
    %3461 = vmatprep.subr.bf16.mxu0 %v2614
    %3462 = vmatpush1.bf16.msra.mxu0 %v2613
    %3463 = vmatprep.subr.bf16.mxu0 %v2602
    %3464 = vmatpush1.bf16.msra.mxu0 %v2601
    %3465 = vmatprep.subr.bf16.mxu0 %v2782
    %3466 = vmatpush2.bf16.msra.mxu0 %v2781
    %3467 = vmatprep.subr.bf16.mxu0 %v2770
    %3468 = vmatpush2.bf16.msra.mxu0 %v2769
    %3469 = vmatprep.subr.bf16.mxu0 %v2758
    %3470 = vmatpush2.bf16.msra.mxu0 %v2757
    %3471 = vmatprep.subr.bf16.mxu0 %v2746
    %3472 = vmatpush2.bf16.msra.mxu0 %v2745
    %3473 = vmatprep.subr.bf16.mxu0 %v2734
    %3474 = vmatpush2.bf16.msra.mxu0 %v2733
    %3475 = vmatprep.subr.bf16.mxu0 %v2722
    %3476 = vmatpush2.bf16.msra.mxu0 %v2721
    %3477 = vmatprep.subr.bf16.mxu0 %v2710
    %3478 = vmatpush2.bf16.msra.mxu0 %v2709
    %3479 = vmatprep.subr.bf16.mxu0 %v2698
    %3480 = vmatpush2.bf16.msra.mxu0 %v2697
    %3481 = vmatprep.mubr.bf16.mxu0 %v982
    %3482 = vmatmul.mubr.bf16.gmra.mxu0 %v981
    %v3483 = vpop.f32.mrf.mxu0
    %v3484 = vadd.f32 %v1398, %v3483
    %v3485 = vpop.f32.mrf.mxu0
    %v3486 = vadd.f32 %v1402, %v3485
    %v3487 = vpop.f32.mrf.mxu0
    %v3488 = vpop.f32.mrf.mxu0
    %3489 = vdwg.mxu0
    %3490 = vmatprep.subr.bf16.mxu0 %v2878
    %3491 = vmatpush1.bf16.msra.mxu0 %v2877
    %3492 = vmatprep.subr.bf16.mxu0 %v2866
    %3493 = vmatpush1.bf16.msra.mxu0 %v2865
    %3494 = vmatprep.subr.bf16.mxu0 %v2854
    %3495 = vmatpush1.bf16.msra.mxu0 %v2853
    %3496 = vmatprep.subr.bf16.mxu0 %v2842
    %3497 = vmatpush1.bf16.msra.mxu0 %v2841
    %3498 = vmatprep.subr.bf16.mxu0 %v2830
    %3499 = vmatpush1.bf16.msra.mxu0 %v2829
    %3500 = vmatprep.subr.bf16.mxu0 %v2818
    %3501 = vmatpush1.bf16.msra.mxu0 %v2817
    %3502 = vmatprep.subr.bf16.mxu0 %v2806
    %3503 = vmatpush1.bf16.msra.mxu0 %v2805
    %3504 = vmatprep.subr.bf16.mxu0 %v2794
    %3505 = vmatpush1.bf16.msra.mxu0 %v2793
    %3506 = vmatprep.subr.bf16.mxu0 %v2974
    %3507 = vmatpush2.bf16.msra.mxu0 %v2973
    %3508 = vmatprep.subr.bf16.mxu0 %v2962
    %3509 = vmatpush2.bf16.msra.mxu0 %v2961
    %3510 = vmatprep.subr.bf16.mxu0 %v2950
    %3511 = vmatpush2.bf16.msra.mxu0 %v2949
    %3512 = vmatprep.subr.bf16.mxu0 %v2938
    %3513 = vmatpush2.bf16.msra.mxu0 %v2937
    %3514 = vmatprep.subr.bf16.mxu0 %v2926
    %3515 = vmatpush2.bf16.msra.mxu0 %v2925
    %3516 = vmatprep.subr.bf16.mxu0 %v2914
    %3517 = vmatpush2.bf16.msra.mxu0 %v2913
    %3518 = vmatprep.subr.bf16.mxu0 %v2902
    %3519 = vmatpush2.bf16.msra.mxu0 %v2901
    %3520 = vmatprep.subr.bf16.mxu0 %v2890
    %3521 = vmatpush2.bf16.msra.mxu0 %v2889
    %3522 = vmatprep.mubr.bf16.mxu0 %v984
    %3523 = vmatmul.mubr.bf16.gmra.mxu0 %v983
    %v3524 = vpop.f32.mrf.mxu0
    %v3525 = vadd.f32 %v3484, %v3524
    %v3526 = vpop.f32.mrf.mxu0
    %v3527 = vadd.f32 %v3486, %v3526
    %v3528 = vpop.f32.mrf.mxu0
    %v3529 = vpop.f32.mrf.mxu0
    %3530 = vdwg.mxu0
    %3531 = vmatprep.subr.bf16.mxu0 %v2688
    %3532 = vmatpush1.bf16.msra.mxu0 %v2687
    %3533 = vmatprep.subr.bf16.mxu0 %v2676
    %3534 = vmatpush1.bf16.msra.mxu0 %v2675
    %3535 = vmatprep.subr.bf16.mxu0 %v2664
    %3536 = vmatpush1.bf16.msra.mxu0 %v2663
    %3537 = vmatprep.subr.bf16.mxu0 %v2652
    %3538 = vmatpush1.bf16.msra.mxu0 %v2651
    %3539 = vmatprep.subr.bf16.mxu0 %v2640
    %3540 = vmatpush1.bf16.msra.mxu0 %v2639
    %3541 = vmatprep.subr.bf16.mxu0 %v2628
    %3542 = vmatpush1.bf16.msra.mxu0 %v2627
    %3543 = vmatprep.subr.bf16.mxu0 %v2616
    %3544 = vmatpush1.bf16.msra.mxu0 %v2615
    %3545 = vmatprep.subr.bf16.mxu0 %v2604
    %3546 = vmatpush1.bf16.msra.mxu0 %v2603
    %3547 = vmatprep.subr.bf16.mxu0 %v2784
    %3548 = vmatpush2.bf16.msra.mxu0 %v2783
    %3549 = vmatprep.subr.bf16.mxu0 %v2772
    %3550 = vmatpush2.bf16.msra.mxu0 %v2771
    %3551 = vmatprep.subr.bf16.mxu0 %v2760
    %3552 = vmatpush2.bf16.msra.mxu0 %v2759
    %3553 = vmatprep.subr.bf16.mxu0 %v2748
    %3554 = vmatpush2.bf16.msra.mxu0 %v2747
    %3555 = vmatprep.subr.bf16.mxu0 %v2736
    %3556 = vmatpush2.bf16.msra.mxu0 %v2735
    %3557 = vmatprep.subr.bf16.mxu0 %v2724
    %3558 = vmatpush2.bf16.msra.mxu0 %v2723
    %3559 = vmatprep.subr.bf16.mxu0 %v2712
    %3560 = vmatpush2.bf16.msra.mxu0 %v2711
    %3561 = vmatprep.subr.bf16.mxu0 %v2700
    %3562 = vmatpush2.bf16.msra.mxu0 %v2699
    %3563 = vmatprep.mubr.bf16.mxu0 %v982
    %3564 = vmatmul.mubr.bf16.gmra.mxu0 %v981
    %v3565 = vpop.f32.mrf.mxu0
    %v3566 = vadd.f32 %v1406, %v3565
    %v3567 = vpop.f32.mrf.mxu0
    %v3568 = vadd.f32 %v1410, %v3567
    %v3569 = vpop.f32.mrf.mxu0
    %v3570 = vpop.f32.mrf.mxu0
    %3571 = vdwg.mxu0
    %3572 = vmatprep.subr.bf16.mxu0 %v2880
    %3573 = vmatpush1.bf16.msra.mxu0 %v2879
    %3574 = vmatprep.subr.bf16.mxu0 %v2868
    %3575 = vmatpush1.bf16.msra.mxu0 %v2867
    %3576 = vmatprep.subr.bf16.mxu0 %v2856
    %3577 = vmatpush1.bf16.msra.mxu0 %v2855
    %3578 = vmatprep.subr.bf16.mxu0 %v2844
    %3579 = vmatpush1.bf16.msra.mxu0 %v2843
    %3580 = vmatprep.subr.bf16.mxu0 %v2832
    %3581 = vmatpush1.bf16.msra.mxu0 %v2831
    %3582 = vmatprep.subr.bf16.mxu0 %v2820
    %3583 = vmatpush1.bf16.msra.mxu0 %v2819
    %3584 = vmatprep.subr.bf16.mxu0 %v2808
    %3585 = vmatpush1.bf16.msra.mxu0 %v2807
    %3586 = vmatprep.subr.bf16.mxu0 %v2796
    %3587 = vmatpush1.bf16.msra.mxu0 %v2795
    %3588 = vmatprep.subr.bf16.mxu0 %v2976
    %3589 = vmatpush2.bf16.msra.mxu0 %v2975
    %3590 = vmatprep.subr.bf16.mxu0 %v2964
    %3591 = vmatpush2.bf16.msra.mxu0 %v2963
    %3592 = vmatprep.subr.bf16.mxu0 %v2952
    %3593 = vmatpush2.bf16.msra.mxu0 %v2951
    %3594 = vmatprep.subr.bf16.mxu0 %v2940
    %3595 = vmatpush2.bf16.msra.mxu0 %v2939
    %3596 = vmatprep.subr.bf16.mxu0 %v2928
    %3597 = vmatpush2.bf16.msra.mxu0 %v2927
    %3598 = vmatprep.subr.bf16.mxu0 %v2916
    %3599 = vmatpush2.bf16.msra.mxu0 %v2915
    %3600 = vmatprep.subr.bf16.mxu0 %v2904
    %3601 = vmatpush2.bf16.msra.mxu0 %v2903
    %3602 = vmatprep.subr.bf16.mxu0 %v2892
    %3603 = vmatpush2.bf16.msra.mxu0 %v2891
    %3604 = vmatprep.mubr.bf16.mxu0 %v984
    %3605 = vmatmul.mubr.bf16.gmra.mxu0 %v983
    %v3606 = vpop.f32.mrf.mxu0
    %v3607 = vadd.f32 %v3566, %v3606
    %v3608 = vpop.f32.mrf.mxu0
    %v3609 = vadd.f32 %v3568, %v3608
    %v3610 = vpop.f32.mrf.mxu0
    %v3611 = vpop.f32.mrf.mxu0
    %3612 = vdwg.mxu0
    %3613 = vmatprep.subr.bf16.mxu0 %v2690
    %3614 = vmatpush1.bf16.msra.mxu0 %v2689
    %3615 = vmatprep.subr.bf16.mxu0 %v2678
    %3616 = vmatpush1.bf16.msra.mxu0 %v2677
    %3617 = vmatprep.subr.bf16.mxu0 %v2666
    %3618 = vmatpush1.bf16.msra.mxu0 %v2665
    %3619 = vmatprep.subr.bf16.mxu0 %v2654
    %3620 = vmatpush1.bf16.msra.mxu0 %v2653
    %3621 = vmatprep.subr.bf16.mxu0 %v2642
    %3622 = vmatpush1.bf16.msra.mxu0 %v2641
    %3623 = vmatprep.subr.bf16.mxu0 %v2630
    %3624 = vmatpush1.bf16.msra.mxu0 %v2629
    %3625 = vmatprep.subr.bf16.mxu0 %v2618
    %3626 = vmatpush1.bf16.msra.mxu0 %v2617
    %3627 = vmatprep.subr.bf16.mxu0 %v2606
    %3628 = vmatpush1.bf16.msra.mxu0 %v2605
    %3629 = vmatprep.subr.bf16.mxu0 %v2786
    %3630 = vmatpush2.bf16.msra.mxu0 %v2785
    %3631 = vmatprep.subr.bf16.mxu0 %v2774
    %3632 = vmatpush2.bf16.msra.mxu0 %v2773
    %3633 = vmatprep.subr.bf16.mxu0 %v2762
    %3634 = vmatpush2.bf16.msra.mxu0 %v2761
    %3635 = vmatprep.subr.bf16.mxu0 %v2750
    %3636 = vmatpush2.bf16.msra.mxu0 %v2749
    %3637 = vmatprep.subr.bf16.mxu0 %v2738
    %3638 = vmatpush2.bf16.msra.mxu0 %v2737
    %3639 = vmatprep.subr.bf16.mxu0 %v2726
    %3640 = vmatpush2.bf16.msra.mxu0 %v2725
    %3641 = vmatprep.subr.bf16.mxu0 %v2714
    %3642 = vmatpush2.bf16.msra.mxu0 %v2713
    %3643 = vmatprep.subr.bf16.mxu0 %v2702
    %3644 = vmatpush2.bf16.msra.mxu0 %v2701
    %3645 = vmatprep.mubr.bf16.mxu0 %v982
    %3646 = vmatmul.mubr.bf16.gmra.mxu0 %v981
    %v3647 = vpop.f32.mrf.mxu0
    %v3648 = vadd.f32 %v1414, %v3647
    %v3649 = vpop.f32.mrf.mxu0
    %v3650 = vadd.f32 %v1418, %v3649
    %v3651 = vpop.f32.mrf.mxu0
    %v3652 = vpop.f32.mrf.mxu0
    %3653 = vdwg.mxu0
    %3654 = vmatprep.subr.bf16.mxu0 %v2882
    %3655 = vmatpush1.bf16.msra.mxu0 %v2881
    %3656 = vmatprep.subr.bf16.mxu0 %v2870
    %3657 = vmatpush1.bf16.msra.mxu0 %v2869
    %3658 = vmatprep.subr.bf16.mxu0 %v2858
    %3659 = vmatpush1.bf16.msra.mxu0 %v2857
    %3660 = vmatprep.subr.bf16.mxu0 %v2846
    %3661 = vmatpush1.bf16.msra.mxu0 %v2845
    %3662 = vmatprep.subr.bf16.mxu0 %v2834
    %3663 = vmatpush1.bf16.msra.mxu0 %v2833
    %3664 = vmatprep.subr.bf16.mxu0 %v2822
    %3665 = vmatpush1.bf16.msra.mxu0 %v2821
    %3666 = vmatprep.subr.bf16.mxu0 %v2810
    %3667 = vmatpush1.bf16.msra.mxu0 %v2809
    %3668 = vmatprep.subr.bf16.mxu0 %v2798
    %3669 = vmatpush1.bf16.msra.mxu0 %v2797
    %3670 = vmatprep.subr.bf16.mxu0 %v2978
    %3671 = vmatpush2.bf16.msra.mxu0 %v2977
    %3672 = vmatprep.subr.bf16.mxu0 %v2966
    %3673 = vmatpush2.bf16.msra.mxu0 %v2965
    %3674 = vmatprep.subr.bf16.mxu0 %v2954
    %3675 = vmatpush2.bf16.msra.mxu0 %v2953
    %3676 = vmatprep.subr.bf16.mxu0 %v2942
    %3677 = vmatpush2.bf16.msra.mxu0 %v2941
    %3678 = vmatprep.subr.bf16.mxu0 %v2930
    %3679 = vmatpush2.bf16.msra.mxu0 %v2929
    %3680 = vmatprep.subr.bf16.mxu0 %v2918
    %3681 = vmatpush2.bf16.msra.mxu0 %v2917
    %3682 = vmatprep.subr.bf16.mxu0 %v2906
    %3683 = vmatpush2.bf16.msra.mxu0 %v2905
    %3684 = vmatprep.subr.bf16.mxu0 %v2894
    %3685 = vmatpush2.bf16.msra.mxu0 %v2893
    %3686 = vmatprep.mubr.bf16.mxu0 %v984
    %3687 = vmatmul.mubr.bf16.gmra.mxu0 %v983
    %v3688 = vpop.f32.mrf.mxu0
    %v3689 = vadd.f32 %v3648, %v3688
    %v3690 = vpop.f32.mrf.mxu0
    %v3691 = vadd.f32 %v3650, %v3690
    %v3692 = vpop.f32.mrf.mxu0
    %v3693 = vpop.f32.mrf.mxu0
    %3694 = vdwg.mxu0
    %3695 = vmatprep.subr.bf16.mxu0 %v2692
    %3696 = vmatpush1.bf16.msra.mxu0 %v2691
    %3697 = vmatprep.subr.bf16.mxu0 %v2680
    %3698 = vmatpush1.bf16.msra.mxu0 %v2679
    %3699 = vmatprep.subr.bf16.mxu0 %v2668
    %3700 = vmatpush1.bf16.msra.mxu0 %v2667
    %3701 = vmatprep.subr.bf16.mxu0 %v2656
    %3702 = vmatpush1.bf16.msra.mxu0 %v2655
    %3703 = vmatprep.subr.bf16.mxu0 %v2644
    %3704 = vmatpush1.bf16.msra.mxu0 %v2643
    %3705 = vmatprep.subr.bf16.mxu0 %v2632
    %3706 = vmatpush1.bf16.msra.mxu0 %v2631
    %3707 = vmatprep.subr.bf16.mxu0 %v2620
    %3708 = vmatpush1.bf16.msra.mxu0 %v2619
    %3709 = vmatprep.subr.bf16.mxu0 %v2608
    %3710 = vmatpush1.bf16.msra.mxu0 %v2607
    %3711 = vmatprep.subr.bf16.mxu0 %v2788
    %3712 = vmatpush2.bf16.msra.mxu0 %v2787
    %3713 = vmatprep.subr.bf16.mxu0 %v2776
    %3714 = vmatpush2.bf16.msra.mxu0 %v2775
    %3715 = vmatprep.subr.bf16.mxu0 %v2764
    %3716 = vmatpush2.bf16.msra.mxu0 %v2763
    %3717 = vmatprep.subr.bf16.mxu0 %v2752
    %3718 = vmatpush2.bf16.msra.mxu0 %v2751
    %3719 = vmatprep.subr.bf16.mxu0 %v2740
    %3720 = vmatpush2.bf16.msra.mxu0 %v2739
    %3721 = vmatprep.subr.bf16.mxu0 %v2728
    %3722 = vmatpush2.bf16.msra.mxu0 %v2727
    %3723 = vmatprep.subr.bf16.mxu0 %v2716
    %3724 = vmatpush2.bf16.msra.mxu0 %v2715
    %3725 = vmatprep.subr.bf16.mxu0 %v2704
    %3726 = vmatpush2.bf16.msra.mxu0 %v2703
    %3727 = vmatprep.mubr.bf16.mxu0 %v982
    %3728 = vmatmul.mubr.bf16.gmra.mxu0 %v981
    %v3729 = vpop.f32.mrf.mxu0
    %v3730 = vadd.f32 %v1422, %v3729
    %v3731 = vpop.f32.mrf.mxu0
    %v3732 = vadd.f32 %v1426, %v3731
    %v3733 = vpop.f32.mrf.mxu0
    %v3734 = vpop.f32.mrf.mxu0
    %3735 = vdwg.mxu0
    %3736 = vmatprep.subr.bf16.mxu0 %v2884
    %3737 = vmatpush1.bf16.msra.mxu0 %v2883
    %3738 = vmatprep.subr.bf16.mxu0 %v2872
    %3739 = vmatpush1.bf16.msra.mxu0 %v2871
    %3740 = vmatprep.subr.bf16.mxu0 %v2860
    %3741 = vmatpush1.bf16.msra.mxu0 %v2859
    %3742 = vmatprep.subr.bf16.mxu0 %v2848
    %3743 = vmatpush1.bf16.msra.mxu0 %v2847
    %3744 = vmatprep.subr.bf16.mxu0 %v2836
    %3745 = vmatpush1.bf16.msra.mxu0 %v2835
    %3746 = vmatprep.subr.bf16.mxu0 %v2824
    %3747 = vmatpush1.bf16.msra.mxu0 %v2823
    %3748 = vmatprep.subr.bf16.mxu0 %v2812
    %3749 = vmatpush1.bf16.msra.mxu0 %v2811
    %3750 = vmatprep.subr.bf16.mxu0 %v2800
    %3751 = vmatpush1.bf16.msra.mxu0 %v2799
    %3752 = vmatprep.subr.bf16.mxu0 %v2980
    %3753 = vmatpush2.bf16.msra.mxu0 %v2979
    %3754 = vmatprep.subr.bf16.mxu0 %v2968
    %3755 = vmatpush2.bf16.msra.mxu0 %v2967
    %3756 = vmatprep.subr.bf16.mxu0 %v2956
    %3757 = vmatpush2.bf16.msra.mxu0 %v2955
    %3758 = vmatprep.subr.bf16.mxu0 %v2944
    %3759 = vmatpush2.bf16.msra.mxu0 %v2943
    %3760 = vmatprep.subr.bf16.mxu0 %v2932
    %3761 = vmatpush2.bf16.msra.mxu0 %v2931
    %3762 = vmatprep.subr.bf16.mxu0 %v2920
    %3763 = vmatpush2.bf16.msra.mxu0 %v2919
    %3764 = vmatprep.subr.bf16.mxu0 %v2908
    %3765 = vmatpush2.bf16.msra.mxu0 %v2907
    %3766 = vmatprep.subr.bf16.mxu0 %v2896
    %3767 = vmatpush2.bf16.msra.mxu0 %v2895
    %3768 = vmatprep.mubr.bf16.mxu0 %v984
    %3769 = vmatmul.mubr.bf16.gmra.mxu0 %v983
    %v3770 = vpop.f32.mrf.mxu0
    %v3771 = vadd.f32 %v3730, %v3770
    %v3772 = vpop.f32.mrf.mxu0
    %v3773 = vadd.f32 %v3732, %v3772
    %v3774 = vpop.f32.mrf.mxu0
    %v3775 = vpop.f32.mrf.mxu0
    %3776 = vdwg.mxu0
    %3777 = vmatprep.subr.bf16.mxu0 %v2694
    %3778 = vmatpush1.bf16.msra.mxu0 %v2693
    %3779 = vmatprep.subr.bf16.mxu0 %v2682
    %3780 = vmatpush1.bf16.msra.mxu0 %v2681
    %3781 = vmatprep.subr.bf16.mxu0 %v2670
    %3782 = vmatpush1.bf16.msra.mxu0 %v2669
    %3783 = vmatprep.subr.bf16.mxu0 %v2658
    %3784 = vmatpush1.bf16.msra.mxu0 %v2657
    %3785 = vmatprep.subr.bf16.mxu0 %v2646
    %3786 = vmatpush1.bf16.msra.mxu0 %v2645
    %3787 = vmatprep.subr.bf16.mxu0 %v2634
    %3788 = vmatpush1.bf16.msra.mxu0 %v2633
    %3789 = vmatprep.subr.bf16.mxu0 %v2622
    %3790 = vmatpush1.bf16.msra.mxu0 %v2621
    %3791 = vmatprep.subr.bf16.mxu0 %v2610
    %3792 = vmatpush1.bf16.msra.mxu0 %v2609
    %3793 = vmatprep.subr.bf16.mxu0 %v2790
    %3794 = vmatpush2.bf16.msra.mxu0 %v2789
    %3795 = vmatprep.subr.bf16.mxu0 %v2778
    %3796 = vmatpush2.bf16.msra.mxu0 %v2777
    %3797 = vmatprep.subr.bf16.mxu0 %v2766
    %3798 = vmatpush2.bf16.msra.mxu0 %v2765
    %3799 = vmatprep.subr.bf16.mxu0 %v2754
    %3800 = vmatpush2.bf16.msra.mxu0 %v2753
    %3801 = vmatprep.subr.bf16.mxu0 %v2742
    %3802 = vmatpush2.bf16.msra.mxu0 %v2741
    %3803 = vmatprep.subr.bf16.mxu0 %v2730
    %3804 = vmatpush2.bf16.msra.mxu0 %v2729
    %3805 = vmatprep.subr.bf16.mxu0 %v2718
    %3806 = vmatpush2.bf16.msra.mxu0 %v2717
    %3807 = vmatprep.subr.bf16.mxu0 %v2706
    %3808 = vmatpush2.bf16.msra.mxu0 %v2705
    %3809 = vmatprep.mubr.bf16.mxu0 %v982
    %3810 = vmatmul.mubr.bf16.gmra.mxu0 %v981
    %v3811 = vpop.f32.mrf.mxu0
    %v3812 = vadd.f32 %v1430, %v3811
    %v3813 = vpop.f32.mrf.mxu0
    %v3814 = vadd.f32 %v1434, %v3813
    %v3815 = vpop.f32.mrf.mxu0
    %v3816 = vpop.f32.mrf.mxu0
    %3817 = vdwg.mxu0
    %3818 = vmatprep.subr.bf16.mxu0 %v2886
    %3819 = vmatpush1.bf16.msra.mxu0 %v2885
    %3820 = vmatprep.subr.bf16.mxu0 %v2874
    %3821 = vmatpush1.bf16.msra.mxu0 %v2873
    %3822 = vmatprep.subr.bf16.mxu0 %v2862
    %3823 = vmatpush1.bf16.msra.mxu0 %v2861
    %3824 = vmatprep.subr.bf16.mxu0 %v2850
    %3825 = vmatpush1.bf16.msra.mxu0 %v2849
    %3826 = vmatprep.subr.bf16.mxu0 %v2838
    %3827 = vmatpush1.bf16.msra.mxu0 %v2837
    %3828 = vmatprep.subr.bf16.mxu0 %v2826
    %3829 = vmatpush1.bf16.msra.mxu0 %v2825
    %3830 = vmatprep.subr.bf16.mxu0 %v2814
    %3831 = vmatpush1.bf16.msra.mxu0 %v2813
    %3832 = vmatprep.subr.bf16.mxu0 %v2802
    %3833 = vmatpush1.bf16.msra.mxu0 %v2801
    %3834 = vmatprep.subr.bf16.mxu0 %v2982
    %3835 = vmatpush2.bf16.msra.mxu0 %v2981
    %3836 = vmatprep.subr.bf16.mxu0 %v2970
    %3837 = vmatpush2.bf16.msra.mxu0 %v2969
    %3838 = vmatprep.subr.bf16.mxu0 %v2958
    %3839 = vmatpush2.bf16.msra.mxu0 %v2957
    %3840 = vmatprep.subr.bf16.mxu0 %v2946
    %3841 = vmatpush2.bf16.msra.mxu0 %v2945
    %3842 = vmatprep.subr.bf16.mxu0 %v2934
    %3843 = vmatpush2.bf16.msra.mxu0 %v2933
    %3844 = vmatprep.subr.bf16.mxu0 %v2922
    %3845 = vmatpush2.bf16.msra.mxu0 %v2921
    %3846 = vmatprep.subr.bf16.mxu0 %v2910
    %3847 = vmatpush2.bf16.msra.mxu0 %v2909
    %3848 = vmatprep.subr.bf16.mxu0 %v2898
    %3849 = vmatpush2.bf16.msra.mxu0 %v2897
    %3850 = vmatprep.mubr.bf16.mxu0 %v984
    %3851 = vmatmul.mubr.bf16.gmra.mxu0 %v983
    %v3852 = vpop.f32.mrf.mxu0
    %v3853 = vadd.f32 %v3812, %v3852
    %v3854 = vpop.f32.mrf.mxu0
    %v3855 = vadd.f32 %v3814, %v3854
    %v3856 = vpop.f32.mrf.mxu0
    %v3857 = vpop.f32.mrf.mxu0
    %3858 = vdwg.mxu0
    %v3859 = vpack.c.bf16 %v995, %v995
    %v3860 = vpack.c.bf16 %v996, %v996
    %v3861 = vpack.c.bf16 %v997, %v997
    %v3862 = vpack.c.bf16 %v998, %v998
    %v3863 = vld [vmem:[#allocation2] sm:$0xff]
    %v3864 = vld [vmem:[#allocation2 + $0x8] sm:$0xff]
    %v3865 = vld [vmem:[#allocation2 + $0x10] sm:$0xff]
    %v3866 = vld [vmem:[#allocation2 + $0x18] sm:$0xff]
    %v3867 = vld [vmem:[#allocation2 + $0x20] sm:$0xff]
    %v3868 = vld [vmem:[#allocation2 + $0x28] sm:$0xff]
    %v3869 = vld [vmem:[#allocation2 + $0x30] sm:$0xff]
    %v3870 = vld [vmem:[#allocation2 + $0x38] sm:$0xff]
    %v3871 = vld [vmem:[#allocation2 + $0x40] sm:$0xff]
    %v3872 = vld [vmem:[#allocation2 + $0x48] sm:$0xff]
    %v3873 = vld [vmem:[#allocation2 + $0x50] sm:$0xff]
    %v3874 = vld [vmem:[#allocation2 + $0x58] sm:$0xff]
    %v3875 = vld [vmem:[#allocation2 + $0x60] sm:$0xff]
    %v3876 = vld [vmem:[#allocation2 + $0x68] sm:$0xff]
    %v3877 = vld [vmem:[#allocation2 + $0x70] sm:$0xff]
    %v3878 = vld [vmem:[#allocation2 + $0x78] sm:$0xff]
    %v3879 = vld [vmem:[#allocation2 + $0x80] sm:$0xff]
    %v3880 = vld [vmem:[#allocation2 + $0x88] sm:$0xff]
    %v3881 = vld [vmem:[#allocation2 + $0x90] sm:$0xff]
    %v3882 = vld [vmem:[#allocation2 + $0x98] sm:$0xff]
    %v3883 = vld [vmem:[#allocation2 + $0xa0] sm:$0xff]
    %v3884 = vld [vmem:[#allocation2 + $0xa8] sm:$0xff]
    %v3885 = vld [vmem:[#allocation2 + $0xb0] sm:$0xff]
    %v3886 = vld [vmem:[#allocation2 + $0xb8] sm:$0xff]
    %v3887 = vld [vmem:[#allocation2 + $0xc0] sm:$0xff]
    %v3888 = vld [vmem:[#allocation2 + $0xc8] sm:$0xff]
    %v3889 = vld [vmem:[#allocation2 + $0xd0] sm:$0xff]
    %v3890 = vld [vmem:[#allocation2 + $0xd8] sm:$0xff]
    %v3891 = vld [vmem:[#allocation2 + $0xe0] sm:$0xff]
    %v3892 = vld [vmem:[#allocation2 + $0xe8] sm:$0xff]
    %v3893 = vld [vmem:[#allocation2 + $0xf0] sm:$0xff]
    %v3894 = vld [vmem:[#allocation2 + $0xf8] sm:$0xff]
    %v3895 = vld [vmem:[#allocation2 + $0x100] sm:$0xff]
    %v3896 = vld [vmem:[#allocation2 + $0x108] sm:$0xff]
    %v3897 = vld [vmem:[#allocation2 + $0x110] sm:$0xff]
    %v3898 = vld [vmem:[#allocation2 + $0x118] sm:$0xff]
    %v3899 = vld [vmem:[#allocation2 + $0x120] sm:$0xff]
    %v3900 = vld [vmem:[#allocation2 + $0x128] sm:$0xff]
    %v3901 = vld [vmem:[#allocation2 + $0x130] sm:$0xff]
    %v3902 = vld [vmem:[#allocation2 + $0x138] sm:$0xff]
    %v3903 = vld [vmem:[#allocation2 + $0x140] sm:$0xff]
    %v3904 = vld [vmem:[#allocation2 + $0x148] sm:$0xff]
    %v3905 = vld [vmem:[#allocation2 + $0x150] sm:$0xff]
    %v3906 = vld [vmem:[#allocation2 + $0x158] sm:$0xff]
    %v3907 = vld [vmem:[#allocation2 + $0x160] sm:$0xff]
    %v3908 = vld [vmem:[#allocation2 + $0x168] sm:$0xff]
    %v3909 = vld [vmem:[#allocation2 + $0x170] sm:$0xff]
    %v3910 = vld [vmem:[#allocation2 + $0x178] sm:$0xff]
    %v3911 = vld [vmem:[#allocation2 + $0x180] sm:$0xff]
    %v3912 = vld [vmem:[#allocation2 + $0x188] sm:$0xff]
    %v3913 = vld [vmem:[#allocation2 + $0x190] sm:$0xff]
    %v3914 = vld [vmem:[#allocation2 + $0x198] sm:$0xff]
    %v3915 = vld [vmem:[#allocation2 + $0x1a0] sm:$0xff]
    %v3916 = vld [vmem:[#allocation2 + $0x1a8] sm:$0xff]
    %v3917 = vld [vmem:[#allocation2 + $0x1b0] sm:$0xff]
    %v3918 = vld [vmem:[#allocation2 + $0x1b8] sm:$0xff]
    %v3919 = vld [vmem:[#allocation2 + $0x1c0] sm:$0xff]
    %v3920 = vld [vmem:[#allocation2 + $0x1c8] sm:$0xff]
    %v3921 = vld [vmem:[#allocation2 + $0x1d0] sm:$0xff]
    %v3922 = vld [vmem:[#allocation2 + $0x1d8] sm:$0xff]
    %v3923 = vld [vmem:[#allocation2 + $0x1e0] sm:$0xff]
    %v3924 = vld [vmem:[#allocation2 + $0x1e8] sm:$0xff]
    %v3925 = vld [vmem:[#allocation2 + $0x1f0] sm:$0xff]
    %v3926 = vld [vmem:[#allocation2 + $0x1f8] sm:$0xff]
    %v3927 = vld [vmem:[#allocation2 + $0x200] sm:$0xff]
    %v3928 = vld [vmem:[#allocation2 + $0x208] sm:$0xff]
    %v3929 = vld [vmem:[#allocation2 + $0x210] sm:$0xff]
    %v3930 = vld [vmem:[#allocation2 + $0x218] sm:$0xff]
    %v3931 = vld [vmem:[#allocation2 + $0x220] sm:$0xff]
    %v3932 = vld [vmem:[#allocation2 + $0x228] sm:$0xff]
    %v3933 = vld [vmem:[#allocation2 + $0x230] sm:$0xff]
    %v3934 = vld [vmem:[#allocation2 + $0x238] sm:$0xff]
    %v3935 = vld [vmem:[#allocation2 + $0x240] sm:$0xff]
    %v3936 = vld [vmem:[#allocation2 + $0x248] sm:$0xff]
    %v3937 = vld [vmem:[#allocation2 + $0x250] sm:$0xff]
    %v3938 = vld [vmem:[#allocation2 + $0x258] sm:$0xff]
    %v3939 = vld [vmem:[#allocation2 + $0x260] sm:$0xff]
    %v3940 = vld [vmem:[#allocation2 + $0x268] sm:$0xff]
    %v3941 = vld [vmem:[#allocation2 + $0x270] sm:$0xff]
    %v3942 = vld [vmem:[#allocation2 + $0x278] sm:$0xff]
    %v3943 = vld [vmem:[#allocation2 + $0x280] sm:$0xff]
    %v3944 = vld [vmem:[#allocation2 + $0x288] sm:$0xff]
    %v3945 = vld [vmem:[#allocation2 + $0x290] sm:$0xff]
    %v3946 = vld [vmem:[#allocation2 + $0x298] sm:$0xff]
    %v3947 = vld [vmem:[#allocation2 + $0x2a0] sm:$0xff]
    %v3948 = vld [vmem:[#allocation2 + $0x2a8] sm:$0xff]
    %v3949 = vld [vmem:[#allocation2 + $0x2b0] sm:$0xff]
    %v3950 = vld [vmem:[#allocation2 + $0x2b8] sm:$0xff]
    %v3951 = vld [vmem:[#allocation2 + $0x2c0] sm:$0xff]
    %v3952 = vld [vmem:[#allocation2 + $0x2c8] sm:$0xff]
    %v3953 = vld [vmem:[#allocation2 + $0x2d0] sm:$0xff]
    %v3954 = vld [vmem:[#allocation2 + $0x2d8] sm:$0xff]
    %v3955 = vld [vmem:[#allocation2 + $0x2e0] sm:$0xff]
    %v3956 = vld [vmem:[#allocation2 + $0x2e8] sm:$0xff]
    %v3957 = vld [vmem:[#allocation2 + $0x2f0] sm:$0xff]
    %v3958 = vld [vmem:[#allocation2 + $0x2f8] sm:$0xff]
    %v3959 = vld [vmem:[#allocation2 + $0x300] sm:$0xff]
    %v3960 = vld [vmem:[#allocation2 + $0x308] sm:$0xff]
    %v3961 = vld [vmem:[#allocation2 + $0x310] sm:$0xff]
    %v3962 = vld [vmem:[#allocation2 + $0x318] sm:$0xff]
    %v3963 = vld [vmem:[#allocation2 + $0x320] sm:$0xff]
    %v3964 = vld [vmem:[#allocation2 + $0x328] sm:$0xff]
    %v3965 = vld [vmem:[#allocation2 + $0x330] sm:$0xff]
    %v3966 = vld [vmem:[#allocation2 + $0x338] sm:$0xff]
    %v3967 = vld [vmem:[#allocation2 + $0x340] sm:$0xff]
    %v3968 = vld [vmem:[#allocation2 + $0x348] sm:$0xff]
    %v3969 = vld [vmem:[#allocation2 + $0x350] sm:$0xff]
    %v3970 = vld [vmem:[#allocation2 + $0x358] sm:$0xff]
    %v3971 = vld [vmem:[#allocation2 + $0x360] sm:$0xff]
    %v3972 = vld [vmem:[#allocation2 + $0x368] sm:$0xff]
    %v3973 = vld [vmem:[#allocation2 + $0x370] sm:$0xff]
    %v3974 = vld [vmem:[#allocation2 + $0x378] sm:$0xff]
    %v3975 = vld [vmem:[#allocation2 + $0x380] sm:$0xff]
    %v3976 = vld [vmem:[#allocation2 + $0x388] sm:$0xff]
    %v3977 = vld [vmem:[#allocation2 + $0x390] sm:$0xff]
    %v3978 = vld [vmem:[#allocation2 + $0x398] sm:$0xff]
    %v3979 = vld [vmem:[#allocation2 + $0x3a0] sm:$0xff]
    %v3980 = vld [vmem:[#allocation2 + $0x3a8] sm:$0xff]
    %v3981 = vld [vmem:[#allocation2 + $0x3b0] sm:$0xff]
    %v3982 = vld [vmem:[#allocation2 + $0x3b8] sm:$0xff]
    %v3983 = vld [vmem:[#allocation2 + $0x3c0] sm:$0xff]
    %v3984 = vld [vmem:[#allocation2 + $0x3c8] sm:$0xff]
    %v3985 = vld [vmem:[#allocation2 + $0x3d0] sm:$0xff]
    %v3986 = vld [vmem:[#allocation2 + $0x3d8] sm:$0xff]
    %v3987 = vld [vmem:[#allocation2 + $0x3e0] sm:$0xff]
    %v3988 = vld [vmem:[#allocation2 + $0x3e8] sm:$0xff]
    %v3989 = vld [vmem:[#allocation2 + $0x3f0] sm:$0xff]
    %v3990 = vld [vmem:[#allocation2 + $0x3f8] sm:$0xff]
    %v3991 = vld [vmem:[#allocation2 + $0x400] sm:$0xff]
    %v3992 = vld [vmem:[#allocation2 + $0x408] sm:$0xff]
    %v3993 = vld [vmem:[#allocation2 + $0x410] sm:$0xff]
    %v3994 = vld [vmem:[#allocation2 + $0x418] sm:$0xff]
    %v3995 = vld [vmem:[#allocation2 + $0x420] sm:$0xff]
    %v3996 = vld [vmem:[#allocation2 + $0x428] sm:$0xff]
    %v3997 = vld [vmem:[#allocation2 + $0x430] sm:$0xff]
    %v3998 = vld [vmem:[#allocation2 + $0x438] sm:$0xff]
    %v3999 = vld [vmem:[#allocation2 + $0x440] sm:$0xff]
    %v4000 = vld [vmem:[#allocation2 + $0x448] sm:$0xff]
    %v4001 = vld [vmem:[#allocation2 + $0x450] sm:$0xff]
    %v4002 = vld [vmem:[#allocation2 + $0x458] sm:$0xff]
    %v4003 = vld [vmem:[#allocation2 + $0x460] sm:$0xff]
    %v4004 = vld [vmem:[#allocation2 + $0x468] sm:$0xff]
    %v4005 = vld [vmem:[#allocation2 + $0x470] sm:$0xff]
    %v4006 = vld [vmem:[#allocation2 + $0x478] sm:$0xff]
    %v4007 = vld [vmem:[#allocation2 + $0x480] sm:$0xff]
    %v4008 = vld [vmem:[#allocation2 + $0x488] sm:$0xff]
    %v4009 = vld [vmem:[#allocation2 + $0x490] sm:$0xff]
    %v4010 = vld [vmem:[#allocation2 + $0x498] sm:$0xff]
    %v4011 = vld [vmem:[#allocation2 + $0x4a0] sm:$0xff]
    %v4012 = vld [vmem:[#allocation2 + $0x4a8] sm:$0xff]
    %v4013 = vld [vmem:[#allocation2 + $0x4b0] sm:$0xff]
    %v4014 = vld [vmem:[#allocation2 + $0x4b8] sm:$0xff]
    %v4015 = vld [vmem:[#allocation2 + $0x4c0] sm:$0xff]
    %v4016 = vld [vmem:[#allocation2 + $0x4c8] sm:$0xff]
    %v4017 = vld [vmem:[#allocation2 + $0x4d0] sm:$0xff]
    %v4018 = vld [vmem:[#allocation2 + $0x4d8] sm:$0xff]
    %v4019 = vld [vmem:[#allocation2 + $0x4e0] sm:$0xff]
    %v4020 = vld [vmem:[#allocation2 + $0x4e8] sm:$0xff]
    %v4021 = vld [vmem:[#allocation2 + $0x4f0] sm:$0xff]
    %v4022 = vld [vmem:[#allocation2 + $0x4f8] sm:$0xff]
    %v4023 = vld [vmem:[#allocation2 + $0x500] sm:$0xff]
    %v4024 = vld [vmem:[#allocation2 + $0x508] sm:$0xff]
    %v4025 = vld [vmem:[#allocation2 + $0x510] sm:$0xff]
    %v4026 = vld [vmem:[#allocation2 + $0x518] sm:$0xff]
    %v4027 = vld [vmem:[#allocation2 + $0x520] sm:$0xff]
    %v4028 = vld [vmem:[#allocation2 + $0x528] sm:$0xff]
    %v4029 = vld [vmem:[#allocation2 + $0x530] sm:$0xff]
    %v4030 = vld [vmem:[#allocation2 + $0x538] sm:$0xff]
    %v4031 = vld [vmem:[#allocation2 + $0x540] sm:$0xff]
    %v4032 = vld [vmem:[#allocation2 + $0x548] sm:$0xff]
    %v4033 = vld [vmem:[#allocation2 + $0x550] sm:$0xff]
    %v4034 = vld [vmem:[#allocation2 + $0x558] sm:$0xff]
    %v4035 = vld [vmem:[#allocation2 + $0x560] sm:$0xff]
    %v4036 = vld [vmem:[#allocation2 + $0x568] sm:$0xff]
    %v4037 = vld [vmem:[#allocation2 + $0x570] sm:$0xff]
    %v4038 = vld [vmem:[#allocation2 + $0x578] sm:$0xff]
    %v4039 = vld [vmem:[#allocation2 + $0x580] sm:$0xff]
    %v4040 = vld [vmem:[#allocation2 + $0x588] sm:$0xff]
    %v4041 = vld [vmem:[#allocation2 + $0x590] sm:$0xff]
    %v4042 = vld [vmem:[#allocation2 + $0x598] sm:$0xff]
    %v4043 = vld [vmem:[#allocation2 + $0x5a0] sm:$0xff]
    %v4044 = vld [vmem:[#allocation2 + $0x5a8] sm:$0xff]
    %v4045 = vld [vmem:[#allocation2 + $0x5b0] sm:$0xff]
    %v4046 = vld [vmem:[#allocation2 + $0x5b8] sm:$0xff]
    %v4047 = vld [vmem:[#allocation2 + $0x5c0] sm:$0xff]
    %v4048 = vld [vmem:[#allocation2 + $0x5c8] sm:$0xff]
    %v4049 = vld [vmem:[#allocation2 + $0x5d0] sm:$0xff]
    %v4050 = vld [vmem:[#allocation2 + $0x5d8] sm:$0xff]
    %v4051 = vld [vmem:[#allocation2 + $0x5e0] sm:$0xff]
    %v4052 = vld [vmem:[#allocation2 + $0x5e8] sm:$0xff]
    %v4053 = vld [vmem:[#allocation2 + $0x5f0] sm:$0xff]
    %v4054 = vld [vmem:[#allocation2 + $0x5f8] sm:$0xff]
    %v4055 = vld [vmem:[#allocation2 + $0x600] sm:$0xff]
    %v4056 = vld [vmem:[#allocation2 + $0x608] sm:$0xff]
    %v4057 = vld [vmem:[#allocation2 + $0x610] sm:$0xff]
    %v4058 = vld [vmem:[#allocation2 + $0x618] sm:$0xff]
    %v4059 = vld [vmem:[#allocation2 + $0x620] sm:$0xff]
    %v4060 = vld [vmem:[#allocation2 + $0x628] sm:$0xff]
    %v4061 = vld [vmem:[#allocation2 + $0x630] sm:$0xff]
    %v4062 = vld [vmem:[#allocation2 + $0x638] sm:$0xff]
    %v4063 = vld [vmem:[#allocation2 + $0x640] sm:$0xff]
    %v4064 = vld [vmem:[#allocation2 + $0x648] sm:$0xff]
    %v4065 = vld [vmem:[#allocation2 + $0x650] sm:$0xff]
    %v4066 = vld [vmem:[#allocation2 + $0x658] sm:$0xff]
    %v4067 = vld [vmem:[#allocation2 + $0x660] sm:$0xff]
    %v4068 = vld [vmem:[#allocation2 + $0x668] sm:$0xff]
    %v4069 = vld [vmem:[#allocation2 + $0x670] sm:$0xff]
    %v4070 = vld [vmem:[#allocation2 + $0x678] sm:$0xff]
    %v4071 = vld [vmem:[#allocation2 + $0x680] sm:$0xff]
    %v4072 = vld [vmem:[#allocation2 + $0x688] sm:$0xff]
    %v4073 = vld [vmem:[#allocation2 + $0x690] sm:$0xff]
    %v4074 = vld [vmem:[#allocation2 + $0x698] sm:$0xff]
    %v4075 = vld [vmem:[#allocation2 + $0x6a0] sm:$0xff]
    %v4076 = vld [vmem:[#allocation2 + $0x6a8] sm:$0xff]
    %v4077 = vld [vmem:[#allocation2 + $0x6b0] sm:$0xff]
    %v4078 = vld [vmem:[#allocation2 + $0x6b8] sm:$0xff]
    %v4079 = vld [vmem:[#allocation2 + $0x6c0] sm:$0xff]
    %v4080 = vld [vmem:[#allocation2 + $0x6c8] sm:$0xff]
    %v4081 = vld [vmem:[#allocation2 + $0x6d0] sm:$0xff]
    %v4082 = vld [vmem:[#allocation2 + $0x6d8] sm:$0xff]
    %v4083 = vld [vmem:[#allocation2 + $0x6e0] sm:$0xff]
    %v4084 = vld [vmem:[#allocation2 + $0x6e8] sm:$0xff]
    %v4085 = vld [vmem:[#allocation2 + $0x6f0] sm:$0xff]
    %v4086 = vld [vmem:[#allocation2 + $0x6f8] sm:$0xff]
    %v4087 = vld [vmem:[#allocation2 + $0x700] sm:$0xff]
    %v4088 = vld [vmem:[#allocation2 + $0x708] sm:$0xff]
    %v4089 = vld [vmem:[#allocation2 + $0x710] sm:$0xff]
    %v4090 = vld [vmem:[#allocation2 + $0x718] sm:$0xff]
    %v4091 = vld [vmem:[#allocation2 + $0x720] sm:$0xff]
    %v4092 = vld [vmem:[#allocation2 + $0x728] sm:$0xff]
    %v4093 = vld [vmem:[#allocation2 + $0x730] sm:$0xff]
    %v4094 = vld [vmem:[#allocation2 + $0x738] sm:$0xff]
    %v4095 = vld [vmem:[#allocation2 + $0x740] sm:$0xff]
    %v4096 = vld [vmem:[#allocation2 + $0x748] sm:$0xff]
    %v4097 = vld [vmem:[#allocation2 + $0x750] sm:$0xff]
    %v4098 = vld [vmem:[#allocation2 + $0x758] sm:$0xff]
    %v4099 = vld [vmem:[#allocation2 + $0x760] sm:$0xff]
    %v4100 = vld [vmem:[#allocation2 + $0x768] sm:$0xff]
    %v4101 = vld [vmem:[#allocation2 + $0x770] sm:$0xff]
    %v4102 = vld [vmem:[#allocation2 + $0x778] sm:$0xff]
    %v4103 = vld [vmem:[#allocation2 + $0x780] sm:$0xff]
    %v4104 = vld [vmem:[#allocation2 + $0x788] sm:$0xff]
    %v4105 = vld [vmem:[#allocation2 + $0x790] sm:$0xff]
    %v4106 = vld [vmem:[#allocation2 + $0x798] sm:$0xff]
    %v4107 = vld [vmem:[#allocation2 + $0x7a0] sm:$0xff]
    %v4108 = vld [vmem:[#allocation2 + $0x7a8] sm:$0xff]
    %v4109 = vld [vmem:[#allocation2 + $0x7b0] sm:$0xff]
    %v4110 = vld [vmem:[#allocation2 + $0x7b8] sm:$0xff]
    %v4111 = vld [vmem:[#allocation2 + $0x7c0] sm:$0xff]
    %v4112 = vld [vmem:[#allocation2 + $0x7c8] sm:$0xff]
    %v4113 = vld [vmem:[#allocation2 + $0x7d0] sm:$0xff]
    %v4114 = vld [vmem:[#allocation2 + $0x7d8] sm:$0xff]
    %v4115 = vld [vmem:[#allocation2 + $0x7e0] sm:$0xff]
    %v4116 = vld [vmem:[#allocation2 + $0x7e8] sm:$0xff]
    %v4117 = vld [vmem:[#allocation2 + $0x7f0] sm:$0xff]
    %v4118 = vld [vmem:[#allocation2 + $0x7f8] sm:$0xff]
    %v4119 = vld [vmem:[#allocation2 + $0x800] sm:$0xff]
    %v4120 = vld [vmem:[#allocation2 + $0x808] sm:$0xff]
    %v4121 = vld [vmem:[#allocation2 + $0x810] sm:$0xff]
    %v4122 = vld [vmem:[#allocation2 + $0x818] sm:$0xff]
    %v4123 = vld [vmem:[#allocation2 + $0x820] sm:$0xff]
    %v4124 = vld [vmem:[#allocation2 + $0x828] sm:$0xff]
    %v4125 = vld [vmem:[#allocation2 + $0x830] sm:$0xff]
    %v4126 = vld [vmem:[#allocation2 + $0x838] sm:$0xff]
    %v4127 = vld [vmem:[#allocation2 + $0x840] sm:$0xff]
    %v4128 = vld [vmem:[#allocation2 + $0x848] sm:$0xff]
    %v4129 = vld [vmem:[#allocation2 + $0x850] sm:$0xff]
    %v4130 = vld [vmem:[#allocation2 + $0x858] sm:$0xff]
    %v4131 = vld [vmem:[#allocation2 + $0x860] sm:$0xff]
    %v4132 = vld [vmem:[#allocation2 + $0x868] sm:$0xff]
    %v4133 = vld [vmem:[#allocation2 + $0x870] sm:$0xff]
    %v4134 = vld [vmem:[#allocation2 + $0x878] sm:$0xff]
    %v4135 = vld [vmem:[#allocation2 + $0x880] sm:$0xff]
    %v4136 = vld [vmem:[#allocation2 + $0x888] sm:$0xff]
    %v4137 = vld [vmem:[#allocation2 + $0x890] sm:$0xff]
    %v4138 = vld [vmem:[#allocation2 + $0x898] sm:$0xff]
    %v4139 = vld [vmem:[#allocation2 + $0x8a0] sm:$0xff]
    %v4140 = vld [vmem:[#allocation2 + $0x8a8] sm:$0xff]
    %v4141 = vld [vmem:[#allocation2 + $0x8b0] sm:$0xff]
    %v4142 = vld [vmem:[#allocation2 + $0x8b8] sm:$0xff]
    %v4143 = vld [vmem:[#allocation2 + $0x8c0] sm:$0xff]
    %v4144 = vld [vmem:[#allocation2 + $0x8c8] sm:$0xff]
    %v4145 = vld [vmem:[#allocation2 + $0x8d0] sm:$0xff]
    %v4146 = vld [vmem:[#allocation2 + $0x8d8] sm:$0xff]
    %v4147 = vld [vmem:[#allocation2 + $0x8e0] sm:$0xff]
    %v4148 = vld [vmem:[#allocation2 + $0x8e8] sm:$0xff]
    %v4149 = vld [vmem:[#allocation2 + $0x8f0] sm:$0xff]
    %v4150 = vld [vmem:[#allocation2 + $0x8f8] sm:$0xff]
    %v4151 = vld [vmem:[#allocation2 + $0x900] sm:$0xff]
    %v4152 = vld [vmem:[#allocation2 + $0x908] sm:$0xff]
    %v4153 = vld [vmem:[#allocation2 + $0x910] sm:$0xff]
    %v4154 = vld [vmem:[#allocation2 + $0x918] sm:$0xff]
    %v4155 = vld [vmem:[#allocation2 + $0x920] sm:$0xff]
    %v4156 = vld [vmem:[#allocation2 + $0x928] sm:$0xff]
    %v4157 = vld [vmem:[#allocation2 + $0x930] sm:$0xff]
    %v4158 = vld [vmem:[#allocation2 + $0x938] sm:$0xff]
    %v4159 = vld [vmem:[#allocation2 + $0x940] sm:$0xff]
    %v4160 = vld [vmem:[#allocation2 + $0x948] sm:$0xff]
    %v4161 = vld [vmem:[#allocation2 + $0x950] sm:$0xff]
    %v4162 = vld [vmem:[#allocation2 + $0x958] sm:$0xff]
    %v4163 = vld [vmem:[#allocation2 + $0x960] sm:$0xff]
    %v4164 = vld [vmem:[#allocation2 + $0x968] sm:$0xff]
    %v4165 = vld [vmem:[#allocation2 + $0x970] sm:$0xff]
    %v4166 = vld [vmem:[#allocation2 + $0x978] sm:$0xff]
    %v4167 = vld [vmem:[#allocation2 + $0x980] sm:$0xff]
    %v4168 = vld [vmem:[#allocation2 + $0x988] sm:$0xff]
    %v4169 = vld [vmem:[#allocation2 + $0x990] sm:$0xff]
    %v4170 = vld [vmem:[#allocation2 + $0x998] sm:$0xff]
    %v4171 = vld [vmem:[#allocation2 + $0x9a0] sm:$0xff]
    %v4172 = vld [vmem:[#allocation2 + $0x9a8] sm:$0xff]
    %v4173 = vld [vmem:[#allocation2 + $0x9b0] sm:$0xff]
    %v4174 = vld [vmem:[#allocation2 + $0x9b8] sm:$0xff]
    %v4175 = vld [vmem:[#allocation2 + $0x9c0] sm:$0xff]
    %v4176 = vld [vmem:[#allocation2 + $0x9c8] sm:$0xff]
    %v4177 = vld [vmem:[#allocation2 + $0x9d0] sm:$0xff]
    %v4178 = vld [vmem:[#allocation2 + $0x9d8] sm:$0xff]
    %v4179 = vld [vmem:[#allocation2 + $0x9e0] sm:$0xff]
    %v4180 = vld [vmem:[#allocation2 + $0x9e8] sm:$0xff]
    %v4181 = vld [vmem:[#allocation2 + $0x9f0] sm:$0xff]
    %v4182 = vld [vmem:[#allocation2 + $0x9f8] sm:$0xff]
    %v4183 = vld [vmem:[#allocation2 + $0xa00] sm:$0xff]
    %v4184 = vld [vmem:[#allocation2 + $0xa08] sm:$0xff]
    %v4185 = vld [vmem:[#allocation2 + $0xa10] sm:$0xff]
    %v4186 = vld [vmem:[#allocation2 + $0xa18] sm:$0xff]
    %v4187 = vld [vmem:[#allocation2 + $0xa20] sm:$0xff]
    %v4188 = vld [vmem:[#allocation2 + $0xa28] sm:$0xff]
    %v4189 = vld [vmem:[#allocation2 + $0xa30] sm:$0xff]
    %v4190 = vld [vmem:[#allocation2 + $0xa38] sm:$0xff]
    %v4191 = vld [vmem:[#allocation2 + $0xa40] sm:$0xff]
    %v4192 = vld [vmem:[#allocation2 + $0xa48] sm:$0xff]
    %v4193 = vld [vmem:[#allocation2 + $0xa50] sm:$0xff]
    %v4194 = vld [vmem:[#allocation2 + $0xa58] sm:$0xff]
    %v4195 = vld [vmem:[#allocation2 + $0xa60] sm:$0xff]
    %v4196 = vld [vmem:[#allocation2 + $0xa68] sm:$0xff]
    %v4197 = vld [vmem:[#allocation2 + $0xa70] sm:$0xff]
    %v4198 = vld [vmem:[#allocation2 + $0xa78] sm:$0xff]
    %v4199 = vld [vmem:[#allocation2 + $0xa80] sm:$0xff]
    %v4200 = vld [vmem:[#allocation2 + $0xa88] sm:$0xff]
    %v4201 = vld [vmem:[#allocation2 + $0xa90] sm:$0xff]
    %v4202 = vld [vmem:[#allocation2 + $0xa98] sm:$0xff]
    %v4203 = vld [vmem:[#allocation2 + $0xaa0] sm:$0xff]
    %v4204 = vld [vmem:[#allocation2 + $0xaa8] sm:$0xff]
    %v4205 = vld [vmem:[#allocation2 + $0xab0] sm:$0xff]
    %v4206 = vld [vmem:[#allocation2 + $0xab8] sm:$0xff]
    %v4207 = vld [vmem:[#allocation2 + $0xac0] sm:$0xff]
    %v4208 = vld [vmem:[#allocation2 + $0xac8] sm:$0xff]
    %v4209 = vld [vmem:[#allocation2 + $0xad0] sm:$0xff]
    %v4210 = vld [vmem:[#allocation2 + $0xad8] sm:$0xff]
    %v4211 = vld [vmem:[#allocation2 + $0xae0] sm:$0xff]
    %v4212 = vld [vmem:[#allocation2 + $0xae8] sm:$0xff]
    %v4213 = vld [vmem:[#allocation2 + $0xaf0] sm:$0xff]
    %v4214 = vld [vmem:[#allocation2 + $0xaf8] sm:$0xff]
    %v4215 = vld [vmem:[#allocation2 + $0xb00] sm:$0xff]
    %v4216 = vld [vmem:[#allocation2 + $0xb08] sm:$0xff]
    %v4217 = vld [vmem:[#allocation2 + $0xb10] sm:$0xff]
    %v4218 = vld [vmem:[#allocation2 + $0xb18] sm:$0xff]
    %v4219 = vld [vmem:[#allocation2 + $0xb20] sm:$0xff]
    %v4220 = vld [vmem:[#allocation2 + $0xb28] sm:$0xff]
    %v4221 = vld [vmem:[#allocation2 + $0xb30] sm:$0xff]
    %v4222 = vld [vmem:[#allocation2 + $0xb38] sm:$0xff]
    %v4223 = vld [vmem:[#allocation2 + $0xb40] sm:$0xff]
    %v4224 = vld [vmem:[#allocation2 + $0xb48] sm:$0xff]
    %v4225 = vld [vmem:[#allocation2 + $0xb50] sm:$0xff]
    %v4226 = vld [vmem:[#allocation2 + $0xb58] sm:$0xff]
    %v4227 = vld [vmem:[#allocation2 + $0xb60] sm:$0xff]
    %v4228 = vld [vmem:[#allocation2 + $0xb68] sm:$0xff]
    %v4229 = vld [vmem:[#allocation2 + $0xb70] sm:$0xff]
    %v4230 = vld [vmem:[#allocation2 + $0xb78] sm:$0xff]
    %v4231 = vld [vmem:[#allocation2 + $0xb80] sm:$0xff]
    %v4232 = vld [vmem:[#allocation2 + $0xb88] sm:$0xff]
    %v4233 = vld [vmem:[#allocation2 + $0xb90] sm:$0xff]
    %v4234 = vld [vmem:[#allocation2 + $0xb98] sm:$0xff]
    %v4235 = vld [vmem:[#allocation2 + $0xba0] sm:$0xff]
    %v4236 = vld [vmem:[#allocation2 + $0xba8] sm:$0xff]
    %v4237 = vld [vmem:[#allocation2 + $0xbb0] sm:$0xff]
    %v4238 = vld [vmem:[#allocation2 + $0xbb8] sm:$0xff]
    %v4239 = vld [vmem:[#allocation2 + $0xbc0] sm:$0xff]
    %v4240 = vld [vmem:[#allocation2 + $0xbc8] sm:$0xff]
    %v4241 = vld [vmem:[#allocation2 + $0xbd0] sm:$0xff]
    %v4242 = vld [vmem:[#allocation2 + $0xbd8] sm:$0xff]
    %v4243 = vld [vmem:[#allocation2 + $0xbe0] sm:$0xff]
    %v4244 = vld [vmem:[#allocation2 + $0xbe8] sm:$0xff]
    %v4245 = vld [vmem:[#allocation2 + $0xbf0] sm:$0xff]
    %v4246 = vld [vmem:[#allocation2 + $0xbf8] sm:$0xff]
    %v4247 = vld [vmem:[%s12] sm:$0xff]
    %v4248 = vld [vmem:[%s12 + $0x8] sm:$0xf]
    %v4251 = vlaneseq
    %v4252 = vshrl.u32 %v4251, 7
    %v4253 = vsub.s32 0, %v4252
    %v4254 = vrot.slane %v4247, %v4253
    %v4255 = vlaneseq
    %v4256 = vshrl.u32 %v4255, 7
    %v4257 = vsub.s32 1, %v4256
    %v4258 = vrot.slane %v4247, %v4257
    %v4259 = vlaneseq
    %v4260 = vshrl.u32 %v4259, 7
    %v4261 = vsub.s32 2, %v4260
    %v4262 = vrot.slane %v4247, %v4261
    %v4263 = vlaneseq
    %v4264 = vshrl.u32 %v4263, 7
    %v4265 = vsub.s32 3, %v4264
    %v4266 = vrot.slane %v4247, %v4265
    %v4267 = vlaneseq
    %v4268 = vshrl.u32 %v4267, 7
    %v4269 = vsub.s32 4, %v4268
    %v4270 = vrot.slane %v4247, %v4269
    %v4271 = vlaneseq
    %v4272 = vshrl.u32 %v4271, 7
    %v4273 = vsub.s32 5, %v4272
    %v4274 = vrot.slane %v4247, %v4273
    %v4275 = vlaneseq
    %v4276 = vshrl.u32 %v4275, 7
    %v4277 = vsub.s32 6, %v4276
    %v4278 = vrot.slane %v4247, %v4277
    %v4279 = vlaneseq
    %v4280 = vshrl.u32 %v4279, 7
    %v4281 = vsub.s32 7, %v4280
    %v4282 = vrot.slane %v4247, %v4281
    %v4283 = vlaneseq
    %v4284 = vshrl.u32 %v4283, 7
    %v4285 = vsub.s32 0, %v4284
    %v4286 = vrot.slane %v4248, %v4285
    %v4287 = vlaneseq
    %v4288 = vshrl.u32 %v4287, 7
    %v4289 = vsub.s32 1, %v4288
    %v4290 = vrot.slane %v4248, %v4289
    %v4291 = vlaneseq
    %v4292 = vshrl.u32 %v4291, 7
    %v4293 = vsub.s32 2, %v4292
    %v4294 = vrot.slane %v4248, %v4293
    %v4295 = vlaneseq
    %v4296 = vshrl.u32 %v4295, 7
    %v4297 = vsub.s32 3, %v4296
    %v4298 = vrot.slane %v4248, %v4297
    %v4695 = vunpack.c.l.b16 %v3863
    %v4696 = vunpack.c.h.b16 %v3863
    %v4697 = vunpack.c.l.b16 %v3864
    %v4698 = vunpack.c.h.b16 %v3864
    %v4699 = vunpack.c.l.b16 %v3865
    %v4700 = vunpack.c.h.b16 %v3865
    %v4701 = vunpack.c.l.b16 %v3866
    %v4702 = vunpack.c.h.b16 %v3866
    %v4703 = vunpack.c.l.b16 %v3867
    %v4704 = vunpack.c.h.b16 %v3867
    %v4705 = vunpack.c.l.b16 %v3868
    %v4706 = vunpack.c.h.b16 %v3868
    %v4707 = vunpack.c.l.b16 %v3869
    %v4708 = vunpack.c.h.b16 %v3869
    %v4709 = vunpack.c.l.b16 %v3870
    %v4710 = vunpack.c.h.b16 %v3870
    %v4711 = vunpack.c.l.b16 %v3871
    %v4712 = vunpack.c.h.b16 %v3871
    %v4713 = vunpack.c.l.b16 %v3872
    %v4714 = vunpack.c.h.b16 %v3872
    %v4715 = vunpack.c.l.b16 %v3873
    %v4716 = vunpack.c.h.b16 %v3873
    %v4717 = vunpack.c.l.b16 %v3874
    %v4718 = vunpack.c.h.b16 %v3874
    %v4719 = vunpack.c.l.b16 %v3875
    %v4720 = vunpack.c.h.b16 %v3875
    %v4721 = vunpack.c.l.b16 %v3876
    %v4722 = vunpack.c.h.b16 %v3876
    %v4723 = vunpack.c.l.b16 %v3877
    %v4724 = vunpack.c.h.b16 %v3877
    %v4725 = vunpack.c.l.b16 %v3878
    %v4726 = vunpack.c.h.b16 %v3878
    %v4727 = vunpack.c.l.b16 %v3879
    %v4728 = vunpack.c.h.b16 %v3879
    %v4729 = vunpack.c.l.b16 %v3880
    %v4730 = vunpack.c.h.b16 %v3880
    %v4731 = vunpack.c.l.b16 %v3881
    %v4732 = vunpack.c.h.b16 %v3881
    %v4733 = vunpack.c.l.b16 %v3882
    %v4734 = vunpack.c.h.b16 %v3882
    %v4735 = vunpack.c.l.b16 %v3883
    %v4736 = vunpack.c.h.b16 %v3883
    %v4737 = vunpack.c.l.b16 %v3884
    %v4738 = vunpack.c.h.b16 %v3884
    %v4739 = vunpack.c.l.b16 %v3885
    %v4740 = vunpack.c.h.b16 %v3885
    %v4741 = vunpack.c.l.b16 %v3886
    %v4742 = vunpack.c.h.b16 %v3886
    %v4743 = vunpack.c.l.b16 %v3887
    %v4744 = vunpack.c.h.b16 %v3887
    %v4745 = vunpack.c.l.b16 %v3888
    %v4746 = vunpack.c.h.b16 %v3888
    %v4747 = vunpack.c.l.b16 %v3889
    %v4748 = vunpack.c.h.b16 %v3889
    %v4749 = vunpack.c.l.b16 %v3890
    %v4750 = vunpack.c.h.b16 %v3890
    %v4751 = vunpack.c.l.b16 %v3891
    %v4752 = vunpack.c.h.b16 %v3891
    %v4753 = vunpack.c.l.b16 %v3892
    %v4754 = vunpack.c.h.b16 %v3892
    %v4755 = vunpack.c.l.b16 %v3893
    %v4756 = vunpack.c.h.b16 %v3893
    %v4757 = vunpack.c.l.b16 %v3894
    %v4758 = vunpack.c.h.b16 %v3894
    %v4759 = vunpack.c.l.b16 %v3895
    %v4760 = vunpack.c.h.b16 %v3895
    %v4761 = vunpack.c.l.b16 %v3896
    %v4762 = vunpack.c.h.b16 %v3896
    %v4763 = vunpack.c.l.b16 %v3897
    %v4764 = vunpack.c.h.b16 %v3897
    %v4765 = vunpack.c.l.b16 %v3898
    %v4766 = vunpack.c.h.b16 %v3898
    %v4767 = vunpack.c.l.b16 %v3899
    %v4768 = vunpack.c.h.b16 %v3899
    %v4769 = vunpack.c.l.b16 %v3900
    %v4770 = vunpack.c.h.b16 %v3900
    %v4771 = vunpack.c.l.b16 %v3901
    %v4772 = vunpack.c.h.b16 %v3901
    %v4773 = vunpack.c.l.b16 %v3902
    %v4774 = vunpack.c.h.b16 %v3902
    %v4775 = vunpack.c.l.b16 %v3903
    %v4776 = vunpack.c.h.b16 %v3903
    %v4777 = vunpack.c.l.b16 %v3904
    %v4778 = vunpack.c.h.b16 %v3904
    %v4779 = vunpack.c.l.b16 %v3905
    %v4780 = vunpack.c.h.b16 %v3905
    %v4781 = vunpack.c.l.b16 %v3906
    %v4782 = vunpack.c.h.b16 %v3906
    %v4783 = vunpack.c.l.b16 %v3907
    %v4784 = vunpack.c.h.b16 %v3907
    %v4785 = vunpack.c.l.b16 %v3908
    %v4786 = vunpack.c.h.b16 %v3908
    %v4787 = vunpack.c.l.b16 %v3909
    %v4788 = vunpack.c.h.b16 %v3909
    %v4789 = vunpack.c.l.b16 %v3910
    %v4790 = vunpack.c.h.b16 %v3910
    %v4791 = vunpack.c.l.b16 %v3911
    %v4792 = vunpack.c.h.b16 %v3911
    %v4793 = vunpack.c.l.b16 %v3912
    %v4794 = vunpack.c.h.b16 %v3912
    %v4795 = vunpack.c.l.b16 %v3913
    %v4796 = vunpack.c.h.b16 %v3913
    %v4797 = vunpack.c.l.b16 %v3914
    %v4798 = vunpack.c.h.b16 %v3914
    %v4799 = vunpack.c.l.b16 %v3915
    %v4800 = vunpack.c.h.b16 %v3915
    %v4801 = vunpack.c.l.b16 %v3916
    %v4802 = vunpack.c.h.b16 %v3916
    %v4803 = vunpack.c.l.b16 %v3917
    %v4804 = vunpack.c.h.b16 %v3917
    %v4805 = vunpack.c.l.b16 %v3918
    %v4806 = vunpack.c.h.b16 %v3918
    %v4807 = vunpack.c.l.b16 %v3919
    %v4808 = vunpack.c.h.b16 %v3919
    %v4809 = vunpack.c.l.b16 %v3920
    %v4810 = vunpack.c.h.b16 %v3920
    %v4811 = vunpack.c.l.b16 %v3921
    %v4812 = vunpack.c.h.b16 %v3921
    %v4813 = vunpack.c.l.b16 %v3922
    %v4814 = vunpack.c.h.b16 %v3922
    %v4815 = vunpack.c.l.b16 %v3923
    %v4816 = vunpack.c.h.b16 %v3923
    %v4817 = vunpack.c.l.b16 %v3924
    %v4818 = vunpack.c.h.b16 %v3924
    %v4819 = vunpack.c.l.b16 %v3925
    %v4820 = vunpack.c.h.b16 %v3925
    %v4821 = vunpack.c.l.b16 %v3926
    %v4822 = vunpack.c.h.b16 %v3926
    %v4823 = vunpack.c.l.b16 %v3927
    %v4824 = vunpack.c.h.b16 %v3927
    %v4825 = vunpack.c.l.b16 %v3928
    %v4826 = vunpack.c.h.b16 %v3928
    %v4827 = vunpack.c.l.b16 %v3929
    %v4828 = vunpack.c.h.b16 %v3929
    %v4829 = vunpack.c.l.b16 %v3930
    %v4830 = vunpack.c.h.b16 %v3930
    %v4831 = vunpack.c.l.b16 %v3931
    %v4832 = vunpack.c.h.b16 %v3931
    %v4833 = vunpack.c.l.b16 %v3932
    %v4834 = vunpack.c.h.b16 %v3932
    %v4835 = vunpack.c.l.b16 %v3933
    %v4836 = vunpack.c.h.b16 %v3933
    %v4837 = vunpack.c.l.b16 %v3934
    %v4838 = vunpack.c.h.b16 %v3934
    %v4839 = vunpack.c.l.b16 %v3935
    %v4840 = vunpack.c.h.b16 %v3935
    %v4841 = vunpack.c.l.b16 %v3936
    %v4842 = vunpack.c.h.b16 %v3936
    %v4843 = vunpack.c.l.b16 %v3937
    %v4844 = vunpack.c.h.b16 %v3937
    %v4845 = vunpack.c.l.b16 %v3938
    %v4846 = vunpack.c.h.b16 %v3938
    %v4847 = vunpack.c.l.b16 %v3939
    %v4848 = vunpack.c.h.b16 %v3939
    %v4849 = vunpack.c.l.b16 %v3940
    %v4850 = vunpack.c.h.b16 %v3940
    %v4851 = vunpack.c.l.b16 %v3941
    %v4852 = vunpack.c.h.b16 %v3941
    %v4853 = vunpack.c.l.b16 %v3942
    %v4854 = vunpack.c.h.b16 %v3942
    %v4855 = vunpack.c.l.b16 %v3943
    %v4856 = vunpack.c.h.b16 %v3943
    %v4857 = vunpack.c.l.b16 %v3944
    %v4858 = vunpack.c.h.b16 %v3944
    %v4859 = vunpack.c.l.b16 %v3945
    %v4860 = vunpack.c.h.b16 %v3945
    %v4861 = vunpack.c.l.b16 %v3946
    %v4862 = vunpack.c.h.b16 %v3946
    %v4863 = vunpack.c.l.b16 %v3947
    %v4864 = vunpack.c.h.b16 %v3947
    %v4865 = vunpack.c.l.b16 %v3948
    %v4866 = vunpack.c.h.b16 %v3948
    %v4867 = vunpack.c.l.b16 %v3949
    %v4868 = vunpack.c.h.b16 %v3949
    %v4869 = vunpack.c.l.b16 %v3950
    %v4870 = vunpack.c.h.b16 %v3950
    %v4871 = vunpack.c.l.b16 %v3951
    %v4872 = vunpack.c.h.b16 %v3951
    %v4873 = vunpack.c.l.b16 %v3952
    %v4874 = vunpack.c.h.b16 %v3952
    %v4875 = vunpack.c.l.b16 %v3953
    %v4876 = vunpack.c.h.b16 %v3953
    %v4877 = vunpack.c.l.b16 %v3954
    %v4878 = vunpack.c.h.b16 %v3954
    %v4879 = vunpack.c.l.b16 %v3955
    %v4880 = vunpack.c.h.b16 %v3955
    %v4881 = vunpack.c.l.b16 %v3956
    %v4882 = vunpack.c.h.b16 %v3956
    %v4883 = vunpack.c.l.b16 %v3957
    %v4884 = vunpack.c.h.b16 %v3957
    %v4885 = vunpack.c.l.b16 %v3958
    %v4886 = vunpack.c.h.b16 %v3958
    %v4887 = vunpack.c.l.b16 %v3959
    %v4888 = vunpack.c.h.b16 %v3959
    %v4889 = vunpack.c.l.b16 %v3960
    %v4890 = vunpack.c.h.b16 %v3960
    %v4891 = vunpack.c.l.b16 %v3961
    %v4892 = vunpack.c.h.b16 %v3961
    %v4893 = vunpack.c.l.b16 %v3962
    %v4894 = vunpack.c.h.b16 %v3962
    %v4895 = vunpack.c.l.b16 %v3963
    %v4896 = vunpack.c.h.b16 %v3963
    %v4897 = vunpack.c.l.b16 %v3964
    %v4898 = vunpack.c.h.b16 %v3964
    %v4899 = vunpack.c.l.b16 %v3965
    %v4900 = vunpack.c.h.b16 %v3965
    %v4901 = vunpack.c.l.b16 %v3966
    %v4902 = vunpack.c.h.b16 %v3966
    %v4903 = vunpack.c.l.b16 %v3967
    %v4904 = vunpack.c.h.b16 %v3967
    %v4905 = vunpack.c.l.b16 %v3968
    %v4906 = vunpack.c.h.b16 %v3968
    %v4907 = vunpack.c.l.b16 %v3969
    %v4908 = vunpack.c.h.b16 %v3969
    %v4909 = vunpack.c.l.b16 %v3970
    %v4910 = vunpack.c.h.b16 %v3970
    %v4911 = vunpack.c.l.b16 %v3971
    %v4912 = vunpack.c.h.b16 %v3971
    %v4913 = vunpack.c.l.b16 %v3972
    %v4914 = vunpack.c.h.b16 %v3972
    %v4915 = vunpack.c.l.b16 %v3973
    %v4916 = vunpack.c.h.b16 %v3973
    %v4917 = vunpack.c.l.b16 %v3974
    %v4918 = vunpack.c.h.b16 %v3974
    %v4919 = vunpack.c.l.b16 %v3975
    %v4920 = vunpack.c.h.b16 %v3975
    %v4921 = vunpack.c.l.b16 %v3976
    %v4922 = vunpack.c.h.b16 %v3976
    %v4923 = vunpack.c.l.b16 %v3977
    %v4924 = vunpack.c.h.b16 %v3977
    %v4925 = vunpack.c.l.b16 %v3978
    %v4926 = vunpack.c.h.b16 %v3978
    %v4927 = vunpack.c.l.b16 %v3979
    %v4928 = vunpack.c.h.b16 %v3979
    %v4929 = vunpack.c.l.b16 %v3980
    %v4930 = vunpack.c.h.b16 %v3980
    %v4931 = vunpack.c.l.b16 %v3981
    %v4932 = vunpack.c.h.b16 %v3981
    %v4933 = vunpack.c.l.b16 %v3982
    %v4934 = vunpack.c.h.b16 %v3982
    %v4935 = vunpack.c.l.b16 %v3983
    %v4936 = vunpack.c.h.b16 %v3983
    %v4937 = vunpack.c.l.b16 %v3984
    %v4938 = vunpack.c.h.b16 %v3984
    %v4939 = vunpack.c.l.b16 %v3985
    %v4940 = vunpack.c.h.b16 %v3985
    %v4941 = vunpack.c.l.b16 %v3986
    %v4942 = vunpack.c.h.b16 %v3986
    %v4943 = vunpack.c.l.b16 %v3987
    %v4944 = vunpack.c.h.b16 %v3987
    %v4945 = vunpack.c.l.b16 %v3988
    %v4946 = vunpack.c.h.b16 %v3988
    %v4947 = vunpack.c.l.b16 %v3989
    %v4948 = vunpack.c.h.b16 %v3989
    %v4949 = vunpack.c.l.b16 %v3990
    %v4950 = vunpack.c.h.b16 %v3990
    %v4951 = vunpack.c.l.b16 %v3991
    %v4952 = vunpack.c.h.b16 %v3991
    %v4953 = vunpack.c.l.b16 %v3992
    %v4954 = vunpack.c.h.b16 %v3992
    %v4955 = vunpack.c.l.b16 %v3993
    %v4956 = vunpack.c.h.b16 %v3993
    %v4957 = vunpack.c.l.b16 %v3994
    %v4958 = vunpack.c.h.b16 %v3994
    %v4959 = vunpack.c.l.b16 %v3995
    %v4960 = vunpack.c.h.b16 %v3995
    %v4961 = vunpack.c.l.b16 %v3996
    %v4962 = vunpack.c.h.b16 %v3996
    %v4963 = vunpack.c.l.b16 %v3997
    %v4964 = vunpack.c.h.b16 %v3997
    %v4965 = vunpack.c.l.b16 %v3998
    %v4966 = vunpack.c.h.b16 %v3998
    %v4967 = vunpack.c.l.b16 %v3999
    %v4968 = vunpack.c.h.b16 %v3999
    %v4969 = vunpack.c.l.b16 %v4000
    %v4970 = vunpack.c.h.b16 %v4000
    %v4971 = vunpack.c.l.b16 %v4001
    %v4972 = vunpack.c.h.b16 %v4001
    %v4973 = vunpack.c.l.b16 %v4002
    %v4974 = vunpack.c.h.b16 %v4002
    %v4975 = vunpack.c.l.b16 %v4003
    %v4976 = vunpack.c.h.b16 %v4003
    %v4977 = vunpack.c.l.b16 %v4004
    %v4978 = vunpack.c.h.b16 %v4004
    %v4979 = vunpack.c.l.b16 %v4005
    %v4980 = vunpack.c.h.b16 %v4005
    %v4981 = vunpack.c.l.b16 %v4006
    %v4982 = vunpack.c.h.b16 %v4006
    %v4983 = vunpack.c.l.b16 %v4007
    %v4984 = vunpack.c.h.b16 %v4007
    %v4985 = vunpack.c.l.b16 %v4008
    %v4986 = vunpack.c.h.b16 %v4008
    %v4987 = vunpack.c.l.b16 %v4009
    %v4988 = vunpack.c.h.b16 %v4009
    %v4989 = vunpack.c.l.b16 %v4010
    %v4990 = vunpack.c.h.b16 %v4010
    %v4991 = vunpack.c.l.b16 %v4011
    %v4992 = vunpack.c.h.b16 %v4011
    %v4993 = vunpack.c.l.b16 %v4012
    %v4994 = vunpack.c.h.b16 %v4012
    %v4995 = vunpack.c.l.b16 %v4013
    %v4996 = vunpack.c.h.b16 %v4013
    %v4997 = vunpack.c.l.b16 %v4014
    %v4998 = vunpack.c.h.b16 %v4014
    %v4999 = vunpack.c.l.b16 %v4015
    %v5000 = vunpack.c.h.b16 %v4015
    %v5001 = vunpack.c.l.b16 %v4016
    %v5002 = vunpack.c.h.b16 %v4016
    %v5003 = vunpack.c.l.b16 %v4017
    %v5004 = vunpack.c.h.b16 %v4017
    %v5005 = vunpack.c.l.b16 %v4018
    %v5006 = vunpack.c.h.b16 %v4018
    %v5007 = vunpack.c.l.b16 %v4019
    %v5008 = vunpack.c.h.b16 %v4019
    %v5009 = vunpack.c.l.b16 %v4020
    %v5010 = vunpack.c.h.b16 %v4020
    %v5011 = vunpack.c.l.b16 %v4021
    %v5012 = vunpack.c.h.b16 %v4021
    %v5013 = vunpack.c.l.b16 %v4022
    %v5014 = vunpack.c.h.b16 %v4022
    %v5015 = vunpack.c.l.b16 %v4023
    %v5016 = vunpack.c.h.b16 %v4023
    %v5017 = vunpack.c.l.b16 %v4024
    %v5018 = vunpack.c.h.b16 %v4024
    %v5019 = vunpack.c.l.b16 %v4025
    %v5020 = vunpack.c.h.b16 %v4025
    %v5021 = vunpack.c.l.b16 %v4026
    %v5022 = vunpack.c.h.b16 %v4026
    %v5023 = vunpack.c.l.b16 %v4027
    %v5024 = vunpack.c.h.b16 %v4027
    %v5025 = vunpack.c.l.b16 %v4028
    %v5026 = vunpack.c.h.b16 %v4028
    %v5027 = vunpack.c.l.b16 %v4029
    %v5028 = vunpack.c.h.b16 %v4029
    %v5029 = vunpack.c.l.b16 %v4030
    %v5030 = vunpack.c.h.b16 %v4030
    %v5031 = vunpack.c.l.b16 %v4031
    %v5032 = vunpack.c.h.b16 %v4031
    %v5033 = vunpack.c.l.b16 %v4032
    %v5034 = vunpack.c.h.b16 %v4032
    %v5035 = vunpack.c.l.b16 %v4033
    %v5036 = vunpack.c.h.b16 %v4033
    %v5037 = vunpack.c.l.b16 %v4034
    %v5038 = vunpack.c.h.b16 %v4034
    %v5039 = vunpack.c.l.b16 %v4035
    %v5040 = vunpack.c.h.b16 %v4035
    %v5041 = vunpack.c.l.b16 %v4036
    %v5042 = vunpack.c.h.b16 %v4036
    %v5043 = vunpack.c.l.b16 %v4037
    %v5044 = vunpack.c.h.b16 %v4037
    %v5045 = vunpack.c.l.b16 %v4038
    %v5046 = vunpack.c.h.b16 %v4038
    %v5047 = vunpack.c.l.b16 %v4039
    %v5048 = vunpack.c.h.b16 %v4039
    %v5049 = vunpack.c.l.b16 %v4040
    %v5050 = vunpack.c.h.b16 %v4040
    %v5051 = vunpack.c.l.b16 %v4041
    %v5052 = vunpack.c.h.b16 %v4041
    %v5053 = vunpack.c.l.b16 %v4042
    %v5054 = vunpack.c.h.b16 %v4042
    %v5055 = vunpack.c.l.b16 %v4043
    %v5056 = vunpack.c.h.b16 %v4043
    %v5057 = vunpack.c.l.b16 %v4044
    %v5058 = vunpack.c.h.b16 %v4044
    %v5059 = vunpack.c.l.b16 %v4045
    %v5060 = vunpack.c.h.b16 %v4045
    %v5061 = vunpack.c.l.b16 %v4046
    %v5062 = vunpack.c.h.b16 %v4046
    %v5063 = vunpack.c.l.b16 %v4047
    %v5064 = vunpack.c.h.b16 %v4047
    %v5065 = vunpack.c.l.b16 %v4048
    %v5066 = vunpack.c.h.b16 %v4048
    %v5067 = vunpack.c.l.b16 %v4049
    %v5068 = vunpack.c.h.b16 %v4049
    %v5069 = vunpack.c.l.b16 %v4050
    %v5070 = vunpack.c.h.b16 %v4050
    %v5071 = vunpack.c.l.b16 %v4051
    %v5072 = vunpack.c.h.b16 %v4051
    %v5073 = vunpack.c.l.b16 %v4052
    %v5074 = vunpack.c.h.b16 %v4052
    %v5075 = vunpack.c.l.b16 %v4053
    %v5076 = vunpack.c.h.b16 %v4053
    %v5077 = vunpack.c.l.b16 %v4054
    %v5078 = vunpack.c.h.b16 %v4054
    %v5079 = vunpack.c.l.b16 %v4055
    %v5080 = vunpack.c.h.b16 %v4055
    %v5081 = vunpack.c.l.b16 %v4056
    %v5082 = vunpack.c.h.b16 %v4056
    %v5083 = vunpack.c.l.b16 %v4057
    %v5084 = vunpack.c.h.b16 %v4057
    %v5085 = vunpack.c.l.b16 %v4058
    %v5086 = vunpack.c.h.b16 %v4058
    %v5087 = vunpack.c.l.b16 %v4059
    %v5088 = vunpack.c.h.b16 %v4059
    %v5089 = vunpack.c.l.b16 %v4060
    %v5090 = vunpack.c.h.b16 %v4060
    %v5091 = vunpack.c.l.b16 %v4061
    %v5092 = vunpack.c.h.b16 %v4061
    %v5093 = vunpack.c.l.b16 %v4062
    %v5094 = vunpack.c.h.b16 %v4062
    %v5095 = vunpack.c.l.b16 %v4063
    %v5096 = vunpack.c.h.b16 %v4063
    %v5097 = vunpack.c.l.b16 %v4064
    %v5098 = vunpack.c.h.b16 %v4064
    %v5099 = vunpack.c.l.b16 %v4065
    %v5100 = vunpack.c.h.b16 %v4065
    %v5101 = vunpack.c.l.b16 %v4066
    %v5102 = vunpack.c.h.b16 %v4066
    %v5103 = vunpack.c.l.b16 %v4067
    %v5104 = vunpack.c.h.b16 %v4067
    %v5105 = vunpack.c.l.b16 %v4068
    %v5106 = vunpack.c.h.b16 %v4068
    %v5107 = vunpack.c.l.b16 %v4069
    %v5108 = vunpack.c.h.b16 %v4069
    %v5109 = vunpack.c.l.b16 %v4070
    %v5110 = vunpack.c.h.b16 %v4070
    %v5111 = vunpack.c.l.b16 %v4071
    %v5112 = vunpack.c.h.b16 %v4071
    %v5113 = vunpack.c.l.b16 %v4072
    %v5114 = vunpack.c.h.b16 %v4072
    %v5115 = vunpack.c.l.b16 %v4073
    %v5116 = vunpack.c.h.b16 %v4073
    %v5117 = vunpack.c.l.b16 %v4074
    %v5118 = vunpack.c.h.b16 %v4074
    %v5119 = vunpack.c.l.b16 %v4075
    %v5120 = vunpack.c.h.b16 %v4075
    %v5121 = vunpack.c.l.b16 %v4076
    %v5122 = vunpack.c.h.b16 %v4076
    %v5123 = vunpack.c.l.b16 %v4077
    %v5124 = vunpack.c.h.b16 %v4077
    %v5125 = vunpack.c.l.b16 %v4078
    %v5126 = vunpack.c.h.b16 %v4078
    %v5127 = vunpack.c.l.b16 %v4079
    %v5128 = vunpack.c.h.b16 %v4079
    %v5129 = vunpack.c.l.b16 %v4080
    %v5130 = vunpack.c.h.b16 %v4080
    %v5131 = vunpack.c.l.b16 %v4081
    %v5132 = vunpack.c.h.b16 %v4081
    %v5133 = vunpack.c.l.b16 %v4082
    %v5134 = vunpack.c.h.b16 %v4082
    %v5135 = vunpack.c.l.b16 %v4083
    %v5136 = vunpack.c.h.b16 %v4083
    %v5137 = vunpack.c.l.b16 %v4084
    %v5138 = vunpack.c.h.b16 %v4084
    %v5139 = vunpack.c.l.b16 %v4085
    %v5140 = vunpack.c.h.b16 %v4085
    %v5141 = vunpack.c.l.b16 %v4086
    %v5142 = vunpack.c.h.b16 %v4086
    %v5143 = vunpack.c.l.b16 %v4087
    %v5144 = vunpack.c.h.b16 %v4087
    %v5145 = vunpack.c.l.b16 %v4088
    %v5146 = vunpack.c.h.b16 %v4088
    %v5147 = vunpack.c.l.b16 %v4089
    %v5148 = vunpack.c.h.b16 %v4089
    %v5149 = vunpack.c.l.b16 %v4090
    %v5150 = vunpack.c.h.b16 %v4090
    %v5151 = vunpack.c.l.b16 %v4091
    %v5152 = vunpack.c.h.b16 %v4091
    %v5153 = vunpack.c.l.b16 %v4092
    %v5154 = vunpack.c.h.b16 %v4092
    %v5155 = vunpack.c.l.b16 %v4093
    %v5156 = vunpack.c.h.b16 %v4093
    %v5157 = vunpack.c.l.b16 %v4094
    %v5158 = vunpack.c.h.b16 %v4094
    %v5159 = vunpack.c.l.b16 %v4095
    %v5160 = vunpack.c.h.b16 %v4095
    %v5161 = vunpack.c.l.b16 %v4096
    %v5162 = vunpack.c.h.b16 %v4096
    %v5163 = vunpack.c.l.b16 %v4097
    %v5164 = vunpack.c.h.b16 %v4097
    %v5165 = vunpack.c.l.b16 %v4098
    %v5166 = vunpack.c.h.b16 %v4098
    %v5167 = vunpack.c.l.b16 %v4099
    %v5168 = vunpack.c.h.b16 %v4099
    %v5169 = vunpack.c.l.b16 %v4100
    %v5170 = vunpack.c.h.b16 %v4100
    %v5171 = vunpack.c.l.b16 %v4101
    %v5172 = vunpack.c.h.b16 %v4101
    %v5173 = vunpack.c.l.b16 %v4102
    %v5174 = vunpack.c.h.b16 %v4102
    %v5175 = vunpack.c.l.b16 %v4103
    %v5176 = vunpack.c.h.b16 %v4103
    %v5177 = vunpack.c.l.b16 %v4104
    %v5178 = vunpack.c.h.b16 %v4104
    %v5179 = vunpack.c.l.b16 %v4105
    %v5180 = vunpack.c.h.b16 %v4105
    %v5181 = vunpack.c.l.b16 %v4106
    %v5182 = vunpack.c.h.b16 %v4106
    %v5183 = vunpack.c.l.b16 %v4107
    %v5184 = vunpack.c.h.b16 %v4107
    %v5185 = vunpack.c.l.b16 %v4108
    %v5186 = vunpack.c.h.b16 %v4108
    %v5187 = vunpack.c.l.b16 %v4109
    %v5188 = vunpack.c.h.b16 %v4109
    %v5189 = vunpack.c.l.b16 %v4110
    %v5190 = vunpack.c.h.b16 %v4110
    %v5191 = vunpack.c.l.b16 %v4111
    %v5192 = vunpack.c.h.b16 %v4111
    %v5193 = vunpack.c.l.b16 %v4112
    %v5194 = vunpack.c.h.b16 %v4112
    %v5195 = vunpack.c.l.b16 %v4113
    %v5196 = vunpack.c.h.b16 %v4113
    %v5197 = vunpack.c.l.b16 %v4114
    %v5198 = vunpack.c.h.b16 %v4114
    %v5199 = vunpack.c.l.b16 %v4115
    %v5200 = vunpack.c.h.b16 %v4115
    %v5201 = vunpack.c.l.b16 %v4116
    %v5202 = vunpack.c.h.b16 %v4116
    %v5203 = vunpack.c.l.b16 %v4117
    %v5204 = vunpack.c.h.b16 %v4117
    %v5205 = vunpack.c.l.b16 %v4118
    %v5206 = vunpack.c.h.b16 %v4118
    %v5207 = vunpack.c.l.b16 %v4119
    %v5208 = vunpack.c.h.b16 %v4119
    %v5209 = vunpack.c.l.b16 %v4120
    %v5210 = vunpack.c.h.b16 %v4120
    %v5211 = vunpack.c.l.b16 %v4121
    %v5212 = vunpack.c.h.b16 %v4121
    %v5213 = vunpack.c.l.b16 %v4122
    %v5214 = vunpack.c.h.b16 %v4122
    %v5215 = vunpack.c.l.b16 %v4123
    %v5216 = vunpack.c.h.b16 %v4123
    %v5217 = vunpack.c.l.b16 %v4124
    %v5218 = vunpack.c.h.b16 %v4124
    %v5219 = vunpack.c.l.b16 %v4125
    %v5220 = vunpack.c.h.b16 %v4125
    %v5221 = vunpack.c.l.b16 %v4126
    %v5222 = vunpack.c.h.b16 %v4126
    %v5223 = vunpack.c.l.b16 %v4127
    %v5224 = vunpack.c.h.b16 %v4127
    %v5225 = vunpack.c.l.b16 %v4128
    %v5226 = vunpack.c.h.b16 %v4128
    %v5227 = vunpack.c.l.b16 %v4129
    %v5228 = vunpack.c.h.b16 %v4129
    %v5229 = vunpack.c.l.b16 %v4130
    %v5230 = vunpack.c.h.b16 %v4130
    %v5231 = vunpack.c.l.b16 %v4131
    %v5232 = vunpack.c.h.b16 %v4131
    %v5233 = vunpack.c.l.b16 %v4132
    %v5234 = vunpack.c.h.b16 %v4132
    %v5235 = vunpack.c.l.b16 %v4133
    %v5236 = vunpack.c.h.b16 %v4133
    %v5237 = vunpack.c.l.b16 %v4134
    %v5238 = vunpack.c.h.b16 %v4134
    %v5239 = vunpack.c.l.b16 %v4135
    %v5240 = vunpack.c.h.b16 %v4135
    %v5241 = vunpack.c.l.b16 %v4136
    %v5242 = vunpack.c.h.b16 %v4136
    %v5243 = vunpack.c.l.b16 %v4137
    %v5244 = vunpack.c.h.b16 %v4137
    %v5245 = vunpack.c.l.b16 %v4138
    %v5246 = vunpack.c.h.b16 %v4138
    %v5247 = vunpack.c.l.b16 %v4139
    %v5248 = vunpack.c.h.b16 %v4139
    %v5249 = vunpack.c.l.b16 %v4140
    %v5250 = vunpack.c.h.b16 %v4140
    %v5251 = vunpack.c.l.b16 %v4141
    %v5252 = vunpack.c.h.b16 %v4141
    %v5253 = vunpack.c.l.b16 %v4142
    %v5254 = vunpack.c.h.b16 %v4142
    %v5255 = vunpack.c.l.b16 %v4143
    %v5256 = vunpack.c.h.b16 %v4143
    %v5257 = vunpack.c.l.b16 %v4144
    %v5258 = vunpack.c.h.b16 %v4144
    %v5259 = vunpack.c.l.b16 %v4145
    %v5260 = vunpack.c.h.b16 %v4145
    %v5261 = vunpack.c.l.b16 %v4146
    %v5262 = vunpack.c.h.b16 %v4146
    %v5263 = vunpack.c.l.b16 %v4147
    %v5264 = vunpack.c.h.b16 %v4147
    %v5265 = vunpack.c.l.b16 %v4148
    %v5266 = vunpack.c.h.b16 %v4148
    %v5267 = vunpack.c.l.b16 %v4149
    %v5268 = vunpack.c.h.b16 %v4149
    %v5269 = vunpack.c.l.b16 %v4150
    %v5270 = vunpack.c.h.b16 %v4150
    %v5271 = vunpack.c.l.b16 %v4151
    %v5272 = vunpack.c.h.b16 %v4151
    %v5273 = vunpack.c.l.b16 %v4152
    %v5274 = vunpack.c.h.b16 %v4152
    %v5275 = vunpack.c.l.b16 %v4153
    %v5276 = vunpack.c.h.b16 %v4153
    %v5277 = vunpack.c.l.b16 %v4154
    %v5278 = vunpack.c.h.b16 %v4154
    %v5279 = vunpack.c.l.b16 %v4155
    %v5280 = vunpack.c.h.b16 %v4155
    %v5281 = vunpack.c.l.b16 %v4156
    %v5282 = vunpack.c.h.b16 %v4156
    %v5283 = vunpack.c.l.b16 %v4157
    %v5284 = vunpack.c.h.b16 %v4157
    %v5285 = vunpack.c.l.b16 %v4158
    %v5286 = vunpack.c.h.b16 %v4158
    %v5287 = vunpack.c.l.b16 %v4159
    %v5288 = vunpack.c.h.b16 %v4159
    %v5289 = vunpack.c.l.b16 %v4160
    %v5290 = vunpack.c.h.b16 %v4160
    %v5291 = vunpack.c.l.b16 %v4161
    %v5292 = vunpack.c.h.b16 %v4161
    %v5293 = vunpack.c.l.b16 %v4162
    %v5294 = vunpack.c.h.b16 %v4162
    %v5295 = vunpack.c.l.b16 %v4163
    %v5296 = vunpack.c.h.b16 %v4163
    %v5297 = vunpack.c.l.b16 %v4164
    %v5298 = vunpack.c.h.b16 %v4164
    %v5299 = vunpack.c.l.b16 %v4165
    %v5300 = vunpack.c.h.b16 %v4165
    %v5301 = vunpack.c.l.b16 %v4166
    %v5302 = vunpack.c.h.b16 %v4166
    %v5303 = vunpack.c.l.b16 %v4167
    %v5304 = vunpack.c.h.b16 %v4167
    %v5305 = vunpack.c.l.b16 %v4168
    %v5306 = vunpack.c.h.b16 %v4168
    %v5307 = vunpack.c.l.b16 %v4169
    %v5308 = vunpack.c.h.b16 %v4169
    %v5309 = vunpack.c.l.b16 %v4170
    %v5310 = vunpack.c.h.b16 %v4170
    %v5311 = vunpack.c.l.b16 %v4171
    %v5312 = vunpack.c.h.b16 %v4171
    %v5313 = vunpack.c.l.b16 %v4172
    %v5314 = vunpack.c.h.b16 %v4172
    %v5315 = vunpack.c.l.b16 %v4173
    %v5316 = vunpack.c.h.b16 %v4173
    %v5317 = vunpack.c.l.b16 %v4174
    %v5318 = vunpack.c.h.b16 %v4174
    %v5319 = vunpack.c.l.b16 %v4175
    %v5320 = vunpack.c.h.b16 %v4175
    %v5321 = vunpack.c.l.b16 %v4176
    %v5322 = vunpack.c.h.b16 %v4176
    %v5323 = vunpack.c.l.b16 %v4177
    %v5324 = vunpack.c.h.b16 %v4177
    %v5325 = vunpack.c.l.b16 %v4178
    %v5326 = vunpack.c.h.b16 %v4178
    %v5327 = vunpack.c.l.b16 %v4179
    %v5328 = vunpack.c.h.b16 %v4179
    %v5329 = vunpack.c.l.b16 %v4180
    %v5330 = vunpack.c.h.b16 %v4180
    %v5331 = vunpack.c.l.b16 %v4181
    %v5332 = vunpack.c.h.b16 %v4181
    %v5333 = vunpack.c.l.b16 %v4182
    %v5334 = vunpack.c.h.b16 %v4182
    %v5335 = vunpack.c.l.b16 %v4183
    %v5336 = vunpack.c.h.b16 %v4183
    %v5337 = vunpack.c.l.b16 %v4184
    %v5338 = vunpack.c.h.b16 %v4184
    %v5339 = vunpack.c.l.b16 %v4185
    %v5340 = vunpack.c.h.b16 %v4185
    %v5341 = vunpack.c.l.b16 %v4186
    %v5342 = vunpack.c.h.b16 %v4186
    %v5343 = vunpack.c.l.b16 %v4187
    %v5344 = vunpack.c.h.b16 %v4187
    %v5345 = vunpack.c.l.b16 %v4188
    %v5346 = vunpack.c.h.b16 %v4188
    %v5347 = vunpack.c.l.b16 %v4189
    %v5348 = vunpack.c.h.b16 %v4189
    %v5349 = vunpack.c.l.b16 %v4190
    %v5350 = vunpack.c.h.b16 %v4190
    %v5351 = vunpack.c.l.b16 %v4191
    %v5352 = vunpack.c.h.b16 %v4191
    %v5353 = vunpack.c.l.b16 %v4192
    %v5354 = vunpack.c.h.b16 %v4192
    %v5355 = vunpack.c.l.b16 %v4193
    %v5356 = vunpack.c.h.b16 %v4193
    %v5357 = vunpack.c.l.b16 %v4194
    %v5358 = vunpack.c.h.b16 %v4194
    %v5359 = vunpack.c.l.b16 %v4195
    %v5360 = vunpack.c.h.b16 %v4195
    %v5361 = vunpack.c.l.b16 %v4196
    %v5362 = vunpack.c.h.b16 %v4196
    %v5363 = vunpack.c.l.b16 %v4197
    %v5364 = vunpack.c.h.b16 %v4197
    %v5365 = vunpack.c.l.b16 %v4198
    %v5366 = vunpack.c.h.b16 %v4198
    %v5367 = vunpack.c.l.b16 %v4199
    %v5368 = vunpack.c.h.b16 %v4199
    %v5369 = vunpack.c.l.b16 %v4200
    %v5370 = vunpack.c.h.b16 %v4200
    %v5371 = vunpack.c.l.b16 %v4201
    %v5372 = vunpack.c.h.b16 %v4201
    %v5373 = vunpack.c.l.b16 %v4202
    %v5374 = vunpack.c.h.b16 %v4202
    %v5375 = vunpack.c.l.b16 %v4203
    %v5376 = vunpack.c.h.b16 %v4203
    %v5377 = vunpack.c.l.b16 %v4204
    %v5378 = vunpack.c.h.b16 %v4204
    %v5379 = vunpack.c.l.b16 %v4205
    %v5380 = vunpack.c.h.b16 %v4205
    %v5381 = vunpack.c.l.b16 %v4206
    %v5382 = vunpack.c.h.b16 %v4206
    %v5383 = vunpack.c.l.b16 %v4207
    %v5384 = vunpack.c.h.b16 %v4207
    %v5385 = vunpack.c.l.b16 %v4208
    %v5386 = vunpack.c.h.b16 %v4208
    %v5387 = vunpack.c.l.b16 %v4209
    %v5388 = vunpack.c.h.b16 %v4209
    %v5389 = vunpack.c.l.b16 %v4210
    %v5390 = vunpack.c.h.b16 %v4210
    %v5391 = vunpack.c.l.b16 %v4211
    %v5392 = vunpack.c.h.b16 %v4211
    %v5393 = vunpack.c.l.b16 %v4212
    %v5394 = vunpack.c.h.b16 %v4212
    %v5395 = vunpack.c.l.b16 %v4213
    %v5396 = vunpack.c.h.b16 %v4213
    %v5397 = vunpack.c.l.b16 %v4214
    %v5398 = vunpack.c.h.b16 %v4214
    %v5399 = vunpack.c.l.b16 %v4215
    %v5400 = vunpack.c.h.b16 %v4215
    %v5401 = vunpack.c.l.b16 %v4216
    %v5402 = vunpack.c.h.b16 %v4216
    %v5403 = vunpack.c.l.b16 %v4217
    %v5404 = vunpack.c.h.b16 %v4217
    %v5405 = vunpack.c.l.b16 %v4218
    %v5406 = vunpack.c.h.b16 %v4218
    %v5407 = vunpack.c.l.b16 %v4219
    %v5408 = vunpack.c.h.b16 %v4219
    %v5409 = vunpack.c.l.b16 %v4220
    %v5410 = vunpack.c.h.b16 %v4220
    %v5411 = vunpack.c.l.b16 %v4221
    %v5412 = vunpack.c.h.b16 %v4221
    %v5413 = vunpack.c.l.b16 %v4222
    %v5414 = vunpack.c.h.b16 %v4222
    %v5415 = vunpack.c.l.b16 %v4223
    %v5416 = vunpack.c.h.b16 %v4223
    %v5417 = vunpack.c.l.b16 %v4224
    %v5418 = vunpack.c.h.b16 %v4224
    %v5419 = vunpack.c.l.b16 %v4225
    %v5420 = vunpack.c.h.b16 %v4225
    %v5421 = vunpack.c.l.b16 %v4226
    %v5422 = vunpack.c.h.b16 %v4226
    %v5423 = vunpack.c.l.b16 %v4227
    %v5424 = vunpack.c.h.b16 %v4227
    %v5425 = vunpack.c.l.b16 %v4228
    %v5426 = vunpack.c.h.b16 %v4228
    %v5427 = vunpack.c.l.b16 %v4229
    %v5428 = vunpack.c.h.b16 %v4229
    %v5429 = vunpack.c.l.b16 %v4230
    %v5430 = vunpack.c.h.b16 %v4230
    %v5431 = vunpack.c.l.b16 %v4231
    %v5432 = vunpack.c.h.b16 %v4231
    %v5433 = vunpack.c.l.b16 %v4232
    %v5434 = vunpack.c.h.b16 %v4232
    %v5435 = vunpack.c.l.b16 %v4233
    %v5436 = vunpack.c.h.b16 %v4233
    %v5437 = vunpack.c.l.b16 %v4234
    %v5438 = vunpack.c.h.b16 %v4234
    %v5439 = vunpack.c.l.b16 %v4235
    %v5440 = vunpack.c.h.b16 %v4235
    %v5441 = vunpack.c.l.b16 %v4236
    %v5442 = vunpack.c.h.b16 %v4236
    %v5443 = vunpack.c.l.b16 %v4237
    %v5444 = vunpack.c.h.b16 %v4237
    %v5445 = vunpack.c.l.b16 %v4238
    %v5446 = vunpack.c.h.b16 %v4238
    %v5447 = vunpack.c.l.b16 %v4239
    %v5448 = vunpack.c.h.b16 %v4239
    %v5449 = vunpack.c.l.b16 %v4240
    %v5450 = vunpack.c.h.b16 %v4240
    %v5451 = vunpack.c.l.b16 %v4241
    %v5452 = vunpack.c.h.b16 %v4241
    %v5453 = vunpack.c.l.b16 %v4242
    %v5454 = vunpack.c.h.b16 %v4242
    %v5455 = vunpack.c.l.b16 %v4243
    %v5456 = vunpack.c.h.b16 %v4243
    %v5457 = vunpack.c.l.b16 %v4244
    %v5458 = vunpack.c.h.b16 %v4244
    %v5459 = vunpack.c.l.b16 %v4245
    %v5460 = vunpack.c.h.b16 %v4245
    %v5461 = vunpack.c.l.b16 %v4246
    %v5462 = vunpack.c.h.b16 %v4246
    %v5463 = vpack.c.b16 %v4707, %v4695
    %v5464 = vpack.c.b16 %v4708, %v4696
    %v5465 = vpack.c.b16 %v4709, %v4697
    %v5466 = vpack.c.b16 %v4710, %v4698
    %v5467 = vpack.c.b16 %v4711, %v4699
    %v5468 = vpack.c.b16 %v4712, %v4700
    %v5469 = vpack.c.b16 %v4713, %v4701
    %v5470 = vpack.c.b16 %v4714, %v4702
    %v5471 = vpack.c.b16 %v4715, %v4703
    %v5472 = vpack.c.b16 %v4716, %v4704
    %v5473 = vpack.c.b16 %v4717, %v4705
    %v5474 = vpack.c.b16 %v4718, %v4706
    %v5475 = vpack.c.b16 %v4731, %v4719
    %v5476 = vpack.c.b16 %v4732, %v4720
    %v5477 = vpack.c.b16 %v4733, %v4721
    %v5478 = vpack.c.b16 %v4734, %v4722
    %v5479 = vpack.c.b16 %v4735, %v4723
    %v5480 = vpack.c.b16 %v4736, %v4724
    %v5481 = vpack.c.b16 %v4737, %v4725
    %v5482 = vpack.c.b16 %v4738, %v4726
    %v5483 = vpack.c.b16 %v4739, %v4727
    %v5484 = vpack.c.b16 %v4740, %v4728
    %v5485 = vpack.c.b16 %v4741, %v4729
    %v5486 = vpack.c.b16 %v4742, %v4730
    %v5487 = vpack.c.b16 %v4755, %v4743
    %v5488 = vpack.c.b16 %v4756, %v4744
    %v5489 = vpack.c.b16 %v4757, %v4745
    %v5490 = vpack.c.b16 %v4758, %v4746
    %v5491 = vpack.c.b16 %v4759, %v4747
    %v5492 = vpack.c.b16 %v4760, %v4748
    %v5493 = vpack.c.b16 %v4761, %v4749
    %v5494 = vpack.c.b16 %v4762, %v4750
    %v5495 = vpack.c.b16 %v4763, %v4751
    %v5496 = vpack.c.b16 %v4764, %v4752
    %v5497 = vpack.c.b16 %v4765, %v4753
    %v5498 = vpack.c.b16 %v4766, %v4754
    %v5499 = vpack.c.b16 %v4779, %v4767
    %v5500 = vpack.c.b16 %v4780, %v4768
    %v5501 = vpack.c.b16 %v4781, %v4769
    %v5502 = vpack.c.b16 %v4782, %v4770
    %v5503 = vpack.c.b16 %v4783, %v4771
    %v5504 = vpack.c.b16 %v4784, %v4772
    %v5505 = vpack.c.b16 %v4785, %v4773
    %v5506 = vpack.c.b16 %v4786, %v4774
    %v5507 = vpack.c.b16 %v4787, %v4775
    %v5508 = vpack.c.b16 %v4788, %v4776
    %v5509 = vpack.c.b16 %v4789, %v4777
    %v5510 = vpack.c.b16 %v4790, %v4778
    %v5511 = vpack.c.b16 %v4803, %v4791
    %v5512 = vpack.c.b16 %v4804, %v4792
    %v5513 = vpack.c.b16 %v4805, %v4793
    %v5514 = vpack.c.b16 %v4806, %v4794
    %v5515 = vpack.c.b16 %v4807, %v4795
    %v5516 = vpack.c.b16 %v4808, %v4796
    %v5517 = vpack.c.b16 %v4809, %v4797
    %v5518 = vpack.c.b16 %v4810, %v4798
    %v5519 = vpack.c.b16 %v4811, %v4799
    %v5520 = vpack.c.b16 %v4812, %v4800
    %v5521 = vpack.c.b16 %v4813, %v4801
    %v5522 = vpack.c.b16 %v4814, %v4802
    %v5523 = vpack.c.b16 %v4827, %v4815
    %v5524 = vpack.c.b16 %v4828, %v4816
    %v5525 = vpack.c.b16 %v4829, %v4817
    %v5526 = vpack.c.b16 %v4830, %v4818
    %v5527 = vpack.c.b16 %v4831, %v4819
    %v5528 = vpack.c.b16 %v4832, %v4820
    %v5529 = vpack.c.b16 %v4833, %v4821
    %v5530 = vpack.c.b16 %v4834, %v4822
    %v5531 = vpack.c.b16 %v4835, %v4823
    %v5532 = vpack.c.b16 %v4836, %v4824
    %v5533 = vpack.c.b16 %v4837, %v4825
    %v5534 = vpack.c.b16 %v4838, %v4826
    %v5535 = vpack.c.b16 %v4851, %v4839
    %v5536 = vpack.c.b16 %v4852, %v4840
    %v5537 = vpack.c.b16 %v4853, %v4841
    %v5538 = vpack.c.b16 %v4854, %v4842
    %v5539 = vpack.c.b16 %v4855, %v4843
    %v5540 = vpack.c.b16 %v4856, %v4844
    %v5541 = vpack.c.b16 %v4857, %v4845
    %v5542 = vpack.c.b16 %v4858, %v4846
    %v5543 = vpack.c.b16 %v4859, %v4847
    %v5544 = vpack.c.b16 %v4860, %v4848
    %v5545 = vpack.c.b16 %v4861, %v4849
    %v5546 = vpack.c.b16 %v4862, %v4850
    %v5547 = vpack.c.b16 %v4875, %v4863
    %v5548 = vpack.c.b16 %v4876, %v4864
    %v5549 = vpack.c.b16 %v4877, %v4865
    %v5550 = vpack.c.b16 %v4878, %v4866
    %v5551 = vpack.c.b16 %v4879, %v4867
    %v5552 = vpack.c.b16 %v4880, %v4868
    %v5553 = vpack.c.b16 %v4881, %v4869
    %v5554 = vpack.c.b16 %v4882, %v4870
    %v5555 = vpack.c.b16 %v4883, %v4871
    %v5556 = vpack.c.b16 %v4884, %v4872
    %v5557 = vpack.c.b16 %v4885, %v4873
    %v5558 = vpack.c.b16 %v4886, %v4874
    %v5559 = vpack.c.b16 %v4899, %v4887
    %v5560 = vpack.c.b16 %v4900, %v4888
    %v5561 = vpack.c.b16 %v4901, %v4889
    %v5562 = vpack.c.b16 %v4902, %v4890
    %v5563 = vpack.c.b16 %v4903, %v4891
    %v5564 = vpack.c.b16 %v4904, %v4892
    %v5565 = vpack.c.b16 %v4905, %v4893
    %v5566 = vpack.c.b16 %v4906, %v4894
    %v5567 = vpack.c.b16 %v4907, %v4895
    %v5568 = vpack.c.b16 %v4908, %v4896
    %v5569 = vpack.c.b16 %v4909, %v4897
    %v5570 = vpack.c.b16 %v4910, %v4898
    %v5571 = vpack.c.b16 %v4923, %v4911
    %v5572 = vpack.c.b16 %v4924, %v4912
    %v5573 = vpack.c.b16 %v4925, %v4913
    %v5574 = vpack.c.b16 %v4926, %v4914
    %v5575 = vpack.c.b16 %v4927, %v4915
    %v5576 = vpack.c.b16 %v4928, %v4916
    %v5577 = vpack.c.b16 %v4929, %v4917
    %v5578 = vpack.c.b16 %v4930, %v4918
    %v5579 = vpack.c.b16 %v4931, %v4919
    %v5580 = vpack.c.b16 %v4932, %v4920
    %v5581 = vpack.c.b16 %v4933, %v4921
    %v5582 = vpack.c.b16 %v4934, %v4922
    %v5583 = vpack.c.b16 %v4947, %v4935
    %v5584 = vpack.c.b16 %v4948, %v4936
    %v5585 = vpack.c.b16 %v4949, %v4937
    %v5586 = vpack.c.b16 %v4950, %v4938
    %v5587 = vpack.c.b16 %v4951, %v4939
    %v5588 = vpack.c.b16 %v4952, %v4940
    %v5589 = vpack.c.b16 %v4953, %v4941
    %v5590 = vpack.c.b16 %v4954, %v4942
    %v5591 = vpack.c.b16 %v4955, %v4943
    %v5592 = vpack.c.b16 %v4956, %v4944
    %v5593 = vpack.c.b16 %v4957, %v4945
    %v5594 = vpack.c.b16 %v4958, %v4946
    %v5595 = vpack.c.b16 %v4971, %v4959
    %v5596 = vpack.c.b16 %v4972, %v4960
    %v5597 = vpack.c.b16 %v4973, %v4961
    %v5598 = vpack.c.b16 %v4974, %v4962
    %v5599 = vpack.c.b16 %v4975, %v4963
    %v5600 = vpack.c.b16 %v4976, %v4964
    %v5601 = vpack.c.b16 %v4977, %v4965
    %v5602 = vpack.c.b16 %v4978, %v4966
    %v5603 = vpack.c.b16 %v4979, %v4967
    %v5604 = vpack.c.b16 %v4980, %v4968
    %v5605 = vpack.c.b16 %v4981, %v4969
    %v5606 = vpack.c.b16 %v4982, %v4970
    %v5607 = vpack.c.b16 %v4995, %v4983
    %v5608 = vpack.c.b16 %v4996, %v4984
    %v5609 = vpack.c.b16 %v4997, %v4985
    %v5610 = vpack.c.b16 %v4998, %v4986
    %v5611 = vpack.c.b16 %v4999, %v4987
    %v5612 = vpack.c.b16 %v5000, %v4988
    %v5613 = vpack.c.b16 %v5001, %v4989
    %v5614 = vpack.c.b16 %v5002, %v4990
    %v5615 = vpack.c.b16 %v5003, %v4991
    %v5616 = vpack.c.b16 %v5004, %v4992
    %v5617 = vpack.c.b16 %v5005, %v4993
    %v5618 = vpack.c.b16 %v5006, %v4994
    %v5619 = vpack.c.b16 %v5019, %v5007
    %v5620 = vpack.c.b16 %v5020, %v5008
    %v5621 = vpack.c.b16 %v5021, %v5009
    %v5622 = vpack.c.b16 %v5022, %v5010
    %v5623 = vpack.c.b16 %v5023, %v5011
    %v5624 = vpack.c.b16 %v5024, %v5012
    %v5625 = vpack.c.b16 %v5025, %v5013
    %v5626 = vpack.c.b16 %v5026, %v5014
    %v5627 = vpack.c.b16 %v5027, %v5015
    %v5628 = vpack.c.b16 %v5028, %v5016
    %v5629 = vpack.c.b16 %v5029, %v5017
    %v5630 = vpack.c.b16 %v5030, %v5018
    %v5631 = vpack.c.b16 %v5043, %v5031
    %v5632 = vpack.c.b16 %v5044, %v5032
    %v5633 = vpack.c.b16 %v5045, %v5033
    %v5634 = vpack.c.b16 %v5046, %v5034
    %v5635 = vpack.c.b16 %v5047, %v5035
    %v5636 = vpack.c.b16 %v5048, %v5036
    %v5637 = vpack.c.b16 %v5049, %v5037
    %v5638 = vpack.c.b16 %v5050, %v5038
    %v5639 = vpack.c.b16 %v5051, %v5039
    %v5640 = vpack.c.b16 %v5052, %v5040
    %v5641 = vpack.c.b16 %v5053, %v5041
    %v5642 = vpack.c.b16 %v5054, %v5042
    %v5643 = vpack.c.b16 %v5067, %v5055
    %v5644 = vpack.c.b16 %v5068, %v5056
    %v5645 = vpack.c.b16 %v5069, %v5057
    %v5646 = vpack.c.b16 %v5070, %v5058
    %v5647 = vpack.c.b16 %v5071, %v5059
    %v5648 = vpack.c.b16 %v5072, %v5060
    %v5649 = vpack.c.b16 %v5073, %v5061
    %v5650 = vpack.c.b16 %v5074, %v5062
    %v5651 = vpack.c.b16 %v5075, %v5063
    %v5652 = vpack.c.b16 %v5076, %v5064
    %v5653 = vpack.c.b16 %v5077, %v5065
    %v5654 = vpack.c.b16 %v5078, %v5066
    %v5655 = vpack.c.b16 %v5091, %v5079
    %v5656 = vpack.c.b16 %v5092, %v5080
    %v5657 = vpack.c.b16 %v5093, %v5081
    %v5658 = vpack.c.b16 %v5094, %v5082
    %v5659 = vpack.c.b16 %v5095, %v5083
    %v5660 = vpack.c.b16 %v5096, %v5084
    %v5661 = vpack.c.b16 %v5097, %v5085
    %v5662 = vpack.c.b16 %v5098, %v5086
    %v5663 = vpack.c.b16 %v5099, %v5087
    %v5664 = vpack.c.b16 %v5100, %v5088
    %v5665 = vpack.c.b16 %v5101, %v5089
    %v5666 = vpack.c.b16 %v5102, %v5090
    %v5667 = vpack.c.b16 %v5115, %v5103
    %v5668 = vpack.c.b16 %v5116, %v5104
    %v5669 = vpack.c.b16 %v5117, %v5105
    %v5670 = vpack.c.b16 %v5118, %v5106
    %v5671 = vpack.c.b16 %v5119, %v5107
    %v5672 = vpack.c.b16 %v5120, %v5108
    %v5673 = vpack.c.b16 %v5121, %v5109
    %v5674 = vpack.c.b16 %v5122, %v5110
    %v5675 = vpack.c.b16 %v5123, %v5111
    %v5676 = vpack.c.b16 %v5124, %v5112
    %v5677 = vpack.c.b16 %v5125, %v5113
    %v5678 = vpack.c.b16 %v5126, %v5114
    %v5679 = vpack.c.b16 %v5139, %v5127
    %v5680 = vpack.c.b16 %v5140, %v5128
    %v5681 = vpack.c.b16 %v5141, %v5129
    %v5682 = vpack.c.b16 %v5142, %v5130
    %v5683 = vpack.c.b16 %v5143, %v5131
    %v5684 = vpack.c.b16 %v5144, %v5132
    %v5685 = vpack.c.b16 %v5145, %v5133
    %v5686 = vpack.c.b16 %v5146, %v5134
    %v5687 = vpack.c.b16 %v5147, %v5135
    %v5688 = vpack.c.b16 %v5148, %v5136
    %v5689 = vpack.c.b16 %v5149, %v5137
    %v5690 = vpack.c.b16 %v5150, %v5138
    %v5691 = vpack.c.b16 %v5163, %v5151
    %v5692 = vpack.c.b16 %v5164, %v5152
    %v5693 = vpack.c.b16 %v5165, %v5153
    %v5694 = vpack.c.b16 %v5166, %v5154
    %v5695 = vpack.c.b16 %v5167, %v5155
    %v5696 = vpack.c.b16 %v5168, %v5156
    %v5697 = vpack.c.b16 %v5169, %v5157
    %v5698 = vpack.c.b16 %v5170, %v5158
    %v5699 = vpack.c.b16 %v5171, %v5159
    %v5700 = vpack.c.b16 %v5172, %v5160
    %v5701 = vpack.c.b16 %v5173, %v5161
    %v5702 = vpack.c.b16 %v5174, %v5162
    %v5703 = vpack.c.b16 %v5187, %v5175
    %v5704 = vpack.c.b16 %v5188, %v5176
    %v5705 = vpack.c.b16 %v5189, %v5177
    %v5706 = vpack.c.b16 %v5190, %v5178
    %v5707 = vpack.c.b16 %v5191, %v5179
    %v5708 = vpack.c.b16 %v5192, %v5180
    %v5709 = vpack.c.b16 %v5193, %v5181
    %v5710 = vpack.c.b16 %v5194, %v5182
    %v5711 = vpack.c.b16 %v5195, %v5183
    %v5712 = vpack.c.b16 %v5196, %v5184
    %v5713 = vpack.c.b16 %v5197, %v5185
    %v5714 = vpack.c.b16 %v5198, %v5186
    %v5715 = vpack.c.b16 %v5211, %v5199
    %v5716 = vpack.c.b16 %v5212, %v5200
    %v5717 = vpack.c.b16 %v5213, %v5201
    %v5718 = vpack.c.b16 %v5214, %v5202
    %v5719 = vpack.c.b16 %v5215, %v5203
    %v5720 = vpack.c.b16 %v5216, %v5204
    %v5721 = vpack.c.b16 %v5217, %v5205
    %v5722 = vpack.c.b16 %v5218, %v5206
    %v5723 = vpack.c.b16 %v5219, %v5207
    %v5724 = vpack.c.b16 %v5220, %v5208
    %v5725 = vpack.c.b16 %v5221, %v5209
    %v5726 = vpack.c.b16 %v5222, %v5210
    %v5727 = vpack.c.b16 %v5235, %v5223
    %v5728 = vpack.c.b16 %v5236, %v5224
    %v5729 = vpack.c.b16 %v5237, %v5225
    %v5730 = vpack.c.b16 %v5238, %v5226
    %v5731 = vpack.c.b16 %v5239, %v5227
    %v5732 = vpack.c.b16 %v5240, %v5228
    %v5733 = vpack.c.b16 %v5241, %v5229
    %v5734 = vpack.c.b16 %v5242, %v5230
    %v5735 = vpack.c.b16 %v5243, %v5231
    %v5736 = vpack.c.b16 %v5244, %v5232
    %v5737 = vpack.c.b16 %v5245, %v5233
    %v5738 = vpack.c.b16 %v5246, %v5234
    %v5739 = vpack.c.b16 %v5259, %v5247
    %v5740 = vpack.c.b16 %v5260, %v5248
    %v5741 = vpack.c.b16 %v5261, %v5249
    %v5742 = vpack.c.b16 %v5262, %v5250
    %v5743 = vpack.c.b16 %v5263, %v5251
    %v5744 = vpack.c.b16 %v5264, %v5252
    %v5745 = vpack.c.b16 %v5265, %v5253
    %v5746 = vpack.c.b16 %v5266, %v5254
    %v5747 = vpack.c.b16 %v5267, %v5255
    %v5748 = vpack.c.b16 %v5268, %v5256
    %v5749 = vpack.c.b16 %v5269, %v5257
    %v5750 = vpack.c.b16 %v5270, %v5258
    %v5751 = vpack.c.b16 %v5283, %v5271
    %v5752 = vpack.c.b16 %v5284, %v5272
    %v5753 = vpack.c.b16 %v5285, %v5273
    %v5754 = vpack.c.b16 %v5286, %v5274
    %v5755 = vpack.c.b16 %v5287, %v5275
    %v5756 = vpack.c.b16 %v5288, %v5276
    %v5757 = vpack.c.b16 %v5289, %v5277
    %v5758 = vpack.c.b16 %v5290, %v5278
    %v5759 = vpack.c.b16 %v5291, %v5279
    %v5760 = vpack.c.b16 %v5292, %v5280
    %v5761 = vpack.c.b16 %v5293, %v5281
    %v5762 = vpack.c.b16 %v5294, %v5282
    %v5763 = vpack.c.b16 %v5307, %v5295
    %v5764 = vpack.c.b16 %v5308, %v5296
    %v5765 = vpack.c.b16 %v5309, %v5297
    %v5766 = vpack.c.b16 %v5310, %v5298
    %v5767 = vpack.c.b16 %v5311, %v5299
    %v5768 = vpack.c.b16 %v5312, %v5300
    %v5769 = vpack.c.b16 %v5313, %v5301
    %v5770 = vpack.c.b16 %v5314, %v5302
    %v5771 = vpack.c.b16 %v5315, %v5303
    %v5772 = vpack.c.b16 %v5316, %v5304
    %v5773 = vpack.c.b16 %v5317, %v5305
    %v5774 = vpack.c.b16 %v5318, %v5306
    %v5775 = vpack.c.b16 %v5331, %v5319
    %v5776 = vpack.c.b16 %v5332, %v5320
    %v5777 = vpack.c.b16 %v5333, %v5321
    %v5778 = vpack.c.b16 %v5334, %v5322
    %v5779 = vpack.c.b16 %v5335, %v5323
    %v5780 = vpack.c.b16 %v5336, %v5324
    %v5781 = vpack.c.b16 %v5337, %v5325
    %v5782 = vpack.c.b16 %v5338, %v5326
    %v5783 = vpack.c.b16 %v5339, %v5327
    %v5784 = vpack.c.b16 %v5340, %v5328
    %v5785 = vpack.c.b16 %v5341, %v5329
    %v5786 = vpack.c.b16 %v5342, %v5330
    %v5787 = vpack.c.b16 %v5355, %v5343
    %v5788 = vpack.c.b16 %v5356, %v5344
    %v5789 = vpack.c.b16 %v5357, %v5345
    %v5790 = vpack.c.b16 %v5358, %v5346
    %v5791 = vpack.c.b16 %v5359, %v5347
    %v5792 = vpack.c.b16 %v5360, %v5348
    %v5793 = vpack.c.b16 %v5361, %v5349
    %v5794 = vpack.c.b16 %v5362, %v5350
    %v5795 = vpack.c.b16 %v5363, %v5351
    %v5796 = vpack.c.b16 %v5364, %v5352
    %v5797 = vpack.c.b16 %v5365, %v5353
    %v5798 = vpack.c.b16 %v5366, %v5354
    %v5799 = vpack.c.b16 %v5379, %v5367
    %v5800 = vpack.c.b16 %v5380, %v5368
    %v5801 = vpack.c.b16 %v5381, %v5369
    %v5802 = vpack.c.b16 %v5382, %v5370
    %v5803 = vpack.c.b16 %v5383, %v5371
    %v5804 = vpack.c.b16 %v5384, %v5372
    %v5805 = vpack.c.b16 %v5385, %v5373
    %v5806 = vpack.c.b16 %v5386, %v5374
    %v5807 = vpack.c.b16 %v5387, %v5375
    %v5808 = vpack.c.b16 %v5388, %v5376
    %v5809 = vpack.c.b16 %v5389, %v5377
    %v5810 = vpack.c.b16 %v5390, %v5378
    %v5811 = vpack.c.b16 %v5403, %v5391
    %v5812 = vpack.c.b16 %v5404, %v5392
    %v5813 = vpack.c.b16 %v5405, %v5393
    %v5814 = vpack.c.b16 %v5406, %v5394
    %v5815 = vpack.c.b16 %v5407, %v5395
    %v5816 = vpack.c.b16 %v5408, %v5396
    %v5817 = vpack.c.b16 %v5409, %v5397
    %v5818 = vpack.c.b16 %v5410, %v5398
    %v5819 = vpack.c.b16 %v5411, %v5399
    %v5820 = vpack.c.b16 %v5412, %v5400
    %v5821 = vpack.c.b16 %v5413, %v5401
    %v5822 = vpack.c.b16 %v5414, %v5402
    %v5823 = vpack.c.b16 %v5427, %v5415
    %v5824 = vpack.c.b16 %v5428, %v5416
    %v5825 = vpack.c.b16 %v5429, %v5417
    %v5826 = vpack.c.b16 %v5430, %v5418
    %v5827 = vpack.c.b16 %v5431, %v5419
    %v5828 = vpack.c.b16 %v5432, %v5420
    %v5829 = vpack.c.b16 %v5433, %v5421
    %v5830 = vpack.c.b16 %v5434, %v5422
    %v5831 = vpack.c.b16 %v5435, %v5423
    %v5832 = vpack.c.b16 %v5436, %v5424
    %v5833 = vpack.c.b16 %v5437, %v5425
    %v5834 = vpack.c.b16 %v5438, %v5426
    %v5835 = vpack.c.b16 %v5451, %v5439
    %v5836 = vpack.c.b16 %v5452, %v5440
    %v5837 = vpack.c.b16 %v5453, %v5441
    %v5838 = vpack.c.b16 %v5454, %v5442
    %v5839 = vpack.c.b16 %v5455, %v5443
    %v5840 = vpack.c.b16 %v5456, %v5444
    %v5841 = vpack.c.b16 %v5457, %v5445
    %v5842 = vpack.c.b16 %v5458, %v5446
    %v5843 = vpack.c.b16 %v5459, %v5447
    %v5844 = vpack.c.b16 %v5460, %v5448
    %v5845 = vpack.c.b16 %v5461, %v5449
    %v5846 = vpack.c.b16 %v5462, %v5450
    %6231 = vmatprep.subr.bf16.mxu0 %v5548
    %6232 = vmatpush1.bf16.msra.mxu0 %v5547
    %6233 = vmatprep.subr.bf16.mxu0 %v5536
    %6234 = vmatpush1.bf16.msra.mxu0 %v5535
    %6235 = vmatprep.subr.bf16.mxu0 %v5524
    %6236 = vmatpush1.bf16.msra.mxu0 %v5523
    %6237 = vmatprep.subr.bf16.mxu0 %v5512
    %6238 = vmatpush1.bf16.msra.mxu0 %v5511
    %6239 = vmatprep.subr.bf16.mxu0 %v5500
    %6240 = vmatpush1.bf16.msra.mxu0 %v5499
    %6241 = vmatprep.subr.bf16.mxu0 %v5488
    %6242 = vmatpush1.bf16.msra.mxu0 %v5487
    %6243 = vmatprep.subr.bf16.mxu0 %v5476
    %6244 = vmatpush1.bf16.msra.mxu0 %v5475
    %6245 = vmatprep.subr.bf16.mxu0 %v5464
    %6246 = vmatpush1.bf16.msra.mxu0 %v5463
    %6247 = vmatprep.subr.bf16.mxu0 %v5644
    %6248 = vmatpush2.bf16.msra.mxu0 %v5643
    %6249 = vmatprep.subr.bf16.mxu0 %v5632
    %6250 = vmatpush2.bf16.msra.mxu0 %v5631
    %6251 = vmatprep.subr.bf16.mxu0 %v5620
    %6252 = vmatpush2.bf16.msra.mxu0 %v5619
    %6253 = vmatprep.subr.bf16.mxu0 %v5608
    %6254 = vmatpush2.bf16.msra.mxu0 %v5607
    %6255 = vmatprep.subr.bf16.mxu0 %v5596
    %6256 = vmatpush2.bf16.msra.mxu0 %v5595
    %6257 = vmatprep.subr.bf16.mxu0 %v5584
    %6258 = vmatpush2.bf16.msra.mxu0 %v5583
    %6259 = vmatprep.subr.bf16.mxu0 %v5572
    %6260 = vmatpush2.bf16.msra.mxu0 %v5571
    %6261 = vmatprep.subr.bf16.mxu0 %v5560
    %6262 = vmatpush2.bf16.msra.mxu0 %v5559
    %6263 = vmatprep.mubr.bf16.mxu0 %v3860
    %6264 = vmatmul.mubr.bf16.gmra.mxu0 %v3859
    %v6265 = vpop.f32.mrf.mxu0
    %v6266 = vadd.f32 %v4254, %v6265
    %v6267 = vpop.f32.mrf.mxu0
    %v6268 = vadd.f32 %v4258, %v6267
    %v6269 = vpop.f32.mrf.mxu0
    %v6270 = vpop.f32.mrf.mxu0
    %6271 = vdwg.mxu0
    %6272 = vmatprep.subr.bf16.mxu0 %v5740
    %6273 = vmatpush1.bf16.msra.mxu0 %v5739
    %6274 = vmatprep.subr.bf16.mxu0 %v5728
    %6275 = vmatpush1.bf16.msra.mxu0 %v5727
    %6276 = vmatprep.subr.bf16.mxu0 %v5716
    %6277 = vmatpush1.bf16.msra.mxu0 %v5715
    %6278 = vmatprep.subr.bf16.mxu0 %v5704
    %6279 = vmatpush1.bf16.msra.mxu0 %v5703
    %6280 = vmatprep.subr.bf16.mxu0 %v5692
    %6281 = vmatpush1.bf16.msra.mxu0 %v5691
    %6282 = vmatprep.subr.bf16.mxu0 %v5680
    %6283 = vmatpush1.bf16.msra.mxu0 %v5679
    %6284 = vmatprep.subr.bf16.mxu0 %v5668
    %6285 = vmatpush1.bf16.msra.mxu0 %v5667
    %6286 = vmatprep.subr.bf16.mxu0 %v5656
    %6287 = vmatpush1.bf16.msra.mxu0 %v5655
    %6288 = vmatprep.subr.bf16.mxu0 %v5836
    %6289 = vmatpush2.bf16.msra.mxu0 %v5835
    %6290 = vmatprep.subr.bf16.mxu0 %v5824
    %6291 = vmatpush2.bf16.msra.mxu0 %v5823
    %6292 = vmatprep.subr.bf16.mxu0 %v5812
    %6293 = vmatpush2.bf16.msra.mxu0 %v5811
    %6294 = vmatprep.subr.bf16.mxu0 %v5800
    %6295 = vmatpush2.bf16.msra.mxu0 %v5799
    %6296 = vmatprep.subr.bf16.mxu0 %v5788
    %6297 = vmatpush2.bf16.msra.mxu0 %v5787
    %6298 = vmatprep.subr.bf16.mxu0 %v5776
    %6299 = vmatpush2.bf16.msra.mxu0 %v5775
    %6300 = vmatprep.subr.bf16.mxu0 %v5764
    %6301 = vmatpush2.bf16.msra.mxu0 %v5763
    %6302 = vmatprep.subr.bf16.mxu0 %v5752
    %6303 = vmatpush2.bf16.msra.mxu0 %v5751
    %6304 = vmatprep.mubr.bf16.mxu0 %v3862
    %6305 = vmatmul.mubr.bf16.gmra.mxu0 %v3861
    %v6306 = vpop.f32.mrf.mxu0
    %v6307 = vadd.f32 %v6266, %v6306
    %v6308 = vpop.f32.mrf.mxu0
    %v6309 = vadd.f32 %v6268, %v6308
    %v6310 = vpop.f32.mrf.mxu0
    %v6311 = vpop.f32.mrf.mxu0
    %6312 = vdwg.mxu0
    %6313 = vmatprep.subr.bf16.mxu0 %v5550
    %6314 = vmatpush1.bf16.msra.mxu0 %v5549
    %6315 = vmatprep.subr.bf16.mxu0 %v5538
    %6316 = vmatpush1.bf16.msra.mxu0 %v5537
    %6317 = vmatprep.subr.bf16.mxu0 %v5526
    %6318 = vmatpush1.bf16.msra.mxu0 %v5525
    %6319 = vmatprep.subr.bf16.mxu0 %v5514
    %6320 = vmatpush1.bf16.msra.mxu0 %v5513
    %6321 = vmatprep.subr.bf16.mxu0 %v5502
    %6322 = vmatpush1.bf16.msra.mxu0 %v5501
    %6323 = vmatprep.subr.bf16.mxu0 %v5490
    %6324 = vmatpush1.bf16.msra.mxu0 %v5489
    %6325 = vmatprep.subr.bf16.mxu0 %v5478
    %6326 = vmatpush1.bf16.msra.mxu0 %v5477
    %6327 = vmatprep.subr.bf16.mxu0 %v5466
    %6328 = vmatpush1.bf16.msra.mxu0 %v5465
    %6329 = vmatprep.subr.bf16.mxu0 %v5646
    %6330 = vmatpush2.bf16.msra.mxu0 %v5645
    %6331 = vmatprep.subr.bf16.mxu0 %v5634
    %6332 = vmatpush2.bf16.msra.mxu0 %v5633
    %6333 = vmatprep.subr.bf16.mxu0 %v5622
    %6334 = vmatpush2.bf16.msra.mxu0 %v5621
    %6335 = vmatprep.subr.bf16.mxu0 %v5610
    %6336 = vmatpush2.bf16.msra.mxu0 %v5609
    %6337 = vmatprep.subr.bf16.mxu0 %v5598
    %6338 = vmatpush2.bf16.msra.mxu0 %v5597
    %6339 = vmatprep.subr.bf16.mxu0 %v5586
    %6340 = vmatpush2.bf16.msra.mxu0 %v5585
    %6341 = vmatprep.subr.bf16.mxu0 %v5574
    %6342 = vmatpush2.bf16.msra.mxu0 %v5573
    %6343 = vmatprep.subr.bf16.mxu0 %v5562
    %6344 = vmatpush2.bf16.msra.mxu0 %v5561
    %6345 = vmatprep.mubr.bf16.mxu0 %v3860
    %6346 = vmatmul.mubr.bf16.gmra.mxu0 %v3859
    %v6347 = vpop.f32.mrf.mxu0
    %v6348 = vadd.f32 %v4262, %v6347
    %v6349 = vpop.f32.mrf.mxu0
    %v6350 = vadd.f32 %v4266, %v6349
    %v6351 = vpop.f32.mrf.mxu0
    %v6352 = vpop.f32.mrf.mxu0
    %6353 = vdwg.mxu0
    %6354 = vmatprep.subr.bf16.mxu0 %v5742
    %6355 = vmatpush1.bf16.msra.mxu0 %v5741
    %6356 = vmatprep.subr.bf16.mxu0 %v5730
    %6357 = vmatpush1.bf16.msra.mxu0 %v5729
    %6358 = vmatprep.subr.bf16.mxu0 %v5718
    %6359 = vmatpush1.bf16.msra.mxu0 %v5717
    %6360 = vmatprep.subr.bf16.mxu0 %v5706
    %6361 = vmatpush1.bf16.msra.mxu0 %v5705
    %6362 = vmatprep.subr.bf16.mxu0 %v5694
    %6363 = vmatpush1.bf16.msra.mxu0 %v5693
    %6364 = vmatprep.subr.bf16.mxu0 %v5682
    %6365 = vmatpush1.bf16.msra.mxu0 %v5681
    %6366 = vmatprep.subr.bf16.mxu0 %v5670
    %6367 = vmatpush1.bf16.msra.mxu0 %v5669
    %6368 = vmatprep.subr.bf16.mxu0 %v5658
    %6369 = vmatpush1.bf16.msra.mxu0 %v5657
    %6370 = vmatprep.subr.bf16.mxu0 %v5838
    %6371 = vmatpush2.bf16.msra.mxu0 %v5837
    %6372 = vmatprep.subr.bf16.mxu0 %v5826
    %6373 = vmatpush2.bf16.msra.mxu0 %v5825
    %6374 = vmatprep.subr.bf16.mxu0 %v5814
    %6375 = vmatpush2.bf16.msra.mxu0 %v5813
    %6376 = vmatprep.subr.bf16.mxu0 %v5802
    %6377 = vmatpush2.bf16.msra.mxu0 %v5801
    %6378 = vmatprep.subr.bf16.mxu0 %v5790
    %6379 = vmatpush2.bf16.msra.mxu0 %v5789
    %6380 = vmatprep.subr.bf16.mxu0 %v5778
    %6381 = vmatpush2.bf16.msra.mxu0 %v5777
    %6382 = vmatprep.subr.bf16.mxu0 %v5766
    %6383 = vmatpush2.bf16.msra.mxu0 %v5765
    %6384 = vmatprep.subr.bf16.mxu0 %v5754
    %6385 = vmatpush2.bf16.msra.mxu0 %v5753
    %6386 = vmatprep.mubr.bf16.mxu0 %v3862
    %6387 = vmatmul.mubr.bf16.gmra.mxu0 %v3861
    %v6388 = vpop.f32.mrf.mxu0
    %v6389 = vadd.f32 %v6348, %v6388
    %v6390 = vpop.f32.mrf.mxu0
    %v6391 = vadd.f32 %v6350, %v6390
    %v6392 = vpop.f32.mrf.mxu0
    %v6393 = vpop.f32.mrf.mxu0
    %6394 = vdwg.mxu0
    %6395 = vmatprep.subr.bf16.mxu0 %v5552
    %6396 = vmatpush1.bf16.msra.mxu0 %v5551
    %6397 = vmatprep.subr.bf16.mxu0 %v5540
    %6398 = vmatpush1.bf16.msra.mxu0 %v5539
    %6399 = vmatprep.subr.bf16.mxu0 %v5528
    %6400 = vmatpush1.bf16.msra.mxu0 %v5527
    %6401 = vmatprep.subr.bf16.mxu0 %v5516
    %6402 = vmatpush1.bf16.msra.mxu0 %v5515
    %6403 = vmatprep.subr.bf16.mxu0 %v5504
    %6404 = vmatpush1.bf16.msra.mxu0 %v5503
    %6405 = vmatprep.subr.bf16.mxu0 %v5492
    %6406 = vmatpush1.bf16.msra.mxu0 %v5491
    %6407 = vmatprep.subr.bf16.mxu0 %v5480
    %6408 = vmatpush1.bf16.msra.mxu0 %v5479
    %6409 = vmatprep.subr.bf16.mxu0 %v5468
    %6410 = vmatpush1.bf16.msra.mxu0 %v5467
    %6411 = vmatprep.subr.bf16.mxu0 %v5648
    %6412 = vmatpush2.bf16.msra.mxu0 %v5647
    %6413 = vmatprep.subr.bf16.mxu0 %v5636
    %6414 = vmatpush2.bf16.msra.mxu0 %v5635
    %6415 = vmatprep.subr.bf16.mxu0 %v5624
    %6416 = vmatpush2.bf16.msra.mxu0 %v5623
    %6417 = vmatprep.subr.bf16.mxu0 %v5612
    %6418 = vmatpush2.bf16.msra.mxu0 %v5611
    %6419 = vmatprep.subr.bf16.mxu0 %v5600
    %6420 = vmatpush2.bf16.msra.mxu0 %v5599
    %6421 = vmatprep.subr.bf16.mxu0 %v5588
    %6422 = vmatpush2.bf16.msra.mxu0 %v5587
    %6423 = vmatprep.subr.bf16.mxu0 %v5576
    %6424 = vmatpush2.bf16.msra.mxu0 %v5575
    %6425 = vmatprep.subr.bf16.mxu0 %v5564
    %6426 = vmatpush2.bf16.msra.mxu0 %v5563
    %6427 = vmatprep.mubr.bf16.mxu0 %v3860
    %6428 = vmatmul.mubr.bf16.gmra.mxu0 %v3859
    %v6429 = vpop.f32.mrf.mxu0
    %v6430 = vadd.f32 %v4270, %v6429
    %v6431 = vpop.f32.mrf.mxu0
    %v6432 = vadd.f32 %v4274, %v6431
    %v6433 = vpop.f32.mrf.mxu0
    %v6434 = vpop.f32.mrf.mxu0
    %6435 = vdwg.mxu0
    %6436 = vmatprep.subr.bf16.mxu0 %v5744
    %6437 = vmatpush1.bf16.msra.mxu0 %v5743
    %6438 = vmatprep.subr.bf16.mxu0 %v5732
    %6439 = vmatpush1.bf16.msra.mxu0 %v5731
    %6440 = vmatprep.subr.bf16.mxu0 %v5720
    %6441 = vmatpush1.bf16.msra.mxu0 %v5719
    %6442 = vmatprep.subr.bf16.mxu0 %v5708
    %6443 = vmatpush1.bf16.msra.mxu0 %v5707
    %6444 = vmatprep.subr.bf16.mxu0 %v5696
    %6445 = vmatpush1.bf16.msra.mxu0 %v5695
    %6446 = vmatprep.subr.bf16.mxu0 %v5684
    %6447 = vmatpush1.bf16.msra.mxu0 %v5683
    %6448 = vmatprep.subr.bf16.mxu0 %v5672
    %6449 = vmatpush1.bf16.msra.mxu0 %v5671
    %6450 = vmatprep.subr.bf16.mxu0 %v5660
    %6451 = vmatpush1.bf16.msra.mxu0 %v5659
    %6452 = vmatprep.subr.bf16.mxu0 %v5840
    %6453 = vmatpush2.bf16.msra.mxu0 %v5839
    %6454 = vmatprep.subr.bf16.mxu0 %v5828
    %6455 = vmatpush2.bf16.msra.mxu0 %v5827
    %6456 = vmatprep.subr.bf16.mxu0 %v5816
    %6457 = vmatpush2.bf16.msra.mxu0 %v5815
    %6458 = vmatprep.subr.bf16.mxu0 %v5804
    %6459 = vmatpush2.bf16.msra.mxu0 %v5803
    %6460 = vmatprep.subr.bf16.mxu0 %v5792
    %6461 = vmatpush2.bf16.msra.mxu0 %v5791
    %6462 = vmatprep.subr.bf16.mxu0 %v5780
    %6463 = vmatpush2.bf16.msra.mxu0 %v5779
    %6464 = vmatprep.subr.bf16.mxu0 %v5768
    %6465 = vmatpush2.bf16.msra.mxu0 %v5767
    %6466 = vmatprep.subr.bf16.mxu0 %v5756
    %6467 = vmatpush2.bf16.msra.mxu0 %v5755
    %6468 = vmatprep.mubr.bf16.mxu0 %v3862
    %6469 = vmatmul.mubr.bf16.gmra.mxu0 %v3861
    %v6470 = vpop.f32.mrf.mxu0
    %v6471 = vadd.f32 %v6430, %v6470
    %v6472 = vpop.f32.mrf.mxu0
    %v6473 = vadd.f32 %v6432, %v6472
    %v6474 = vpop.f32.mrf.mxu0
    %v6475 = vpop.f32.mrf.mxu0
    %6476 = vdwg.mxu0
    %6477 = vmatprep.subr.bf16.mxu0 %v5554
    %6478 = vmatpush1.bf16.msra.mxu0 %v5553
    %6479 = vmatprep.subr.bf16.mxu0 %v5542
    %6480 = vmatpush1.bf16.msra.mxu0 %v5541
    %6481 = vmatprep.subr.bf16.mxu0 %v5530
    %6482 = vmatpush1.bf16.msra.mxu0 %v5529
    %6483 = vmatprep.subr.bf16.mxu0 %v5518
    %6484 = vmatpush1.bf16.msra.mxu0 %v5517
    %6485 = vmatprep.subr.bf16.mxu0 %v5506
    %6486 = vmatpush1.bf16.msra.mxu0 %v5505
    %6487 = vmatprep.subr.bf16.mxu0 %v5494
    %6488 = vmatpush1.bf16.msra.mxu0 %v5493
    %6489 = vmatprep.subr.bf16.mxu0 %v5482
    %6490 = vmatpush1.bf16.msra.mxu0 %v5481
    %6491 = vmatprep.subr.bf16.mxu0 %v5470
    %6492 = vmatpush1.bf16.msra.mxu0 %v5469
    %6493 = vmatprep.subr.bf16.mxu0 %v5650
    %6494 = vmatpush2.bf16.msra.mxu0 %v5649
    %6495 = vmatprep.subr.bf16.mxu0 %v5638
    %6496 = vmatpush2.bf16.msra.mxu0 %v5637
    %6497 = vmatprep.subr.bf16.mxu0 %v5626
    %6498 = vmatpush2.bf16.msra.mxu0 %v5625
    %6499 = vmatprep.subr.bf16.mxu0 %v5614
    %6500 = vmatpush2.bf16.msra.mxu0 %v5613
    %6501 = vmatprep.subr.bf16.mxu0 %v5602
    %6502 = vmatpush2.bf16.msra.mxu0 %v5601
    %6503 = vmatprep.subr.bf16.mxu0 %v5590
    %6504 = vmatpush2.bf16.msra.mxu0 %v5589
    %6505 = vmatprep.subr.bf16.mxu0 %v5578
    %6506 = vmatpush2.bf16.msra.mxu0 %v5577
    %6507 = vmatprep.subr.bf16.mxu0 %v5566
    %6508 = vmatpush2.bf16.msra.mxu0 %v5565
    %6509 = vmatprep.mubr.bf16.mxu0 %v3860
    %6510 = vmatmul.mubr.bf16.gmra.mxu0 %v3859
    %v6511 = vpop.f32.mrf.mxu0
    %v6512 = vadd.f32 %v4278, %v6511
    %v6513 = vpop.f32.mrf.mxu0
    %v6514 = vadd.f32 %v4282, %v6513
    %v6515 = vpop.f32.mrf.mxu0
    %v6516 = vpop.f32.mrf.mxu0
    %6517 = vdwg.mxu0
    %6518 = vmatprep.subr.bf16.mxu0 %v5746
    %6519 = vmatpush1.bf16.msra.mxu0 %v5745
    %6520 = vmatprep.subr.bf16.mxu0 %v5734
    %6521 = vmatpush1.bf16.msra.mxu0 %v5733
    %6522 = vmatprep.subr.bf16.mxu0 %v5722
    %6523 = vmatpush1.bf16.msra.mxu0 %v5721
    %6524 = vmatprep.subr.bf16.mxu0 %v5710
    %6525 = vmatpush1.bf16.msra.mxu0 %v5709
    %6526 = vmatprep.subr.bf16.mxu0 %v5698
    %6527 = vmatpush1.bf16.msra.mxu0 %v5697
    %6528 = vmatprep.subr.bf16.mxu0 %v5686
    %6529 = vmatpush1.bf16.msra.mxu0 %v5685
    %6530 = vmatprep.subr.bf16.mxu0 %v5674
    %6531 = vmatpush1.bf16.msra.mxu0 %v5673
    %6532 = vmatprep.subr.bf16.mxu0 %v5662
    %6533 = vmatpush1.bf16.msra.mxu0 %v5661
    %6534 = vmatprep.subr.bf16.mxu0 %v5842
    %6535 = vmatpush2.bf16.msra.mxu0 %v5841
    %6536 = vmatprep.subr.bf16.mxu0 %v5830
    %6537 = vmatpush2.bf16.msra.mxu0 %v5829
    %6538 = vmatprep.subr.bf16.mxu0 %v5818
    %6539 = vmatpush2.bf16.msra.mxu0 %v5817
    %6540 = vmatprep.subr.bf16.mxu0 %v5806
    %6541 = vmatpush2.bf16.msra.mxu0 %v5805
    %6542 = vmatprep.subr.bf16.mxu0 %v5794
    %6543 = vmatpush2.bf16.msra.mxu0 %v5793
    %6544 = vmatprep.subr.bf16.mxu0 %v5782
    %6545 = vmatpush2.bf16.msra.mxu0 %v5781
    %6546 = vmatprep.subr.bf16.mxu0 %v5770
    %6547 = vmatpush2.bf16.msra.mxu0 %v5769
    %6548 = vmatprep.subr.bf16.mxu0 %v5758
    %6549 = vmatpush2.bf16.msra.mxu0 %v5757
    %6550 = vmatprep.mubr.bf16.mxu0 %v3862
    %6551 = vmatmul.mubr.bf16.gmra.mxu0 %v3861
    %v6552 = vpop.f32.mrf.mxu0
    %v6553 = vadd.f32 %v6512, %v6552
    %v6554 = vpop.f32.mrf.mxu0
    %v6555 = vadd.f32 %v6514, %v6554
    %v6556 = vpop.f32.mrf.mxu0
    %v6557 = vpop.f32.mrf.mxu0
    %6558 = vdwg.mxu0
    %6559 = vmatprep.subr.bf16.mxu0 %v5556
    %6560 = vmatpush1.bf16.msra.mxu0 %v5555
    %6561 = vmatprep.subr.bf16.mxu0 %v5544
    %6562 = vmatpush1.bf16.msra.mxu0 %v5543
    %6563 = vmatprep.subr.bf16.mxu0 %v5532
    %6564 = vmatpush1.bf16.msra.mxu0 %v5531
    %6565 = vmatprep.subr.bf16.mxu0 %v5520
    %6566 = vmatpush1.bf16.msra.mxu0 %v5519
    %6567 = vmatprep.subr.bf16.mxu0 %v5508
    %6568 = vmatpush1.bf16.msra.mxu0 %v5507
    %6569 = vmatprep.subr.bf16.mxu0 %v5496
    %6570 = vmatpush1.bf16.msra.mxu0 %v5495
    %6571 = vmatprep.subr.bf16.mxu0 %v5484
    %6572 = vmatpush1.bf16.msra.mxu0 %v5483
    %6573 = vmatprep.subr.bf16.mxu0 %v5472
    %6574 = vmatpush1.bf16.msra.mxu0 %v5471
    %6575 = vmatprep.subr.bf16.mxu0 %v5652
    %6576 = vmatpush2.bf16.msra.mxu0 %v5651
    %6577 = vmatprep.subr.bf16.mxu0 %v5640
    %6578 = vmatpush2.bf16.msra.mxu0 %v5639
    %6579 = vmatprep.subr.bf16.mxu0 %v5628
    %6580 = vmatpush2.bf16.msra.mxu0 %v5627
    %6581 = vmatprep.subr.bf16.mxu0 %v5616
    %6582 = vmatpush2.bf16.msra.mxu0 %v5615
    %6583 = vmatprep.subr.bf16.mxu0 %v5604
    %6584 = vmatpush2.bf16.msra.mxu0 %v5603
    %6585 = vmatprep.subr.bf16.mxu0 %v5592
    %6586 = vmatpush2.bf16.msra.mxu0 %v5591
    %6587 = vmatprep.subr.bf16.mxu0 %v5580
    %6588 = vmatpush2.bf16.msra.mxu0 %v5579
    %6589 = vmatprep.subr.bf16.mxu0 %v5568
    %6590 = vmatpush2.bf16.msra.mxu0 %v5567
    %6591 = vmatprep.mubr.bf16.mxu0 %v3860
    %6592 = vmatmul.mubr.bf16.gmra.mxu0 %v3859
    %v6593 = vpop.f32.mrf.mxu0
    %v6594 = vadd.f32 %v4286, %v6593
    %v6595 = vpop.f32.mrf.mxu0
    %v6596 = vadd.f32 %v4290, %v6595
    %v6597 = vpop.f32.mrf.mxu0
    %v6598 = vpop.f32.mrf.mxu0
    %6599 = vdwg.mxu0
    %6600 = vmatprep.subr.bf16.mxu0 %v5748
    %6601 = vmatpush1.bf16.msra.mxu0 %v5747
    %6602 = vmatprep.subr.bf16.mxu0 %v5736
    %6603 = vmatpush1.bf16.msra.mxu0 %v5735
    %6604 = vmatprep.subr.bf16.mxu0 %v5724
    %6605 = vmatpush1.bf16.msra.mxu0 %v5723
    %6606 = vmatprep.subr.bf16.mxu0 %v5712
    %6607 = vmatpush1.bf16.msra.mxu0 %v5711
    %6608 = vmatprep.subr.bf16.mxu0 %v5700
    %6609 = vmatpush1.bf16.msra.mxu0 %v5699
    %6610 = vmatprep.subr.bf16.mxu0 %v5688
    %6611 = vmatpush1.bf16.msra.mxu0 %v5687
    %6612 = vmatprep.subr.bf16.mxu0 %v5676
    %6613 = vmatpush1.bf16.msra.mxu0 %v5675
    %6614 = vmatprep.subr.bf16.mxu0 %v5664
    %6615 = vmatpush1.bf16.msra.mxu0 %v5663
    %6616 = vmatprep.subr.bf16.mxu0 %v5844
    %6617 = vmatpush2.bf16.msra.mxu0 %v5843
    %6618 = vmatprep.subr.bf16.mxu0 %v5832
    %6619 = vmatpush2.bf16.msra.mxu0 %v5831
    %6620 = vmatprep.subr.bf16.mxu0 %v5820
    %6621 = vmatpush2.bf16.msra.mxu0 %v5819
    %6622 = vmatprep.subr.bf16.mxu0 %v5808
    %6623 = vmatpush2.bf16.msra.mxu0 %v5807
    %6624 = vmatprep.subr.bf16.mxu0 %v5796
    %6625 = vmatpush2.bf16.msra.mxu0 %v5795
    %6626 = vmatprep.subr.bf16.mxu0 %v5784
    %6627 = vmatpush2.bf16.msra.mxu0 %v5783
    %6628 = vmatprep.subr.bf16.mxu0 %v5772
    %6629 = vmatpush2.bf16.msra.mxu0 %v5771
    %6630 = vmatprep.subr.bf16.mxu0 %v5760
    %6631 = vmatpush2.bf16.msra.mxu0 %v5759
    %6632 = vmatprep.mubr.bf16.mxu0 %v3862
    %6633 = vmatmul.mubr.bf16.gmra.mxu0 %v3861
    %v6634 = vpop.f32.mrf.mxu0
    %v6635 = vadd.f32 %v6594, %v6634
    %v6636 = vpop.f32.mrf.mxu0
    %v6637 = vadd.f32 %v6596, %v6636
    %v6638 = vpop.f32.mrf.mxu0
    %v6639 = vpop.f32.mrf.mxu0
    %6640 = vdwg.mxu0
    %6641 = vmatprep.subr.bf16.mxu0 %v5558
    %6642 = vmatpush1.bf16.msra.mxu0 %v5557
    %6643 = vmatprep.subr.bf16.mxu0 %v5546
    %6644 = vmatpush1.bf16.msra.mxu0 %v5545
    %6645 = vmatprep.subr.bf16.mxu0 %v5534
    %6646 = vmatpush1.bf16.msra.mxu0 %v5533
    %6647 = vmatprep.subr.bf16.mxu0 %v5522
    %6648 = vmatpush1.bf16.msra.mxu0 %v5521
    %6649 = vmatprep.subr.bf16.mxu0 %v5510
    %6650 = vmatpush1.bf16.msra.mxu0 %v5509
    %6651 = vmatprep.subr.bf16.mxu0 %v5498
    %6652 = vmatpush1.bf16.msra.mxu0 %v5497
    %6653 = vmatprep.subr.bf16.mxu0 %v5486
    %6654 = vmatpush1.bf16.msra.mxu0 %v5485
    %6655 = vmatprep.subr.bf16.mxu0 %v5474
    %6656 = vmatpush1.bf16.msra.mxu0 %v5473
    %6657 = vmatprep.subr.bf16.mxu0 %v5654
    %6658 = vmatpush2.bf16.msra.mxu0 %v5653
    %6659 = vmatprep.subr.bf16.mxu0 %v5642
    %6660 = vmatpush2.bf16.msra.mxu0 %v5641
    %6661 = vmatprep.subr.bf16.mxu0 %v5630
    %6662 = vmatpush2.bf16.msra.mxu0 %v5629
    %6663 = vmatprep.subr.bf16.mxu0 %v5618
    %6664 = vmatpush2.bf16.msra.mxu0 %v5617
    %6665 = vmatprep.subr.bf16.mxu0 %v5606
    %6666 = vmatpush2.bf16.msra.mxu0 %v5605
    %6667 = vmatprep.subr.bf16.mxu0 %v5594
    %6668 = vmatpush2.bf16.msra.mxu0 %v5593
    %6669 = vmatprep.subr.bf16.mxu0 %v5582
    %6670 = vmatpush2.bf16.msra.mxu0 %v5581
    %6671 = vmatprep.subr.bf16.mxu0 %v5570
    %6672 = vmatpush2.bf16.msra.mxu0 %v5569
    %6673 = vmatprep.mubr.bf16.mxu0 %v3860
    %6674 = vmatmul.mubr.bf16.gmra.mxu0 %v3859
    %v6675 = vpop.f32.mrf.mxu0
    %v6676 = vadd.f32 %v4294, %v6675
    %v6677 = vpop.f32.mrf.mxu0
    %v6678 = vadd.f32 %v4298, %v6677
    %v6679 = vpop.f32.mrf.mxu0
    %v6680 = vpop.f32.mrf.mxu0
    %6681 = vdwg.mxu0
    %6682 = vmatprep.subr.bf16.mxu0 %v5750
    %6683 = vmatpush1.bf16.msra.mxu0 %v5749
    %6684 = vmatprep.subr.bf16.mxu0 %v5738
    %6685 = vmatpush1.bf16.msra.mxu0 %v5737
    %6686 = vmatprep.subr.bf16.mxu0 %v5726
    %6687 = vmatpush1.bf16.msra.mxu0 %v5725
    %6688 = vmatprep.subr.bf16.mxu0 %v5714
    %6689 = vmatpush1.bf16.msra.mxu0 %v5713
    %6690 = vmatprep.subr.bf16.mxu0 %v5702
    %6691 = vmatpush1.bf16.msra.mxu0 %v5701
    %6692 = vmatprep.subr.bf16.mxu0 %v5690
    %6693 = vmatpush1.bf16.msra.mxu0 %v5689
    %6694 = vmatprep.subr.bf16.mxu0 %v5678
    %6695 = vmatpush1.bf16.msra.mxu0 %v5677
    %6696 = vmatprep.subr.bf16.mxu0 %v5666
    %6697 = vmatpush1.bf16.msra.mxu0 %v5665
    %6698 = vmatprep.subr.bf16.mxu0 %v5846
    %6699 = vmatpush2.bf16.msra.mxu0 %v5845
    %6700 = vmatprep.subr.bf16.mxu0 %v5834
    %6701 = vmatpush2.bf16.msra.mxu0 %v5833
    %6702 = vmatprep.subr.bf16.mxu0 %v5822
    %6703 = vmatpush2.bf16.msra.mxu0 %v5821
    %6704 = vmatprep.subr.bf16.mxu0 %v5810
    %6705 = vmatpush2.bf16.msra.mxu0 %v5809
    %6706 = vmatprep.subr.bf16.mxu0 %v5798
    %6707 = vmatpush2.bf16.msra.mxu0 %v5797
    %6708 = vmatprep.subr.bf16.mxu0 %v5786
    %6709 = vmatpush2.bf16.msra.mxu0 %v5785
    %6710 = vmatprep.subr.bf16.mxu0 %v5774
    %6711 = vmatpush2.bf16.msra.mxu0 %v5773
    %6712 = vmatprep.subr.bf16.mxu0 %v5762
    %6713 = vmatpush2.bf16.msra.mxu0 %v5761
    %6714 = vmatprep.mubr.bf16.mxu0 %v3862
    %6715 = vmatmul.mubr.bf16.gmra.mxu0 %v3861
    %v6716 = vpop.f32.mrf.mxu0
    %v6717 = vadd.f32 %v6676, %v6716
    %v6718 = vpop.f32.mrf.mxu0
    %v6719 = vadd.f32 %v6678, %v6718
    %v6720 = vpop.f32.mrf.mxu0
    %v6721 = vpop.f32.mrf.mxu0
    %6722 = vdwg.mxu0
    %v6723 = vadd.f32 %v3443, %v6307
    %v6724 = vadd.f32 %v3445, %v6309
    %v6725 = vadd.f32 %v3525, %v6389
    %v6726 = vadd.f32 %v3527, %v6391
    %v6727 = vxor.u32 %v6723, 2147483648
    %v6728 = vxor.u32 %v6724, 2147483648
    %v6729 = vxor.u32 %v6725, 2147483648
    %v6730 = vxor.u32 %v6726, 2147483648
    %v6731 = vmul.f32 %v6727, 1.442695
    %v6732 = vpow.pop %v6731
    %v6733 = vmul.f32 %v6728, 1.442695
    %v6734 = vpow.pop %v6733
    %v6735 = vmul.f32 %v6729, 1.442695
    %v6736 = vpow.pop %v6735
    %v6737 = vmul.f32 %v6730, 1.442695
    %v6738 = vpow.pop %v6737
    %v6739 = vadd.f32 %v6732, 1.0
    %v6740 = vadd.f32 %v6734, 1.0
    %v6741 = vadd.f32 %v6736, 1.0
    %v6742 = vadd.f32 %v6738, 1.0
    %v6743 = vrcp.pop %v6739
    %v6744 = vmul.f32 1.0, %v6743
    %v6745 = vrcp.pop %v6740
    %v6746 = vmul.f32 1.0, %v6745
    %v6747 = vrcp.pop %v6741
    %v6748 = vmul.f32 1.0, %v6747
    %v6749 = vrcp.pop %v6742
    %v6750 = vmul.f32 1.0, %v6749
    %v6751 = vadd.f32 %v3607, %v6471
    %v6752 = vadd.f32 %v3609, %v6473
    %v6753 = vadd.f32 %v3689, %v6553
    %v6754 = vadd.f32 %v3691, %v6555
    %v6755 = vxor.u32 %v6751, 2147483648
    %v6756 = vxor.u32 %v6752, 2147483648
    %v6757 = vxor.u32 %v6753, 2147483648
    %v6758 = vxor.u32 %v6754, 2147483648
    %v6759 = vmul.f32 %v6755, 1.442695
    %v6760 = vpow.pop %v6759
    %v6761 = vmul.f32 %v6756, 1.442695
    %v6762 = vpow.pop %v6761
    %v6763 = vmul.f32 %v6757, 1.442695
    %v6764 = vpow.pop %v6763
    %v6765 = vmul.f32 %v6758, 1.442695
    %v6766 = vpow.pop %v6765
    %v6767 = vadd.f32 %v6760, 1.0
    %v6768 = vadd.f32 %v6762, 1.0
    %v6769 = vadd.f32 %v6764, 1.0
    %v6770 = vadd.f32 %v6766, 1.0
    %v6771 = vrcp.pop %v6767
    %v6772 = vmul.f32 1.0, %v6771
    %v6773 = vrcp.pop %v6768
    %v6774 = vmul.f32 1.0, %v6773
    %v6775 = vrcp.pop %v6769
    %v6776 = vmul.f32 1.0, %v6775
    %v6777 = vrcp.pop %v6770
    %v6778 = vmul.f32 1.0, %v6777
    %v6779 = vmul.f32 %v6744, %v6635
    %v6780 = vmul.f32 %v6746, %v6637
    %v6781 = vmul.f32 %v6748, %v6717
    %v6782 = vmul.f32 %v6750, %v6719
    %v6783 = vadd.f32 %v3771, %v6779
    %v6784 = vadd.f32 %v3773, %v6780
    %v6785 = vadd.f32 %v3853, %v6781
    %v6786 = vadd.f32 %v3855, %v6782
    %v6787 = vtanh.pop %v6783
    %v6788 = vtanh.pop %v6784
    %v6789 = vtanh.pop %v6785
    %v6790 = vtanh.pop %v6786
    %v6791 = vsub.f32 1.0, %v6772
    %v6792 = vsub.f32 1.0, %v6774
    %v6793 = vsub.f32 1.0, %v6776
    %v6794 = vsub.f32 1.0, %v6778
    %v6795 = vmul.f32 %v6791, %v6787
    %v6796 = vmul.f32 %v6792, %v6788
    %v6797 = vmul.f32 %v6793, %v6789
    %v6798 = vmul.f32 %v6794, %v6790
    %v6799 = vmul.f32 %v6772, %v995
    %v6800 = vmul.f32 %v6774, %v996
    %v6801 = vmul.f32 %v6776, %v997
    %v6802 = vmul.f32 %v6778, %v998
    %v6803 = vadd.f32 %v6795, %v6799
    %v6804 = vadd.f32 %v6796, %v6800
    %v6805 = vadd.f32 %v6797, %v6801
    %v6806 = vadd.f32 %v6798, %v6802
    %6807 = vst [vmem:[%s13] sm:$0xff] %v6803
    %6808 = vst [vmem:[%s13 + $0x8] sm:$0xff] %v6804
    %6809 = vst [vmem:[%s13 + $0x10] sm:$0xff] %v6805
    %6810 = vst [vmem:[%s13 + $0x18] sm:$0xff] %v6806
    // Predicated region
    $region58: #{seq2seq_forward.3} parent=1 // pred_check
      _
    $region59: #{seq2seq_forward.3} parent=1 // pred_check_branch
      %6812 = sbr.rel (0) target = $region61
    $region60: #{seq2seq_forward.3} parent=1 // pred_region
      _
    $region61: #{seq2seq_forward.3} parent=1 // pred_fallthru
      _
    // Predicated region
    $region62: #{seq2seq_forward.3} parent=1 // pred_check
      _
    $region63: #{seq2seq_forward.3} parent=1 // pred_check_branch
      %6814 = sbr.rel (0) target = $region65
    $region64: #{seq2seq_forward.3} parent=1 // pred_region
      _
    $region65: #{seq2seq_forward.3} parent=1 // pred_fallthru
      _
    %6815 = vsyncpa [#allocation3], 1

</llo_original>
